<compile_context>
chip_gen: v6e
topology: v6e:2x2x1
jax: 0.10.0
libtpu: 0.0.40
codegen_flags: <defaults>
</compile_context>

<pallas_src>
import random

import jax
import jax.numpy as jnp
from jax import lax
from jax.experimental import pallas as pl
from jax.experimental.pallas import tpu as pltpu

# ----------------------------- model dims -----------------------------------
INPUT_DIM = 20     # src vocab
OUTPUT_DIM = 24    # trg vocab (decoder.output_dim)
EMB_DIM = 16
HID_DIM = 32       # encoder.hid_dim == decoder.hid_dim
N_LAYERS = 1

B_PAD = 8          # batch padded to one f32 sublane tile
V_PAD = 128        # decoder vocab padded to a full lane tile (lane-dense fc)
SRC_V_PAD = 32     # encoder vocab padded for the in-kernel one-hot lookup

_VMEM = pl.BlockSpec(memory_space=pltpu.MemorySpace.VMEM)
_SMEM = pl.BlockSpec(memory_space=pltpu.MemorySpace.SMEM)


# ----------------------------- encoder kernel --------------------------------
def _encoder_kernel(src_ref,                         # [S*B_PAD, 1] int32
                    emb_ref,                         # [SRC_V_PAD, E]
                    wih_ref, b_ref,                  # [E, 8H], [1, 8H] (fwd|bwd)
                    whh_f_ref, whh_b_ref,            # [H, 4H] each
                    attn_wenc_ref, attn_b_ref,       # [2H, H], [1, H]
                    enc_out_ref,                     # [S*B_PAD, 2H]
                    enc_part_ref,                    # [S*B_PAD, H]
                    hf_ref, cf_ref, hb_ref, cb_ref,  # [B_PAD, H]
                    xg_ref):                         # scratch [S*B_PAD, 8H]
    H = HID_DIM
    SB = enc_out_ref.shape[0]
    S = SB // B_PAD

    # Embedding lookup as an in-kernel one-hot matmul, fused with BOTH
    # directions' input projections (one [SB, E] @ [E, 8H] MXU call).
    vlane = lax.broadcasted_iota(jnp.int32, (SB, SRC_V_PAD), 1)
    onehot = (vlane == src_ref[...]).astype(jnp.float32)          # [SB, Vsrc]
    emb = jnp.dot(onehot, emb_ref[...], preferred_element_type=jnp.float32)
    xg_ref[...] = (
        jnp.dot(emb, wih_ref[...], preferred_element_type=jnp.float32)
        + b_ref[...])

    whh_f = whh_f_ref[...]
    whh_b = whh_b_ref[...]
    h0 = jnp.zeros((B_PAD, H), jnp.float32)

    def _cell(xg, h, c, whh):
        gates = xg + jnp.dot(h, whh, preferred_element_type=jnp.float32)
        i = jax.nn.sigmoid(gates[:, 0 * H:1 * H])
        f = jax.nn.sigmoid(gates[:, 1 * H:2 * H])
        g = jnp.tanh(gates[:, 2 * H:3 * H])
        o = jax.nn.sigmoid(gates[:, 3 * H:4 * H])
        c_new = f * c + i * g
        h_new = o * jnp.tanh(c_new)
        return h_new, c_new

    # Interleaved fwd (position t) + bwd (position S-1-t) recurrence: two
    # independent dependency chains per iteration; fully unrolled (S is small).
    def body(t, carry):
        h_f, c_f, h_b, c_b = carry
        s = S - 1 - t
        row_f = pl.multiple_of(t * B_PAD, B_PAD)
        row_b = pl.multiple_of(s * B_PAD, B_PAD)
        h_f, c_f = _cell(xg_ref[pl.ds(row_f, B_PAD), 0:4 * H], h_f, c_f, whh_f)
        h_b, c_b = _cell(xg_ref[pl.ds(row_b, B_PAD), 4 * H:8 * H], h_b, c_b, whh_b)
        enc_out_ref[pl.ds(row_f, B_PAD), 0:H] = h_f
        enc_out_ref[pl.ds(row_b, B_PAD), H:2 * H] = h_b
        return h_f, c_f, h_b, c_b

    h_f, c_f, h_b, c_b = lax.fori_loop(0, S, body, (h0, h0, h0, h0),
                                       unroll=True)

    hf_ref[...] = h_f
    cf_ref[...] = c_f
    hb_ref[...] = h_b
    cb_ref[...] = c_b

    # Attention enc_out-projection, hoisted out of the decode loop and fused
    # here (enc_out is already resident in VMEM).
    enc_part_ref[...] = (
        jnp.dot(enc_out_ref[...], attn_wenc_ref[...],
                preferred_element_type=jnp.float32)
        + attn_b_ref[...])


# ----------------------------- decoder kernel --------------------------------
def _decoder_kernel(tf_ref,                          # SMEM [T] int32
                    trg_ref,                         # [T, B_PAD, 1] int32
                    enc_out_ref,                     # [S, B_PAD, 2H]
                    enc_part_ref,                    # [S, B_PAD, H]
                    hb_ref, cb_ref,                  # [B_PAD, 2H]
                    lt_w_ref, lt_b_ref, st_w_ref, st_b_ref,
                    attn_wh_ref,                     # [H, H]
                    attn_v_ref,                      # [1, H]
                    attn_vb_ref,                     # [1, 1]
                    w_gate_in_ref,                   # [V_PAD, 4H] (dec_emb@W_ih_e)
                    w_gate_hc_ref,                   # [3H, 4H]    ([Whh; W_ih_c])
                    gate_b_ref,                      # [1, 4H]
                    w_fc_in_ref,                     # [V_PAD, V_PAD] (dec_emb@fc_we)
                    w_fc_hc_ref,                     # [3H, V_PAD]  ([fc_wh; fc_wc])
                    fc_b_ref,                        # [1, V_PAD]
                    out_ref):                        # [T, B_PAD, V_PAD]
    H = HID_DIM
    T = out_ref.shape[0]

    # Seq2Seq bridge linears (linear_lt / linear_st) on the quirk-reshaped
    # encoder hidden/cell states.
    h0 = (jnp.dot(hb_ref[...], lt_w_ref[...], preferred_element_type=jnp.float32)
          + lt_b_ref[...])
    c0 = (jnp.dot(cb_ref[...], st_w_ref[...], preferred_element_type=jnp.float32)
          + st_b_ref[...])

    # ---- loop-invariant VMEM reads hoisted out of the decode loop ----
    enc_out = enc_out_ref[...]                                    # [S,B,2H]
    enc_part = enc_part_ref[...]                                  # [S,B,H]
    attn_wh = attn_wh_ref[...]
    attn_v = attn_v_ref[...]
    attn_vb = attn_vb_ref[...]
    gate_b = gate_b_ref[...]
    fc_b = fc_b_ref[...]
    # (the large folded weights stay as in-loop VMEM reads: vreg budget)

    lane = lax.broadcasted_iota(jnp.int32, (B_PAD, V_PAD), 1)
    neg = jnp.float32(-1e30)

    def onehot(tok):                                              # tok [B_PAD,1]
        return (lane == tok).astype(jnp.float32)                  # [B_PAD,V_PAD]

    # outputs[0] stays zeros, as in the reference forward.
    out_ref[0] = jnp.zeros((B_PAD, V_PAD), jnp.float32)

    def step(t, carry):
        inp_oh, h, c = carry

        # ---- additive attention over source positions ----
        h_part = jnp.dot(h, attn_wh, preferred_element_type=jnp.float32)
        energy = jnp.tanh(enc_part + h_part[None])                # [S,B,H]
        scores = (jnp.sum(energy * attn_v, axis=-1, keepdims=True)
                  + attn_vb)                                      # [S,B,1]
        m = jnp.max(scores, axis=0, keepdims=True)
        e = jnp.exp(scores - m)
        a = e * pl.reciprocal(jnp.sum(e, axis=0, keepdims=True), approx=True)
        context = jnp.sum(a * enc_out, axis=0)                    # [B,2H]

        # ---- fused LSTM cell: 2 MXU pushes (dec_emb folded; [h,ctx] stacked)
        hc = jnp.concatenate([h, context], axis=-1)               # [B,3H]
        gates = (jnp.dot(inp_oh, w_gate_in_ref[...],
                         preferred_element_type=jnp.float32)
                 + jnp.dot(hc, w_gate_hc_ref[...],
                           preferred_element_type=jnp.float32)
                 + gate_b)                                        # [B,4H]
        i = jax.nn.sigmoid(gates[:, 0 * H:1 * H])
        f = jax.nn.sigmoid(gates[:, 1 * H:2 * H])
        g = jnp.tanh(gates[:, 2 * H:3 * H])
        o = jax.nn.sigmoid(gates[:, 3 * H:4 * H])
        c_new = f * c + i * g
        h_new = o * jnp.tanh(c_new)

        # ---- output projection: 2 MXU pushes, lane-dense (V_PAD = 128) ----
        hc_out = jnp.concatenate([h_new, context], axis=-1)       # [B,3H]
        out = (jnp.dot(inp_oh, w_fc_in_ref[...],
                       preferred_element_type=jnp.float32)
               + jnp.dot(hc_out, w_fc_hc_ref[...],
                         preferred_element_type=jnp.float32)
               + fc_b)                                            # [B,V_PAD]
        out_ref[t] = out

        # ---- greedy argmax over the real vocab lanes ----
        masked = jnp.where(lane < OUTPUT_DIM, out, neg)
        mx = jnp.max(masked, axis=1, keepdims=True)
        cand = jnp.where(masked == mx, lane, V_PAD)
        amin = jnp.min(cand, axis=1, keepdims=True)               # first argmax
        top1_oh = (lane == amin).astype(jnp.float32)

        # ---- teacher-forcing select (scalar flag from SMEM) ----
        tf = (tf_ref[t] != 0).astype(jnp.float32)
        inp_next = tf * onehot(trg_ref[t]) + (1.0 - tf) * top1_oh
        return inp_next, h_new, c_new

    inp0 = onehot(trg_ref[0])                                     # input = trg[0]
    lax.fori_loop(1, T, step, (inp0, h0, c0), unroll=True)


# ----------------------------- kernel wrappers --------------------------------
def encoder_call(p, src_ids, S):
    H = HID_DIM
    SB = S * B_PAD
    out_shapes = (
        jax.ShapeDtypeStruct((SB, 2 * H), jnp.float32),   # enc_out (flat)
        jax.ShapeDtypeStruct((SB, H), jnp.float32),       # enc_part (flat)
        jax.ShapeDtypeStruct((B_PAD, H), jnp.float32),    # h_f
        jax.ShapeDtypeStruct((B_PAD, H), jnp.float32),    # c_f
        jax.ShapeDtypeStruct((B_PAD, H), jnp.float32),    # h_b
        jax.ShapeDtypeStruct((B_PAD, H), jnp.float32),    # c_b
    )
    return pl.pallas_call(
        _encoder_kernel,
        out_shape=out_shapes,
        in_specs=[_VMEM] * 8,
        out_specs=(_VMEM,) * 6,
        scratch_shapes=[pltpu.VMEM((SB, 8 * H), jnp.float32)],
    )(src_ids, p["enc_emb"], p["enc_wih_fb"], p["enc_b_fb"],
      p["enc_whh_f"], p["enc_whh_b"], p["attn_wenc"], p["attn_b"])


def decoder_call(p, tf_flags, trg_ids, enc_out, enc_part, h_bridge, c_bridge):
    T = trg_ids.shape[0]
    return pl.pallas_call(
        _decoder_kernel,
        out_shape=jax.ShapeDtypeStruct((T, B_PAD, V_PAD), jnp.float32),
        in_specs=[_SMEM] + [_VMEM] * 18,
        out_specs=_VMEM,
        cost_estimate=pl.CostEstimate(flops=3_000_000,
                                      transcendentals=30_000,
                                      bytes_accessed=300_000),
    )(tf_flags, trg_ids, enc_out, enc_part, h_bridge, c_bridge,
      p["lt_w"], p["lt_b"], p["st_w"], p["st_b"],
      p["attn_wh"], p["attn_v"], p["attn_vb"],
      p["w_gate_in"], p["w_gate_hc"], p["dec_b"],
      p["w_fc_in"], p["w_fc_hc"], p["fc_b"])


# ----------------------------- parameters ------------------------------------
def init_params(key):
    def nrm(k, shape, scale=0.1):
        return scale * jax.random.normal(k, shape, dtype=jnp.float32)

    keys = jax.random.split(key, 24)
    H, E = HID_DIM, EMB_DIM

    # base (reference-layout) parameters
    enc_emb = nrm(keys[0], (INPUT_DIM, E))
    enc_wih_f = nrm(keys[1], (E, 4 * H))
    enc_whh_f = nrm(keys[2], (H, 4 * H))
    enc_b_f = nrm(keys[3], (1, 4 * H))
    enc_wih_b = nrm(keys[4], (E, 4 * H))
    enc_whh_b = nrm(keys[5], (H, 4 * H))
    enc_b_b = nrm(keys[6], (1, 4 * H))
    lt_w = nrm(keys[7], (2 * H, H))
    lt_b = nrm(keys[8], (1, H))
    st_w = nrm(keys[9], (2 * H, H))
    st_b = nrm(keys[10], (1, H))
    dec_emb = nrm(keys[11], (OUTPUT_DIM, E))
    attn_wh = nrm(keys[12], (H, H))
    attn_wenc = nrm(keys[13], (2 * H, H))
    attn_b = nrm(keys[14], (1, H))
    attn_v = nrm(keys[15], (1, H))
    dec_wih_e = nrm(keys[16], (E, 4 * H))
    dec_wih_c = nrm(keys[17], (2 * H, 4 * H))
    dec_whh = nrm(keys[18], (H, 4 * H))
    dec_b = nrm(keys[19], (1, 4 * H))
    fc_wh = nrm(keys[20], (H, OUTPUT_DIM))
    fc_wc = nrm(keys[21], (2 * H, OUTPUT_DIM))
    fc_we = nrm(keys[22], (E, OUTPUT_DIM))
    fc_b = nrm(keys[23], (1, OUTPUT_DIM))

    # vocab padding (lane-dense fc output + in-kernel one-hot lookups)
    dec_emb_p = jnp.zeros((V_PAD, E), jnp.float32).at[:OUTPUT_DIM].set(dec_emb)
    fc_we_p = jnp.zeros((E, V_PAD), jnp.float32).at[:, :OUTPUT_DIM].set(fc_we)
    fc_wh_p = jnp.zeros((H, V_PAD), jnp.float32).at[:, :OUTPUT_DIM].set(fc_wh)
    fc_wc_p = jnp.zeros((2 * H, V_PAD), jnp.float32).at[:, :OUTPUT_DIM].set(fc_wc)
    fc_b_p = jnp.zeros((1, V_PAD), jnp.float32).at[:, :OUTPUT_DIM].set(fc_b)

    return {
        # encoder: padded embedding + fused fwd|bwd input projection
        "enc_emb": jnp.zeros((SRC_V_PAD, E), jnp.float32).at[:INPUT_DIM].set(enc_emb),
        "enc_wih_fb": jnp.concatenate([enc_wih_f, enc_wih_b], axis=1),   # [E, 8H]
        "enc_b_fb": jnp.concatenate([enc_b_f, enc_b_b], axis=1),         # [1, 8H]
        "enc_whh_f": enc_whh_f,
        "enc_whh_b": enc_whh_b,
        # Seq2Seq bridge linears
        "lt_w": lt_w, "lt_b": lt_b, "st_w": st_w, "st_b": st_b,
        # attention
        "attn_wh": attn_wh, "attn_wenc": attn_wenc, "attn_b": attn_b,
        "attn_v": attn_v, "attn_vb": jnp.zeros((1, 1), jnp.float32),
        # decoder: dec_emb folded into the input-side matmuls; [h, ctx]
        # weights stacked so each per-step group is 2 MXU pushes
        "w_gate_in": jnp.dot(dec_emb_p, dec_wih_e),                       # [Vp,4H]
        "w_gate_hc": jnp.concatenate([dec_whh, dec_wih_c], axis=0),       # [3H,4H]
        "dec_b": dec_b,
        "w_fc_in": jnp.dot(dec_emb_p, fc_we_p),                           # [Vp,Vp]
        "w_fc_hc": jnp.concatenate([fc_wh_p, fc_wc_p], axis=0),           # [3H,Vp]
        "fc_b": fc_b_p,
    }


# ----------------------------- Seq2Seq.forward --------------------------------
@jax.jit
def seq2seq_forward(p, src, trg, tf_flags):
    """Mirrors Seq2Seq.forward: returns outputs [max_len, B, trg_vocab]."""
    S, B = src.shape
    T = trg.shape[0]
    H = HID_DIM
    assert B <= B_PAD

    # ----- encoder (embedding + both recurrences + attn enc-projection) -----
    src_ids = jnp.pad(src, ((0, 0), (0, B_PAD - B))).reshape(S * B_PAD, 1)
    enc_out_flat, enc_part_flat, h_f, c_f, h_b, c_b = encoder_call(p, src_ids, S)
    enc_out = enc_out_flat.reshape(S, B_PAD, 2 * H)
    enc_part = enc_part_flat.reshape(S, B_PAD, H)

    # ----- bridge: exact reproduction of the .view() reshape quirk -----
    h_cat = jnp.stack([h_f[:B], h_b[:B]], axis=0)                 # [2, B, H]
    c_cat = jnp.stack([c_f[:B], c_b[:B]], axis=0)
    h_view = h_cat.reshape(N_LAYERS, B, 2 * H)[0]                 # [B, 2H]
    c_view = c_cat.reshape(N_LAYERS, B, 2 * H)[0]
    h_bridge = jnp.pad(h_view, ((0, B_PAD - B), (0, 0)))
    c_bridge = jnp.pad(c_view, ((0, B_PAD - B), (0, 0)))

    # ----- decoder: whole decode loop (trg one-hot built in-kernel) -----
    trg_ids = jnp.pad(trg, ((0, 0), (0, B_PAD - B)))[:, :, None]  # [T,B_PAD,1]
    out_pad = decoder_call(p, tf_flags, trg_ids, enc_out, enc_part,
                           h_bridge, c_bridge)
    return out_pad[:, :B, :OUTPUT_DIM]                            # [T, B, V]


# ----------------------------- main -------------------------------------------
if __name__ == "__main__":
    key = jax.random.PRNGKey(0)
    k_param, k_src, k_trg = jax.random.split(key, 3)

    params = init_params(k_param)

    SRC_LEN, TRG_LEN, BATCH = 10, 8, 2
    src = jax.random.randint(k_src, (SRC_LEN, BATCH), 0, INPUT_DIM, dtype=jnp.int32)
    trg = jax.random.randint(k_trg, (TRG_LEN, BATCH), 0, OUTPUT_DIM, dtype=jnp.int32)

    # teacher-forcing decisions drawn on the host, exactly one random.random()
    # per decode step (same rng consumption as the reference forward), passed
    # in as data so the whole forward stays jitted.
    rng = random.Random(0)
    teacher_forcing_ratio = 0.5
    tf_host = [0] * TRG_LEN
    for t in range(1, TRG_LEN):
        tf_host[t] = int(rng.random() < teacher_forcing_ratio)
    tf_flags = jnp.asarray(tf_host, dtype=jnp.int32)

    outs = seq2seq_forward(params, src, trg, tf_flags)
    outs = jax.block_until_ready(outs)

    assert outs.shape == (TRG_LEN, BATCH, OUTPUT_DIM)
    assert bool(jnp.all(jnp.isfinite(outs)))
    print("KERNEL_OK")
</pallas_src>

<mosaic_0001>
module attributes {stable_mosaic.version = 11 : i64} {
  func.func @_encoder_kernel(%arg0: memref<80x1xi32, #tpu.memory_space<vmem>>, %arg1: memref<32x16xf32, #tpu.memory_space<vmem>>, %arg2: memref<16x256xf32, #tpu.memory_space<vmem>>, %arg3: memref<1x256xf32, #tpu.memory_space<vmem>>, %arg4: memref<32x128xf32, #tpu.memory_space<vmem>>, %arg5: memref<32x128xf32, #tpu.memory_space<vmem>>, %arg6: memref<64x32xf32, #tpu.memory_space<vmem>>, %arg7: memref<1x32xf32, #tpu.memory_space<vmem>>, %arg8: memref<80x64xf32, #tpu.memory_space<vmem>>, %arg9: memref<80x32xf32, #tpu.memory_space<vmem>>, %arg10: memref<8x32xf32, #tpu.memory_space<vmem>>, %arg11: memref<8x32xf32, #tpu.memory_space<vmem>>, %arg12: memref<8x32xf32, #tpu.memory_space<vmem>>, %arg13: memref<8x32xf32, #tpu.memory_space<vmem>>, %arg14: memref<80x256xf32, #tpu.memory_space<vmem>>) attributes {dimension_semantics = [], scalar_prefetch = 0 : i64, scratch_operands = 1 : i64, tpu.core_type = #tpu.core_type<tc>} {
    %0 = tpu.iota {dimensions = array<i32: 1>} : vector<80x32xi32>
    %c0 = arith.constant 0 : index
    %c0_0 = arith.constant 0 : index
    %1 = vector.load %arg0[%c0, %c0_0] : memref<80x1xi32, #tpu.memory_space<vmem>>, vector<80x1xi32>
    %2 = vector.broadcast %1 : vector<80x1xi32> to vector<80x32xi32>
    %3 = arith.cmpi eq, %0, %2 : vector<80x32xi32>
    %4 = arith.extui %3 : vector<80x32xi1> to vector<80x32xi32>
    %5 = arith.sitofp %4 : vector<80x32xi32> to vector<80x32xf32>
    %c0_1 = arith.constant 0 : index
    %c0_2 = arith.constant 0 : index
    %6 = vector.load %arg1[%c0_1, %c0_2] : memref<32x16xf32, #tpu.memory_space<vmem>>, vector<32x16xf32>
    %cst = arith.constant dense<0.000000e+00> : vector<80x16xf32>
    %7 = tpu.matmul %5, %6, %cst {dimension_numbers = #tpu.dot_dimension_numbers<[1], [0], [0], [1], [0, 0, 1, 1], [], []>} : vector<80x32xf32>, vector<32x16xf32>, vector<80x16xf32> -> vector<80x16xf32>
    %c0_3 = arith.constant 0 : index
    %c0_4 = arith.constant 0 : index
    %8 = vector.load %arg2[%c0_3, %c0_4] : memref<16x256xf32, #tpu.memory_space<vmem>>, vector<16x256xf32>
    %cst_5 = arith.constant dense<0.000000e+00> : vector<80x256xf32>
    %9 = tpu.matmul %7, %8, %cst_5 {dimension_numbers = #tpu.dot_dimension_numbers<[1], [0], [0], [1], [0, 0, 1, 1], [], []>} : vector<80x16xf32>, vector<16x256xf32>, vector<80x256xf32> -> vector<80x256xf32>
    %c0_6 = arith.constant 0 : index
    %c0_7 = arith.constant 0 : index
    %10 = vector.load %arg3[%c0_6, %c0_7] : memref<1x256xf32, #tpu.memory_space<vmem>>, vector<1x256xf32>
    %11 = vector.broadcast %10 : vector<1x256xf32> to vector<80x256xf32>
    %12 = arith.addf %9, %11 : vector<80x256xf32>
    %c0_8 = arith.constant 0 : index
    %c0_9 = arith.constant 0 : index
    %13 = vector.load %arg14[%c0_8, %c0_9] : memref<80x256xf32, #tpu.memory_space<vmem>>, vector<80x256xf32>
    tpu.vector_store %arg14[%c0_8, %c0_9], %12 {strides = array<i32>} : memref<80x256xf32, #tpu.memory_space<vmem>>, vector<80x256xf32>,
    %c0_10 = arith.constant 0 : index
    %c0_11 = arith.constant 0 : index
    %14 = vector.load %arg4[%c0_10, %c0_11] : memref<32x128xf32, #tpu.memory_space<vmem>>, vector<32x128xf32>
    %c0_12 = arith.constant 0 : index
    %c0_13 = arith.constant 0 : index
    %15 = vector.load %arg5[%c0_12, %c0_13] : memref<32x128xf32, #tpu.memory_space<vmem>>, vector<32x128xf32>
    %cst_14 = arith.constant 0.000000e+00 : f32
    %16 = vector.broadcast %cst_14 : f32 to vector<8x32xf32>
    %c0_i32 = arith.constant 0 : i32
    %c9_i32 = arith.constant 9 : i32
    %17 = arith.subi %c9_i32, %c0_i32 : i32
    %c8_i32 = arith.constant 8 : i32
    %18 = arith.muli %c0_i32, %c8_i32 : i32
    %19 = tpu.assume_multiple %18, 8 : i32
    %c8_i32_15 = arith.constant 8 : i32
    %20 = arith.muli %17, %c8_i32_15 : i32
    %21 = tpu.assume_multiple %20, 8 : i32
    %22 = arith.index_cast %19 : i32 to index
    %c0_16 = arith.constant 0 : index
    %23 = vector.load %arg14[%22, %c0_16] : memref<80x256xf32, #tpu.memory_space<vmem>>, vector<8x128xf32>
    %cst_17 = arith.constant dense<0.000000e+00> : vector<8x128xf32>
    %24 = tpu.matmul %16, %14, %cst_17 {dimension_numbers = #tpu.dot_dimension_numbers<[1], [0], [0], [1], [0, 0, 1, 1], [], []>} : vector<8x32xf32>, vector<32x128xf32>, vector<8x128xf32> -> vector<8x128xf32>
    %25 = arith.addf %23, %24 : vector<8x128xf32>
    %26 = vector.extract_strided_slice %25 {offsets = [0, 0], sizes = [8, 32], strides = [1, 1]} : vector<8x128xf32> to vector<8x32xf32>
    %27 = arith.negf %26 : vector<8x32xf32>
    %28 = math.exp %27 : vector<8x32xf32>
    %cst_18 = arith.constant 1.000000e+00 : f32
    %29 = vector.broadcast %cst_18 : f32 to vector<8x32xf32>
    %30 = arith.addf %29, %28 : vector<8x32xf32>
    %31 = arith.divf %29, %30 : vector<8x32xf32>
    %32 = vector.extract_strided_slice %25 {offsets = [0, 32], sizes = [8, 32], strides = [1, 1]} : vector<8x128xf32> to vector<8x32xf32>
    %33 = arith.negf %32 : vector<8x32xf32>
    %34 = math.exp %33 : vector<8x32xf32>
    %cst_19 = arith.constant 1.000000e+00 : f32
    %35 = vector.broadcast %cst_19 : f32 to vector<8x32xf32>
    %36 = arith.addf %35, %34 : vector<8x32xf32>
    %37 = arith.divf %35, %36 : vector<8x32xf32>
    %38 = vector.extract_strided_slice %25 {offsets = [0, 64], sizes = [8, 32], strides = [1, 1]} : vector<8x128xf32> to vector<8x32xf32>
    %39 = math.tanh %38 : vector<8x32xf32>
    %40 = vector.extract_strided_slice %25 {offsets = [0, 96], sizes = [8, 32], strides = [1, 1]} : vector<8x128xf32> to vector<8x32xf32>
    %41 = arith.negf %40 : vector<8x32xf32>
    %42 = math.exp %41 : vector<8x32xf32>
    %cst_20 = arith.constant 1.000000e+00 : f32
    %43 = vector.broadcast %cst_20 : f32 to vector<8x32xf32>
    %44 = arith.addf %43, %42 : vector<8x32xf32>
    %45 = arith.divf %43, %44 : vector<8x32xf32>
    %46 = arith.mulf %37, %16 : vector<8x32xf32>
    %47 = arith.mulf %31, %39 : vector<8x32xf32>
    %48 = arith.addf %46, %47 : vector<8x32xf32>
    %49 = math.tanh %48 : vector<8x32xf32>
    %50 = arith.mulf %45, %49 : vector<8x32xf32>
    %51 = arith.index_cast %21 : i32 to index
    %c128 = arith.constant 128 : index
    %52 = vector.load %arg14[%51, %c128] : memref<80x256xf32, #tpu.memory_space<vmem>>, vector<8x128xf32>
    %cst_21 = arith.constant dense<0.000000e+00> : vector<8x128xf32>
    %53 = tpu.matmul %16, %15, %cst_21 {dimension_numbers = #tpu.dot_dimension_numbers<[1], [0], [0], [1], [0, 0, 1, 1], [], []>} : vector<8x32xf32>, vector<32x128xf32>, vector<8x128xf32> -> vector<8x128xf32>
    %54 = arith.addf %52, %53 : vector<8x128xf32>
    %55 = vector.extract_strided_slice %54 {offsets = [0, 0], sizes = [8, 32], strides = [1, 1]} : vector<8x128xf32> to vector<8x32xf32>
    %56 = arith.negf %55 : vector<8x32xf32>
    %57 = math.exp %56 : vector<8x32xf32>
    %cst_22 = arith.constant 1.000000e+00 : f32
    %58 = vector.broadcast %cst_22 : f32 to vector<8x32xf32>
    %59 = arith.addf %58, %57 : vector<8x32xf32>
    %60 = arith.divf %58, %59 : vector<8x32xf32>
    %61 = vector.extract_strided_slice %54 {offsets = [0, 32], sizes = [8, 32], strides = [1, 1]} : vector<8x128xf32> to vector<8x32xf32>
    %62 = arith.negf %61 : vector<8x32xf32>
    %63 = math.exp %62 : vector<8x32xf32>
    %cst_23 = arith.constant 1.000000e+00 : f32
    %64 = vector.broadcast %cst_23 : f32 to vector<8x32xf32>
    %65 = arith.addf %64, %63 : vector<8x32xf32>
    %66 = arith.divf %64, %65 : vector<8x32xf32>
    %67 = vector.extract_strided_slice %54 {offsets = [0, 64], sizes = [8, 32], strides = [1, 1]} : vector<8x128xf32> to vector<8x32xf32>
    %68 = math.tanh %67 : vector<8x32xf32>
    %69 = vector.extract_strided_slice %54 {offsets = [0, 96], sizes = [8, 32], strides = [1, 1]} : vector<8x128xf32> to vector<8x32xf32>
    %70 = arith.negf %69 : vector<8x32xf32>
    %71 = math.exp %70 : vector<8x32xf32>
    %cst_24 = arith.constant 1.000000e+00 : f32
    %72 = vector.broadcast %cst_24 : f32 to vector<8x32xf32>
    %73 = arith.addf %72, %71 : vector<8x32xf32>
    %74 = arith.divf %72, %73 : vector<8x32xf32>
    %75 = arith.mulf %66, %16 : vector<8x32xf32>
    %76 = arith.mulf %60, %68 : vector<8x32xf32>
    %77 = arith.addf %75, %76 : vector<8x32xf32>
    %78 = math.tanh %77 : vector<8x32xf32>
    %79 = arith.mulf %74, %78 : vector<8x32xf32>
    %80 = arith.index_cast %19 : i32 to index
    %c0_25 = arith.constant 0 : index
    %81 = vector.load %arg8[%80, %c0_25] : memref<80x64xf32, #tpu.memory_space<vmem>>, vector<8x32xf32>
    tpu.vector_store %arg8[%80, %c0_25], %50 {strides = array<i32>} : memref<80x64xf32, #tpu.memory_space<vmem>>, vector<8x32xf32>,
    %82 = arith.index_cast %21 : i32 to index
    %c32 = arith.constant 32 : index
    %83 = vector.load %arg8[%82, %c32] : memref<80x64xf32, #tpu.memory_space<vmem>>, vector<8x32xf32>
    tpu.vector_store %arg8[%82, %c32], %79 {strides = array<i32>} : memref<80x64xf32, #tpu.memory_space<vmem>>, vector<8x32xf32>,
    %c1_i32 = arith.constant 1 : i32
    %c9_i32_26 = arith.constant 9 : i32
    %84 = arith.subi %c9_i32_26, %c1_i32 : i32
    %c8_i32_27 = arith.constant 8 : i32
    %85 = arith.muli %c1_i32, %c8_i32_27 : i32
    %86 = tpu.assume_multiple %85, 8 : i32
    %c8_i32_28 = arith.constant 8 : i32
    %87 = arith.muli %84, %c8_i32_28 : i32
    %88 = tpu.assume_multiple %87, 8 : i32
    %89 = arith.index_cast %86 : i32 to index
    %c0_29 = arith.constant 0 : index
    %90 = vector.load %arg14[%89, %c0_29] : memref<80x256xf32, #tpu.memory_space<vmem>>, vector<8x128xf32>
    %cst_30 = arith.constant dense<0.000000e+00> : vector<8x128xf32>
    %91 = tpu.matmul %50, %14, %cst_30 {dimension_numbers = #tpu.dot_dimension_numbers<[1], [0], [0], [1], [0, 0, 1, 1], [], []>} : vector<8x32xf32>, vector<32x128xf32>, vector<8x128xf32> -> vector<8x128xf32>
    %92 = arith.addf %90, %91 : vector<8x128xf32>
    %93 = vector.extract_strided_slice %92 {offsets = [0, 0], sizes = [8, 32], strides = [1, 1]} : vector<8x128xf32> to vector<8x32xf32>
    %94 = arith.negf %93 : vector<8x32xf32>
    %95 = math.exp %94 : vector<8x32xf32>
    %cst_31 = arith.constant 1.000000e+00 : f32
    %96 = vector.broadcast %cst_31 : f32 to vector<8x32xf32>
    %97 = arith.addf %96, %95 : vector<8x32xf32>
    %98 = arith.divf %96, %97 : vector<8x32xf32>
    %99 = vector.extract_strided_slice %92 {offsets = [0, 32], sizes = [8, 32], strides = [1, 1]} : vector<8x128xf32> to vector<8x32xf32>
    %100 = arith.negf %99 : vector<8x32xf32>
    %101 = math.exp %100 : vector<8x32xf32>
    %cst_32 = arith.constant 1.000000e+00 : f32
    %102 = vector.broadcast %cst_32 : f32 to vector<8x32xf32>
    %103 = arith.addf %102, %101 : vector<8x32xf32>
    %104 = arith.divf %102, %103 : vector<8x32xf32>
    %105 = vector.extract_strided_slice %92 {offsets = [0, 64], sizes = [8, 32], strides = [1, 1]} : vector<8x128xf32> to vector<8x32xf32>
    %106 = math.tanh %105 : vector<8x32xf32>
    %107 = vector.extract_strided_slice %92 {offsets = [0, 96], sizes = [8, 32], strides = [1, 1]} : vector<8x128xf32> to vector<8x32xf32>
    %108 = arith.negf %107 : vector<8x32xf32>
    %109 = math.exp %108 : vector<8x32xf32>
    %cst_33 = arith.constant 1.000000e+00 : f32
    %110 = vector.broadcast %cst_33 : f32 to vector<8x32xf32>
    %111 = arith.addf %110, %109 : vector<8x32xf32>
    %112 = arith.divf %110, %111 : vector<8x32xf32>
    %113 = arith.mulf %104, %48 : vector<8x32xf32>
    %114 = arith.mulf %98, %106 : vector<8x32xf32>
    %115 = arith.addf %113, %114 : vector<8x32xf32>
    %116 = math.tanh %115 : vector<8x32xf32>
    %117 = arith.mulf %112, %116 : vector<8x32xf32>
    %118 = arith.index_cast %88 : i32 to index
    %c128_34 = arith.constant 128 : index
    %119 = vector.load %arg14[%118, %c128_34] : memref<80x256xf32, #tpu.memory_space<vmem>>, vector<8x128xf32>
    %cst_35 = arith.constant dense<0.000000e+00> : vector<8x128xf32>
    %120 = tpu.matmul %79, %15, %cst_35 {dimension_numbers = #tpu.dot_dimension_numbers<[1], [0], [0], [1], [0, 0, 1, 1], [], []>} : vector<8x32xf32>, vector<32x128xf32>, vector<8x128xf32> -> vector<8x128xf32>
    %121 = arith.addf %119, %120 : vector<8x128xf32>
    %122 = vector.extract_strided_slice %121 {offsets = [0, 0], sizes = [8, 32], strides = [1, 1]} : vector<8x128xf32> to vector<8x32xf32>
    %123 = arith.negf %122 : vector<8x32xf32>
    %124 = math.exp %123 : vector<8x32xf32>
    %cst_36 = arith.constant 1.000000e+00 : f32
    %125 = vector.broadcast %cst_36 : f32 to vector<8x32xf32>
    %126 = arith.addf %125, %124 : vector<8x32xf32>
    %127 = arith.divf %125, %126 : vector<8x32xf32>
    %128 = vector.extract_strided_slice %121 {offsets = [0, 32], sizes = [8, 32], strides = [1, 1]} : vector<8x128xf32> to vector<8x32xf32>
    %129 = arith.negf %128 : vector<8x32xf32>
    %130 = math.exp %129 : vector<8x32xf32>
    %cst_37 = arith.constant 1.000000e+00 : f32
    %131 = vector.broadcast %cst_37 : f32 to vector<8x32xf32>
    %132 = arith.addf %131, %130 : vector<8x32xf32>
    %133 = arith.divf %131, %132 : vector<8x32xf32>
    %134 = vector.extract_strided_slice %121 {offsets = [0, 64], sizes = [8, 32], strides = [1, 1]} : vector<8x128xf32> to vector<8x32xf32>
    %135 = math.tanh %134 : vector<8x32xf32>
    %136 = vector.extract_strided_slice %121 {offsets = [0, 96], sizes = [8, 32], strides = [1, 1]} : vector<8x128xf32> to vector<8x32xf32>
    %137 = arith.negf %136 : vector<8x32xf32>
    %138 = math.exp %137 : vector<8x32xf32>
    %cst_38 = arith.constant 1.000000e+00 : f32
    %139 = vector.broadcast %cst_38 : f32 to vector<8x32xf32>
    %140 = arith.addf %139, %138 : vector<8x32xf32>
    %141 = arith.divf %139, %140 : vector<8x32xf32>
    %142 = arith.mulf %133, %77 : vector<8x32xf32>
    %143 = arith.mulf %127, %135 : vector<8x32xf32>
    %144 = arith.addf %142, %143 : vector<8x32xf32>
    %145 = math.tanh %144 : vector<8x32xf32>
    %146 = arith.mulf %141, %145 : vector<8x32xf32>
    %147 = arith.index_cast %86 : i32 to index
    %c0_39 = arith.constant 0 : index
    %148 = vector.load %arg8[%147, %c0_39] : memref<80x64xf32, #tpu.memory_space<vmem>>, vector<8x32xf32>
    tpu.vector_store %arg8[%147, %c0_39], %117 {strides = array<i32>} : memref<80x64xf32, #tpu.memory_space<vmem>>, vector<8x32xf32>,
    %149 = arith.index_cast %88 : i32 to index
    %c32_40 = arith.constant 32 : index
    %150 = vector.load %arg8[%149, %c32_40] : memref<80x64xf32, #tpu.memory_space<vmem>>, vector<8x32xf32>
    tpu.vector_store %arg8[%149, %c32_40], %146 {strides = array<i32>} : memref<80x64xf32, #tpu.memory_space<vmem>>, vector<8x32xf32>,
    %c2_i32 = arith.constant 2 : i32
    %c9_i32_41 = arith.constant 9 : i32
    %151 = arith.subi %c9_i32_41, %c2_i32 : i32
    %c8_i32_42 = arith.constant 8 : i32
    %152 = arith.muli %c2_i32, %c8_i32_42 : i32
    %153 = tpu.assume_multiple %152, 8 : i32
    %c8_i32_43 = arith.constant 8 : i32
    %154 = arith.muli %151, %c8_i32_43 : i32
    %155 = tpu.assume_multiple %154, 8 : i32
    %156 = arith.index_cast %153 : i32 to index
    %c0_44 = arith.constant 0 : index
    %157 = vector.load %arg14[%156, %c0_44] : memref<80x256xf32, #tpu.memory_space<vmem>>, vector<8x128xf32>
    %cst_45 = arith.constant dense<0.000000e+00> : vector<8x128xf32>
    %158 = tpu.matmul %117, %14, %cst_45 {dimension_numbers = #tpu.dot_dimension_numbers<[1], [0], [0], [1], [0, 0, 1, 1], [], []>} : vector<8x32xf32>, vector<32x128xf32>, vector<8x128xf32> -> vector<8x128xf32>
    %159 = arith.addf %157, %158 : vector<8x128xf32>
    %160 = vector.extract_strided_slice %159 {offsets = [0, 0], sizes = [8, 32], strides = [1, 1]} : vector<8x128xf32> to vector<8x32xf32>
    %161 = arith.negf %160 : vector<8x32xf32>
    %162 = math.exp %161 : vector<8x32xf32>
    %cst_46 = arith.constant 1.000000e+00 : f32
    %163 = vector.broadcast %cst_46 : f32 to vector<8x32xf32>
    %164 = arith.addf %163, %162 : vector<8x32xf32>
    %165 = arith.divf %163, %164 : vector<8x32xf32>
    %166 = vector.extract_strided_slice %159 {offsets = [0, 32], sizes = [8, 32], strides = [1, 1]} : vector<8x128xf32> to vector<8x32xf32>
    %167 = arith.negf %166 : vector<8x32xf32>
    %168 = math.exp %167 : vector<8x32xf32>
    %cst_47 = arith.constant 1.000000e+00 : f32
    %169 = vector.broadcast %cst_47 : f32 to vector<8x32xf32>
    %170 = arith.addf %169, %168 : vector<8x32xf32>
    %171 = arith.divf %169, %170 : vector<8x32xf32>
    %172 = vector.extract_strided_slice %159 {offsets = [0, 64], sizes = [8, 32], strides = [1, 1]} : vector<8x128xf32> to vector<8x32xf32>
    %173 = math.tanh %172 : vector<8x32xf32>
    %174 = vector.extract_strided_slice %159 {offsets = [0, 96], sizes = [8, 32], strides = [1, 1]} : vector<8x128xf32> to vector<8x32xf32>
    %175 = arith.negf %174 : vector<8x32xf32>
    %176 = math.exp %175 : vector<8x32xf32>
    %cst_48 = arith.constant 1.000000e+00 : f32
    %177 = vector.broadcast %cst_48 : f32 to vector<8x32xf32>
    %178 = arith.addf %177, %176 : vector<8x32xf32>
    %179 = arith.divf %177, %178 : vector<8x32xf32>
    %180 = arith.mulf %171, %115 : vector<8x32xf32>
    %181 = arith.mulf %165, %173 : vector<8x32xf32>
    %182 = arith.addf %180, %181 : vector<8x32xf32>
    %183 = math.tanh %182 : vector<8x32xf32>
    %184 = arith.mulf %179, %183 : vector<8x32xf32>
    %185 = arith.index_cast %155 : i32 to index
    %c128_49 = arith.constant 128 : index
    %186 = vector.load %arg14[%185, %c128_49] : memref<80x256xf32, #tpu.memory_space<vmem>>, vector<8x128xf32>
    %cst_50 = arith.constant dense<0.000000e+00> : vector<8x128xf32>
    %187 = tpu.matmul %146, %15, %cst_50 {dimension_numbers = #tpu.dot_dimension_numbers<[1], [0], [0], [1], [0, 0, 1, 1], [], []>} : vector<8x32xf32>, vector<32x128xf32>, vector<8x128xf32> -> vector<8x128xf32>
    %188 = arith.addf %186, %187 : vector<8x128xf32>
    %189 = vector.extract_strided_slice %188 {offsets = [0, 0], sizes = [8, 32], strides = [1, 1]} : vector<8x128xf32> to vector<8x32xf32>
    %190 = arith.negf %189 : vector<8x32xf32>
    %191 = math.exp %190 : vector<8x32xf32>
    %cst_51 = arith.constant 1.000000e+00 : f32
    %192 = vector.broadcast %cst_51 : f32 to vector<8x32xf32>
    %193 = arith.addf %192, %191 : vector<8x32xf32>
    %194 = arith.divf %192, %193 : vector<8x32xf32>
    %195 = vector.extract_strided_slice %188 {offsets = [0, 32], sizes = [8, 32], strides = [1, 1]} : vector<8x128xf32> to vector<8x32xf32>
    %196 = arith.negf %195 : vector<8x32xf32>
    %197 = math.exp %196 : vector<8x32xf32>
    %cst_52 = arith.constant 1.000000e+00 : f32
    %198 = vector.broadcast %cst_52 : f32 to vector<8x32xf32>
    %199 = arith.addf %198, %197 : vector<8x32xf32>
    %200 = arith.divf %198, %199 : vector<8x32xf32>
    %201 = vector.extract_strided_slice %188 {offsets = [0, 64], sizes = [8, 32], strides = [1, 1]} : vector<8x128xf32> to vector<8x32xf32>
    %202 = math.tanh %201 : vector<8x32xf32>
    %203 = vector.extract_strided_slice %188 {offsets = [0, 96], sizes = [8, 32], strides = [1, 1]} : vector<8x128xf32> to vector<8x32xf32>
    %204 = arith.negf %203 : vector<8x32xf32>
    %205 = math.exp %204 : vector<8x32xf32>
    %cst_53 = arith.constant 1.000000e+00 : f32
    %206 = vector.broadcast %cst_53 : f32 to vector<8x32xf32>
    %207 = arith.addf %206, %205 : vector<8x32xf32>
    %208 = arith.divf %206, %207 : vector<8x32xf32>
    %209 = arith.mulf %200, %144 : vector<8x32xf32>
    %210 = arith.mulf %194, %202 : vector<8x32xf32>
    %211 = arith.addf %209, %210 : vector<8x32xf32>
    %212 = math.tanh %211 : vector<8x32xf32>
    %213 = arith.mulf %208, %212 : vector<8x32xf32>
    %214 = arith.index_cast %153 : i32 to index
    %c0_54 = arith.constant 0 : index
    %215 = vector.load %arg8[%214, %c0_54] : memref<80x64xf32, #tpu.memory_space<vmem>>, vector<8x32xf32>
    tpu.vector_store %arg8[%214, %c0_54], %184 {strides = array<i32>} : memref<80x64xf32, #tpu.memory_space<vmem>>, vector<8x32xf32>,
    %216 = arith.index_cast %155 : i32 to index
    %c32_55 = arith.constant 32 : index
    %217 = vector.load %arg8[%216, %c32_55] : memref<80x64xf32, #tpu.memory_space<vmem>>, vector<8x32xf32>
    tpu.vector_store %arg8[%216, %c32_55], %213 {strides = array<i32>} : memref<80x64xf32, #tpu.memory_space<vmem>>, vector<8x32xf32>,
    %c3_i32 = arith.constant 3 : i32
    %c9_i32_56 = arith.constant 9 : i32
    %218 = arith.subi %c9_i32_56, %c3_i32 : i32
    %c8_i32_57 = arith.constant 8 : i32
    %219 = arith.muli %c3_i32, %c8_i32_57 : i32
    %220 = tpu.assume_multiple %219, 8 : i32
    %c8_i32_58 = arith.constant 8 : i32
    %221 = arith.muli %218, %c8_i32_58 : i32
    %222 = tpu.assume_multiple %221, 8 : i32
    %223 = arith.index_cast %220 : i32 to index
    %c0_59 = arith.constant 0 : index
    %224 = vector.load %arg14[%223, %c0_59] : memref<80x256xf32, #tpu.memory_space<vmem>>, vector<8x128xf32>
    %cst_60 = arith.constant dense<0.000000e+00> : vector<8x128xf32>
    %225 = tpu.matmul %184, %14, %cst_60 {dimension_numbers = #tpu.dot_dimension_numbers<[1], [0], [0], [1], [0, 0, 1, 1], [], []>} : vector<8x32xf32>, vector<32x128xf32>, vector<8x128xf32> -> vector<8x128xf32>
    %226 = arith.addf %224, %225 : vector<8x128xf32>
    %227 = vector.extract_strided_slice %226 {offsets = [0, 0], sizes = [8, 32], strides = [1, 1]} : vector<8x128xf32> to vector<8x32xf32>
    %228 = arith.negf %227 : vector<8x32xf32>
    %229 = math.exp %228 : vector<8x32xf32>
    %cst_61 = arith.constant 1.000000e+00 : f32
    %230 = vector.broadcast %cst_61 : f32 to vector<8x32xf32>
    %231 = arith.addf %230, %229 : vector<8x32xf32>
    %232 = arith.divf %230, %231 : vector<8x32xf32>
    %233 = vector.extract_strided_slice %226 {offsets = [0, 32], sizes = [8, 32], strides = [1, 1]} : vector<8x128xf32> to vector<8x32xf32>
    %234 = arith.negf %233 : vector<8x32xf32>
    %235 = math.exp %234 : vector<8x32xf32>
    %cst_62 = arith.constant 1.000000e+00 : f32
    %236 = vector.broadcast %cst_62 : f32 to vector<8x32xf32>
    %237 = arith.addf %236, %235 : vector<8x32xf32>
    %238 = arith.divf %236, %237 : vector<8x32xf32>
    %239 = vector.extract_strided_slice %226 {offsets = [0, 64], sizes = [8, 32], strides = [1, 1]} : vector<8x128xf32> to vector<8x32xf32>
    %240 = math.tanh %239 : vector<8x32xf32>
    %241 = vector.extract_strided_slice %226 {offsets = [0, 96], sizes = [8, 32], strides = [1, 1]} : vector<8x128xf32> to vector<8x32xf32>
    %242 = arith.negf %241 : vector<8x32xf32>
    %243 = math.exp %242 : vector<8x32xf32>
    %cst_63 = arith.constant 1.000000e+00 : f32
    %244 = vector.broadcast %cst_63 : f32 to vector<8x32xf32>
    %245 = arith.addf %244, %243 : vector<8x32xf32>
    %246 = arith.divf %244, %245 : vector<8x32xf32>
    %247 = arith.mulf %238, %182 : vector<8x32xf32>
    %248 = arith.mulf %232, %240 : vector<8x32xf32>
    %249 = arith.addf %247, %248 : vector<8x32xf32>
    %250 = math.tanh %249 : vector<8x32xf32>
    %251 = arith.mulf %246, %250 : vector<8x32xf32>
    %252 = arith.index_cast %222 : i32 to index
    %c128_64 = arith.constant 128 : index
    %253 = vector.load %arg14[%252, %c128_64] : memref<80x256xf32, #tpu.memory_space<vmem>>, vector<8x128xf32>
    %cst_65 = arith.constant dense<0.000000e+00> : vector<8x128xf32>
    %254 = tpu.matmul %213, %15, %cst_65 {dimension_numbers = #tpu.dot_dimension_numbers<[1], [0], [0], [1], [0, 0, 1, 1], [], []>} : vector<8x32xf32>, vector<32x128xf32>, vector<8x128xf32> -> vector<8x128xf32>
    %255 = arith.addf %253, %254 : vector<8x128xf32>
    %256 = vector.extract_strided_slice %255 {offsets = [0, 0], sizes = [8, 32], strides = [1, 1]} : vector<8x128xf32> to vector<8x32xf32>
    %257 = arith.negf %256 : vector<8x32xf32>
    %258 = math.exp %257 : vector<8x32xf32>
    %cst_66 = arith.constant 1.000000e+00 : f32
    %259 = vector.broadcast %cst_66 : f32 to vector<8x32xf32>
    %260 = arith.addf %259, %258 : vector<8x32xf32>
    %261 = arith.divf %259, %260 : vector<8x32xf32>
    %262 = vector.extract_strided_slice %255 {offsets = [0, 32], sizes = [8, 32], strides = [1, 1]} : vector<8x128xf32> to vector<8x32xf32>
    %263 = arith.negf %262 : vector<8x32xf32>
    %264 = math.exp %263 : vector<8x32xf32>
    %cst_67 = arith.constant 1.000000e+00 : f32
    %265 = vector.broadcast %cst_67 : f32 to vector<8x32xf32>
    %266 = arith.addf %265, %264 : vector<8x32xf32>
    %267 = arith.divf %265, %266 : vector<8x32xf32>
    %268 = vector.extract_strided_slice %255 {offsets = [0, 64], sizes = [8, 32], strides = [1, 1]} : vector<8x128xf32> to vector<8x32xf32>
    %269 = math.tanh %268 : vector<8x32xf32>
    %270 = vector.extract_strided_slice %255 {offsets = [0, 96], sizes = [8, 32], strides = [1, 1]} : vector<8x128xf32> to vector<8x32xf32>
    %271 = arith.negf %270 : vector<8x32xf32>
    %272 = math.exp %271 : vector<8x32xf32>
    %cst_68 = arith.constant 1.000000e+00 : f32
    %273 = vector.broadcast %cst_68 : f32 to vector<8x32xf32>
    %274 = arith.addf %273, %272 : vector<8x32xf32>
    %275 = arith.divf %273, %274 : vector<8x32xf32>
    %276 = arith.mulf %267, %211 : vector<8x32xf32>
    %277 = arith.mulf %261, %269 : vector<8x32xf32>
    %278 = arith.addf %276, %277 : vector<8x32xf32>
    %279 = math.tanh %278 : vector<8x32xf32>
    %280 = arith.mulf %275, %279 : vector<8x32xf32>
    %281 = arith.index_cast %220 : i32 to index
    %c0_69 = arith.constant 0 : index
    %282 = vector.load %arg8[%281, %c0_69] : memref<80x64xf32, #tpu.memory_space<vmem>>, vector<8x32xf32>
    tpu.vector_store %arg8[%281, %c0_69], %251 {strides = array<i32>} : memref<80x64xf32, #tpu.memory_space<vmem>>, vector<8x32xf32>,
    %283 = arith.index_cast %222 : i32 to index
    %c32_70 = arith.constant 32 : index
    %284 = vector.load %arg8[%283, %c32_70] : memref<80x64xf32, #tpu.memory_space<vmem>>, vector<8x32xf32>
    tpu.vector_store %arg8[%283, %c32_70], %280 {strides = array<i32>} : memref<80x64xf32, #tpu.memory_space<vmem>>, vector<8x32xf32>,
    %c4_i32 = arith.constant 4 : i32
    %c9_i32_71 = arith.constant 9 : i32
    %285 = arith.subi %c9_i32_71, %c4_i32 : i32
    %c8_i32_72 = arith.constant 8 : i32
    %286 = arith.muli %c4_i32, %c8_i32_72 : i32
    %287 = tpu.assume_multiple %286, 8 : i32
    %c8_i32_73 = arith.constant 8 : i32
    %288 = arith.muli %285, %c8_i32_73 : i32
    %289 = tpu.assume_multiple %288, 8 : i32
    %290 = arith.index_cast %287 : i32 to index
    %c0_74 = arith.constant 0 : index
    %291 = vector.load %arg14[%290, %c0_74] : memref<80x256xf32, #tpu.memory_space<vmem>>, vector<8x128xf32>
    %cst_75 = arith.constant dense<0.000000e+00> : vector<8x128xf32>
    %292 = tpu.matmul %251, %14, %cst_75 {dimension_numbers = #tpu.dot_dimension_numbers<[1], [0], [0], [1], [0, 0, 1, 1], [], []>} : vector<8x32xf32>, vector<32x128xf32>, vector<8x128xf32> -> vector<8x128xf32>
    %293 = arith.addf %291, %292 : vector<8x128xf32>
    %294 = vector.extract_strided_slice %293 {offsets = [0, 0], sizes = [8, 32], strides = [1, 1]} : vector<8x128xf32> to vector<8x32xf32>
    %295 = arith.negf %294 : vector<8x32xf32>
    %296 = math.exp %295 : vector<8x32xf32>
    %cst_76 = arith.constant 1.000000e+00 : f32
    %297 = vector.broadcast %cst_76 : f32 to vector<8x32xf32>
    %298 = arith.addf %297, %296 : vector<8x32xf32>
    %299 = arith.divf %297, %298 : vector<8x32xf32>
    %300 = vector.extract_strided_slice %293 {offsets = [0, 32], sizes = [8, 32], strides = [1, 1]} : vector<8x128xf32> to vector<8x32xf32>
    %301 = arith.negf %300 : vector<8x32xf32>
    %302 = math.exp %301 : vector<8x32xf32>
    %cst_77 = arith.constant 1.000000e+00 : f32
    %303 = vector.broadcast %cst_77 : f32 to vector<8x32xf32>
    %304 = arith.addf %303, %302 : vector<8x32xf32>
    %305 = arith.divf %303, %304 : vector<8x32xf32>
    %306 = vector.extract_strided_slice %293 {offsets = [0, 64], sizes = [8, 32], strides = [1, 1]} : vector<8x128xf32> to vector<8x32xf32>
    %307 = math.tanh %306 : vector<8x32xf32>
    %308 = vector.extract_strided_slice %293 {offsets = [0, 96], sizes = [8, 32], strides = [1, 1]} : vector<8x128xf32> to vector<8x32xf32>
    %309 = arith.negf %308 : vector<8x32xf32>
    %310 = math.exp %309 : vector<8x32xf32>
    %cst_78 = arith.constant 1.000000e+00 : f32
    %311 = vector.broadcast %cst_78 : f32 to vector<8x32xf32>
    %312 = arith.addf %311, %310 : vector<8x32xf32>
    %313 = arith.divf %311, %312 : vector<8x32xf32>
    %314 = arith.mulf %305, %249 : vector<8x32xf32>
    %315 = arith.mulf %299, %307 : vector<8x32xf32>
    %316 = arith.addf %314, %315 : vector<8x32xf32>
    %317 = math.tanh %316 : vector<8x32xf32>
    %318 = arith.mulf %313, %317 : vector<8x32xf32>
    %319 = arith.index_cast %289 : i32 to index
    %c128_79 = arith.constant 128 : index
    %320 = vector.load %arg14[%319, %c128_79] : memref<80x256xf32, #tpu.memory_space<vmem>>, vector<8x128xf32>
    %cst_80 = arith.constant dense<0.000000e+00> : vector<8x128xf32>
    %321 = tpu.matmul %280, %15, %cst_80 {dimension_numbers = #tpu.dot_dimension_numbers<[1], [0], [0], [1], [0, 0, 1, 1], [], []>} : vector<8x32xf32>, vector<32x128xf32>, vector<8x128xf32> -> vector<8x128xf32>
    %322 = arith.addf %320, %321 : vector<8x128xf32>
    %323 = vector.extract_strided_slice %322 {offsets = [0, 0], sizes = [8, 32], strides = [1, 1]} : vector<8x128xf32> to vector<8x32xf32>
    %324 = arith.negf %323 : vector<8x32xf32>
    %325 = math.exp %324 : vector<8x32xf32>
    %cst_81 = arith.constant 1.000000e+00 : f32
    %326 = vector.broadcast %cst_81 : f32 to vector<8x32xf32>
    %327 = arith.addf %326, %325 : vector<8x32xf32>
    %328 = arith.divf %326, %327 : vector<8x32xf32>
    %329 = vector.extract_strided_slice %322 {offsets = [0, 32], sizes = [8, 32], strides = [1, 1]} : vector<8x128xf32> to vector<8x32xf32>
    %330 = arith.negf %329 : vector<8x32xf32>
    %331 = math.exp %330 : vector<8x32xf32>
    %cst_82 = arith.constant 1.000000e+00 : f32
    %332 = vector.broadcast %cst_82 : f32 to vector<8x32xf32>
    %333 = arith.addf %332, %331 : vector<8x32xf32>
    %334 = arith.divf %332, %333 : vector<8x32xf32>
    %335 = vector.extract_strided_slice %322 {offsets = [0, 64], sizes = [8, 32], strides = [1, 1]} : vector<8x128xf32> to vector<8x32xf32>
    %336 = math.tanh %335 : vector<8x32xf32>
    %337 = vector.extract_strided_slice %322 {offsets = [0, 96], sizes = [8, 32], strides = [1, 1]} : vector<8x128xf32> to vector<8x32xf32>
    %338 = arith.negf %337 : vector<8x32xf32>
    %339 = math.exp %338 : vector<8x32xf32>
    %cst_83 = arith.constant 1.000000e+00 : f32
    %340 = vector.broadcast %cst_83 : f32 to vector<8x32xf32>
    %341 = arith.addf %340, %339 : vector<8x32xf32>
    %342 = arith.divf %340, %341 : vector<8x32xf32>
    %343 = arith.mulf %334, %278 : vector<8x32xf32>
    %344 = arith.mulf %328, %336 : vector<8x32xf32>
    %345 = arith.addf %343, %344 : vector<8x32xf32>
    %346 = math.tanh %345 : vector<8x32xf32>
    %347 = arith.mulf %342, %346 : vector<8x32xf32>
    %348 = arith.index_cast %287 : i32 to index
    %c0_84 = arith.constant 0 : index
    %349 = vector.load %arg8[%348, %c0_84] : memref<80x64xf32, #tpu.memory_space<vmem>>, vector<8x32xf32>
    tpu.vector_store %arg8[%348, %c0_84], %318 {strides = array<i32>} : memref<80x64xf32, #tpu.memory_space<vmem>>, vector<8x32xf32>,
    %350 = arith.index_cast %289 : i32 to index
    %c32_85 = arith.constant 32 : index
    %351 = vector.load %arg8[%350, %c32_85] : memref<80x64xf32, #tpu.memory_space<vmem>>, vector<8x32xf32>
    tpu.vector_store %arg8[%350, %c32_85], %347 {strides = array<i32>} : memref<80x64xf32, #tpu.memory_space<vmem>>, vector<8x32xf32>,
    %c5_i32 = arith.constant 5 : i32
    %c9_i32_86 = arith.constant 9 : i32
    %352 = arith.subi %c9_i32_86, %c5_i32 : i32
    %c8_i32_87 = arith.constant 8 : i32
    %353 = arith.muli %c5_i32, %c8_i32_87 : i32
    %354 = tpu.assume_multiple %353, 8 : i32
    %c8_i32_88 = arith.constant 8 : i32
    %355 = arith.muli %352, %c8_i32_88 : i32
    %356 = tpu.assume_multiple %355, 8 : i32
    %357 = arith.index_cast %354 : i32 to index
    %c0_89 = arith.constant 0 : index
    %358 = vector.load %arg14[%357, %c0_89] : memref<80x256xf32, #tpu.memory_space<vmem>>, vector<8x128xf32>
    %cst_90 = arith.constant dense<0.000000e+00> : vector<8x128xf32>
    %359 = tpu.matmul %318, %14, %cst_90 {dimension_numbers = #tpu.dot_dimension_numbers<[1], [0], [0], [1], [0, 0, 1, 1], [], []>} : vector<8x32xf32>, vector<32x128xf32>, vector<8x128xf32> -> vector<8x128xf32>
    %360 = arith.addf %358, %359 : vector<8x128xf32>
    %361 = vector.extract_strided_slice %360 {offsets = [0, 0], sizes = [8, 32], strides = [1, 1]} : vector<8x128xf32> to vector<8x32xf32>
    %362 = arith.negf %361 : vector<8x32xf32>
    %363 = math.exp %362 : vector<8x32xf32>
    %cst_91 = arith.constant 1.000000e+00 : f32
    %364 = vector.broadcast %cst_91 : f32 to vector<8x32xf32>
    %365 = arith.addf %364, %363 : vector<8x32xf32>
    %366 = arith.divf %364, %365 : vector<8x32xf32>
    %367 = vector.extract_strided_slice %360 {offsets = [0, 32], sizes = [8, 32], strides = [1, 1]} : vector<8x128xf32> to vector<8x32xf32>
    %368 = arith.negf %367 : vector<8x32xf32>
    %369 = math.exp %368 : vector<8x32xf32>
    %cst_92 = arith.constant 1.000000e+00 : f32
    %370 = vector.broadcast %cst_92 : f32 to vector<8x32xf32>
    %371 = arith.addf %370, %369 : vector<8x32xf32>
    %372 = arith.divf %370, %371 : vector<8x32xf32>
    %373 = vector.extract_strided_slice %360 {offsets = [0, 64], sizes = [8, 32], strides = [1, 1]} : vector<8x128xf32> to vector<8x32xf32>
    %374 = math.tanh %373 : vector<8x32xf32>
    %375 = vector.extract_strided_slice %360 {offsets = [0, 96], sizes = [8, 32], strides = [1, 1]} : vector<8x128xf32> to vector<8x32xf32>
    %376 = arith.negf %375 : vector<8x32xf32>
    %377 = math.exp %376 : vector<8x32xf32>
    %cst_93 = arith.constant 1.000000e+00 : f32
    %378 = vector.broadcast %cst_93 : f32 to vector<8x32xf32>
    %379 = arith.addf %378, %377 : vector<8x32xf32>
    %380 = arith.divf %378, %379 : vector<8x32xf32>
    %381 = arith.mulf %372, %316 : vector<8x32xf32>
    %382 = arith.mulf %366, %374 : vector<8x32xf32>
    %383 = arith.addf %381, %382 : vector<8x32xf32>
    %384 = math.tanh %383 : vector<8x32xf32>
    %385 = arith.mulf %380, %384 : vector<8x32xf32>
    %386 = arith.index_cast %356 : i32 to index
    %c128_94 = arith.constant 128 : index
    %387 = vector.load %arg14[%386, %c128_94] : memref<80x256xf32, #tpu.memory_space<vmem>>, vector<8x128xf32>
    %cst_95 = arith.constant dense<0.000000e+00> : vector<8x128xf32>
    %388 = tpu.matmul %347, %15, %cst_95 {dimension_numbers = #tpu.dot_dimension_numbers<[1], [0], [0], [1], [0, 0, 1, 1], [], []>} : vector<8x32xf32>, vector<32x128xf32>, vector<8x128xf32> -> vector<8x128xf32>
    %389 = arith.addf %387, %388 : vector<8x128xf32>
    %390 = vector.extract_strided_slice %389 {offsets = [0, 0], sizes = [8, 32], strides = [1, 1]} : vector<8x128xf32> to vector<8x32xf32>
    %391 = arith.negf %390 : vector<8x32xf32>
    %392 = math.exp %391 : vector<8x32xf32>
    %cst_96 = arith.constant 1.000000e+00 : f32
    %393 = vector.broadcast %cst_96 : f32 to vector<8x32xf32>
    %394 = arith.addf %393, %392 : vector<8x32xf32>
    %395 = arith.divf %393, %394 : vector<8x32xf32>
    %396 = vector.extract_strided_slice %389 {offsets = [0, 32], sizes = [8, 32], strides = [1, 1]} : vector<8x128xf32> to vector<8x32xf32>
    %397 = arith.negf %396 : vector<8x32xf32>
    %398 = math.exp %397 : vector<8x32xf32>
    %cst_97 = arith.constant 1.000000e+00 : f32
    %399 = vector.broadcast %cst_97 : f32 to vector<8x32xf32>
    %400 = arith.addf %399, %398 : vector<8x32xf32>
    %401 = arith.divf %399, %400 : vector<8x32xf32>
    %402 = vector.extract_strided_slice %389 {offsets = [0, 64], sizes = [8, 32], strides = [1, 1]} : vector<8x128xf32> to vector<8x32xf32>
    %403 = math.tanh %402 : vector<8x32xf32>
    %404 = vector.extract_strided_slice %389 {offsets = [0, 96], sizes = [8, 32], strides = [1, 1]} : vector<8x128xf32> to vector<8x32xf32>
    %405 = arith.negf %404 : vector<8x32xf32>
    %406 = math.exp %405 : vector<8x32xf32>
    %cst_98 = arith.constant 1.000000e+00 : f32
    %407 = vector.broadcast %cst_98 : f32 to vector<8x32xf32>
    %408 = arith.addf %407, %406 : vector<8x32xf32>
    %409 = arith.divf %407, %408 : vector<8x32xf32>
    %410 = arith.mulf %401, %345 : vector<8x32xf32>
    %411 = arith.mulf %395, %403 : vector<8x32xf32>
    %412 = arith.addf %410, %411 : vector<8x32xf32>
    %413 = math.tanh %412 : vector<8x32xf32>
    %414 = arith.mulf %409, %413 : vector<8x32xf32>
    %415 = arith.index_cast %354 : i32 to index
    %c0_99 = arith.constant 0 : index
    %416 = vector.load %arg8[%415, %c0_99] : memref<80x64xf32, #tpu.memory_space<vmem>>, vector<8x32xf32>
    tpu.vector_store %arg8[%415, %c0_99], %385 {strides = array<i32>} : memref<80x64xf32, #tpu.memory_space<vmem>>, vector<8x32xf32>,
    %417 = arith.index_cast %356 : i32 to index
    %c32_100 = arith.constant 32 : index
    %418 = vector.load %arg8[%417, %c32_100] : memref<80x64xf32, #tpu.memory_space<vmem>>, vector<8x32xf32>
    tpu.vector_store %arg8[%417, %c32_100], %414 {strides = array<i32>} : memref<80x64xf32, #tpu.memory_space<vmem>>, vector<8x32xf32>,
    %c6_i32 = arith.constant 6 : i32
    %c9_i32_101 = arith.constant 9 : i32
    %419 = arith.subi %c9_i32_101, %c6_i32 : i32
    %c8_i32_102 = arith.constant 8 : i32
    %420 = arith.muli %c6_i32, %c8_i32_102 : i32
    %421 = tpu.assume_multiple %420, 8 : i32
    %c8_i32_103 = arith.constant 8 : i32
    %422 = arith.muli %419, %c8_i32_103 : i32
    %423 = tpu.assume_multiple %422, 8 : i32
    %424 = arith.index_cast %421 : i32 to index
    %c0_104 = arith.constant 0 : index
    %425 = vector.load %arg14[%424, %c0_104] : memref<80x256xf32, #tpu.memory_space<vmem>>, vector<8x128xf32>
    %cst_105 = arith.constant dense<0.000000e+00> : vector<8x128xf32>
    %426 = tpu.matmul %385, %14, %cst_105 {dimension_numbers = #tpu.dot_dimension_numbers<[1], [0], [0], [1], [0, 0, 1, 1], [], []>} : vector<8x32xf32>, vector<32x128xf32>, vector<8x128xf32> -> vector<8x128xf32>
    %427 = arith.addf %425, %426 : vector<8x128xf32>
    %428 = vector.extract_strided_slice %427 {offsets = [0, 0], sizes = [8, 32], strides = [1, 1]} : vector<8x128xf32> to vector<8x32xf32>
    %429 = arith.negf %428 : vector<8x32xf32>
    %430 = math.exp %429 : vector<8x32xf32>
    %cst_106 = arith.constant 1.000000e+00 : f32
    %431 = vector.broadcast %cst_106 : f32 to vector<8x32xf32>
    %432 = arith.addf %431, %430 : vector<8x32xf32>
    %433 = arith.divf %431, %432 : vector<8x32xf32>
    %434 = vector.extract_strided_slice %427 {offsets = [0, 32], sizes = [8, 32], strides = [1, 1]} : vector<8x128xf32> to vector<8x32xf32>
    %435 = arith.negf %434 : vector<8x32xf32>
    %436 = math.exp %435 : vector<8x32xf32>
    %cst_107 = arith.constant 1.000000e+00 : f32
    %437 = vector.broadcast %cst_107 : f32 to vector<8x32xf32>
    %438 = arith.addf %437, %436 : vector<8x32xf32>
    %439 = arith.divf %437, %438 : vector<8x32xf32>
    %440 = vector.extract_strided_slice %427 {offsets = [0, 64], sizes = [8, 32], strides = [1, 1]} : vector<8x128xf32> to vector<8x32xf32>
    %441 = math.tanh %440 : vector<8x32xf32>
    %442 = vector.extract_strided_slice %427 {offsets = [0, 96], sizes = [8, 32], strides = [1, 1]} : vector<8x128xf32> to vector<8x32xf32>
    %443 = arith.negf %442 : vector<8x32xf32>
    %444 = math.exp %443 : vector<8x32xf32>
    %cst_108 = arith.constant 1.000000e+00 : f32
    %445 = vector.broadcast %cst_108 : f32 to vector<8x32xf32>
    %446 = arith.addf %445, %444 : vector<8x32xf32>
    %447 = arith.divf %445, %446 : vector<8x32xf32>
    %448 = arith.mulf %439, %383 : vector<8x32xf32>
    %449 = arith.mulf %433, %441 : vector<8x32xf32>
    %450 = arith.addf %448, %449 : vector<8x32xf32>
    %451 = math.tanh %450 : vector<8x32xf32>
    %452 = arith.mulf %447, %451 : vector<8x32xf32>
    %453 = arith.index_cast %423 : i32 to index
    %c128_109 = arith.constant 128 : index
    %454 = vector.load %arg14[%453, %c128_109] : memref<80x256xf32, #tpu.memory_space<vmem>>, vector<8x128xf32>
    %cst_110 = arith.constant dense<0.000000e+00> : vector<8x128xf32>
    %455 = tpu.matmul %414, %15, %cst_110 {dimension_numbers = #tpu.dot_dimension_numbers<[1], [0], [0], [1], [0, 0, 1, 1], [], []>} : vector<8x32xf32>, vector<32x128xf32>, vector<8x128xf32> -> vector<8x128xf32>
    %456 = arith.addf %454, %455 : vector<8x128xf32>
    %457 = vector.extract_strided_slice %456 {offsets = [0, 0], sizes = [8, 32], strides = [1, 1]} : vector<8x128xf32> to vector<8x32xf32>
    %458 = arith.negf %457 : vector<8x32xf32>
    %459 = math.exp %458 : vector<8x32xf32>
    %cst_111 = arith.constant 1.000000e+00 : f32
    %460 = vector.broadcast %cst_111 : f32 to vector<8x32xf32>
    %461 = arith.addf %460, %459 : vector<8x32xf32>
    %462 = arith.divf %460, %461 : vector<8x32xf32>
    %463 = vector.extract_strided_slice %456 {offsets = [0, 32], sizes = [8, 32], strides = [1, 1]} : vector<8x128xf32> to vector<8x32xf32>
    %464 = arith.negf %463 : vector<8x32xf32>
    %465 = math.exp %464 : vector<8x32xf32>
    %cst_112 = arith.constant 1.000000e+00 : f32
    %466 = vector.broadcast %cst_112 : f32 to vector<8x32xf32>
    %467 = arith.addf %466, %465 : vector<8x32xf32>
    %468 = arith.divf %466, %467 : vector<8x32xf32>
    %469 = vector.extract_strided_slice %456 {offsets = [0, 64], sizes = [8, 32], strides = [1, 1]} : vector<8x128xf32> to vector<8x32xf32>
    %470 = math.tanh %469 : vector<8x32xf32>
    %471 = vector.extract_strided_slice %456 {offsets = [0, 96], sizes = [8, 32], strides = [1, 1]} : vector<8x128xf32> to vector<8x32xf32>
    %472 = arith.negf %471 : vector<8x32xf32>
    %473 = math.exp %472 : vector<8x32xf32>
    %cst_113 = arith.constant 1.000000e+00 : f32
    %474 = vector.broadcast %cst_113 : f32 to vector<8x32xf32>
    %475 = arith.addf %474, %473 : vector<8x32xf32>
    %476 = arith.divf %474, %475 : vector<8x32xf32>
    %477 = arith.mulf %468, %412 : vector<8x32xf32>
    %478 = arith.mulf %462, %470 : vector<8x32xf32>
    %479 = arith.addf %477, %478 : vector<8x32xf32>
    %480 = math.tanh %479 : vector<8x32xf32>
    %481 = arith.mulf %476, %480 : vector<8x32xf32>
    %482 = arith.index_cast %421 : i32 to index
    %c0_114 = arith.constant 0 : index
    %483 = vector.load %arg8[%482, %c0_114] : memref<80x64xf32, #tpu.memory_space<vmem>>, vector<8x32xf32>
    tpu.vector_store %arg8[%482, %c0_114], %452 {strides = array<i32>} : memref<80x64xf32, #tpu.memory_space<vmem>>, vector<8x32xf32>,
    %484 = arith.index_cast %423 : i32 to index
    %c32_115 = arith.constant 32 : index
    %485 = vector.load %arg8[%484, %c32_115] : memref<80x64xf32, #tpu.memory_space<vmem>>, vector<8x32xf32>
    tpu.vector_store %arg8[%484, %c32_115], %481 {strides = array<i32>} : memref<80x64xf32, #tpu.memory_space<vmem>>, vector<8x32xf32>,
    %c7_i32 = arith.constant 7 : i32
    %c9_i32_116 = arith.constant 9 : i32
    %486 = arith.subi %c9_i32_116, %c7_i32 : i32
    %c8_i32_117 = arith.constant 8 : i32
    %487 = arith.muli %c7_i32, %c8_i32_117 : i32
    %488 = tpu.assume_multiple %487, 8 : i32
    %c8_i32_118 = arith.constant 8 : i32
    %489 = arith.muli %486, %c8_i32_118 : i32
    %490 = tpu.assume_multiple %489, 8 : i32
    %491 = arith.index_cast %488 : i32 to index
    %c0_119 = arith.constant 0 : index
    %492 = vector.load %arg14[%491, %c0_119] : memref<80x256xf32, #tpu.memory_space<vmem>>, vector<8x128xf32>
    %cst_120 = arith.constant dense<0.000000e+00> : vector<8x128xf32>
    %493 = tpu.matmul %452, %14, %cst_120 {dimension_numbers = #tpu.dot_dimension_numbers<[1], [0], [0], [1], [0, 0, 1, 1], [], []>} : vector<8x32xf32>, vector<32x128xf32>, vector<8x128xf32> -> vector<8x128xf32>
    %494 = arith.addf %492, %493 : vector<8x128xf32>
    %495 = vector.extract_strided_slice %494 {offsets = [0, 0], sizes = [8, 32], strides = [1, 1]} : vector<8x128xf32> to vector<8x32xf32>
    %496 = arith.negf %495 : vector<8x32xf32>
    %497 = math.exp %496 : vector<8x32xf32>
    %cst_121 = arith.constant 1.000000e+00 : f32
    %498 = vector.broadcast %cst_121 : f32 to vector<8x32xf32>
    %499 = arith.addf %498, %497 : vector<8x32xf32>
    %500 = arith.divf %498, %499 : vector<8x32xf32>
    %501 = vector.extract_strided_slice %494 {offsets = [0, 32], sizes = [8, 32], strides = [1, 1]} : vector<8x128xf32> to vector<8x32xf32>
    %502 = arith.negf %501 : vector<8x32xf32>
    %503 = math.exp %502 : vector<8x32xf32>
    %cst_122 = arith.constant 1.000000e+00 : f32
    %504 = vector.broadcast %cst_122 : f32 to vector<8x32xf32>
    %505 = arith.addf %504, %503 : vector<8x32xf32>
    %506 = arith.divf %504, %505 : vector<8x32xf32>
    %507 = vector.extract_strided_slice %494 {offsets = [0, 64], sizes = [8, 32], strides = [1, 1]} : vector<8x128xf32> to vector<8x32xf32>
    %508 = math.tanh %507 : vector<8x32xf32>
    %509 = vector.extract_strided_slice %494 {offsets = [0, 96], sizes = [8, 32], strides = [1, 1]} : vector<8x128xf32> to vector<8x32xf32>
    %510 = arith.negf %509 : vector<8x32xf32>
    %511 = math.exp %510 : vector<8x32xf32>
    %cst_123 = arith.constant 1.000000e+00 : f32
    %512 = vector.broadcast %cst_123 : f32 to vector<8x32xf32>
    %513 = arith.addf %512, %511 : vector<8x32xf32>
    %514 = arith.divf %512, %513 : vector<8x32xf32>
    %515 = arith.mulf %506, %450 : vector<8x32xf32>
    %516 = arith.mulf %500, %508 : vector<8x32xf32>
    %517 = arith.addf %515, %516 : vector<8x32xf32>
    %518 = math.tanh %517 : vector<8x32xf32>
    %519 = arith.mulf %514, %518 : vector<8x32xf32>
    %520 = arith.index_cast %490 : i32 to index
    %c128_124 = arith.constant 128 : index
    %521 = vector.load %arg14[%520, %c128_124] : memref<80x256xf32, #tpu.memory_space<vmem>>, vector<8x128xf32>
    %cst_125 = arith.constant dense<0.000000e+00> : vector<8x128xf32>
    %522 = tpu.matmul %481, %15, %cst_125 {dimension_numbers = #tpu.dot_dimension_numbers<[1], [0], [0], [1], [0, 0, 1, 1], [], []>} : vector<8x32xf32>, vector<32x128xf32>, vector<8x128xf32> -> vector<8x128xf32>
    %523 = arith.addf %521, %522 : vector<8x128xf32>
    %524 = vector.extract_strided_slice %523 {offsets = [0, 0], sizes = [8, 32], strides = [1, 1]} : vector<8x128xf32> to vector<8x32xf32>
    %525 = arith.negf %524 : vector<8x32xf32>
    %526 = math.exp %525 : vector<8x32xf32>
    %cst_126 = arith.constant 1.000000e+00 : f32
    %527 = vector.broadcast %cst_126 : f32 to vector<8x32xf32>
    %528 = arith.addf %527, %526 : vector<8x32xf32>
    %529 = arith.divf %527, %528 : vector<8x32xf32>
    %530 = vector.extract_strided_slice %523 {offsets = [0, 32], sizes = [8, 32], strides = [1, 1]} : vector<8x128xf32> to vector<8x32xf32>
    %531 = arith.negf %530 : vector<8x32xf32>
    %532 = math.exp %531 : vector<8x32xf32>
    %cst_127 = arith.constant 1.000000e+00 : f32
    %533 = vector.broadcast %cst_127 : f32 to vector<8x32xf32>
    %534 = arith.addf %533, %532 : vector<8x32xf32>
    %535 = arith.divf %533, %534 : vector<8x32xf32>
    %536 = vector.extract_strided_slice %523 {offsets = [0, 64], sizes = [8, 32], strides = [1, 1]} : vector<8x128xf32> to vector<8x32xf32>
    %537 = math.tanh %536 : vector<8x32xf32>
    %538 = vector.extract_strided_slice %523 {offsets = [0, 96], sizes = [8, 32], strides = [1, 1]} : vector<8x128xf32> to vector<8x32xf32>
    %539 = arith.negf %538 : vector<8x32xf32>
    %540 = math.exp %539 : vector<8x32xf32>
    %cst_128 = arith.constant 1.000000e+00 : f32
    %541 = vector.broadcast %cst_128 : f32 to vector<8x32xf32>
    %542 = arith.addf %541, %540 : vector<8x32xf32>
    %543 = arith.divf %541, %542 : vector<8x32xf32>
    %544 = arith.mulf %535, %479 : vector<8x32xf32>
    %545 = arith.mulf %529, %537 : vector<8x32xf32>
    %546 = arith.addf %544, %545 : vector<8x32xf32>
    %547 = math.tanh %546 : vector<8x32xf32>
    %548 = arith.mulf %543, %547 : vector<8x32xf32>
    %549 = arith.index_cast %488 : i32 to index
    %c0_129 = arith.constant 0 : index
    %550 = vector.load %arg8[%549, %c0_129] : memref<80x64xf32, #tpu.memory_space<vmem>>, vector<8x32xf32>
    tpu.vector_store %arg8[%549, %c0_129], %519 {strides = array<i32>} : memref<80x64xf32, #tpu.memory_space<vmem>>, vector<8x32xf32>,
    %551 = arith.index_cast %490 : i32 to index
    %c32_130 = arith.constant 32 : index
    %552 = vector.load %arg8[%551, %c32_130] : memref<80x64xf32, #tpu.memory_space<vmem>>, vector<8x32xf32>
    tpu.vector_store %arg8[%551, %c32_130], %548 {strides = array<i32>} : memref<80x64xf32, #tpu.memory_space<vmem>>, vector<8x32xf32>,
    %c8_i32_131 = arith.constant 8 : i32
    %c9_i32_132 = arith.constant 9 : i32
    %553 = arith.subi %c9_i32_132, %c8_i32_131 : i32
    %c8_i32_133 = arith.constant 8 : i32
    %554 = arith.muli %c8_i32_131, %c8_i32_133 : i32
    %555 = tpu.assume_multiple %554, 8 : i32
    %c8_i32_134 = arith.constant 8 : i32
    %556 = arith.muli %553, %c8_i32_134 : i32
    %557 = tpu.assume_multiple %556, 8 : i32
    %558 = arith.index_cast %555 : i32 to index
    %c0_135 = arith.constant 0 : index
    %559 = vector.load %arg14[%558, %c0_135] : memref<80x256xf32, #tpu.memory_space<vmem>>, vector<8x128xf32>
    %cst_136 = arith.constant dense<0.000000e+00> : vector<8x128xf32>
    %560 = tpu.matmul %519, %14, %cst_136 {dimension_numbers = #tpu.dot_dimension_numbers<[1], [0], [0], [1], [0, 0, 1, 1], [], []>} : vector<8x32xf32>, vector<32x128xf32>, vector<8x128xf32> -> vector<8x128xf32>
    %561 = arith.addf %559, %560 : vector<8x128xf32>
    %562 = vector.extract_strided_slice %561 {offsets = [0, 0], sizes = [8, 32], strides = [1, 1]} : vector<8x128xf32> to vector<8x32xf32>
    %563 = arith.negf %562 : vector<8x32xf32>
    %564 = math.exp %563 : vector<8x32xf32>
    %cst_137 = arith.constant 1.000000e+00 : f32
    %565 = vector.broadcast %cst_137 : f32 to vector<8x32xf32>
    %566 = arith.addf %565, %564 : vector<8x32xf32>
    %567 = arith.divf %565, %566 : vector<8x32xf32>
    %568 = vector.extract_strided_slice %561 {offsets = [0, 32], sizes = [8, 32], strides = [1, 1]} : vector<8x128xf32> to vector<8x32xf32>
    %569 = arith.negf %568 : vector<8x32xf32>
    %570 = math.exp %569 : vector<8x32xf32>
    %cst_138 = arith.constant 1.000000e+00 : f32
    %571 = vector.broadcast %cst_138 : f32 to vector<8x32xf32>
    %572 = arith.addf %571, %570 : vector<8x32xf32>
    %573 = arith.divf %571, %572 : vector<8x32xf32>
    %574 = vector.extract_strided_slice %561 {offsets = [0, 64], sizes = [8, 32], strides = [1, 1]} : vector<8x128xf32> to vector<8x32xf32>
    %575 = math.tanh %574 : vector<8x32xf32>
    %576 = vector.extract_strided_slice %561 {offsets = [0, 96], sizes = [8, 32], strides = [1, 1]} : vector<8x128xf32> to vector<8x32xf32>
    %577 = arith.negf %576 : vector<8x32xf32>
    %578 = math.exp %577 : vector<8x32xf32>
    %cst_139 = arith.constant 1.000000e+00 : f32
    %579 = vector.broadcast %cst_139 : f32 to vector<8x32xf32>
    %580 = arith.addf %579, %578 : vector<8x32xf32>
    %581 = arith.divf %579, %580 : vector<8x32xf32>
    %582 = arith.mulf %573, %517 : vector<8x32xf32>
    %583 = arith.mulf %567, %575 : vector<8x32xf32>
    %584 = arith.addf %582, %583 : vector<8x32xf32>
    %585 = math.tanh %584 : vector<8x32xf32>
    %586 = arith.mulf %581, %585 : vector<8x32xf32>
    %587 = arith.index_cast %557 : i32 to index
    %c128_140 = arith.constant 128 : index
    %588 = vector.load %arg14[%587, %c128_140] : memref<80x256xf32, #tpu.memory_space<vmem>>, vector<8x128xf32>
    %cst_141 = arith.constant dense<0.000000e+00> : vector<8x128xf32>
    %589 = tpu.matmul %548, %15, %cst_141 {dimension_numbers = #tpu.dot_dimension_numbers<[1], [0], [0], [1], [0, 0, 1, 1], [], []>} : vector<8x32xf32>, vector<32x128xf32>, vector<8x128xf32> -> vector<8x128xf32>
    %590 = arith.addf %588, %589 : vector<8x128xf32>
    %591 = vector.extract_strided_slice %590 {offsets = [0, 0], sizes = [8, 32], strides = [1, 1]} : vector<8x128xf32> to vector<8x32xf32>
    %592 = arith.negf %591 : vector<8x32xf32>
    %593 = math.exp %592 : vector<8x32xf32>
    %cst_142 = arith.constant 1.000000e+00 : f32
    %594 = vector.broadcast %cst_142 : f32 to vector<8x32xf32>
    %595 = arith.addf %594, %593 : vector<8x32xf32>
    %596 = arith.divf %594, %595 : vector<8x32xf32>
    %597 = vector.extract_strided_slice %590 {offsets = [0, 32], sizes = [8, 32], strides = [1, 1]} : vector<8x128xf32> to vector<8x32xf32>
    %598 = arith.negf %597 : vector<8x32xf32>
    %599 = math.exp %598 : vector<8x32xf32>
    %cst_143 = arith.constant 1.000000e+00 : f32
    %600 = vector.broadcast %cst_143 : f32 to vector<8x32xf32>
    %601 = arith.addf %600, %599 : vector<8x32xf32>
    %602 = arith.divf %600, %601 : vector<8x32xf32>
    %603 = vector.extract_strided_slice %590 {offsets = [0, 64], sizes = [8, 32], strides = [1, 1]} : vector<8x128xf32> to vector<8x32xf32>
    %604 = math.tanh %603 : vector<8x32xf32>
    %605 = vector.extract_strided_slice %590 {offsets = [0, 96], sizes = [8, 32], strides = [1, 1]} : vector<8x128xf32> to vector<8x32xf32>
    %606 = arith.negf %605 : vector<8x32xf32>
    %607 = math.exp %606 : vector<8x32xf32>
    %cst_144 = arith.constant 1.000000e+00 : f32
    %608 = vector.broadcast %cst_144 : f32 to vector<8x32xf32>
    %609 = arith.addf %608, %607 : vector<8x32xf32>
    %610 = arith.divf %608, %609 : vector<8x32xf32>
    %611 = arith.mulf %602, %546 : vector<8x32xf32>
    %612 = arith.mulf %596, %604 : vector<8x32xf32>
    %613 = arith.addf %611, %612 : vector<8x32xf32>
    %614 = math.tanh %613 : vector<8x32xf32>
    %615 = arith.mulf %610, %614 : vector<8x32xf32>
    %616 = arith.index_cast %555 : i32 to index
    %c0_145 = arith.constant 0 : index
    %617 = vector.load %arg8[%616, %c0_145] : memref<80x64xf32, #tpu.memory_space<vmem>>, vector<8x32xf32>
    tpu.vector_store %arg8[%616, %c0_145], %586 {strides = array<i32>} : memref<80x64xf32, #tpu.memory_space<vmem>>, vector<8x32xf32>,
    %618 = arith.index_cast %557 : i32 to index
    %c32_146 = arith.constant 32 : index
    %619 = vector.load %arg8[%618, %c32_146] : memref<80x64xf32, #tpu.memory_space<vmem>>, vector<8x32xf32>
    tpu.vector_store %arg8[%618, %c32_146], %615 {strides = array<i32>} : memref<80x64xf32, #tpu.memory_space<vmem>>, vector<8x32xf32>,
    %c9_i32_147 = arith.constant 9 : i32
    %c9_i32_148 = arith.constant 9 : i32
    %620 = arith.subi %c9_i32_148, %c9_i32_147 : i32
    %c8_i32_149 = arith.constant 8 : i32
    %621 = arith.muli %c9_i32_147, %c8_i32_149 : i32
    %622 = tpu.assume_multiple %621, 8 : i32
    %c8_i32_150 = arith.constant 8 : i32
    %623 = arith.muli %620, %c8_i32_150 : i32
    %624 = tpu.assume_multiple %623, 8 : i32
    %625 = arith.index_cast %622 : i32 to index
    %c0_151 = arith.constant 0 : index
    %626 = vector.load %arg14[%625, %c0_151] : memref<80x256xf32, #tpu.memory_space<vmem>>, vector<8x128xf32>
    %cst_152 = arith.constant dense<0.000000e+00> : vector<8x128xf32>
    %627 = tpu.matmul %586, %14, %cst_152 {dimension_numbers = #tpu.dot_dimension_numbers<[1], [0], [0], [1], [0, 0, 1, 1], [], []>} : vector<8x32xf32>, vector<32x128xf32>, vector<8x128xf32> -> vector<8x128xf32>
    %628 = arith.addf %626, %627 : vector<8x128xf32>
    %629 = vector.extract_strided_slice %628 {offsets = [0, 0], sizes = [8, 32], strides = [1, 1]} : vector<8x128xf32> to vector<8x32xf32>
    %630 = arith.negf %629 : vector<8x32xf32>
    %631 = math.exp %630 : vector<8x32xf32>
    %cst_153 = arith.constant 1.000000e+00 : f32
    %632 = vector.broadcast %cst_153 : f32 to vector<8x32xf32>
    %633 = arith.addf %632, %631 : vector<8x32xf32>
    %634 = arith.divf %632, %633 : vector<8x32xf32>
    %635 = vector.extract_strided_slice %628 {offsets = [0, 32], sizes = [8, 32], strides = [1, 1]} : vector<8x128xf32> to vector<8x32xf32>
    %636 = arith.negf %635 : vector<8x32xf32>
    %637 = math.exp %636 : vector<8x32xf32>
    %cst_154 = arith.constant 1.000000e+00 : f32
    %638 = vector.broadcast %cst_154 : f32 to vector<8x32xf32>
    %639 = arith.addf %638, %637 : vector<8x32xf32>
    %640 = arith.divf %638, %639 : vector<8x32xf32>
    %641 = vector.extract_strided_slice %628 {offsets = [0, 64], sizes = [8, 32], strides = [1, 1]} : vector<8x128xf32> to vector<8x32xf32>
    %642 = math.tanh %641 : vector<8x32xf32>
    %643 = vector.extract_strided_slice %628 {offsets = [0, 96], sizes = [8, 32], strides = [1, 1]} : vector<8x128xf32> to vector<8x32xf32>
    %644 = arith.negf %643 : vector<8x32xf32>
    %645 = math.exp %644 : vector<8x32xf32>
    %cst_155 = arith.constant 1.000000e+00 : f32
    %646 = vector.broadcast %cst_155 : f32 to vector<8x32xf32>
    %647 = arith.addf %646, %645 : vector<8x32xf32>
    %648 = arith.divf %646, %647 : vector<8x32xf32>
    %649 = arith.mulf %640, %584 : vector<8x32xf32>
    %650 = arith.mulf %634, %642 : vector<8x32xf32>
    %651 = arith.addf %649, %650 : vector<8x32xf32>
    %652 = math.tanh %651 : vector<8x32xf32>
    %653 = arith.mulf %648, %652 : vector<8x32xf32>
    %654 = arith.index_cast %624 : i32 to index
    %c128_156 = arith.constant 128 : index
    %655 = vector.load %arg14[%654, %c128_156] : memref<80x256xf32, #tpu.memory_space<vmem>>, vector<8x128xf32>
    %cst_157 = arith.constant dense<0.000000e+00> : vector<8x128xf32>
    %656 = tpu.matmul %615, %15, %cst_157 {dimension_numbers = #tpu.dot_dimension_numbers<[1], [0], [0], [1], [0, 0, 1, 1], [], []>} : vector<8x32xf32>, vector<32x128xf32>, vector<8x128xf32> -> vector<8x128xf32>
    %657 = arith.addf %655, %656 : vector<8x128xf32>
    %658 = vector.extract_strided_slice %657 {offsets = [0, 0], sizes = [8, 32], strides = [1, 1]} : vector<8x128xf32> to vector<8x32xf32>
    %659 = arith.negf %658 : vector<8x32xf32>
    %660 = math.exp %659 : vector<8x32xf32>
    %cst_158 = arith.constant 1.000000e+00 : f32
    %661 = vector.broadcast %cst_158 : f32 to vector<8x32xf32>
    %662 = arith.addf %661, %660 : vector<8x32xf32>
    %663 = arith.divf %661, %662 : vector<8x32xf32>
    %664 = vector.extract_strided_slice %657 {offsets = [0, 32], sizes = [8, 32], strides = [1, 1]} : vector<8x128xf32> to vector<8x32xf32>
    %665 = arith.negf %664 : vector<8x32xf32>
    %666 = math.exp %665 : vector<8x32xf32>
    %cst_159 = arith.constant 1.000000e+00 : f32
    %667 = vector.broadcast %cst_159 : f32 to vector<8x32xf32>
    %668 = arith.addf %667, %666 : vector<8x32xf32>
    %669 = arith.divf %667, %668 : vector<8x32xf32>
    %670 = vector.extract_strided_slice %657 {offsets = [0, 64], sizes = [8, 32], strides = [1, 1]} : vector<8x128xf32> to vector<8x32xf32>
    %671 = math.tanh %670 : vector<8x32xf32>
    %672 = vector.extract_strided_slice %657 {offsets = [0, 96], sizes = [8, 32], strides = [1, 1]} : vector<8x128xf32> to vector<8x32xf32>
    %673 = arith.negf %672 : vector<8x32xf32>
    %674 = math.exp %673 : vector<8x32xf32>
    %cst_160 = arith.constant 1.000000e+00 : f32
    %675 = vector.broadcast %cst_160 : f32 to vector<8x32xf32>
    %676 = arith.addf %675, %674 : vector<8x32xf32>
    %677 = arith.divf %675, %676 : vector<8x32xf32>
    %678 = arith.mulf %669, %613 : vector<8x32xf32>
    %679 = arith.mulf %663, %671 : vector<8x32xf32>
    %680 = arith.addf %678, %679 : vector<8x32xf32>
    %681 = math.tanh %680 : vector<8x32xf32>
    %682 = arith.mulf %677, %681 : vector<8x32xf32>
    %683 = arith.index_cast %622 : i32 to index
    %c0_161 = arith.constant 0 : index
    %684 = vector.load %arg8[%683, %c0_161] : memref<80x64xf32, #tpu.memory_space<vmem>>, vector<8x32xf32>
    tpu.vector_store %arg8[%683, %c0_161], %653 {strides = array<i32>} : memref<80x64xf32, #tpu.memory_space<vmem>>, vector<8x32xf32>,
    %685 = arith.index_cast %624 : i32 to index
    %c32_162 = arith.constant 32 : index
    %686 = vector.load %arg8[%685, %c32_162] : memref<80x64xf32, #tpu.memory_space<vmem>>, vector<8x32xf32>
    tpu.vector_store %arg8[%685, %c32_162], %682 {strides = array<i32>} : memref<80x64xf32, #tpu.memory_space<vmem>>, vector<8x32xf32>,
    %c10_i32 = arith.constant 10 : i32
    %c0_163 = arith.constant 0 : index
    %c0_164 = arith.constant 0 : index
    %687 = vector.load %arg10[%c0_163, %c0_164] : memref<8x32xf32, #tpu.memory_space<vmem>>, vector<8x32xf32>
    tpu.vector_store %arg10[%c0_163, %c0_164], %653 {strides = array<i32>} : memref<8x32xf32, #tpu.memory_space<vmem>>, vector<8x32xf32>,
    %c0_165 = arith.constant 0 : index
    %c0_166 = arith.constant 0 : index
    %688 = vector.load %arg11[%c0_165, %c0_166] : memref<8x32xf32, #tpu.memory_space<vmem>>, vector<8x32xf32>
    tpu.vector_store %arg11[%c0_165, %c0_166], %651 {strides = array<i32>} : memref<8x32xf32, #tpu.memory_space<vmem>>, vector<8x32xf32>,
    %c0_167 = arith.constant 0 : index
    %c0_168 = arith.constant 0 : index
    %689 = vector.load %arg12[%c0_167, %c0_168] : memref<8x32xf32, #tpu.memory_space<vmem>>, vector<8x32xf32>
    tpu.vector_store %arg12[%c0_167, %c0_168], %682 {strides = array<i32>} : memref<8x32xf32, #tpu.memory_space<vmem>>, vector<8x32xf32>,
    %c0_169 = arith.constant 0 : index
    %c0_170 = arith.constant 0 : index
    %690 = vector.load %arg13[%c0_169, %c0_170] : memref<8x32xf32, #tpu.memory_space<vmem>>, vector<8x32xf32>
    tpu.vector_store %arg13[%c0_169, %c0_170], %680 {strides = array<i32>} : memref<8x32xf32, #tpu.memory_space<vmem>>, vector<8x32xf32>,
    %c0_171 = arith.constant 0 : index
    %c0_172 = arith.constant 0 : index
    %691 = vector.load %arg8[%c0_171, %c0_172] : memref<80x64xf32, #tpu.memory_space<vmem>>, vector<80x64xf32>
    %c0_173 = arith.constant 0 : index
    %c0_174 = arith.constant 0 : index
    %692 = vector.load %arg6[%c0_173, %c0_174] : memref<64x32xf32, #tpu.memory_space<vmem>>, vector<64x32xf32>
    %cst_175 = arith.constant dense<0.000000e+00> : vector<80x32xf32>
    %693 = tpu.matmul %691, %692, %cst_175 {dimension_numbers = #tpu.dot_dimension_numbers<[1], [0], [0], [1], [0, 0, 1, 1], [], []>} : vector<80x64xf32>, vector<64x32xf32>, vector<80x32xf32> -> vector<80x32xf32>
    %c0_176 = arith.constant 0 : index
    %c0_177 = arith.constant 0 : index
    %694 = vector.load %arg7[%c0_176, %c0_177] : memref<1x32xf32, #tpu.memory_space<vmem>>, vector<1x32xf32>
    %695 = vector.broadcast %694 : vector<1x32xf32> to vector<80x32xf32>
    %696 = arith.addf %693, %695 : vector<80x32xf32>
    %c0_178 = arith.constant 0 : index
    %c0_179 = arith.constant 0 : index
    %697 = vector.load %arg9[%c0_178, %c0_179] : memref<80x32xf32, #tpu.memory_space<vmem>>, vector<80x32xf32>
    tpu.vector_store %arg9[%c0_178, %c0_179], %696 {strides = array<i32>} : memref<80x32xf32, #tpu.memory_space<vmem>>, vector<80x32xf32>,
    return
  }
}

module attributes {stable_mosaic.version = 11 : i64} {
  func.func @_decoder_kernel(%arg0: memref<8xi32, #tpu.memory_space<smem>>, %arg1: memref<8x8x1xi32, #tpu.memory_space<vmem>>, %arg2: memref<10x8x64xf32, #tpu.memory_space<vmem>>, %arg3: memref<10x8x32xf32, #tpu.memory_space<vmem>>, %arg4: memref<8x64xf32, #tpu.memory_space<vmem>>, %arg5: memref<8x64xf32, #tpu.memory_space<vmem>>, %arg6: memref<64x32xf32, #tpu.memory_space<vmem>>, %arg7: memref<1x32xf32, #tpu.memory_space<vmem>>, %arg8: memref<64x32xf32, #tpu.memory_space<vmem>>, %arg9: memref<1x32xf32, #tpu.memory_space<vmem>>, %arg10: memref<32x32xf32, #tpu.memory_space<vmem>>, %arg11: memref<1x32xf32, #tpu.memory_space<vmem>>, %arg12: memref<1x1xf32, #tpu.memory_space<vmem>>, %arg13: memref<128x128xf32, #tpu.memory_space<vmem>>, %arg14: memref<96x128xf32, #tpu.memory_space<vmem>>, %arg15: memref<1x128xf32, #tpu.memory_space<vmem>>, %arg16: memref<128x128xf32, #tpu.memory_space<vmem>>, %arg17: memref<96x128xf32, #tpu.memory_space<vmem>>, %arg18: memref<1x128xf32, #tpu.memory_space<vmem>>, %arg19: memref<8x8x128xf32, #tpu.memory_space<vmem>>) attributes {dimension_semantics = [], scalar_prefetch = 0 : i64, scratch_operands = 0 : i64, tpu.core_type = #tpu.core_type<tc>} {
    %c0 = arith.constant 0 : index
    %c0_0 = arith.constant 0 : index
    %0 = vector.load %arg4[%c0, %c0_0] : memref<8x64xf32, #tpu.memory_space<vmem>>, vector<8x64xf32>
    %c0_1 = arith.constant 0 : index
    %c0_2 = arith.constant 0 : index
    %1 = vector.load %arg6[%c0_1, %c0_2] : memref<64x32xf32, #tpu.memory_space<vmem>>, vector<64x32xf32>
    %cst = arith.constant dense<0.000000e+00> : vector<8x32xf32>
    %2 = tpu.matmul %0, %1, %cst {dimension_numbers = #tpu.dot_dimension_numbers<[1], [0], [0], [1], [0, 0, 1, 1], [], []>} : vector<8x64xf32>, vector<64x32xf32>, vector<8x32xf32> -> vector<8x32xf32>
    %c0_3 = arith.constant 0 : index
    %c0_4 = arith.constant 0 : index
    %3 = vector.load %arg7[%c0_3, %c0_4] : memref<1x32xf32, #tpu.memory_space<vmem>>, vector<1x32xf32>
    %4 = vector.broadcast %3 : vector<1x32xf32> to vector<8x32xf32>
    %5 = arith.addf %2, %4 : vector<8x32xf32>
    %c0_5 = arith.constant 0 : index
    %c0_6 = arith.constant 0 : index
    %6 = vector.load %arg5[%c0_5, %c0_6] : memref<8x64xf32, #tpu.memory_space<vmem>>, vector<8x64xf32>
    %c0_7 = arith.constant 0 : index
    %c0_8 = arith.constant 0 : index
    %7 = vector.load %arg8[%c0_7, %c0_8] : memref<64x32xf32, #tpu.memory_space<vmem>>, vector<64x32xf32>
    %cst_9 = arith.constant dense<0.000000e+00> : vector<8x32xf32>
    %8 = tpu.matmul %6, %7, %cst_9 {dimension_numbers = #tpu.dot_dimension_numbers<[1], [0], [0], [1], [0, 0, 1, 1], [], []>} : vector<8x64xf32>, vector<64x32xf32>, vector<8x32xf32> -> vector<8x32xf32>
    %c0_10 = arith.constant 0 : index
    %c0_11 = arith.constant 0 : index
    %9 = vector.load %arg9[%c0_10, %c0_11] : memref<1x32xf32, #tpu.memory_space<vmem>>, vector<1x32xf32>
    %10 = vector.broadcast %9 : vector<1x32xf32> to vector<8x32xf32>
    %11 = arith.addf %8, %10 : vector<8x32xf32>
    %c0_12 = arith.constant 0 : index
    %c0_13 = arith.constant 0 : index
    %c0_14 = arith.constant 0 : index
    %12 = vector.load %arg2[%c0_12, %c0_13, %c0_14] : memref<10x8x64xf32, #tpu.memory_space<vmem>>, vector<10x8x64xf32>
    %c0_15 = arith.constant 0 : index
    %c0_16 = arith.constant 0 : index
    %c0_17 = arith.constant 0 : index
    %13 = vector.load %arg3[%c0_15, %c0_16, %c0_17] : memref<10x8x32xf32, #tpu.memory_space<vmem>>, vector<10x8x32xf32>
    %c0_18 = arith.constant 0 : index
    %c0_19 = arith.constant 0 : index
    %14 = vector.load %arg10[%c0_18, %c0_19] : memref<32x32xf32, #tpu.memory_space<vmem>>, vector<32x32xf32>
    %c0_20 = arith.constant 0 : index
    %c0_21 = arith.constant 0 : index
    %15 = vector.load %arg11[%c0_20, %c0_21] : memref<1x32xf32, #tpu.memory_space<vmem>>, vector<1x32xf32>
    %c0_22 = arith.constant 0 : index
    %c0_23 = arith.constant 0 : index
    %16 = vector.load %arg12[%c0_22, %c0_23] : memref<1x1xf32, #tpu.memory_space<vmem>>, vector<1x1xf32>
    %c0_24 = arith.constant 0 : index
    %c0_25 = arith.constant 0 : index
    %17 = vector.load %arg15[%c0_24, %c0_25] : memref<1x128xf32, #tpu.memory_space<vmem>>, vector<1x128xf32>
    %c0_26 = arith.constant 0 : index
    %c0_27 = arith.constant 0 : index
    %18 = vector.load %arg18[%c0_26, %c0_27] : memref<1x128xf32, #tpu.memory_space<vmem>>, vector<1x128xf32>
    %19 = tpu.iota {dimensions = array<i32: 1>} : vector<8x128xi32>
    %cst_28 = arith.constant 0.000000e+00 : f32
    %20 = vector.broadcast %cst_28 : f32 to vector<8x128xf32>
    %c0_29 = arith.constant 0 : index
    %c0_30 = arith.constant 0 : index
    %c0_31 = arith.constant 0 : index
    %21 = vector.load %arg19[%c0_29, %c0_30, %c0_31] : memref<8x8x128xf32, #tpu.memory_space<vmem>>, vector<1x8x128xf32>
    %22 = vector.shape_cast %21 : vector<1x8x128xf32> to vector<8x128xf32>
    %23 = vector.shape_cast %20 : vector<8x128xf32> to vector<1x8x128xf32>
    tpu.vector_store %arg19[%c0_29, %c0_30, %c0_31], %23 {strides = array<i32>} : memref<8x8x128xf32, #tpu.memory_space<vmem>>, vector<1x8x128xf32>,
    %c0_32 = arith.constant 0 : index
    %c0_33 = arith.constant 0 : index
    %c0_34 = arith.constant 0 : index
    %24 = vector.load %arg1[%c0_32, %c0_33, %c0_34] : memref<8x8x1xi32, #tpu.memory_space<vmem>>, vector<1x8x1xi32>
    %25 = vector.shape_cast %24 : vector<1x8x1xi32> to vector<8x1xi32>
    %26 = vector.broadcast %25 : vector<8x1xi32> to vector<8x128xi32>
    %27 = arith.cmpi eq, %19, %26 : vector<8x128xi32>
    %28 = arith.extui %27 : vector<8x128xi1> to vector<8x128xi32>
    %29 = arith.sitofp %28 : vector<8x128xi32> to vector<8x128xf32>
    %cst_35 = arith.constant -1.000000e+30 : f32
    %c1_i32 = arith.constant 1 : i32
    %cst_36 = arith.constant dense<0.000000e+00> : vector<8x32xf32>
    %30 = tpu.matmul %5, %14, %cst_36 {dimension_numbers = #tpu.dot_dimension_numbers<[1], [0], [0], [1], [0, 0, 1, 1], [], []>} : vector<8x32xf32>, vector<32x32xf32>, vector<8x32xf32> -> vector<8x32xf32>
    %31 = vector.shape_cast %30 : vector<8x32xf32> to vector<1x8x32xf32>
    %32 = vector.broadcast %31 : vector<1x8x32xf32> to vector<10x8x32xf32>
    %33 = arith.addf %13, %32 : vector<10x8x32xf32>
    %34 = math.tanh %33 : vector<10x8x32xf32>
    %35 = vector.shape_cast %15 : vector<1x32xf32> to vector<1x1x32xf32>
    %36 = vector.broadcast %35 : vector<1x1x32xf32> to vector<10x8x32xf32>
    %37 = arith.mulf %34, %36 : vector<10x8x32xf32>
    %cst_37 = arith.constant dense<0.000000e+00> : vector<10x8xf32>
    %38 = vector.multi_reduction <add>, %37, %cst_37 [2] : vector<10x8x32xf32> to vector<10x8xf32>
    %39 = vector.shape_cast %38 : vector<10x8xf32> to vector<10x8x1xf32>
    %40 = vector.shape_cast %16 : vector<1x1xf32> to vector<1x1x1xf32>
    %41 = vector.broadcast %40 : vector<1x1x1xf32> to vector<10x8x1xf32>
    %42 = arith.addf %39, %41 : vector<10x8x1xf32>
    %cst_38 = arith.constant dense<0xFF800000> : vector<8x1xf32>
    %43 = vector.multi_reduction <maximumf>, %42, %cst_38 [0] : vector<10x8x1xf32> to vector<8x1xf32>
    %44 = vector.shape_cast %43 : vector<8x1xf32> to vector<1x8x1xf32>
    %45 = vector.broadcast %44 : vector<1x8x1xf32> to vector<10x8x1xf32>
    %46 = arith.subf %42, %45 : vector<10x8x1xf32>
    %47 = math.exp %46 : vector<10x8x1xf32>
    %cst_39 = arith.constant dense<0.000000e+00> : vector<8x1xf32>
    %48 = vector.multi_reduction <add>, %47, %cst_39 [0] : vector<10x8x1xf32> to vector<8x1xf32>
    %49 = vector.shape_cast %48 : vector<8x1xf32> to vector<1x8x1xf32>
    %50 = tpu.reciprocal %49 {approx = true} : vector<1x8x1xf32> -> vector<1x8x1xf32>
    %51 = vector.broadcast %50 : vector<1x8x1xf32> to vector<10x8x1xf32>
    %52 = arith.mulf %47, %51 : vector<10x8x1xf32>
    %53 = vector.broadcast %52 : vector<10x8x1xf32> to vector<10x8x64xf32>
    %54 = arith.mulf %53, %12 : vector<10x8x64xf32>
    %cst_40 = arith.constant dense<0.000000e+00> : vector<8x64xf32>
    %55 = vector.multi_reduction <add>, %54, %cst_40 [0] : vector<10x8x64xf32> to vector<8x64xf32>
    %56 = tpu.concatenate %5, %55 in 1 : vector<8x32xf32>, vector<8x64xf32> -> vector<8x96xf32>
    %c0_41 = arith.constant 0 : index
    %c0_42 = arith.constant 0 : index
    %57 = vector.load %arg13[%c0_41, %c0_42] : memref<128x128xf32, #tpu.memory_space<vmem>>, vector<128x128xf32>
    %cst_43 = arith.constant dense<0.000000e+00> : vector<8x128xf32>
    %58 = tpu.matmul %29, %57, %cst_43 {dimension_numbers = #tpu.dot_dimension_numbers<[1], [0], [0], [1], [0, 0, 1, 1], [], []>} : vector<8x128xf32>, vector<128x128xf32>, vector<8x128xf32> -> vector<8x128xf32>
    %c0_44 = arith.constant 0 : index
    %c0_45 = arith.constant 0 : index
    %59 = vector.load %arg14[%c0_44, %c0_45] : memref<96x128xf32, #tpu.memory_space<vmem>>, vector<96x128xf32>
    %cst_46 = arith.constant dense<0.000000e+00> : vector<8x128xf32>
    %60 = tpu.matmul %56, %59, %cst_46 {dimension_numbers = #tpu.dot_dimension_numbers<[1], [0], [0], [1], [0, 0, 1, 1], [], []>} : vector<8x96xf32>, vector<96x128xf32>, vector<8x128xf32> -> vector<8x128xf32>
    %61 = arith.addf %58, %60 : vector<8x128xf32>
    %62 = vector.broadcast %17 : vector<1x128xf32> to vector<8x128xf32>
    %63 = arith.addf %61, %62 : vector<8x128xf32>
    %64 = vector.extract_strided_slice %63 {offsets = [0, 0], sizes = [8, 32], strides = [1, 1]} : vector<8x128xf32> to vector<8x32xf32>
    %65 = arith.negf %64 : vector<8x32xf32>
    %66 = math.exp %65 : vector<8x32xf32>
    %cst_47 = arith.constant 1.000000e+00 : f32
    %67 = vector.broadcast %cst_47 : f32 to vector<8x32xf32>
    %68 = arith.addf %67, %66 : vector<8x32xf32>
    %69 = arith.divf %67, %68 : vector<8x32xf32>
    %70 = vector.extract_strided_slice %63 {offsets = [0, 32], sizes = [8, 32], strides = [1, 1]} : vector<8x128xf32> to vector<8x32xf32>
    %71 = arith.negf %70 : vector<8x32xf32>
    %72 = math.exp %71 : vector<8x32xf32>
    %cst_48 = arith.constant 1.000000e+00 : f32
    %73 = vector.broadcast %cst_48 : f32 to vector<8x32xf32>
    %74 = arith.addf %73, %72 : vector<8x32xf32>
    %75 = arith.divf %73, %74 : vector<8x32xf32>
    %76 = vector.extract_strided_slice %63 {offsets = [0, 64], sizes = [8, 32], strides = [1, 1]} : vector<8x128xf32> to vector<8x32xf32>
    %77 = math.tanh %76 : vector<8x32xf32>
    %78 = vector.extract_strided_slice %63 {offsets = [0, 96], sizes = [8, 32], strides = [1, 1]} : vector<8x128xf32> to vector<8x32xf32>
    %79 = arith.negf %78 : vector<8x32xf32>
    %80 = math.exp %79 : vector<8x32xf32>
    %cst_49 = arith.constant 1.000000e+00 : f32
    %81 = vector.broadcast %cst_49 : f32 to vector<8x32xf32>
    %82 = arith.addf %81, %80 : vector<8x32xf32>
    %83 = arith.divf %81, %82 : vector<8x32xf32>
    %84 = arith.mulf %75, %11 : vector<8x32xf32>
    %85 = arith.mulf %69, %77 : vector<8x32xf32>
    %86 = arith.addf %84, %85 : vector<8x32xf32>
    %87 = math.tanh %86 : vector<8x32xf32>
    %88 = arith.mulf %83, %87 : vector<8x32xf32>
    %89 = tpu.concatenate %88, %55 in 1 : vector<8x32xf32>, vector<8x64xf32> -> vector<8x96xf32>
    %c0_50 = arith.constant 0 : index
    %c0_51 = arith.constant 0 : index
    %90 = vector.load %arg16[%c0_50, %c0_51] : memref<128x128xf32, #tpu.memory_space<vmem>>, vector<128x128xf32>
    %cst_52 = arith.constant dense<0.000000e+00> : vector<8x128xf32>
    %91 = tpu.matmul %29, %90, %cst_52 {dimension_numbers = #tpu.dot_dimension_numbers<[1], [0], [0], [1], [0, 0, 1, 1], [], []>} : vector<8x128xf32>, vector<128x128xf32>, vector<8x128xf32> -> vector<8x128xf32>
    %c0_53 = arith.constant 0 : index
    %c0_54 = arith.constant 0 : index
    %92 = vector.load %arg17[%c0_53, %c0_54] : memref<96x128xf32, #tpu.memory_space<vmem>>, vector<96x128xf32>
    %cst_55 = arith.constant dense<0.000000e+00> : vector<8x128xf32>
    %93 = tpu.matmul %89, %92, %cst_55 {dimension_numbers = #tpu.dot_dimension_numbers<[1], [0], [0], [1], [0, 0, 1, 1], [], []>} : vector<8x96xf32>, vector<96x128xf32>, vector<8x128xf32> -> vector<8x128xf32>
    %94 = arith.addf %91, %93 : vector<8x128xf32>
    %95 = vector.broadcast %18 : vector<1x128xf32> to vector<8x128xf32>
    %96 = arith.addf %94, %95 : vector<8x128xf32>
    %97 = arith.index_cast %c1_i32 : i32 to index
    %c0_56 = arith.constant 0 : index
    %c0_57 = arith.constant 0 : index
    %98 = vector.load %arg19[%97, %c0_56, %c0_57] : memref<8x8x128xf32, #tpu.memory_space<vmem>>, vector<1x8x128xf32>
    %99 = vector.shape_cast %98 : vector<1x8x128xf32> to vector<8x128xf32>
    %100 = vector.shape_cast %96 : vector<8x128xf32> to vector<1x8x128xf32>
    tpu.vector_store %arg19[%97, %c0_56, %c0_57], %100 {strides = array<i32>} : memref<8x8x128xf32, #tpu.memory_space<vmem>>, vector<1x8x128xf32>,
    %c24_i32 = arith.constant 24 : i32
    %101 = vector.broadcast %c24_i32 : i32 to vector<8x128xi32>
    %102 = arith.cmpi slt, %19, %101 : vector<8x128xi32>
    %103 = vector.broadcast %cst_35 : f32 to vector<8x128xf32>
    %104 = arith.select %102, %96, %103 : vector<8x128xi1>, vector<8x128xf32>
    %cst_58 = arith.constant dense<0xFF800000> : vector<8xf32>
    %105 = vector.multi_reduction <maximumf>, %104, %cst_58 [1] : vector<8x128xf32> to vector<8xf32>
    %106 = vector.shape_cast %105 : vector<8xf32> to vector<8x1xf32>
    %107 = vector.broadcast %106 : vector<8x1xf32> to vector<8x128xf32>
    %108 = arith.cmpf oeq, %104, %107 : vector<8x128xf32>
    %c128_i32 = arith.constant 128 : i32
    %109 = vector.broadcast %c128_i32 : i32 to vector<8x128xi32>
    %110 = arith.select %108, %19, %109 : vector<8x128xi1>, vector<8x128xi32>
    %cst_59 = arith.constant dense<2147483647> : vector<8xi32>
    %111 = vector.multi_reduction <minsi>, %110, %cst_59 [1] : vector<8x128xi32> to vector<8xi32>
    %112 = vector.shape_cast %111 : vector<8xi32> to vector<8x1xi32>
    %113 = vector.broadcast %112 : vector<8x1xi32> to vector<8x128xi32>
    %114 = arith.cmpi eq, %19, %113 : vector<8x128xi32>
    %115 = arith.extui %114 : vector<8x128xi1> to vector<8x128xi32>
    %116 = arith.sitofp %115 : vector<8x128xi32> to vector<8x128xf32>
    %117 = arith.index_cast %c1_i32 : i32 to index
    %118 = memref.load %arg0[%117] : memref<8xi32, #tpu.memory_space<smem>>
    %c0_i32 = arith.constant 0 : i32
    %119 = arith.cmpi ne, %118, %c0_i32 : i32
    %120 = arith.extui %119 : i1 to i32
    %121 = arith.sitofp %120 : i32 to f32
    %122 = arith.index_cast %c1_i32 : i32 to index
    %c0_60 = arith.constant 0 : index
    %c0_61 = arith.constant 0 : index
    %123 = vector.load %arg1[%122, %c0_60, %c0_61] : memref<8x8x1xi32, #tpu.memory_space<vmem>>, vector<1x8x1xi32>
    %124 = vector.shape_cast %123 : vector<1x8x1xi32> to vector<8x1xi32>
    %125 = vector.broadcast %124 : vector<8x1xi32> to vector<8x128xi32>
    %126 = arith.cmpi eq, %19, %125 : vector<8x128xi32>
    %127 = arith.extui %126 : vector<8x128xi1> to vector<8x128xi32>
    %128 = arith.sitofp %127 : vector<8x128xi32> to vector<8x128xf32>
    %129 = vector.broadcast %121 : f32 to vector<8x128xf32>
    %130 = arith.mulf %129, %128 : vector<8x128xf32>
    %cst_62 = arith.constant 1.000000e+00 : f32
    %131 = arith.subf %cst_62, %121 : f32
    %132 = vector.broadcast %131 : f32 to vector<8x128xf32>
    %133 = arith.mulf %132, %116 : vector<8x128xf32>
    %134 = arith.addf %130, %133 : vector<8x128xf32>
    %c2_i32 = arith.constant 2 : i32
    %cst_63 = arith.constant dense<0.000000e+00> : vector<8x32xf32>
    %135 = tpu.matmul %88, %14, %cst_63 {dimension_numbers = #tpu.dot_dimension_numbers<[1], [0], [0], [1], [0, 0, 1, 1], [], []>} : vector<8x32xf32>, vector<32x32xf32>, vector<8x32xf32> -> vector<8x32xf32>
    %136 = vector.shape_cast %135 : vector<8x32xf32> to vector<1x8x32xf32>
    %137 = vector.broadcast %136 : vector<1x8x32xf32> to vector<10x8x32xf32>
    %138 = arith.addf %13, %137 : vector<10x8x32xf32>
    %139 = math.tanh %138 : vector<10x8x32xf32>
    %140 = vector.shape_cast %15 : vector<1x32xf32> to vector<1x1x32xf32>
    %141 = vector.broadcast %140 : vector<1x1x32xf32> to vector<10x8x32xf32>
    %142 = arith.mulf %139, %141 : vector<10x8x32xf32>
    %cst_64 = arith.constant dense<0.000000e+00> : vector<10x8xf32>
    %143 = vector.multi_reduction <add>, %142, %cst_64 [2] : vector<10x8x32xf32> to vector<10x8xf32>
    %144 = vector.shape_cast %143 : vector<10x8xf32> to vector<10x8x1xf32>
    %145 = vector.shape_cast %16 : vector<1x1xf32> to vector<1x1x1xf32>
    %146 = vector.broadcast %145 : vector<1x1x1xf32> to vector<10x8x1xf32>
    %147 = arith.addf %144, %146 : vector<10x8x1xf32>
    %cst_65 = arith.constant dense<0xFF800000> : vector<8x1xf32>
    %148 = vector.multi_reduction <maximumf>, %147, %cst_65 [0] : vector<10x8x1xf32> to vector<8x1xf32>
    %149 = vector.shape_cast %148 : vector<8x1xf32> to vector<1x8x1xf32>
    %150 = vector.broadcast %149 : vector<1x8x1xf32> to vector<10x8x1xf32>
    %151 = arith.subf %147, %150 : vector<10x8x1xf32>
    %152 = math.exp %151 : vector<10x8x1xf32>
    %cst_66 = arith.constant dense<0.000000e+00> : vector<8x1xf32>
    %153 = vector.multi_reduction <add>, %152, %cst_66 [0] : vector<10x8x1xf32> to vector<8x1xf32>
    %154 = vector.shape_cast %153 : vector<8x1xf32> to vector<1x8x1xf32>
    %155 = tpu.reciprocal %154 {approx = true} : vector<1x8x1xf32> -> vector<1x8x1xf32>
    %156 = vector.broadcast %155 : vector<1x8x1xf32> to vector<10x8x1xf32>
    %157 = arith.mulf %152, %156 : vector<10x8x1xf32>
    %158 = vector.broadcast %157 : vector<10x8x1xf32> to vector<10x8x64xf32>
    %159 = arith.mulf %158, %12 : vector<10x8x64xf32>
    %cst_67 = arith.constant dense<0.000000e+00> : vector<8x64xf32>
    %160 = vector.multi_reduction <add>, %159, %cst_67 [0] : vector<10x8x64xf32> to vector<8x64xf32>
    %161 = tpu.concatenate %88, %160 in 1 : vector<8x32xf32>, vector<8x64xf32> -> vector<8x96xf32>
    %c0_68 = arith.constant 0 : index
    %c0_69 = arith.constant 0 : index
    %162 = vector.load %arg13[%c0_68, %c0_69] : memref<128x128xf32, #tpu.memory_space<vmem>>, vector<128x128xf32>
    %cst_70 = arith.constant dense<0.000000e+00> : vector<8x128xf32>
    %163 = tpu.matmul %134, %162, %cst_70 {dimension_numbers = #tpu.dot_dimension_numbers<[1], [0], [0], [1], [0, 0, 1, 1], [], []>} : vector<8x128xf32>, vector<128x128xf32>, vector<8x128xf32> -> vector<8x128xf32>
    %c0_71 = arith.constant 0 : index
    %c0_72 = arith.constant 0 : index
    %164 = vector.load %arg14[%c0_71, %c0_72] : memref<96x128xf32, #tpu.memory_space<vmem>>, vector<96x128xf32>
    %cst_73 = arith.constant dense<0.000000e+00> : vector<8x128xf32>
    %165 = tpu.matmul %161, %164, %cst_73 {dimension_numbers = #tpu.dot_dimension_numbers<[1], [0], [0], [1], [0, 0, 1, 1], [], []>} : vector<8x96xf32>, vector<96x128xf32>, vector<8x128xf32> -> vector<8x128xf32>
    %166 = arith.addf %163, %165 : vector<8x128xf32>
    %167 = vector.broadcast %17 : vector<1x128xf32> to vector<8x128xf32>
    %168 = arith.addf %166, %167 : vector<8x128xf32>
    %169 = vector.extract_strided_slice %168 {offsets = [0, 0], sizes = [8, 32], strides = [1, 1]} : vector<8x128xf32> to vector<8x32xf32>
    %170 = arith.negf %169 : vector<8x32xf32>
    %171 = math.exp %170 : vector<8x32xf32>
    %cst_74 = arith.constant 1.000000e+00 : f32
    %172 = vector.broadcast %cst_74 : f32 to vector<8x32xf32>
    %173 = arith.addf %172, %171 : vector<8x32xf32>
    %174 = arith.divf %172, %173 : vector<8x32xf32>
    %175 = vector.extract_strided_slice %168 {offsets = [0, 32], sizes = [8, 32], strides = [1, 1]} : vector<8x128xf32> to vector<8x32xf32>
    %176 = arith.negf %175 : vector<8x32xf32>
    %177 = math.exp %176 : vector<8x32xf32>
    %cst_75 = arith.constant 1.000000e+00 : f32
    %178 = vector.broadcast %cst_75 : f32 to vector<8x32xf32>
    %179 = arith.addf %178, %177 : vector<8x32xf32>
    %180 = arith.divf %178, %179 : vector<8x32xf32>
    %181 = vector.extract_strided_slice %168 {offsets = [0, 64], sizes = [8, 32], strides = [1, 1]} : vector<8x128xf32> to vector<8x32xf32>
    %182 = math.tanh %181 : vector<8x32xf32>
    %183 = vector.extract_strided_slice %168 {offsets = [0, 96], sizes = [8, 32], strides = [1, 1]} : vector<8x128xf32> to vector<8x32xf32>
    %184 = arith.negf %183 : vector<8x32xf32>
    %185 = math.exp %184 : vector<8x32xf32>
    %cst_76 = arith.constant 1.000000e+00 : f32
    %186 = vector.broadcast %cst_76 : f32 to vector<8x32xf32>
    %187 = arith.addf %186, %185 : vector<8x32xf32>
    %188 = arith.divf %186, %187 : vector<8x32xf32>
    %189 = arith.mulf %180, %86 : vector<8x32xf32>
    %190 = arith.mulf %174, %182 : vector<8x32xf32>
    %191 = arith.addf %189, %190 : vector<8x32xf32>
    %192 = math.tanh %191 : vector<8x32xf32>
    %193 = arith.mulf %188, %192 : vector<8x32xf32>
    %194 = tpu.concatenate %193, %160 in 1 : vector<8x32xf32>, vector<8x64xf32> -> vector<8x96xf32>
    %c0_77 = arith.constant 0 : index
    %c0_78 = arith.constant 0 : index
    %195 = vector.load %arg16[%c0_77, %c0_78] : memref<128x128xf32, #tpu.memory_space<vmem>>, vector<128x128xf32>
    %cst_79 = arith.constant dense<0.000000e+00> : vector<8x128xf32>
    %196 = tpu.matmul %134, %195, %cst_79 {dimension_numbers = #tpu.dot_dimension_numbers<[1], [0], [0], [1], [0, 0, 1, 1], [], []>} : vector<8x128xf32>, vector<128x128xf32>, vector<8x128xf32> -> vector<8x128xf32>
    %c0_80 = arith.constant 0 : index
    %c0_81 = arith.constant 0 : index
    %197 = vector.load %arg17[%c0_80, %c0_81] : memref<96x128xf32, #tpu.memory_space<vmem>>, vector<96x128xf32>
    %cst_82 = arith.constant dense<0.000000e+00> : vector<8x128xf32>
    %198 = tpu.matmul %194, %197, %cst_82 {dimension_numbers = #tpu.dot_dimension_numbers<[1], [0], [0], [1], [0, 0, 1, 1], [], []>} : vector<8x96xf32>, vector<96x128xf32>, vector<8x128xf32> -> vector<8x128xf32>
    %199 = arith.addf %196, %198 : vector<8x128xf32>
    %200 = vector.broadcast %18 : vector<1x128xf32> to vector<8x128xf32>
    %201 = arith.addf %199, %200 : vector<8x128xf32>
    %202 = arith.index_cast %c2_i32 : i32 to index
    %c0_83 = arith.constant 0 : index
    %c0_84 = arith.constant 0 : index
    %203 = vector.load %arg19[%202, %c0_83, %c0_84] : memref<8x8x128xf32, #tpu.memory_space<vmem>>, vector<1x8x128xf32>
    %204 = vector.shape_cast %203 : vector<1x8x128xf32> to vector<8x128xf32>
    %205 = vector.shape_cast %201 : vector<8x128xf32> to vector<1x8x128xf32>
    tpu.vector_store %arg19[%202, %c0_83, %c0_84], %205 {strides = array<i32>} : memref<8x8x128xf32, #tpu.memory_space<vmem>>, vector<1x8x128xf32>,
    %c24_i32_85 = arith.constant 24 : i32
    %206 = vector.broadcast %c24_i32_85 : i32 to vector<8x128xi32>
    %207 = arith.cmpi slt, %19, %206 : vector<8x128xi32>
    %208 = vector.broadcast %cst_35 : f32 to vector<8x128xf32>
    %209 = arith.select %207, %201, %208 : vector<8x128xi1>, vector<8x128xf32>
    %cst_86 = arith.constant dense<0xFF800000> : vector<8xf32>
    %210 = vector.multi_reduction <maximumf>, %209, %cst_86 [1] : vector<8x128xf32> to vector<8xf32>
    %211 = vector.shape_cast %210 : vector<8xf32> to vector<8x1xf32>
    %212 = vector.broadcast %211 : vector<8x1xf32> to vector<8x128xf32>
    %213 = arith.cmpf oeq, %209, %212 : vector<8x128xf32>
    %c128_i32_87 = arith.constant 128 : i32
    %214 = vector.broadcast %c128_i32_87 : i32 to vector<8x128xi32>
    %215 = arith.select %213, %19, %214 : vector<8x128xi1>, vector<8x128xi32>
    %cst_88 = arith.constant dense<2147483647> : vector<8xi32>
    %216 = vector.multi_reduction <minsi>, %215, %cst_88 [1] : vector<8x128xi32> to vector<8xi32>
    %217 = vector.shape_cast %216 : vector<8xi32> to vector<8x1xi32>
    %218 = vector.broadcast %217 : vector<8x1xi32> to vector<8x128xi32>
    %219 = arith.cmpi eq, %19, %218 : vector<8x128xi32>
    %220 = arith.extui %219 : vector<8x128xi1> to vector<8x128xi32>
    %221 = arith.sitofp %220 : vector<8x128xi32> to vector<8x128xf32>
    %222 = arith.index_cast %c2_i32 : i32 to index
    %223 = memref.load %arg0[%222] : memref<8xi32, #tpu.memory_space<smem>>
    %c0_i32_89 = arith.constant 0 : i32
    %224 = arith.cmpi ne, %223, %c0_i32_89 : i32
    %225 = arith.extui %224 : i1 to i32
    %226 = arith.sitofp %225 : i32 to f32
    %227 = arith.index_cast %c2_i32 : i32 to index
    %c0_90 = arith.constant 0 : index
    %c0_91 = arith.constant 0 : index
    %228 = vector.load %arg1[%227, %c0_90, %c0_91] : memref<8x8x1xi32, #tpu.memory_space<vmem>>, vector<1x8x1xi32>
    %229 = vector.shape_cast %228 : vector<1x8x1xi32> to vector<8x1xi32>
    %230 = vector.broadcast %229 : vector<8x1xi32> to vector<8x128xi32>
    %231 = arith.cmpi eq, %19, %230 : vector<8x128xi32>
    %232 = arith.extui %231 : vector<8x128xi1> to vector<8x128xi32>
    %233 = arith.sitofp %232 : vector<8x128xi32> to vector<8x128xf32>
    %234 = vector.broadcast %226 : f32 to vector<8x128xf32>
    %235 = arith.mulf %234, %233 : vector<8x128xf32>
    %cst_92 = arith.constant 1.000000e+00 : f32
    %236 = arith.subf %cst_92, %226 : f32
    %237 = vector.broadcast %236 : f32 to vector<8x128xf32>
    %238 = arith.mulf %237, %221 : vector<8x128xf32>
    %239 = arith.addf %235, %238 : vector<8x128xf32>
    %c3_i32 = arith.constant 3 : i32
    %cst_93 = arith.constant dense<0.000000e+00> : vector<8x32xf32>
    %240 = tpu.matmul %193, %14, %cst_93 {dimension_numbers = #tpu.dot_dimension_numbers<[1], [0], [0], [1], [0, 0, 1, 1], [], []>} : vector<8x32xf32>, vector<32x32xf32>, vector<8x32xf32> -> vector<8x32xf32>
    %241 = vector.shape_cast %240 : vector<8x32xf32> to vector<1x8x32xf32>
    %242 = vector.broadcast %241 : vector<1x8x32xf32> to vector<10x8x32xf32>
    %243 = arith.addf %13, %242 : vector<10x8x32xf32>
    %244 = math.tanh %243 : vector<10x8x32xf32>
    %245 = vector.shape_cast %15 : vector<1x32xf32> to vector<1x1x32xf32>
    %246 = vector.broadcast %245 : vector<1x1x32xf32> to vector<10x8x32xf32>
    %247 = arith.mulf %244, %246 : vector<10x8x32xf32>
    %cst_94 = arith.constant dense<0.000000e+00> : vector<10x8xf32>
    %248 = vector.multi_reduction <add>, %247, %cst_94 [2] : vector<10x8x32xf32> to vector<10x8xf32>
    %249 = vector.shape_cast %248 : vector<10x8xf32> to vector<10x8x1xf32>
    %250 = vector.shape_cast %16 : vector<1x1xf32> to vector<1x1x1xf32>
    %251 = vector.broadcast %250 : vector<1x1x1xf32> to vector<10x8x1xf32>
    %252 = arith.addf %249, %251 : vector<10x8x1xf32>
    %cst_95 = arith.constant dense<0xFF800000> : vector<8x1xf32>
    %253 = vector.multi_reduction <maximumf>, %252, %cst_95 [0] : vector<10x8x1xf32> to vector<8x1xf32>
    %254 = vector.shape_cast %253 : vector<8x1xf32> to vector<1x8x1xf32>
    %255 = vector.broadcast %254 : vector<1x8x1xf32> to vector<10x8x1xf32>
    %256 = arith.subf %252, %255 : vector<10x8x1xf32>
    %257 = math.exp %256 : vector<10x8x1xf32>
    %cst_96 = arith.constant dense<0.000000e+00> : vector<8x1xf32>
    %258 = vector.multi_reduction <add>, %257, %cst_96 [0] : vector<10x8x1xf32> to vector<8x1xf32>
    %259 = vector.shape_cast %258 : vector<8x1xf32> to vector<1x8x1xf32>
    %260 = tpu.reciprocal %259 {approx = true} : vector<1x8x1xf32> -> vector<1x8x1xf32>
    %261 = vector.broadcast %260 : vector<1x8x1xf32> to vector<10x8x1xf32>
    %262 = arith.mulf %257, %261 : vector<10x8x1xf32>
    %263 = vector.broadcast %262 : vector<10x8x1xf32> to vector<10x8x64xf32>
    %264 = arith.mulf %263, %12 : vector<10x8x64xf32>
    %cst_97 = arith.constant dense<0.000000e+00> : vector<8x64xf32>
    %265 = vector.multi_reduction <add>, %264, %cst_97 [0] : vector<10x8x64xf32> to vector<8x64xf32>
    %266 = tpu.concatenate %193, %265 in 1 : vector<8x32xf32>, vector<8x64xf32> -> vector<8x96xf32>
    %c0_98 = arith.constant 0 : index
    %c0_99 = arith.constant 0 : index
    %267 = vector.load %arg13[%c0_98, %c0_99] : memref<128x128xf32, #tpu.memory_space<vmem>>, vector<128x128xf32>
    %cst_100 = arith.constant dense<0.000000e+00> : vector<8x128xf32>
    %268 = tpu.matmul %239, %267, %cst_100 {dimension_numbers = #tpu.dot_dimension_numbers<[1], [0], [0], [1], [0, 0, 1, 1], [], []>} : vector<8x128xf32>, vector<128x128xf32>, vector<8x128xf32> -> vector<8x128xf32>
    %c0_101 = arith.constant 0 : index
    %c0_102 = arith.constant 0 : index
    %269 = vector.load %arg14[%c0_101, %c0_102] : memref<96x128xf32, #tpu.memory_space<vmem>>, vector<96x128xf32>
    %cst_103 = arith.constant dense<0.000000e+00> : vector<8x128xf32>
    %270 = tpu.matmul %266, %269, %cst_103 {dimension_numbers = #tpu.dot_dimension_numbers<[1], [0], [0], [1], [0, 0, 1, 1], [], []>} : vector<8x96xf32>, vector<96x128xf32>, vector<8x128xf32> -> vector<8x128xf32>
    %271 = arith.addf %268, %270 : vector<8x128xf32>
    %272 = vector.broadcast %17 : vector<1x128xf32> to vector<8x128xf32>
    %273 = arith.addf %271, %272 : vector<8x128xf32>
    %274 = vector.extract_strided_slice %273 {offsets = [0, 0], sizes = [8, 32], strides = [1, 1]} : vector<8x128xf32> to vector<8x32xf32>
    %275 = arith.negf %274 : vector<8x32xf32>
    %276 = math.exp %275 : vector<8x32xf32>
    %cst_104 = arith.constant 1.000000e+00 : f32
    %277 = vector.broadcast %cst_104 : f32 to vector<8x32xf32>
    %278 = arith.addf %277, %276 : vector<8x32xf32>
    %279 = arith.divf %277, %278 : vector<8x32xf32>
    %280 = vector.extract_strided_slice %273 {offsets = [0, 32], sizes = [8, 32], strides = [1, 1]} : vector<8x128xf32> to vector<8x32xf32>
    %281 = arith.negf %280 : vector<8x32xf32>
    %282 = math.exp %281 : vector<8x32xf32>
    %cst_105 = arith.constant 1.000000e+00 : f32
    %283 = vector.broadcast %cst_105 : f32 to vector<8x32xf32>
    %284 = arith.addf %283, %282 : vector<8x32xf32>
    %285 = arith.divf %283, %284 : vector<8x32xf32>
    %286 = vector.extract_strided_slice %273 {offsets = [0, 64], sizes = [8, 32], strides = [1, 1]} : vector<8x128xf32> to vector<8x32xf32>
    %287 = math.tanh %286 : vector<8x32xf32>
    %288 = vector.extract_strided_slice %273 {offsets = [0, 96], sizes = [8, 32], strides = [1, 1]} : vector<8x128xf32> to vector<8x32xf32>
    %289 = arith.negf %288 : vector<8x32xf32>
    %290 = math.exp %289 : vector<8x32xf32>
    %cst_106 = arith.constant 1.000000e+00 : f32
    %291 = vector.broadcast %cst_106 : f32 to vector<8x32xf32>
    %292 = arith.addf %291, %290 : vector<8x32xf32>
    %293 = arith.divf %291, %292 : vector<8x32xf32>
    %294 = arith.mulf %285, %191 : vector<8x32xf32>
    %295 = arith.mulf %279, %287 : vector<8x32xf32>
    %296 = arith.addf %294, %295 : vector<8x32xf32>
    %297 = math.tanh %296 : vector<8x32xf32>
    %298 = arith.mulf %293, %297 : vector<8x32xf32>
    %299 = tpu.concatenate %298, %265 in 1 : vector<8x32xf32>, vector<8x64xf32> -> vector<8x96xf32>
    %c0_107 = arith.constant 0 : index
    %c0_108 = arith.constant 0 : index
    %300 = vector.load %arg16[%c0_107, %c0_108] : memref<128x128xf32, #tpu.memory_space<vmem>>, vector<128x128xf32>
    %cst_109 = arith.constant dense<0.000000e+00> : vector<8x128xf32>
    %301 = tpu.matmul %239, %300, %cst_109 {dimension_numbers = #tpu.dot_dimension_numbers<[1], [0], [0], [1], [0, 0, 1, 1], [], []>} : vector<8x128xf32>, vector<128x128xf32>, vector<8x128xf32> -> vector<8x128xf32>
    %c0_110 = arith.constant 0 : index
    %c0_111 = arith.constant 0 : index
    %302 = vector.load %arg17[%c0_110, %c0_111] : memref<96x128xf32, #tpu.memory_space<vmem>>, vector<96x128xf32>
    %cst_112 = arith.constant dense<0.000000e+00> : vector<8x128xf32>
    %303 = tpu.matmul %299, %302, %cst_112 {dimension_numbers = #tpu.dot_dimension_numbers<[1], [0], [0], [1], [0, 0, 1, 1], [], []>} : vector<8x96xf32>, vector<96x128xf32>, vector<8x128xf32> -> vector<8x128xf32>
    %304 = arith.addf %301, %303 : vector<8x128xf32>
    %305 = vector.broadcast %18 : vector<1x128xf32> to vector<8x128xf32>
    %306 = arith.addf %304, %305 : vector<8x128xf32>
    %307 = arith.index_cast %c3_i32 : i32 to index
    %c0_113 = arith.constant 0 : index
    %c0_114 = arith.constant 0 : index
    %308 = vector.load %arg19[%307, %c0_113, %c0_114] : memref<8x8x128xf32, #tpu.memory_space<vmem>>, vector<1x8x128xf32>
    %309 = vector.shape_cast %308 : vector<1x8x128xf32> to vector<8x128xf32>
    %310 = vector.shape_cast %306 : vector<8x128xf32> to vector<1x8x128xf32>
    tpu.vector_store %arg19[%307, %c0_113, %c0_114], %310 {strides = array<i32>} : memref<8x8x128xf32, #tpu.memory_space<vmem>>, vector<1x8x128xf32>,
    %c24_i32_115 = arith.constant 24 : i32
    %311 = vector.broadcast %c24_i32_115 : i32 to vector<8x128xi32>
    %312 = arith.cmpi slt, %19, %311 : vector<8x128xi32>
    %313 = vector.broadcast %cst_35 : f32 to vector<8x128xf32>
    %314 = arith.select %312, %306, %313 : vector<8x128xi1>, vector<8x128xf32>
    %cst_116 = arith.constant dense<0xFF800000> : vector<8xf32>
    %315 = vector.multi_reduction <maximumf>, %314, %cst_116 [1] : vector<8x128xf32> to vector<8xf32>
    %316 = vector.shape_cast %315 : vector<8xf32> to vector<8x1xf32>
    %317 = vector.broadcast %316 : vector<8x1xf32> to vector<8x128xf32>
    %318 = arith.cmpf oeq, %314, %317 : vector<8x128xf32>
    %c128_i32_117 = arith.constant 128 : i32
    %319 = vector.broadcast %c128_i32_117 : i32 to vector<8x128xi32>
    %320 = arith.select %318, %19, %319 : vector<8x128xi1>, vector<8x128xi32>
    %cst_118 = arith.constant dense<2147483647> : vector<8xi32>
    %321 = vector.multi_reduction <minsi>, %320, %cst_118 [1] : vector<8x128xi32> to vector<8xi32>
    %322 = vector.shape_cast %321 : vector<8xi32> to vector<8x1xi32>
    %323 = vector.broadcast %322 : vector<8x1xi32> to vector<8x128xi32>
    %324 = arith.cmpi eq, %19, %323 : vector<8x128xi32>
    %325 = arith.extui %324 : vector<8x128xi1> to vector<8x128xi32>
    %326 = arith.sitofp %325 : vector<8x128xi32> to vector<8x128xf32>
    %327 = arith.index_cast %c3_i32 : i32 to index
    %328 = memref.load %arg0[%327] : memref<8xi32, #tpu.memory_space<smem>>
    %c0_i32_119 = arith.constant 0 : i32
    %329 = arith.cmpi ne, %328, %c0_i32_119 : i32
    %330 = arith.extui %329 : i1 to i32
    %331 = arith.sitofp %330 : i32 to f32
    %332 = arith.index_cast %c3_i32 : i32 to index
    %c0_120 = arith.constant 0 : index
    %c0_121 = arith.constant 0 : index
    %333 = vector.load %arg1[%332, %c0_120, %c0_121] : memref<8x8x1xi32, #tpu.memory_space<vmem>>, vector<1x8x1xi32>
    %334 = vector.shape_cast %333 : vector<1x8x1xi32> to vector<8x1xi32>
    %335 = vector.broadcast %334 : vector<8x1xi32> to vector<8x128xi32>
    %336 = arith.cmpi eq, %19, %335 : vector<8x128xi32>
    %337 = arith.extui %336 : vector<8x128xi1> to vector<8x128xi32>
    %338 = arith.sitofp %337 : vector<8x128xi32> to vector<8x128xf32>
    %339 = vector.broadcast %331 : f32 to vector<8x128xf32>
    %340 = arith.mulf %339, %338 : vector<8x128xf32>
    %cst_122 = arith.constant 1.000000e+00 : f32
    %341 = arith.subf %cst_122, %331 : f32
    %342 = vector.broadcast %341 : f32 to vector<8x128xf32>
    %343 = arith.mulf %342, %326 : vector<8x128xf32>
    %344 = arith.addf %340, %343 : vector<8x128xf32>
    %c4_i32 = arith.constant 4 : i32
    %cst_123 = arith.constant dense<0.000000e+00> : vector<8x32xf32>
    %345 = tpu.matmul %298, %14, %cst_123 {dimension_numbers = #tpu.dot_dimension_numbers<[1], [0], [0], [1], [0, 0, 1, 1], [], []>} : vector<8x32xf32>, vector<32x32xf32>, vector<8x32xf32> -> vector<8x32xf32>
    %346 = vector.shape_cast %345 : vector<8x32xf32> to vector<1x8x32xf32>
    %347 = vector.broadcast %346 : vector<1x8x32xf32> to vector<10x8x32xf32>
    %348 = arith.addf %13, %347 : vector<10x8x32xf32>
    %349 = math.tanh %348 : vector<10x8x32xf32>
    %350 = vector.shape_cast %15 : vector<1x32xf32> to vector<1x1x32xf32>
    %351 = vector.broadcast %350 : vector<1x1x32xf32> to vector<10x8x32xf32>
    %352 = arith.mulf %349, %351 : vector<10x8x32xf32>
    %cst_124 = arith.constant dense<0.000000e+00> : vector<10x8xf32>
    %353 = vector.multi_reduction <add>, %352, %cst_124 [2] : vector<10x8x32xf32> to vector<10x8xf32>
    %354 = vector.shape_cast %353 : vector<10x8xf32> to vector<10x8x1xf32>
    %355 = vector.shape_cast %16 : vector<1x1xf32> to vector<1x1x1xf32>
    %356 = vector.broadcast %355 : vector<1x1x1xf32> to vector<10x8x1xf32>
    %357 = arith.addf %354, %356 : vector<10x8x1xf32>
    %cst_125 = arith.constant dense<0xFF800000> : vector<8x1xf32>
    %358 = vector.multi_reduction <maximumf>, %357, %cst_125 [0] : vector<10x8x1xf32> to vector<8x1xf32>
    %359 = vector.shape_cast %358 : vector<8x1xf32> to vector<1x8x1xf32>
    %360 = vector.broadcast %359 : vector<1x8x1xf32> to vector<10x8x1xf32>
    %361 = arith.subf %357, %360 : vector<10x8x1xf32>
    %362 = math.exp %361 : vector<10x8x1xf32>
    %cst_126 = arith.constant dense<0.000000e+00> : vector<8x1xf32>
    %363 = vector.multi_reduction <add>, %362, %cst_126 [0] : vector<10x8x1xf32> to vector<8x1xf32>
    %364 = vector.shape_cast %363 : vector<8x1xf32> to vector<1x8x1xf32>
    %365 = tpu.reciprocal %364 {approx = true} : vector<1x8x1xf32> -> vector<1x8x1xf32>
    %366 = vector.broadcast %365 : vector<1x8x1xf32> to vector<10x8x1xf32>
    %367 = arith.mulf %362, %366 : vector<10x8x1xf32>
    %368 = vector.broadcast %367 : vector<10x8x1xf32> to vector<10x8x64xf32>
    %369 = arith.mulf %368, %12 : vector<10x8x64xf32>
    %cst_127 = arith.constant dense<0.000000e+00> : vector<8x64xf32>
    %370 = vector.multi_reduction <add>, %369, %cst_127 [0] : vector<10x8x64xf32> to vector<8x64xf32>
    %371 = tpu.concatenate %298, %370 in 1 : vector<8x32xf32>, vector<8x64xf32> -> vector<8x96xf32>
    %c0_128 = arith.constant 0 : index
    %c0_129 = arith.constant 0 : index
    %372 = vector.load %arg13[%c0_128, %c0_129] : memref<128x128xf32, #tpu.memory_space<vmem>>, vector<128x128xf32>
    %cst_130 = arith.constant dense<0.000000e+00> : vector<8x128xf32>
    %373 = tpu.matmul %344, %372, %cst_130 {dimension_numbers = #tpu.dot_dimension_numbers<[1], [0], [0], [1], [0, 0, 1, 1], [], []>} : vector<8x128xf32>, vector<128x128xf32>, vector<8x128xf32> -> vector<8x128xf32>
    %c0_131 = arith.constant 0 : index
    %c0_132 = arith.constant 0 : index
    %374 = vector.load %arg14[%c0_131, %c0_132] : memref<96x128xf32, #tpu.memory_space<vmem>>, vector<96x128xf32>
    %cst_133 = arith.constant dense<0.000000e+00> : vector<8x128xf32>
    %375 = tpu.matmul %371, %374, %cst_133 {dimension_numbers = #tpu.dot_dimension_numbers<[1], [0], [0], [1], [0, 0, 1, 1], [], []>} : vector<8x96xf32>, vector<96x128xf32>, vector<8x128xf32> -> vector<8x128xf32>
    %376 = arith.addf %373, %375 : vector<8x128xf32>
    %377 = vector.broadcast %17 : vector<1x128xf32> to vector<8x128xf32>
    %378 = arith.addf %376, %377 : vector<8x128xf32>
    %379 = vector.extract_strided_slice %378 {offsets = [0, 0], sizes = [8, 32], strides = [1, 1]} : vector<8x128xf32> to vector<8x32xf32>
    %380 = arith.negf %379 : vector<8x32xf32>
    %381 = math.exp %380 : vector<8x32xf32>
    %cst_134 = arith.constant 1.000000e+00 : f32
    %382 = vector.broadcast %cst_134 : f32 to vector<8x32xf32>
    %383 = arith.addf %382, %381 : vector<8x32xf32>
    %384 = arith.divf %382, %383 : vector<8x32xf32>
    %385 = vector.extract_strided_slice %378 {offsets = [0, 32], sizes = [8, 32], strides = [1, 1]} : vector<8x128xf32> to vector<8x32xf32>
    %386 = arith.negf %385 : vector<8x32xf32>
    %387 = math.exp %386 : vector<8x32xf32>
    %cst_135 = arith.constant 1.000000e+00 : f32
    %388 = vector.broadcast %cst_135 : f32 to vector<8x32xf32>
    %389 = arith.addf %388, %387 : vector<8x32xf32>
    %390 = arith.divf %388, %389 : vector<8x32xf32>
    %391 = vector.extract_strided_slice %378 {offsets = [0, 64], sizes = [8, 32], strides = [1, 1]} : vector<8x128xf32> to vector<8x32xf32>
    %392 = math.tanh %391 : vector<8x32xf32>
    %393 = vector.extract_strided_slice %378 {offsets = [0, 96], sizes = [8, 32], strides = [1, 1]} : vector<8x128xf32> to vector<8x32xf32>
    %394 = arith.negf %393 : vector<8x32xf32>
    %395 = math.exp %394 : vector<8x32xf32>
    %cst_136 = arith.constant 1.000000e+00 : f32
    %396 = vector.broadcast %cst_136 : f32 to vector<8x32xf32>
    %397 = arith.addf %396, %395 : vector<8x32xf32>
    %398 = arith.divf %396, %397 : vector<8x32xf32>
    %399 = arith.mulf %390, %296 : vector<8x32xf32>
    %400 = arith.mulf %384, %392 : vector<8x32xf32>
    %401 = arith.addf %399, %400 : vector<8x32xf32>
    %402 = math.tanh %401 : vector<8x32xf32>
    %403 = arith.mulf %398, %402 : vector<8x32xf32>
    %404 = tpu.concatenate %403, %370 in 1 : vector<8x32xf32>, vector<8x64xf32> -> vector<8x96xf32>
    %c0_137 = arith.constant 0 : index
    %c0_138 = arith.constant 0 : index
    %405 = vector.load %arg16[%c0_137, %c0_138] : memref<128x128xf32, #tpu.memory_space<vmem>>, vector<128x128xf32>
    %cst_139 = arith.constant dense<0.000000e+00> : vector<8x128xf32>
    %406 = tpu.matmul %344, %405, %cst_139 {dimension_numbers = #tpu.dot_dimension_numbers<[1], [0], [0], [1], [0, 0, 1, 1], [], []>} : vector<8x128xf32>, vector<128x128xf32>, vector<8x128xf32> -> vector<8x128xf32>
    %c0_140 = arith.constant 0 : index
    %c0_141 = arith.constant 0 : index
    %407 = vector.load %arg17[%c0_140, %c0_141] : memref<96x128xf32, #tpu.memory_space<vmem>>, vector<96x128xf32>
    %cst_142 = arith.constant dense<0.000000e+00> : vector<8x128xf32>
    %408 = tpu.matmul %404, %407, %cst_142 {dimension_numbers = #tpu.dot_dimension_numbers<[1], [0], [0], [1], [0, 0, 1, 1], [], []>} : vector<8x96xf32>, vector<96x128xf32>, vector<8x128xf32> -> vector<8x128xf32>
    %409 = arith.addf %406, %408 : vector<8x128xf32>
    %410 = vector.broadcast %18 : vector<1x128xf32> to vector<8x128xf32>
    %411 = arith.addf %409, %410 : vector<8x128xf32>
    %412 = arith.index_cast %c4_i32 : i32 to index
    %c0_143 = arith.constant 0 : index
    %c0_144 = arith.constant 0 : index
    %413 = vector.load %arg19[%412, %c0_143, %c0_144] : memref<8x8x128xf32, #tpu.memory_space<vmem>>, vector<1x8x128xf32>
    %414 = vector.shape_cast %413 : vector<1x8x128xf32> to vector<8x128xf32>
    %415 = vector.shape_cast %411 : vector<8x128xf32> to vector<1x8x128xf32>
    tpu.vector_store %arg19[%412, %c0_143, %c0_144], %415 {strides = array<i32>} : memref<8x8x128xf32, #tpu.memory_space<vmem>>, vector<1x8x128xf32>,
    %c24_i32_145 = arith.constant 24 : i32
    %416 = vector.broadcast %c24_i32_145 : i32 to vector<8x128xi32>
    %417 = arith.cmpi slt, %19, %416 : vector<8x128xi32>
    %418 = vector.broadcast %cst_35 : f32 to vector<8x128xf32>
    %419 = arith.select %417, %411, %418 : vector<8x128xi1>, vector<8x128xf32>
    %cst_146 = arith.constant dense<0xFF800000> : vector<8xf32>
    %420 = vector.multi_reduction <maximumf>, %419, %cst_146 [1] : vector<8x128xf32> to vector<8xf32>
    %421 = vector.shape_cast %420 : vector<8xf32> to vector<8x1xf32>
    %422 = vector.broadcast %421 : vector<8x1xf32> to vector<8x128xf32>
    %423 = arith.cmpf oeq, %419, %422 : vector<8x128xf32>
    %c128_i32_147 = arith.constant 128 : i32
    %424 = vector.broadcast %c128_i32_147 : i32 to vector<8x128xi32>
    %425 = arith.select %423, %19, %424 : vector<8x128xi1>, vector<8x128xi32>
    %cst_148 = arith.constant dense<2147483647> : vector<8xi32>
    %426 = vector.multi_reduction <minsi>, %425, %cst_148 [1] : vector<8x128xi32> to vector<8xi32>
    %427 = vector.shape_cast %426 : vector<8xi32> to vector<8x1xi32>
    %428 = vector.broadcast %427 : vector<8x1xi32> to vector<8x128xi32>
    %429 = arith.cmpi eq, %19, %428 : vector<8x128xi32>
    %430 = arith.extui %429 : vector<8x128xi1> to vector<8x128xi32>
    %431 = arith.sitofp %430 : vector<8x128xi32> to vector<8x128xf32>
    %432 = arith.index_cast %c4_i32 : i32 to index
    %433 = memref.load %arg0[%432] : memref<8xi32, #tpu.memory_space<smem>>
    %c0_i32_149 = arith.constant 0 : i32
    %434 = arith.cmpi ne, %433, %c0_i32_149 : i32
    %435 = arith.extui %434 : i1 to i32
    %436 = arith.sitofp %435 : i32 to f32
    %437 = arith.index_cast %c4_i32 : i32 to index
    %c0_150 = arith.constant 0 : index
    %c0_151 = arith.constant 0 : index
    %438 = vector.load %arg1[%437, %c0_150, %c0_151] : memref<8x8x1xi32, #tpu.memory_space<vmem>>, vector<1x8x1xi32>
    %439 = vector.shape_cast %438 : vector<1x8x1xi32> to vector<8x1xi32>
    %440 = vector.broadcast %439 : vector<8x1xi32> to vector<8x128xi32>
    %441 = arith.cmpi eq, %19, %440 : vector<8x128xi32>
    %442 = arith.extui %441 : vector<8x128xi1> to vector<8x128xi32>
    %443 = arith.sitofp %442 : vector<8x128xi32> to vector<8x128xf32>
    %444 = vector.broadcast %436 : f32 to vector<8x128xf32>
    %445 = arith.mulf %444, %443 : vector<8x128xf32>
    %cst_152 = arith.constant 1.000000e+00 : f32
    %446 = arith.subf %cst_152, %436 : f32
    %447 = vector.broadcast %446 : f32 to vector<8x128xf32>
    %448 = arith.mulf %447, %431 : vector<8x128xf32>
    %449 = arith.addf %445, %448 : vector<8x128xf32>
    %c5_i32 = arith.constant 5 : i32
    %cst_153 = arith.constant dense<0.000000e+00> : vector<8x32xf32>
    %450 = tpu.matmul %403, %14, %cst_153 {dimension_numbers = #tpu.dot_dimension_numbers<[1], [0], [0], [1], [0, 0, 1, 1], [], []>} : vector<8x32xf32>, vector<32x32xf32>, vector<8x32xf32> -> vector<8x32xf32>
    %451 = vector.shape_cast %450 : vector<8x32xf32> to vector<1x8x32xf32>
    %452 = vector.broadcast %451 : vector<1x8x32xf32> to vector<10x8x32xf32>
    %453 = arith.addf %13, %452 : vector<10x8x32xf32>
    %454 = math.tanh %453 : vector<10x8x32xf32>
    %455 = vector.shape_cast %15 : vector<1x32xf32> to vector<1x1x32xf32>
    %456 = vector.broadcast %455 : vector<1x1x32xf32> to vector<10x8x32xf32>
    %457 = arith.mulf %454, %456 : vector<10x8x32xf32>
    %cst_154 = arith.constant dense<0.000000e+00> : vector<10x8xf32>
    %458 = vector.multi_reduction <add>, %457, %cst_154 [2] : vector<10x8x32xf32> to vector<10x8xf32>
    %459 = vector.shape_cast %458 : vector<10x8xf32> to vector<10x8x1xf32>
    %460 = vector.shape_cast %16 : vector<1x1xf32> to vector<1x1x1xf32>
    %461 = vector.broadcast %460 : vector<1x1x1xf32> to vector<10x8x1xf32>
    %462 = arith.addf %459, %461 : vector<10x8x1xf32>
    %cst_155 = arith.constant dense<0xFF800000> : vector<8x1xf32>
    %463 = vector.multi_reduction <maximumf>, %462, %cst_155 [0] : vector<10x8x1xf32> to vector<8x1xf32>
    %464 = vector.shape_cast %463 : vector<8x1xf32> to vector<1x8x1xf32>
    %465 = vector.broadcast %464 : vector<1x8x1xf32> to vector<10x8x1xf32>
    %466 = arith.subf %462, %465 : vector<10x8x1xf32>
    %467 = math.exp %466 : vector<10x8x1xf32>
    %cst_156 = arith.constant dense<0.000000e+00> : vector<8x1xf32>
    %468 = vector.multi_reduction <add>, %467, %cst_156 [0] : vector<10x8x1xf32> to vector<8x1xf32>
    %469 = vector.shape_cast %468 : vector<8x1xf32> to vector<1x8x1xf32>
    %470 = tpu.reciprocal %469 {approx = true} : vector<1x8x1xf32> -> vector<1x8x1xf32>
    %471 = vector.broadcast %470 : vector<1x8x1xf32> to vector<10x8x1xf32>
    %472 = arith.mulf %467, %471 : vector<10x8x1xf32>
    %473 = vector.broadcast %472 : vector<10x8x1xf32> to vector<10x8x64xf32>
    %474 = arith.mulf %473, %12 : vector<10x8x64xf32>
    %cst_157 = arith.constant dense<0.000000e+00> : vector<8x64xf32>
    %475 = vector.multi_reduction <add>, %474, %cst_157 [0] : vector<10x8x64xf32> to vector<8x64xf32>
    %476 = tpu.concatenate %403, %475 in 1 : vector<8x32xf32>, vector<8x64xf32> -> vector<8x96xf32>
    %c0_158 = arith.constant 0 : index
    %c0_159 = arith.constant 0 : index
    %477 = vector.load %arg13[%c0_158, %c0_159] : memref<128x128xf32, #tpu.memory_space<vmem>>, vector<128x128xf32>
    %cst_160 = arith.constant dense<0.000000e+00> : vector<8x128xf32>
    %478 = tpu.matmul %449, %477, %cst_160 {dimension_numbers = #tpu.dot_dimension_numbers<[1], [0], [0], [1], [0, 0, 1, 1], [], []>} : vector<8x128xf32>, vector<128x128xf32>, vector<8x128xf32> -> vector<8x128xf32>
    %c0_161 = arith.constant 0 : index
    %c0_162 = arith.constant 0 : index
    %479 = vector.load %arg14[%c0_161, %c0_162] : memref<96x128xf32, #tpu.memory_space<vmem>>, vector<96x128xf32>
    %cst_163 = arith.constant dense<0.000000e+00> : vector<8x128xf32>
    %480 = tpu.matmul %476, %479, %cst_163 {dimension_numbers = #tpu.dot_dimension_numbers<[1], [0], [0], [1], [0, 0, 1, 1], [], []>} : vector<8x96xf32>, vector<96x128xf32>, vector<8x128xf32> -> vector<8x128xf32>
    %481 = arith.addf %478, %480 : vector<8x128xf32>
    %482 = vector.broadcast %17 : vector<1x128xf32> to vector<8x128xf32>
    %483 = arith.addf %481, %482 : vector<8x128xf32>
    %484 = vector.extract_strided_slice %483 {offsets = [0, 0], sizes = [8, 32], strides = [1, 1]} : vector<8x128xf32> to vector<8x32xf32>
    %485 = arith.negf %484 : vector<8x32xf32>
    %486 = math.exp %485 : vector<8x32xf32>
    %cst_164 = arith.constant 1.000000e+00 : f32
    %487 = vector.broadcast %cst_164 : f32 to vector<8x32xf32>
    %488 = arith.addf %487, %486 : vector<8x32xf32>
    %489 = arith.divf %487, %488 : vector<8x32xf32>
    %490 = vector.extract_strided_slice %483 {offsets = [0, 32], sizes = [8, 32], strides = [1, 1]} : vector<8x128xf32> to vector<8x32xf32>
    %491 = arith.negf %490 : vector<8x32xf32>
    %492 = math.exp %491 : vector<8x32xf32>
    %cst_165 = arith.constant 1.000000e+00 : f32
    %493 = vector.broadcast %cst_165 : f32 to vector<8x32xf32>
    %494 = arith.addf %493, %492 : vector<8x32xf32>
    %495 = arith.divf %493, %494 : vector<8x32xf32>
    %496 = vector.extract_strided_slice %483 {offsets = [0, 64], sizes = [8, 32], strides = [1, 1]} : vector<8x128xf32> to vector<8x32xf32>
    %497 = math.tanh %496 : vector<8x32xf32>
    %498 = vector.extract_strided_slice %483 {offsets = [0, 96], sizes = [8, 32], strides = [1, 1]} : vector<8x128xf32> to vector<8x32xf32>
    %499 = arith.negf %498 : vector<8x32xf32>
    %500 = math.exp %499 : vector<8x32xf32>
    %cst_166 = arith.constant 1.000000e+00 : f32
    %501 = vector.broadcast %cst_166 : f32 to vector<8x32xf32>
    %502 = arith.addf %501, %500 : vector<8x32xf32>
    %503 = arith.divf %501, %502 : vector<8x32xf32>
    %504 = arith.mulf %495, %401 : vector<8x32xf32>
    %505 = arith.mulf %489, %497 : vector<8x32xf32>
    %506 = arith.addf %504, %505 : vector<8x32xf32>
    %507 = math.tanh %506 : vector<8x32xf32>
    %508 = arith.mulf %503, %507 : vector<8x32xf32>
    %509 = tpu.concatenate %508, %475 in 1 : vector<8x32xf32>, vector<8x64xf32> -> vector<8x96xf32>
    %c0_167 = arith.constant 0 : index
    %c0_168 = arith.constant 0 : index
    %510 = vector.load %arg16[%c0_167, %c0_168] : memref<128x128xf32, #tpu.memory_space<vmem>>, vector<128x128xf32>
    %cst_169 = arith.constant dense<0.000000e+00> : vector<8x128xf32>
    %511 = tpu.matmul %449, %510, %cst_169 {dimension_numbers = #tpu.dot_dimension_numbers<[1], [0], [0], [1], [0, 0, 1, 1], [], []>} : vector<8x128xf32>, vector<128x128xf32>, vector<8x128xf32> -> vector<8x128xf32>
    %c0_170 = arith.constant 0 : index
    %c0_171 = arith.constant 0 : index
    %512 = vector.load %arg17[%c0_170, %c0_171] : memref<96x128xf32, #tpu.memory_space<vmem>>, vector<96x128xf32>
    %cst_172 = arith.constant dense<0.000000e+00> : vector<8x128xf32>
    %513 = tpu.matmul %509, %512, %cst_172 {dimension_numbers = #tpu.dot_dimension_numbers<[1], [0], [0], [1], [0, 0, 1, 1], [], []>} : vector<8x96xf32>, vector<96x128xf32>, vector<8x128xf32> -> vector<8x128xf32>
    %514 = arith.addf %511, %513 : vector<8x128xf32>
    %515 = vector.broadcast %18 : vector<1x128xf32> to vector<8x128xf32>
    %516 = arith.addf %514, %515 : vector<8x128xf32>
    %517 = arith.index_cast %c5_i32 : i32 to index
    %c0_173 = arith.constant 0 : index
    %c0_174 = arith.constant 0 : index
    %518 = vector.load %arg19[%517, %c0_173, %c0_174] : memref<8x8x128xf32, #tpu.memory_space<vmem>>, vector<1x8x128xf32>
    %519 = vector.shape_cast %518 : vector<1x8x128xf32> to vector<8x128xf32>
    %520 = vector.shape_cast %516 : vector<8x128xf32> to vector<1x8x128xf32>
    tpu.vector_store %arg19[%517, %c0_173, %c0_174], %520 {strides = array<i32>} : memref<8x8x128xf32, #tpu.memory_space<vmem>>, vector<1x8x128xf32>,
    %c24_i32_175 = arith.constant 24 : i32
    %521 = vector.broadcast %c24_i32_175 : i32 to vector<8x128xi32>
    %522 = arith.cmpi slt, %19, %521 : vector<8x128xi32>
    %523 = vector.broadcast %cst_35 : f32 to vector<8x128xf32>
    %524 = arith.select %522, %516, %523 : vector<8x128xi1>, vector<8x128xf32>
    %cst_176 = arith.constant dense<0xFF800000> : vector<8xf32>
    %525 = vector.multi_reduction <maximumf>, %524, %cst_176 [1] : vector<8x128xf32> to vector<8xf32>
    %526 = vector.shape_cast %525 : vector<8xf32> to vector<8x1xf32>
    %527 = vector.broadcast %526 : vector<8x1xf32> to vector<8x128xf32>
    %528 = arith.cmpf oeq, %524, %527 : vector<8x128xf32>
    %c128_i32_177 = arith.constant 128 : i32
    %529 = vector.broadcast %c128_i32_177 : i32 to vector<8x128xi32>
    %530 = arith.select %528, %19, %529 : vector<8x128xi1>, vector<8x128xi32>
    %cst_178 = arith.constant dense<2147483647> : vector<8xi32>
    %531 = vector.multi_reduction <minsi>, %530, %cst_178 [1] : vector<8x128xi32> to vector<8xi32>
    %532 = vector.shape_cast %531 : vector<8xi32> to vector<8x1xi32>
    %533 = vector.broadcast %532 : vector<8x1xi32> to vector<8x128xi32>
    %534 = arith.cmpi eq, %19, %533 : vector<8x128xi32>
    %535 = arith.extui %534 : vector<8x128xi1> to vector<8x128xi32>
    %536 = arith.sitofp %535 : vector<8x128xi32> to vector<8x128xf32>
    %537 = arith.index_cast %c5_i32 : i32 to index
    %538 = memref.load %arg0[%537] : memref<8xi32, #tpu.memory_space<smem>>
    %c0_i32_179 = arith.constant 0 : i32
    %539 = arith.cmpi ne, %538, %c0_i32_179 : i32
    %540 = arith.extui %539 : i1 to i32
    %541 = arith.sitofp %540 : i32 to f32
    %542 = arith.index_cast %c5_i32 : i32 to index
    %c0_180 = arith.constant 0 : index
    %c0_181 = arith.constant 0 : index
    %543 = vector.load %arg1[%542, %c0_180, %c0_181] : memref<8x8x1xi32, #tpu.memory_space<vmem>>, vector<1x8x1xi32>
    %544 = vector.shape_cast %543 : vector<1x8x1xi32> to vector<8x1xi32>
    %545 = vector.broadcast %544 : vector<8x1xi32> to vector<8x128xi32>
    %546 = arith.cmpi eq, %19, %545 : vector<8x128xi32>
    %547 = arith.extui %546 : vector<8x128xi1> to vector<8x128xi32>
    %548 = arith.sitofp %547 : vector<8x128xi32> to vector<8x128xf32>
    %549 = vector.broadcast %541 : f32 to vector<8x128xf32>
    %550 = arith.mulf %549, %548 : vector<8x128xf32>
    %cst_182 = arith.constant 1.000000e+00 : f32
    %551 = arith.subf %cst_182, %541 : f32
    %552 = vector.broadcast %551 : f32 to vector<8x128xf32>
    %553 = arith.mulf %552, %536 : vector<8x128xf32>
    %554 = arith.addf %550, %553 : vector<8x128xf32>
    %c6_i32 = arith.constant 6 : i32
    %cst_183 = arith.constant dense<0.000000e+00> : vector<8x32xf32>
    %555 = tpu.matmul %508, %14, %cst_183 {dimension_numbers = #tpu.dot_dimension_numbers<[1], [0], [0], [1], [0, 0, 1, 1], [], []>} : vector<8x32xf32>, vector<32x32xf32>, vector<8x32xf32> -> vector<8x32xf32>
    %556 = vector.shape_cast %555 : vector<8x32xf32> to vector<1x8x32xf32>
    %557 = vector.broadcast %556 : vector<1x8x32xf32> to vector<10x8x32xf32>
    %558 = arith.addf %13, %557 : vector<10x8x32xf32>
    %559 = math.tanh %558 : vector<10x8x32xf32>
    %560 = vector.shape_cast %15 : vector<1x32xf32> to vector<1x1x32xf32>
    %561 = vector.broadcast %560 : vector<1x1x32xf32> to vector<10x8x32xf32>
    %562 = arith.mulf %559, %561 : vector<10x8x32xf32>
    %cst_184 = arith.constant dense<0.000000e+00> : vector<10x8xf32>
    %563 = vector.multi_reduction <add>, %562, %cst_184 [2] : vector<10x8x32xf32> to vector<10x8xf32>
    %564 = vector.shape_cast %563 : vector<10x8xf32> to vector<10x8x1xf32>
    %565 = vector.shape_cast %16 : vector<1x1xf32> to vector<1x1x1xf32>
    %566 = vector.broadcast %565 : vector<1x1x1xf32> to vector<10x8x1xf32>
    %567 = arith.addf %564, %566 : vector<10x8x1xf32>
    %cst_185 = arith.constant dense<0xFF800000> : vector<8x1xf32>
    %568 = vector.multi_reduction <maximumf>, %567, %cst_185 [0] : vector<10x8x1xf32> to vector<8x1xf32>
    %569 = vector.shape_cast %568 : vector<8x1xf32> to vector<1x8x1xf32>
    %570 = vector.broadcast %569 : vector<1x8x1xf32> to vector<10x8x1xf32>
    %571 = arith.subf %567, %570 : vector<10x8x1xf32>
    %572 = math.exp %571 : vector<10x8x1xf32>
    %cst_186 = arith.constant dense<0.000000e+00> : vector<8x1xf32>
    %573 = vector.multi_reduction <add>, %572, %cst_186 [0] : vector<10x8x1xf32> to vector<8x1xf32>
    %574 = vector.shape_cast %573 : vector<8x1xf32> to vector<1x8x1xf32>
    %575 = tpu.reciprocal %574 {approx = true} : vector<1x8x1xf32> -> vector<1x8x1xf32>
    %576 = vector.broadcast %575 : vector<1x8x1xf32> to vector<10x8x1xf32>
    %577 = arith.mulf %572, %576 : vector<10x8x1xf32>
    %578 = vector.broadcast %577 : vector<10x8x1xf32> to vector<10x8x64xf32>
    %579 = arith.mulf %578, %12 : vector<10x8x64xf32>
    %cst_187 = arith.constant dense<0.000000e+00> : vector<8x64xf32>
    %580 = vector.multi_reduction <add>, %579, %cst_187 [0] : vector<10x8x64xf32> to vector<8x64xf32>
    %581 = tpu.concatenate %508, %580 in 1 : vector<8x32xf32>, vector<8x64xf32> -> vector<8x96xf32>
    %c0_188 = arith.constant 0 : index
    %c0_189 = arith.constant 0 : index
    %582 = vector.load %arg13[%c0_188, %c0_189] : memref<128x128xf32, #tpu.memory_space<vmem>>, vector<128x128xf32>
    %cst_190 = arith.constant dense<0.000000e+00> : vector<8x128xf32>
    %583 = tpu.matmul %554, %582, %cst_190 {dimension_numbers = #tpu.dot_dimension_numbers<[1], [0], [0], [1], [0, 0, 1, 1], [], []>} : vector<8x128xf32>, vector<128x128xf32>, vector<8x128xf32> -> vector<8x128xf32>
    %c0_191 = arith.constant 0 : index
    %c0_192 = arith.constant 0 : index
    %584 = vector.load %arg14[%c0_191, %c0_192] : memref<96x128xf32, #tpu.memory_space<vmem>>, vector<96x128xf32>
    %cst_193 = arith.constant dense<0.000000e+00> : vector<8x128xf32>
    %585 = tpu.matmul %581, %584, %cst_193 {dimension_numbers = #tpu.dot_dimension_numbers<[1], [0], [0], [1], [0, 0, 1, 1], [], []>} : vector<8x96xf32>, vector<96x128xf32>, vector<8x128xf32> -> vector<8x128xf32>
    %586 = arith.addf %583, %585 : vector<8x128xf32>
    %587 = vector.broadcast %17 : vector<1x128xf32> to vector<8x128xf32>
    %588 = arith.addf %586, %587 : vector<8x128xf32>
    %589 = vector.extract_strided_slice %588 {offsets = [0, 0], sizes = [8, 32], strides = [1, 1]} : vector<8x128xf32> to vector<8x32xf32>
    %590 = arith.negf %589 : vector<8x32xf32>
    %591 = math.exp %590 : vector<8x32xf32>
    %cst_194 = arith.constant 1.000000e+00 : f32
    %592 = vector.broadcast %cst_194 : f32 to vector<8x32xf32>
    %593 = arith.addf %592, %591 : vector<8x32xf32>
    %594 = arith.divf %592, %593 : vector<8x32xf32>
    %595 = vector.extract_strided_slice %588 {offsets = [0, 32], sizes = [8, 32], strides = [1, 1]} : vector<8x128xf32> to vector<8x32xf32>
    %596 = arith.negf %595 : vector<8x32xf32>
    %597 = math.exp %596 : vector<8x32xf32>
    %cst_195 = arith.constant 1.000000e+00 : f32
    %598 = vector.broadcast %cst_195 : f32 to vector<8x32xf32>
    %599 = arith.addf %598, %597 : vector<8x32xf32>
    %600 = arith.divf %598, %599 : vector<8x32xf32>
    %601 = vector.extract_strided_slice %588 {offsets = [0, 64], sizes = [8, 32], strides = [1, 1]} : vector<8x128xf32> to vector<8x32xf32>
    %602 = math.tanh %601 : vector<8x32xf32>
    %603 = vector.extract_strided_slice %588 {offsets = [0, 96], sizes = [8, 32], strides = [1, 1]} : vector<8x128xf32> to vector<8x32xf32>
    %604 = arith.negf %603 : vector<8x32xf32>
    %605 = math.exp %604 : vector<8x32xf32>
    %cst_196 = arith.constant 1.000000e+00 : f32
    %606 = vector.broadcast %cst_196 : f32 to vector<8x32xf32>
    %607 = arith.addf %606, %605 : vector<8x32xf32>
    %608 = arith.divf %606, %607 : vector<8x32xf32>
    %609 = arith.mulf %600, %506 : vector<8x32xf32>
    %610 = arith.mulf %594, %602 : vector<8x32xf32>
    %611 = arith.addf %609, %610 : vector<8x32xf32>
    %612 = math.tanh %611 : vector<8x32xf32>
    %613 = arith.mulf %608, %612 : vector<8x32xf32>
    %614 = tpu.concatenate %613, %580 in 1 : vector<8x32xf32>, vector<8x64xf32> -> vector<8x96xf32>
    %c0_197 = arith.constant 0 : index
    %c0_198 = arith.constant 0 : index
    %615 = vector.load %arg16[%c0_197, %c0_198] : memref<128x128xf32, #tpu.memory_space<vmem>>, vector<128x128xf32>
    %cst_199 = arith.constant dense<0.000000e+00> : vector<8x128xf32>
    %616 = tpu.matmul %554, %615, %cst_199 {dimension_numbers = #tpu.dot_dimension_numbers<[1], [0], [0], [1], [0, 0, 1, 1], [], []>} : vector<8x128xf32>, vector<128x128xf32>, vector<8x128xf32> -> vector<8x128xf32>
    %c0_200 = arith.constant 0 : index
    %c0_201 = arith.constant 0 : index
    %617 = vector.load %arg17[%c0_200, %c0_201] : memref<96x128xf32, #tpu.memory_space<vmem>>, vector<96x128xf32>
    %cst_202 = arith.constant dense<0.000000e+00> : vector<8x128xf32>
    %618 = tpu.matmul %614, %617, %cst_202 {dimension_numbers = #tpu.dot_dimension_numbers<[1], [0], [0], [1], [0, 0, 1, 1], [], []>} : vector<8x96xf32>, vector<96x128xf32>, vector<8x128xf32> -> vector<8x128xf32>
    %619 = arith.addf %616, %618 : vector<8x128xf32>
    %620 = vector.broadcast %18 : vector<1x128xf32> to vector<8x128xf32>
    %621 = arith.addf %619, %620 : vector<8x128xf32>
    %622 = arith.index_cast %c6_i32 : i32 to index
    %c0_203 = arith.constant 0 : index
    %c0_204 = arith.constant 0 : index
    %623 = vector.load %arg19[%622, %c0_203, %c0_204] : memref<8x8x128xf32, #tpu.memory_space<vmem>>, vector<1x8x128xf32>
    %624 = vector.shape_cast %623 : vector<1x8x128xf32> to vector<8x128xf32>
    %625 = vector.shape_cast %621 : vector<8x128xf32> to vector<1x8x128xf32>
    tpu.vector_store %arg19[%622, %c0_203, %c0_204], %625 {strides = array<i32>} : memref<8x8x128xf32, #tpu.memory_space<vmem>>, vector<1x8x128xf32>,
    %c24_i32_205 = arith.constant 24 : i32
    %626 = vector.broadcast %c24_i32_205 : i32 to vector<8x128xi32>
    %627 = arith.cmpi slt, %19, %626 : vector<8x128xi32>
    %628 = vector.broadcast %cst_35 : f32 to vector<8x128xf32>
    %629 = arith.select %627, %621, %628 : vector<8x128xi1>, vector<8x128xf32>
    %cst_206 = arith.constant dense<0xFF800000> : vector<8xf32>
    %630 = vector.multi_reduction <maximumf>, %629, %cst_206 [1] : vector<8x128xf32> to vector<8xf32>
    %631 = vector.shape_cast %630 : vector<8xf32> to vector<8x1xf32>
    %632 = vector.broadcast %631 : vector<8x1xf32> to vector<8x128xf32>
    %633 = arith.cmpf oeq, %629, %632 : vector<8x128xf32>
    %c128_i32_207 = arith.constant 128 : i32
    %634 = vector.broadcast %c128_i32_207 : i32 to vector<8x128xi32>
    %635 = arith.select %633, %19, %634 : vector<8x128xi1>, vector<8x128xi32>
    %cst_208 = arith.constant dense<2147483647> : vector<8xi32>
    %636 = vector.multi_reduction <minsi>, %635, %cst_208 [1] : vector<8x128xi32> to vector<8xi32>
    %637 = vector.shape_cast %636 : vector<8xi32> to vector<8x1xi32>
    %638 = vector.broadcast %637 : vector<8x1xi32> to vector<8x128xi32>
    %639 = arith.cmpi eq, %19, %638 : vector<8x128xi32>
    %640 = arith.extui %639 : vector<8x128xi1> to vector<8x128xi32>
    %641 = arith.sitofp %640 : vector<8x128xi32> to vector<8x128xf32>
    %642 = arith.index_cast %c6_i32 : i32 to index
    %643 = memref.load %arg0[%642] : memref<8xi32, #tpu.memory_space<smem>>
    %c0_i32_209 = arith.constant 0 : i32
    %644 = arith.cmpi ne, %643, %c0_i32_209 : i32
    %645 = arith.extui %644 : i1 to i32
    %646 = arith.sitofp %645 : i32 to f32
    %647 = arith.index_cast %c6_i32 : i32 to index
    %c0_210 = arith.constant 0 : index
    %c0_211 = arith.constant 0 : index
    %648 = vector.load %arg1[%647, %c0_210, %c0_211] : memref<8x8x1xi32, #tpu.memory_space<vmem>>, vector<1x8x1xi32>
    %649 = vector.shape_cast %648 : vector<1x8x1xi32> to vector<8x1xi32>
    %650 = vector.broadcast %649 : vector<8x1xi32> to vector<8x128xi32>
    %651 = arith.cmpi eq, %19, %650 : vector<8x128xi32>
    %652 = arith.extui %651 : vector<8x128xi1> to vector<8x128xi32>
    %653 = arith.sitofp %652 : vector<8x128xi32> to vector<8x128xf32>
    %654 = vector.broadcast %646 : f32 to vector<8x128xf32>
    %655 = arith.mulf %654, %653 : vector<8x128xf32>
    %cst_212 = arith.constant 1.000000e+00 : f32
    %656 = arith.subf %cst_212, %646 : f32
    %657 = vector.broadcast %656 : f32 to vector<8x128xf32>
    %658 = arith.mulf %657, %641 : vector<8x128xf32>
    %659 = arith.addf %655, %658 : vector<8x128xf32>
    %c7_i32 = arith.constant 7 : i32
    %cst_213 = arith.constant dense<0.000000e+00> : vector<8x32xf32>
    %660 = tpu.matmul %613, %14, %cst_213 {dimension_numbers = #tpu.dot_dimension_numbers<[1], [0], [0], [1], [0, 0, 1, 1], [], []>} : vector<8x32xf32>, vector<32x32xf32>, vector<8x32xf32> -> vector<8x32xf32>
    %661 = vector.shape_cast %660 : vector<8x32xf32> to vector<1x8x32xf32>
    %662 = vector.broadcast %661 : vector<1x8x32xf32> to vector<10x8x32xf32>
    %663 = arith.addf %13, %662 : vector<10x8x32xf32>
    %664 = math.tanh %663 : vector<10x8x32xf32>
    %665 = vector.shape_cast %15 : vector<1x32xf32> to vector<1x1x32xf32>
    %666 = vector.broadcast %665 : vector<1x1x32xf32> to vector<10x8x32xf32>
    %667 = arith.mulf %664, %666 : vector<10x8x32xf32>
    %cst_214 = arith.constant dense<0.000000e+00> : vector<10x8xf32>
    %668 = vector.multi_reduction <add>, %667, %cst_214 [2] : vector<10x8x32xf32> to vector<10x8xf32>
    %669 = vector.shape_cast %668 : vector<10x8xf32> to vector<10x8x1xf32>
    %670 = vector.shape_cast %16 : vector<1x1xf32> to vector<1x1x1xf32>
    %671 = vector.broadcast %670 : vector<1x1x1xf32> to vector<10x8x1xf32>
    %672 = arith.addf %669, %671 : vector<10x8x1xf32>
    %cst_215 = arith.constant dense<0xFF800000> : vector<8x1xf32>
    %673 = vector.multi_reduction <maximumf>, %672, %cst_215 [0] : vector<10x8x1xf32> to vector<8x1xf32>
    %674 = vector.shape_cast %673 : vector<8x1xf32> to vector<1x8x1xf32>
    %675 = vector.broadcast %674 : vector<1x8x1xf32> to vector<10x8x1xf32>
    %676 = arith.subf %672, %675 : vector<10x8x1xf32>
    %677 = math.exp %676 : vector<10x8x1xf32>
    %cst_216 = arith.constant dense<0.000000e+00> : vector<8x1xf32>
    %678 = vector.multi_reduction <add>, %677, %cst_216 [0] : vector<10x8x1xf32> to vector<8x1xf32>
    %679 = vector.shape_cast %678 : vector<8x1xf32> to vector<1x8x1xf32>
    %680 = tpu.reciprocal %679 {approx = true} : vector<1x8x1xf32> -> vector<1x8x1xf32>
    %681 = vector.broadcast %680 : vector<1x8x1xf32> to vector<10x8x1xf32>
    %682 = arith.mulf %677, %681 : vector<10x8x1xf32>
    %683 = vector.broadcast %682 : vector<10x8x1xf32> to vector<10x8x64xf32>
    %684 = arith.mulf %683, %12 : vector<10x8x64xf32>
    %cst_217 = arith.constant dense<0.000000e+00> : vector<8x64xf32>
    %685 = vector.multi_reduction <add>, %684, %cst_217 [0] : vector<10x8x64xf32> to vector<8x64xf32>
    %686 = tpu.concatenate %613, %685 in 1 : vector<8x32xf32>, vector<8x64xf32> -> vector<8x96xf32>
    %c0_218 = arith.constant 0 : index
    %c0_219 = arith.constant 0 : index
    %687 = vector.load %arg13[%c0_218, %c0_219] : memref<128x128xf32, #tpu.memory_space<vmem>>, vector<128x128xf32>
    %cst_220 = arith.constant dense<0.000000e+00> : vector<8x128xf32>
    %688 = tpu.matmul %659, %687, %cst_220 {dimension_numbers = #tpu.dot_dimension_numbers<[1], [0], [0], [1], [0, 0, 1, 1], [], []>} : vector<8x128xf32>, vector<128x128xf32>, vector<8x128xf32> -> vector<8x128xf32>
    %c0_221 = arith.constant 0 : index
    %c0_222 = arith.constant 0 : index
    %689 = vector.load %arg14[%c0_221, %c0_222] : memref<96x128xf32, #tpu.memory_space<vmem>>, vector<96x128xf32>
    %cst_223 = arith.constant dense<0.000000e+00> : vector<8x128xf32>
    %690 = tpu.matmul %686, %689, %cst_223 {dimension_numbers = #tpu.dot_dimension_numbers<[1], [0], [0], [1], [0, 0, 1, 1], [], []>} : vector<8x96xf32>, vector<96x128xf32>, vector<8x128xf32> -> vector<8x128xf32>
    %691 = arith.addf %688, %690 : vector<8x128xf32>
    %692 = vector.broadcast %17 : vector<1x128xf32> to vector<8x128xf32>
    %693 = arith.addf %691, %692 : vector<8x128xf32>
    %694 = vector.extract_strided_slice %693 {offsets = [0, 0], sizes = [8, 32], strides = [1, 1]} : vector<8x128xf32> to vector<8x32xf32>
    %695 = arith.negf %694 : vector<8x32xf32>
    %696 = math.exp %695 : vector<8x32xf32>
    %cst_224 = arith.constant 1.000000e+00 : f32
    %697 = vector.broadcast %cst_224 : f32 to vector<8x32xf32>
    %698 = arith.addf %697, %696 : vector<8x32xf32>
    %699 = arith.divf %697, %698 : vector<8x32xf32>
    %700 = vector.extract_strided_slice %693 {offsets = [0, 32], sizes = [8, 32], strides = [1, 1]} : vector<8x128xf32> to vector<8x32xf32>
    %701 = arith.negf %700 : vector<8x32xf32>
    %702 = math.exp %701 : vector<8x32xf32>
    %cst_225 = arith.constant 1.000000e+00 : f32
    %703 = vector.broadcast %cst_225 : f32 to vector<8x32xf32>
    %704 = arith.addf %703, %702 : vector<8x32xf32>
    %705 = arith.divf %703, %704 : vector<8x32xf32>
    %706 = vector.extract_strided_slice %693 {offsets = [0, 64], sizes = [8, 32], strides = [1, 1]} : vector<8x128xf32> to vector<8x32xf32>
    %707 = math.tanh %706 : vector<8x32xf32>
    %708 = vector.extract_strided_slice %693 {offsets = [0, 96], sizes = [8, 32], strides = [1, 1]} : vector<8x128xf32> to vector<8x32xf32>
    %709 = arith.negf %708 : vector<8x32xf32>
    %710 = math.exp %709 : vector<8x32xf32>
    %cst_226 = arith.constant 1.000000e+00 : f32
    %711 = vector.broadcast %cst_226 : f32 to vector<8x32xf32>
    %712 = arith.addf %711, %710 : vector<8x32xf32>
    %713 = arith.divf %711, %712 : vector<8x32xf32>
    %714 = arith.mulf %705, %611 : vector<8x32xf32>
    %715 = arith.mulf %699, %707 : vector<8x32xf32>
    %716 = arith.addf %714, %715 : vector<8x32xf32>
    %717 = math.tanh %716 : vector<8x32xf32>
    %718 = arith.mulf %713, %717 : vector<8x32xf32>
    %719 = tpu.concatenate %718, %685 in 1 : vector<8x32xf32>, vector<8x64xf32> -> vector<8x96xf32>
    %c0_227 = arith.constant 0 : index
    %c0_228 = arith.constant 0 : index
    %720 = vector.load %arg16[%c0_227, %c0_228] : memref<128x128xf32, #tpu.memory_space<vmem>>, vector<128x128xf32>
    %cst_229 = arith.constant dense<0.000000e+00> : vector<8x128xf32>
    %721 = tpu.matmul %659, %720, %cst_229 {dimension_numbers = #tpu.dot_dimension_numbers<[1], [0], [0], [1], [0, 0, 1, 1], [], []>} : vector<8x128xf32>, vector<128x128xf32>, vector<8x128xf32> -> vector<8x128xf32>
    %c0_230 = arith.constant 0 : index
    %c0_231 = arith.constant 0 : index
    %722 = vector.load %arg17[%c0_230, %c0_231] : memref<96x128xf32, #tpu.memory_space<vmem>>, vector<96x128xf32>
    %cst_232 = arith.constant dense<0.000000e+00> : vector<8x128xf32>
    %723 = tpu.matmul %719, %722, %cst_232 {dimension_numbers = #tpu.dot_dimension_numbers<[1], [0], [0], [1], [0, 0, 1, 1], [], []>} : vector<8x96xf32>, vector<96x128xf32>, vector<8x128xf32> -> vector<8x128xf32>
    %724 = arith.addf %721, %723 : vector<8x128xf32>
    %725 = vector.broadcast %18 : vector<1x128xf32> to vector<8x128xf32>
    %726 = arith.addf %724, %725 : vector<8x128xf32>
    %727 = arith.index_cast %c7_i32 : i32 to index
    %c0_233 = arith.constant 0 : index
    %c0_234 = arith.constant 0 : index
    %728 = vector.load %arg19[%727, %c0_233, %c0_234] : memref<8x8x128xf32, #tpu.memory_space<vmem>>, vector<1x8x128xf32>
    %729 = vector.shape_cast %728 : vector<1x8x128xf32> to vector<8x128xf32>
    %730 = vector.shape_cast %726 : vector<8x128xf32> to vector<1x8x128xf32>
    tpu.vector_store %arg19[%727, %c0_233, %c0_234], %730 {strides = array<i32>} : memref<8x8x128xf32, #tpu.memory_space<vmem>>, vector<1x8x128xf32>,
    %c24_i32_235 = arith.constant 24 : i32
    %731 = vector.broadcast %c24_i32_235 : i32 to vector<8x128xi32>
    %732 = arith.cmpi slt, %19, %731 : vector<8x128xi32>
    %733 = vector.broadcast %cst_35 : f32 to vector<8x128xf32>
    %734 = arith.select %732, %726, %733 : vector<8x128xi1>, vector<8x128xf32>
    %cst_236 = arith.constant dense<0xFF800000> : vector<8xf32>
    %735 = vector.multi_reduction <maximumf>, %734, %cst_236 [1] : vector<8x128xf32> to vector<8xf32>
    %736 = vector.shape_cast %735 : vector<8xf32> to vector<8x1xf32>
    %737 = vector.broadcast %736 : vector<8x1xf32> to vector<8x128xf32>
    %738 = arith.cmpf oeq, %734, %737 : vector<8x128xf32>
    %c128_i32_237 = arith.constant 128 : i32
    %739 = vector.broadcast %c128_i32_237 : i32 to vector<8x128xi32>
    %740 = arith.select %738, %19, %739 : vector<8x128xi1>, vector<8x128xi32>
    %cst_238 = arith.constant dense<2147483647> : vector<8xi32>
    %741 = vector.multi_reduction <minsi>, %740, %cst_238 [1] : vector<8x128xi32> to vector<8xi32>
    %742 = vector.shape_cast %741 : vector<8xi32> to vector<8x1xi32>
    %743 = vector.broadcast %742 : vector<8x1xi32> to vector<8x128xi32>
    %744 = arith.cmpi eq, %19, %743 : vector<8x128xi32>
    %745 = arith.extui %744 : vector<8x128xi1> to vector<8x128xi32>
    %746 = arith.sitofp %745 : vector<8x128xi32> to vector<8x128xf32>
    %747 = arith.index_cast %c7_i32 : i32 to index
    %748 = memref.load %arg0[%747] : memref<8xi32, #tpu.memory_space<smem>>
    %c0_i32_239 = arith.constant 0 : i32
    %749 = arith.cmpi ne, %748, %c0_i32_239 : i32
    %750 = arith.extui %749 : i1 to i32
    %751 = arith.sitofp %750 : i32 to f32
    %752 = arith.index_cast %c7_i32 : i32 to index
    %c0_240 = arith.constant 0 : index
    %c0_241 = arith.constant 0 : index
    %753 = vector.load %arg1[%752, %c0_240, %c0_241] : memref<8x8x1xi32, #tpu.memory_space<vmem>>, vector<1x8x1xi32>
    %754 = vector.shape_cast %753 : vector<1x8x1xi32> to vector<8x1xi32>
    %755 = vector.broadcast %754 : vector<8x1xi32> to vector<8x128xi32>
    %756 = arith.cmpi eq, %19, %755 : vector<8x128xi32>
    %757 = arith.extui %756 : vector<8x128xi1> to vector<8x128xi32>
    %758 = arith.sitofp %757 : vector<8x128xi32> to vector<8x128xf32>
    %759 = vector.broadcast %751 : f32 to vector<8x128xf32>
    %760 = arith.mulf %759, %758 : vector<8x128xf32>
    %cst_242 = arith.constant 1.000000e+00 : f32
    %761 = arith.subf %cst_242, %751 : f32
    %762 = vector.broadcast %761 : f32 to vector<8x128xf32>
    %763 = arith.mulf %762, %746 : vector<8x128xf32>
    %764 = arith.addf %760, %763 : vector<8x128xf32>
    %c7_i32_243 = arith.constant 7 : i32
    return
  }
}

</mosaic_0001>

<llo_original>
// kernel: seq2seq_forward.2
$region0: #{seq2seq_forward.2}
  #allocation0 [shape = 'u32[]', space=smem, size = 0x4, offset = 0x4, fixed_abs, tag = 'smem constant byte address 0x4 - core index']
  #allocation1 [shape = 'u32[144,128]{1,0:T(1,128)}', space=vmem, size = 0x12000, scoped, tag = 'internal scratch']
  #allocation2 [shape = 'f32[80,256]{1,0:T(8,128)}', space=vmem, size = 0x14000, scoped, tag = 'scratch operand']
  %s0 = inlined_call_operand.vmem [shape: s32[80,1], index: 0, kind: input, shape index: {}]
  %s1 = inlined_call_operand.vmem [shape: f32[32,16], index: 1, kind: input, shape index: {}]
  %s2 = inlined_call_operand.vmem [shape: f32[16,256], index: 2, kind: input, shape index: {}]
  %s3 = inlined_call_operand.vmem [shape: f32[1,256], index: 3, kind: input, shape index: {}]
  %s4 = inlined_call_operand.vmem [shape: f32[32,128], index: 4, kind: input, shape index: {}]
  %s5 = inlined_call_operand.vmem [shape: f32[32,128], index: 5, kind: input, shape index: {}]
  %s6 = inlined_call_operand.vmem [shape: f32[64,32], index: 6, kind: input, shape index: {}]
  %s7 = inlined_call_operand.vmem [shape: f32[1,32], index: 7, kind: input, shape index: {}]
  %s8 = inlined_call_operand.vmem [shape: f32[80,64], index: 8, kind: output, shape index: {0}]
  %s9 = inlined_call_operand.vmem [shape: f32[80,32], index: 9, kind: output, shape index: {1}]
  %s10 = inlined_call_operand.vmem [shape: f32[8,32], index: 10, kind: output, shape index: {2}]
  %s11 = inlined_call_operand.vmem [shape: f32[8,32], index: 11, kind: output, shape index: {3}]
  %s12 = inlined_call_operand.vmem [shape: f32[8,32], index: 12, kind: output, shape index: {4}]
  %s13 = inlined_call_operand.vmem [shape: f32[8,32], index: 13, kind: output, shape index: {5}]
  %14 = xla_tuple %s8, %s9, %s10, %s11, %s12, %s13
  %s15 = sld [smem:[#allocation0]]
  $region82: #{seq2seq_forward.2} parent=0
    _
  %s17 = ssub.s32 1, %s15
  %s18 = scalar_select 0, %s17, %s15
  // Predicated region
  $region2: #{seq2seq_forward.2} parent=0 // pred_check
    _
  $region3: #{seq2seq_forward.2} parent=0 // pred_check_branch
    %20 = sbr.rel (0) target = $region5
  $region4: #{seq2seq_forward.2} parent=0 // pred_region
    _
  $region5: #{seq2seq_forward.2} parent=0 // pred_fallthru
    _
  // Predicated region
  $region6: #{seq2seq_forward.2} parent=0 // pred_check
    _
  $region7: #{seq2seq_forward.2} parent=0 // pred_check_branch
    %22 = sbr.rel (0) target = $region9
  $region8: #{seq2seq_forward.2} parent=0 // pred_region
    _
  $region9: #{seq2seq_forward.2} parent=0 // pred_fallthru
    _
  // Predicated region
  $region10: #{seq2seq_forward.2} parent=0 // pred_check
    _
  $region11: #{seq2seq_forward.2} parent=0 // pred_check_branch
    %24 = sbr.rel (0) target = $region13
  $region12: #{seq2seq_forward.2} parent=0 // pred_region
    _
  $region13: #{seq2seq_forward.2} parent=0 // pred_fallthru
    _
  // Predicated region
  $region14: #{seq2seq_forward.2} parent=0 // pred_check
    _
  $region15: #{seq2seq_forward.2} parent=0 // pred_check_branch
    %26 = sbr.rel (0) target = $region17
  $region16: #{seq2seq_forward.2} parent=0 // pred_region
    _
  $region17: #{seq2seq_forward.2} parent=0 // pred_fallthru
    _
  // Predicated region
  $region18: #{seq2seq_forward.2} parent=0 // pred_check
    _
  $region19: #{seq2seq_forward.2} parent=0 // pred_check_branch
    %28 = sbr.rel (0) target = $region21
  $region20: #{seq2seq_forward.2} parent=0 // pred_region
    _
  $region21: #{seq2seq_forward.2} parent=0 // pred_fallthru
    _
  // Predicated region
  $region22: #{seq2seq_forward.2} parent=0 // pred_check
    _
  $region23: #{seq2seq_forward.2} parent=0 // pred_check_branch
    %30 = sbr.rel (0) target = $region25
  $region24: #{seq2seq_forward.2} parent=0 // pred_region
    _
  $region25: #{seq2seq_forward.2} parent=0 // pred_fallthru
    _
  // Predicated region
  $region26: #{seq2seq_forward.2} parent=0 // pred_check
    _
  $region27: #{seq2seq_forward.2} parent=0 // pred_check_branch
    %32 = sbr.rel (0) target = $region29
  $region28: #{seq2seq_forward.2} parent=0 // pred_region
    _
  $region29: #{seq2seq_forward.2} parent=0 // pred_fallthru
    _
  // Predicated region
  $region30: #{seq2seq_forward.2} parent=0 // pred_check
    _
  $region31: #{seq2seq_forward.2} parent=0 // pred_check_branch
    %34 = sbr.rel (0) target = $region33
  $region32: #{seq2seq_forward.2} parent=0 // pred_region
    _
  $region33: #{seq2seq_forward.2} parent=0 // pred_fallthru
    _
  %v35 = vlaneseq
  %v36 = vand.u32 %v35, 127
  %v37 = vld [vmem:[%s0] sm:$0xff]
  %v38 = vld [vmem:[%s0 + $0x8] sm:$0xff]
  %v39 = vld [vmem:[%s0 + $0x10] sm:$0xff]
  %v40 = vld [vmem:[%s0 + $0x18] sm:$0xff]
  %v41 = vld [vmem:[%s0 + $0x20] sm:$0xff]
  %v42 = vld [vmem:[%s0 + $0x28] sm:$0xff]
  %v43 = vld [vmem:[%s0 + $0x30] sm:$0xff]
  %v44 = vld [vmem:[%s0 + $0x38] sm:$0xff]
  %v45 = vld [vmem:[%s0 + $0x40] sm:$0xff]
  %v46 = vld [vmem:[%s0 + $0x48] sm:$0xff]
  %47 = vset.pattern.permute.xlu0 0
  %48 = vperm.xlu0 %47, %v37
  %v49 = vpop.permute.xlu0 %48
  %50 = vset.pattern.permute.xlu0 0
  %51 = vperm.xlu0 %50, %v38
  %v52 = vpop.permute.xlu0 %51
  %53 = vset.pattern.permute.xlu0 0
  %54 = vperm.xlu0 %53, %v39
  %v55 = vpop.permute.xlu0 %54
  %56 = vset.pattern.permute.xlu0 0
  %57 = vperm.xlu0 %56, %v40
  %v58 = vpop.permute.xlu0 %57
  %59 = vset.pattern.permute.xlu0 0
  %60 = vperm.xlu0 %59, %v41
  %v61 = vpop.permute.xlu0 %60
  %62 = vset.pattern.permute.xlu0 0
  %63 = vperm.xlu0 %62, %v42
  %v64 = vpop.permute.xlu0 %63
  %65 = vset.pattern.permute.xlu0 0
  %66 = vperm.xlu0 %65, %v43
  %v67 = vpop.permute.xlu0 %66
  %68 = vset.pattern.permute.xlu0 0
  %69 = vperm.xlu0 %68, %v44
  %v70 = vpop.permute.xlu0 %69
  %71 = vset.pattern.permute.xlu0 0
  %72 = vperm.xlu0 %71, %v45
  %v73 = vpop.permute.xlu0 %72
  %74 = vset.pattern.permute.xlu0 0
  %75 = vperm.xlu0 %74, %v46
  %v76 = vpop.permute.xlu0 %75
  %vm77 = vcmp.eq.s32.totalorder %v36, %v49
  %vm78 = vcmp.eq.s32.totalorder %v36, %v52
  %vm79 = vcmp.eq.s32.totalorder %v36, %v55
  %vm80 = vcmp.eq.s32.totalorder %v36, %v58
  %vm81 = vcmp.eq.s32.totalorder %v36, %v61
  %vm82 = vcmp.eq.s32.totalorder %v36, %v64
  %vm83 = vcmp.eq.s32.totalorder %v36, %v67
  %vm84 = vcmp.eq.s32.totalorder %v36, %v70
  %vm85 = vcmp.eq.s32.totalorder %v36, %v73
  %vm86 = vcmp.eq.s32.totalorder %v36, %v76
  %v87 = vsel %vm77, 1, 0
  %v88 = vsel %vm78, 1, 0
  %v89 = vsel %vm79, 1, 0
  %v90 = vsel %vm80, 1, 0
  %v91 = vsel %vm81, 1, 0
  %v92 = vsel %vm82, 1, 0
  %v93 = vsel %vm83, 1, 0
  %v94 = vsel %vm84, 1, 0
  %v95 = vsel %vm85, 1, 0
  %v96 = vsel %vm86, 1, 0
  %v97 = vcvt.s32.f32 %v87
  %v98 = vcvt.s32.f32 %v88
  %v99 = vcvt.s32.f32 %v89
  %v100 = vcvt.s32.f32 %v90
  %v101 = vcvt.s32.f32 %v91
  %v102 = vcvt.s32.f32 %v92
  %v103 = vcvt.s32.f32 %v93
  %v104 = vcvt.s32.f32 %v94
  %v105 = vcvt.s32.f32 %v95
  %v106 = vcvt.s32.f32 %v96
  %v107 = vld [vmem:[%s1] sm:$0xff]
  %v108 = vld [vmem:[%s1 + $0x8] sm:$0xff]
  %v109 = vld [vmem:[%s1 + $0x10] sm:$0xff]
  %v110 = vld [vmem:[%s1 + $0x18] sm:$0xff]
  %vm111 = vcmask 261120
  %v113 = vsel %vm111, %v97, 0
  %v116 = vsel %vm111, %v98, 0
  %v119 = vsel %vm111, %v99, 0
  %v122 = vsel %vm111, %v100, 0
  %v125 = vsel %vm111, %v101, 0
  %v128 = vsel %vm111, %v102, 0
  %v131 = vsel %vm111, %v103, 0
  %v134 = vsel %vm111, %v104, 0
  %v137 = vsel %vm111, %v105, 0
  %v140 = vsel %vm111, %v106, 0
  %142 = vmatprep.subr.mxu0 0.0
  %143 = vmatpush1.msra.mxu0 0.0
  %144 = vmatprep.subr.mxu0 0.0
  %145 = vmatpush1.msra.mxu0 0.0
  %146 = vmatprep.subr.mxu0 0.0
  %147 = vmatpush1.msra.mxu0 0.0
  %148 = vmatprep.subr.mxu0 0.0
  %149 = vmatpush1.msra.mxu0 0.0
  %150 = vmatprep.subr.mxu0 0.0
  %151 = vmatpush1.msra.mxu0 0.0
  %152 = vmatprep.subr.mxu0 0.0
  %153 = vmatpush1.msra.mxu0 0.0
  %154 = vmatprep.subr.mxu0 0.0
  %155 = vmatpush1.msra.mxu0 0.0
  %156 = vmatprep.subr.mxu0 0.0
  %157 = vmatpush1.msra.mxu0 0.0
  %158 = vmatprep.subr.mxu0 0.0
  %159 = vmatpush1.msra.mxu0 0.0
  %160 = vmatprep.subr.mxu0 0.0
  %161 = vmatpush1.msra.mxu0 0.0
  %162 = vmatprep.subr.mxu0 0.0
  %163 = vmatpush1.msra.mxu0 0.0
  %164 = vmatprep.subr.mxu0 0.0
  %165 = vmatpush1.msra.mxu0 0.0
  %166 = vmatprep.subr.mxu0 0.0
  %167 = vmatpush1.msra.mxu0 %v110
  %168 = vmatprep.subr.mxu0 0.0
  %169 = vmatpush1.msra.mxu0 %v109
  %170 = vmatprep.subr.mxu0 0.0
  %171 = vmatpush1.msra.mxu0 %v108
  %172 = vmatprep.subr.mxu0 0.0
  %173 = vmatpush1.msra.mxu0 %v107
  %174 = vmatprep.subr.mxu0 0.0
  %175 = vmatpush2.msra.mxu0 0.0
  %176 = vmatprep.subr.mxu0 0.0
  %177 = vmatpush2.msra.mxu0 0.0
  %178 = vmatprep.subr.mxu0 0.0
  %179 = vmatpush2.msra.mxu0 0.0
  %180 = vmatprep.subr.mxu0 0.0
  %181 = vmatpush2.msra.mxu0 0.0
  %182 = vmatprep.subr.mxu0 0.0
  %183 = vmatpush2.msra.mxu0 0.0
  %184 = vmatprep.subr.mxu0 0.0
  %185 = vmatpush2.msra.mxu0 0.0
  %186 = vmatprep.subr.mxu0 0.0
  %187 = vmatpush2.msra.mxu0 0.0
  %188 = vmatprep.subr.mxu0 0.0
  %189 = vmatpush2.msra.mxu0 0.0
  %190 = vmatprep.subr.mxu0 0.0
  %191 = vmatpush2.msra.mxu0 0.0
  %192 = vmatprep.subr.mxu0 0.0
  %193 = vmatpush2.msra.mxu0 0.0
  %194 = vmatprep.subr.mxu0 0.0
  %195 = vmatpush2.msra.mxu0 0.0
  %196 = vmatprep.subr.mxu0 0.0
  %197 = vmatpush2.msra.mxu0 0.0
  %198 = vmatprep.subr.mxu0 0.0
  %199 = vmatpush2.msra.mxu0 0.0
  %200 = vmatprep.subr.mxu0 0.0
  %201 = vmatpush2.msra.mxu0 0.0
  %202 = vmatprep.subr.mxu0 0.0
  %203 = vmatpush2.msra.mxu0 0.0
  %204 = vmatprep.subr.mxu0 0.0
  %205 = vmatpush2.msra.mxu0 0.0
  %206 = vmatprep.mubr.f32.mxu0 0.0
  %207 = vmatmul.mubr.f32.gmra.mxu0 %v113
  %v208 = vpop.f32.mrf.mxu0
  %v209 = vadd.f32 0.0, %v208
  %v210 = vpop.f32.mrf.mxu0
  %211 = vmatprep.mubr.f32.mxu0 0.0
  %212 = vmatmul.mubr.f32.gmra.mxu0 %v116
  %v213 = vpop.f32.mrf.mxu0
  %v214 = vadd.f32 0.0, %v213
  %v215 = vpop.f32.mrf.mxu0
  %216 = vmatprep.mubr.f32.mxu0 0.0
  %217 = vmatmul.mubr.f32.gmra.mxu0 %v119
  %v218 = vpop.f32.mrf.mxu0
  %v219 = vadd.f32 0.0, %v218
  %v220 = vpop.f32.mrf.mxu0
  %221 = vmatprep.mubr.f32.mxu0 0.0
  %222 = vmatmul.mubr.f32.gmra.mxu0 %v122
  %v223 = vpop.f32.mrf.mxu0
  %v224 = vadd.f32 0.0, %v223
  %v225 = vpop.f32.mrf.mxu0
  %226 = vmatprep.mubr.f32.mxu0 0.0
  %227 = vmatmul.mubr.f32.gmra.mxu0 %v125
  %v228 = vpop.f32.mrf.mxu0
  %v229 = vadd.f32 0.0, %v228
  %v230 = vpop.f32.mrf.mxu0
  %231 = vmatprep.mubr.f32.mxu0 0.0
  %232 = vmatmul.mubr.f32.gmra.mxu0 %v128
  %v233 = vpop.f32.mrf.mxu0
  %v234 = vadd.f32 0.0, %v233
  %v235 = vpop.f32.mrf.mxu0
  %236 = vmatprep.mubr.f32.mxu0 0.0
  %237 = vmatmul.mubr.f32.gmra.mxu0 %v131
  %v238 = vpop.f32.mrf.mxu0
  %v239 = vadd.f32 0.0, %v238
  %v240 = vpop.f32.mrf.mxu0
  %241 = vmatprep.mubr.f32.mxu0 0.0
  %242 = vmatmul.mubr.f32.gmra.mxu0 %v134
  %v243 = vpop.f32.mrf.mxu0
  %v244 = vadd.f32 0.0, %v243
  %v245 = vpop.f32.mrf.mxu0
  %246 = vmatprep.mubr.f32.mxu0 0.0
  %247 = vmatmul.mubr.f32.gmra.mxu0 %v137
  %v248 = vpop.f32.mrf.mxu0
  %v249 = vadd.f32 0.0, %v248
  %v250 = vpop.f32.mrf.mxu0
  %251 = vmatprep.mubr.f32.mxu0 0.0
  %252 = vmatmul.mubr.f32.gmra.mxu0 %v140
  %v253 = vpop.f32.mrf.mxu0
  %v254 = vadd.f32 0.0, %v253
  %v255 = vpop.f32.mrf.mxu0
  %256 = vdwg.mxu0
  %v257 = vld [vmem:[%s2] sm:$0xff]
  %v258 = vld [vmem:[%s2 + $0x8] sm:$0xff]
  %v259 = vld [vmem:[%s2 + $0x10] sm:$0xff]
  %v260 = vld [vmem:[%s2 + $0x18] sm:$0xff]
  %v261 = vld [vmem:[%s3] sm:$0x3]
  %v263 = vlaneseq
  %v264 = vshrl.u32 %v263, 7
  %v265 = vsub.s32 0, %v264
  %v266 = vrot.slane %v261, %v265
  %v267 = vlaneseq
  %v268 = vshrl.u32 %v267, 7
  %v269 = vsub.s32 1, %v268
  %v270 = vrot.slane %v261, %v269
  %vm273 = vcmask 130048
  %v275 = vsel %vm273, %v209, 0
  %v278 = vsel %vm273, %v214, 0
  %v281 = vsel %vm273, %v219, 0
  %v284 = vsel %vm273, %v224, 0
  %v287 = vsel %vm273, %v229, 0
  %v290 = vsel %vm273, %v234, 0
  %v293 = vsel %vm273, %v239, 0
  %v296 = vsel %vm273, %v244, 0
  %v299 = vsel %vm273, %v249, 0
  %v302 = vsel %vm273, %v254, 0
  %304 = vmatprep.subr.mxu0 0.0
  %305 = vmatpush1.msra.mxu0 0.0
  %306 = vmatprep.subr.mxu0 0.0
  %307 = vmatpush1.msra.mxu0 0.0
  %308 = vmatprep.subr.mxu0 0.0
  %309 = vmatpush1.msra.mxu0 0.0
  %310 = vmatprep.subr.mxu0 0.0
  %311 = vmatpush1.msra.mxu0 0.0
  %312 = vmatprep.subr.mxu0 0.0
  %313 = vmatpush1.msra.mxu0 0.0
  %314 = vmatprep.subr.mxu0 0.0
  %315 = vmatpush1.msra.mxu0 0.0
  %316 = vmatprep.subr.mxu0 0.0
  %317 = vmatpush1.msra.mxu0 0.0
  %318 = vmatprep.subr.mxu0 0.0
  %319 = vmatpush1.msra.mxu0 0.0
  %320 = vmatprep.subr.mxu0 0.0
  %321 = vmatpush1.msra.mxu0 0.0
  %322 = vmatprep.subr.mxu0 0.0
  %323 = vmatpush1.msra.mxu0 0.0
  %324 = vmatprep.subr.mxu0 0.0
  %325 = vmatpush1.msra.mxu0 0.0
  %326 = vmatprep.subr.mxu0 0.0
  %327 = vmatpush1.msra.mxu0 0.0
  %328 = vmatprep.subr.mxu0 0.0
  %329 = vmatpush1.msra.mxu0 0.0
  %330 = vmatprep.subr.mxu0 0.0
  %331 = vmatpush1.msra.mxu0 0.0
  %332 = vmatprep.subr.mxu0 %v260
  %333 = vmatpush1.msra.mxu0 %v259
  %334 = vmatprep.subr.mxu0 %v258
  %335 = vmatpush1.msra.mxu0 %v257
  %336 = vmatprep.subr.mxu0 0.0
  %337 = vmatpush2.msra.mxu0 0.0
  %338 = vmatprep.subr.mxu0 0.0
  %339 = vmatpush2.msra.mxu0 0.0
  %340 = vmatprep.subr.mxu0 0.0
  %341 = vmatpush2.msra.mxu0 0.0
  %342 = vmatprep.subr.mxu0 0.0
  %343 = vmatpush2.msra.mxu0 0.0
  %344 = vmatprep.subr.mxu0 0.0
  %345 = vmatpush2.msra.mxu0 0.0
  %346 = vmatprep.subr.mxu0 0.0
  %347 = vmatpush2.msra.mxu0 0.0
  %348 = vmatprep.subr.mxu0 0.0
  %349 = vmatpush2.msra.mxu0 0.0
  %350 = vmatprep.subr.mxu0 0.0
  %351 = vmatpush2.msra.mxu0 0.0
  %352 = vmatprep.subr.mxu0 0.0
  %353 = vmatpush2.msra.mxu0 0.0
  %354 = vmatprep.subr.mxu0 0.0
  %355 = vmatpush2.msra.mxu0 0.0
  %356 = vmatprep.subr.mxu0 0.0
  %357 = vmatpush2.msra.mxu0 0.0
  %358 = vmatprep.subr.mxu0 0.0
  %359 = vmatpush2.msra.mxu0 0.0
  %360 = vmatprep.subr.mxu0 0.0
  %361 = vmatpush2.msra.mxu0 0.0
  %362 = vmatprep.subr.mxu0 0.0
  %363 = vmatpush2.msra.mxu0 0.0
  %364 = vmatprep.subr.mxu0 0.0
  %365 = vmatpush2.msra.mxu0 0.0
  %366 = vmatprep.subr.mxu0 0.0
  %367 = vmatpush2.msra.mxu0 0.0
  %368 = vmatprep.mubr.f32.mxu0 0.0
  %369 = vmatmul.mubr.f32.gmra.mxu0 %v275
  %v370 = vpop.f32.mrf.mxu0
  %v371 = vadd.f32 %v266, %v370
  %v372 = vpop.f32.mrf.mxu0
  %v373 = vadd.f32 %v270, %v372
  %374 = vmatprep.mubr.f32.mxu0 0.0
  %375 = vmatmul.mubr.f32.gmra.mxu0 %v278
  %v376 = vpop.f32.mrf.mxu0
  %v377 = vadd.f32 %v266, %v376
  %v378 = vpop.f32.mrf.mxu0
  %v379 = vadd.f32 %v270, %v378
  %380 = vmatprep.mubr.f32.mxu0 0.0
  %381 = vmatmul.mubr.f32.gmra.mxu0 %v281
  %v382 = vpop.f32.mrf.mxu0
  %v383 = vadd.f32 %v266, %v382
  %v384 = vpop.f32.mrf.mxu0
  %v385 = vadd.f32 %v270, %v384
  %386 = vmatprep.mubr.f32.mxu0 0.0
  %387 = vmatmul.mubr.f32.gmra.mxu0 %v284
  %v388 = vpop.f32.mrf.mxu0
  %v389 = vadd.f32 %v266, %v388
  %v390 = vpop.f32.mrf.mxu0
  %v391 = vadd.f32 %v270, %v390
  %392 = vmatprep.mubr.f32.mxu0 0.0
  %393 = vmatmul.mubr.f32.gmra.mxu0 %v287
  %v394 = vpop.f32.mrf.mxu0
  %v395 = vadd.f32 %v266, %v394
  %v396 = vpop.f32.mrf.mxu0
  %v397 = vadd.f32 %v270, %v396
  %398 = vmatprep.mubr.f32.mxu0 0.0
  %399 = vmatmul.mubr.f32.gmra.mxu0 %v290
  %v400 = vpop.f32.mrf.mxu0
  %v401 = vadd.f32 %v266, %v400
  %v402 = vpop.f32.mrf.mxu0
  %v403 = vadd.f32 %v270, %v402
  %404 = vmatprep.mubr.f32.mxu0 0.0
  %405 = vmatmul.mubr.f32.gmra.mxu0 %v293
  %v406 = vpop.f32.mrf.mxu0
  %v407 = vadd.f32 %v266, %v406
  %v408 = vpop.f32.mrf.mxu0
  %v409 = vadd.f32 %v270, %v408
  %410 = vmatprep.mubr.f32.mxu0 0.0
  %411 = vmatmul.mubr.f32.gmra.mxu0 %v296
  %v412 = vpop.f32.mrf.mxu0
  %v413 = vadd.f32 %v266, %v412
  %v414 = vpop.f32.mrf.mxu0
  %v415 = vadd.f32 %v270, %v414
  %416 = vmatprep.mubr.f32.mxu0 0.0
  %417 = vmatmul.mubr.f32.gmra.mxu0 %v299
  %v418 = vpop.f32.mrf.mxu0
  %v419 = vadd.f32 %v266, %v418
  %v420 = vpop.f32.mrf.mxu0
  %v421 = vadd.f32 %v270, %v420
  %422 = vmatprep.mubr.f32.mxu0 0.0
  %423 = vmatmul.mubr.f32.gmra.mxu0 %v302
  %v424 = vpop.f32.mrf.mxu0
  %v425 = vadd.f32 %v266, %v424
  %v426 = vpop.f32.mrf.mxu0
  %v427 = vadd.f32 %v270, %v426
  %428 = vdwg.mxu0
  %429 = vst [vmem:[#allocation2] sm:$0xff] %v371
  %430 = vst [vmem:[#allocation2 + $0x8] sm:$0xff] %v373
  %431 = vst [vmem:[#allocation2 + $0x10] sm:$0xff] %v377
  %432 = vst [vmem:[#allocation2 + $0x18] sm:$0xff] %v379
  %433 = vst [vmem:[#allocation2 + $0x20] sm:$0xff] %v383
  %434 = vst [vmem:[#allocation2 + $0x28] sm:$0xff] %v385
  %435 = vst [vmem:[#allocation2 + $0x30] sm:$0xff] %v389
  %436 = vst [vmem:[#allocation2 + $0x38] sm:$0xff] %v391
  %437 = vst [vmem:[#allocation2 + $0x40] sm:$0xff] %v395
  %438 = vst [vmem:[#allocation2 + $0x48] sm:$0xff] %v397
  %439 = vst [vmem:[#allocation2 + $0x50] sm:$0xff] %v401
  %440 = vst [vmem:[#allocation2 + $0x58] sm:$0xff] %v403
  %441 = vst [vmem:[#allocation2 + $0x60] sm:$0xff] %v407
  %442 = vst [vmem:[#allocation2 + $0x68] sm:$0xff] %v409
  %443 = vst [vmem:[#allocation2 + $0x70] sm:$0xff] %v413
  %444 = vst [vmem:[#allocation2 + $0x78] sm:$0xff] %v415
  %445 = vst [vmem:[#allocation2 + $0x80] sm:$0xff] %v419
  %446 = vst [vmem:[#allocation2 + $0x88] sm:$0xff] %v421
  %447 = vst [vmem:[#allocation2 + $0x90] sm:$0xff] %v425
  %448 = vst [vmem:[#allocation2 + $0x98] sm:$0xff] %v427
  %v449 = vld [vmem:[%s4] sm:$0xff]
  %v450 = vld [vmem:[%s4 + $0x8] sm:$0xff]
  %v451 = vld [vmem:[%s4 + $0x10] sm:$0xff]
  %v452 = vld [vmem:[%s4 + $0x18] sm:$0xff]
  %v453 = vld [vmem:[%s5] sm:$0xff]
  %v454 = vld [vmem:[%s5 + $0x8] sm:$0xff]
  %v455 = vld [vmem:[%s5 + $0x10] sm:$0xff]
  %v456 = vld [vmem:[%s5 + $0x18] sm:$0xff]
  %s457 = smul.u32 0, 2
  %s458 = smul.addr %s457, 8
  %s459 = scalar_lea.vmem [#allocation2], %s458
  %v460 = vld [vmem:[%s459] sm:$0xff]
  %v462 = vsel %vm111, 0.0, 0
  %464 = vmatprep.subr.mxu0 0.0
  %465 = vmatpush1.msra.mxu0 0.0
  %466 = vmatprep.subr.mxu0 0.0
  %467 = vmatpush1.msra.mxu0 0.0
  %468 = vmatprep.subr.mxu0 0.0
  %469 = vmatpush1.msra.mxu0 0.0
  %470 = vmatprep.subr.mxu0 0.0
  %471 = vmatpush1.msra.mxu0 0.0
  %472 = vmatprep.subr.mxu0 0.0
  %473 = vmatpush1.msra.mxu0 0.0
  %474 = vmatprep.subr.mxu0 0.0
  %475 = vmatpush1.msra.mxu0 0.0
  %476 = vmatprep.subr.mxu0 0.0
  %477 = vmatpush1.msra.mxu0 0.0
  %478 = vmatprep.subr.mxu0 0.0
  %479 = vmatpush1.msra.mxu0 0.0
  %480 = vmatprep.subr.mxu0 0.0
  %481 = vmatpush1.msra.mxu0 0.0
  %482 = vmatprep.subr.mxu0 0.0
  %483 = vmatpush1.msra.mxu0 0.0
  %484 = vmatprep.subr.mxu0 0.0
  %485 = vmatpush1.msra.mxu0 0.0
  %486 = vmatprep.subr.mxu0 0.0
  %487 = vmatpush1.msra.mxu0 0.0
  %488 = vmatprep.subr.mxu0 0.0
  %489 = vmatpush1.msra.mxu0 %v452
  %490 = vmatprep.subr.mxu0 0.0
  %491 = vmatpush1.msra.mxu0 %v451
  %492 = vmatprep.subr.mxu0 0.0
  %493 = vmatpush1.msra.mxu0 %v450
  %494 = vmatprep.subr.mxu0 0.0
  %495 = vmatpush1.msra.mxu0 %v449
  %496 = vmatprep.subr.mxu0 0.0
  %497 = vmatpush2.msra.mxu0 0.0
  %498 = vmatprep.subr.mxu0 0.0
  %499 = vmatpush2.msra.mxu0 0.0
  %500 = vmatprep.subr.mxu0 0.0
  %501 = vmatpush2.msra.mxu0 0.0
  %502 = vmatprep.subr.mxu0 0.0
  %503 = vmatpush2.msra.mxu0 0.0
  %504 = vmatprep.subr.mxu0 0.0
  %505 = vmatpush2.msra.mxu0 0.0
  %506 = vmatprep.subr.mxu0 0.0
  %507 = vmatpush2.msra.mxu0 0.0
  %508 = vmatprep.subr.mxu0 0.0
  %509 = vmatpush2.msra.mxu0 0.0
  %510 = vmatprep.subr.mxu0 0.0
  %511 = vmatpush2.msra.mxu0 0.0
  %512 = vmatprep.subr.mxu0 0.0
  %513 = vmatpush2.msra.mxu0 0.0
  %514 = vmatprep.subr.mxu0 0.0
  %515 = vmatpush2.msra.mxu0 0.0
  %516 = vmatprep.subr.mxu0 0.0
  %517 = vmatpush2.msra.mxu0 0.0
  %518 = vmatprep.subr.mxu0 0.0
  %519 = vmatpush2.msra.mxu0 0.0
  %520 = vmatprep.subr.mxu0 0.0
  %521 = vmatpush2.msra.mxu0 0.0
  %522 = vmatprep.subr.mxu0 0.0
  %523 = vmatpush2.msra.mxu0 0.0
  %524 = vmatprep.subr.mxu0 0.0
  %525 = vmatpush2.msra.mxu0 0.0
  %526 = vmatprep.subr.mxu0 0.0
  %527 = vmatpush2.msra.mxu0 0.0
  %528 = vmatprep.mubr.f32.mxu0 0.0
  %529 = vmatmul.mubr.f32.gmra.mxu0 %v462
  %v530 = vpop.f32.mrf.mxu0
  %v531 = vadd.f32 0.0, %v530
  %v532 = vpop.f32.mrf.mxu0
  %533 = vdwg.mxu0
  %v534 = vadd.f32 %v460, %v531
  %v535 = vxor.u32 %v534, 2147483648
  %v536 = vmul.f32 %v535, 1.442695
  %v537 = vpow.pop %v536
  %v538 = vadd.f32 %v537, 1.0
  %v539 = vrcp.pop %v538
  %v540 = vmul.f32 1.0, %v539
  %v541 = vtanh.pop %v534
  %v542 = vmul.f32 %v540, 0.0
  %544 = vrot.lane.b32.xlu0 %v541, 64
  %v545 = vpop.permute.xlu0 %544
  %v547 = vmul.f32 %v540, %v545
  %549 = vrot.lane.b32.xlu0 %v547, 32
  %v550 = vpop.permute.xlu0 %549
  %v552 = vadd.f32 %v542, %v550
  %v553 = vtanh.pop %v552
  %555 = vrot.lane.b32.xlu0 %v553, 64
  %v556 = vpop.permute.xlu0 %555
  %v558 = vmul.f32 %v540, %v556
  %s559 = smul.u32 9, 2
  %s560 = smul.addr %s559, 8
  %s561 = scalar_lea.vmem [#allocation2], %s560
  %v562 = vld [vmem:[%s561 + $0x8] sm:$0xff]
  %563 = vmatprep.subr.mxu0 0.0
  %564 = vmatpush1.msra.mxu0 0.0
  %565 = vmatprep.subr.mxu0 0.0
  %566 = vmatpush1.msra.mxu0 0.0
  %567 = vmatprep.subr.mxu0 0.0
  %568 = vmatpush1.msra.mxu0 0.0
  %569 = vmatprep.subr.mxu0 0.0
  %570 = vmatpush1.msra.mxu0 0.0
  %571 = vmatprep.subr.mxu0 0.0
  %572 = vmatpush1.msra.mxu0 0.0
  %573 = vmatprep.subr.mxu0 0.0
  %574 = vmatpush1.msra.mxu0 0.0
  %575 = vmatprep.subr.mxu0 0.0
  %576 = vmatpush1.msra.mxu0 0.0
  %577 = vmatprep.subr.mxu0 0.0
  %578 = vmatpush1.msra.mxu0 0.0
  %579 = vmatprep.subr.mxu0 0.0
  %580 = vmatpush1.msra.mxu0 0.0
  %581 = vmatprep.subr.mxu0 0.0
  %582 = vmatpush1.msra.mxu0 0.0
  %583 = vmatprep.subr.mxu0 0.0
  %584 = vmatpush1.msra.mxu0 0.0
  %585 = vmatprep.subr.mxu0 0.0
  %586 = vmatpush1.msra.mxu0 0.0
  %587 = vmatprep.subr.mxu0 0.0
  %588 = vmatpush1.msra.mxu0 %v456
  %589 = vmatprep.subr.mxu0 0.0
  %590 = vmatpush1.msra.mxu0 %v455
  %591 = vmatprep.subr.mxu0 0.0
  %592 = vmatpush1.msra.mxu0 %v454
  %593 = vmatprep.subr.mxu0 0.0
  %594 = vmatpush1.msra.mxu0 %v453
  %595 = vmatprep.subr.mxu0 0.0
  %596 = vmatpush2.msra.mxu0 0.0
  %597 = vmatprep.subr.mxu0 0.0
  %598 = vmatpush2.msra.mxu0 0.0
  %599 = vmatprep.subr.mxu0 0.0
  %600 = vmatpush2.msra.mxu0 0.0
  %601 = vmatprep.subr.mxu0 0.0
  %602 = vmatpush2.msra.mxu0 0.0
  %603 = vmatprep.subr.mxu0 0.0
  %604 = vmatpush2.msra.mxu0 0.0
  %605 = vmatprep.subr.mxu0 0.0
  %606 = vmatpush2.msra.mxu0 0.0
  %607 = vmatprep.subr.mxu0 0.0
  %608 = vmatpush2.msra.mxu0 0.0
  %609 = vmatprep.subr.mxu0 0.0
  %610 = vmatpush2.msra.mxu0 0.0
  %611 = vmatprep.subr.mxu0 0.0
  %612 = vmatpush2.msra.mxu0 0.0
  %613 = vmatprep.subr.mxu0 0.0
  %614 = vmatpush2.msra.mxu0 0.0
  %615 = vmatprep.subr.mxu0 0.0
  %616 = vmatpush2.msra.mxu0 0.0
  %617 = vmatprep.subr.mxu0 0.0
  %618 = vmatpush2.msra.mxu0 0.0
  %619 = vmatprep.subr.mxu0 0.0
  %620 = vmatpush2.msra.mxu0 0.0
  %621 = vmatprep.subr.mxu0 0.0
  %622 = vmatpush2.msra.mxu0 0.0
  %623 = vmatprep.subr.mxu0 0.0
  %624 = vmatpush2.msra.mxu0 0.0
  %625 = vmatprep.subr.mxu0 0.0
  %626 = vmatpush2.msra.mxu0 0.0
  %627 = vmatprep.mubr.f32.mxu0 0.0
  %628 = vmatmul.mubr.f32.gmra.mxu0 %v462
  %v629 = vpop.f32.mrf.mxu0
  %v630 = vadd.f32 0.0, %v629
  %v631 = vpop.f32.mrf.mxu0
  %632 = vdwg.mxu0
  %v633 = vadd.f32 %v562, %v630
  %v634 = vxor.u32 %v633, 2147483648
  %v635 = vmul.f32 %v634, 1.442695
  %v636 = vpow.pop %v635
  %v637 = vadd.f32 %v636, 1.0
  %v638 = vrcp.pop %v637
  %v639 = vmul.f32 1.0, %v638
  %v640 = vtanh.pop %v633
  %v641 = vmul.f32 %v639, 0.0
  %643 = vrot.lane.b32.xlu0 %v640, 64
  %v644 = vpop.permute.xlu0 %643
  %v646 = vmul.f32 %v639, %v644
  %648 = vrot.lane.b32.xlu0 %v646, 32
  %v649 = vpop.permute.xlu0 %648
  %v651 = vadd.f32 %v641, %v649
  %v652 = vtanh.pop %v651
  %654 = vrot.lane.b32.xlu0 %v652, 64
  %v655 = vpop.permute.xlu0 %654
  %v657 = vmul.f32 %v639, %v655
  %659 = vrot.lane.b32.xlu0 %v558, 32
  %v660 = vpop.permute.xlu0 %659
  %662 = vst.msk [vmem:[%s8] sm:$0xff] %vm111, %v660
  %664 = vrot.lane.b32.xlu0 %v657, 64
  %v665 = vpop.permute.xlu0 %664
  %s667 = scalar_lea.vmem %s8, 72
  %vm668 = vcmask 523520
  %669 = vst.msk [vmem:[%s667] sm:$0xff] %vm668, %v665
  %s670 = smul.u32 1, 2
  %s671 = smul.addr %s670, 8
  %s672 = scalar_lea.vmem [#allocation2], %s671
  %v673 = vld [vmem:[%s672] sm:$0xff]
  %v674 = vsel %vm111, %v660, 0
  %676 = vmatprep.subr.mxu0 0.0
  %677 = vmatpush1.msra.mxu0 0.0
  %678 = vmatprep.subr.mxu0 0.0
  %679 = vmatpush1.msra.mxu0 0.0
  %680 = vmatprep.subr.mxu0 0.0
  %681 = vmatpush1.msra.mxu0 0.0
  %682 = vmatprep.subr.mxu0 0.0
  %683 = vmatpush1.msra.mxu0 0.0
  %684 = vmatprep.subr.mxu0 0.0
  %685 = vmatpush1.msra.mxu0 0.0
  %686 = vmatprep.subr.mxu0 0.0
  %687 = vmatpush1.msra.mxu0 0.0
  %688 = vmatprep.subr.mxu0 0.0
  %689 = vmatpush1.msra.mxu0 0.0
  %690 = vmatprep.subr.mxu0 0.0
  %691 = vmatpush1.msra.mxu0 0.0
  %692 = vmatprep.subr.mxu0 0.0
  %693 = vmatpush1.msra.mxu0 0.0
  %694 = vmatprep.subr.mxu0 0.0
  %695 = vmatpush1.msra.mxu0 0.0
  %696 = vmatprep.subr.mxu0 0.0
  %697 = vmatpush1.msra.mxu0 0.0
  %698 = vmatprep.subr.mxu0 0.0
  %699 = vmatpush1.msra.mxu0 0.0
  %700 = vmatprep.subr.mxu0 0.0
  %701 = vmatpush1.msra.mxu0 %v452
  %702 = vmatprep.subr.mxu0 0.0
  %703 = vmatpush1.msra.mxu0 %v451
  %704 = vmatprep.subr.mxu0 0.0
  %705 = vmatpush1.msra.mxu0 %v450
  %706 = vmatprep.subr.mxu0 0.0
  %707 = vmatpush1.msra.mxu0 %v449
  %708 = vmatprep.subr.mxu0 0.0
  %709 = vmatpush2.msra.mxu0 0.0
  %710 = vmatprep.subr.mxu0 0.0
  %711 = vmatpush2.msra.mxu0 0.0
  %712 = vmatprep.subr.mxu0 0.0
  %713 = vmatpush2.msra.mxu0 0.0
  %714 = vmatprep.subr.mxu0 0.0
  %715 = vmatpush2.msra.mxu0 0.0
  %716 = vmatprep.subr.mxu0 0.0
  %717 = vmatpush2.msra.mxu0 0.0
  %718 = vmatprep.subr.mxu0 0.0
  %719 = vmatpush2.msra.mxu0 0.0
  %720 = vmatprep.subr.mxu0 0.0
  %721 = vmatpush2.msra.mxu0 0.0
  %722 = vmatprep.subr.mxu0 0.0
  %723 = vmatpush2.msra.mxu0 0.0
  %724 = vmatprep.subr.mxu0 0.0
  %725 = vmatpush2.msra.mxu0 0.0
  %726 = vmatprep.subr.mxu0 0.0
  %727 = vmatpush2.msra.mxu0 0.0
  %728 = vmatprep.subr.mxu0 0.0
  %729 = vmatpush2.msra.mxu0 0.0
  %730 = vmatprep.subr.mxu0 0.0
  %731 = vmatpush2.msra.mxu0 0.0
  %732 = vmatprep.subr.mxu0 0.0
  %733 = vmatpush2.msra.mxu0 0.0
  %734 = vmatprep.subr.mxu0 0.0
  %735 = vmatpush2.msra.mxu0 0.0
  %736 = vmatprep.subr.mxu0 0.0
  %737 = vmatpush2.msra.mxu0 0.0
  %738 = vmatprep.subr.mxu0 0.0
  %739 = vmatpush2.msra.mxu0 0.0
  %740 = vmatprep.mubr.f32.mxu0 0.0
  %741 = vmatmul.mubr.f32.gmra.mxu0 %v674
  %v742 = vpop.f32.mrf.mxu0
  %v743 = vadd.f32 0.0, %v742
  %v744 = vpop.f32.mrf.mxu0
  %745 = vdwg.mxu0
  %v746 = vadd.f32 %v673, %v743
  %v747 = vxor.u32 %v746, 2147483648
  %v748 = vmul.f32 %v747, 1.442695
  %v749 = vpow.pop %v748
  %v750 = vadd.f32 %v749, 1.0
  %v751 = vrcp.pop %v750
  %v752 = vmul.f32 1.0, %v751
  %v753 = vtanh.pop %v746
  %v754 = vmul.f32 %v752, %v552
  %756 = vrot.lane.b32.xlu0 %v753, 64
  %v757 = vpop.permute.xlu0 %756
  %v759 = vmul.f32 %v752, %v757
  %761 = vrot.lane.b32.xlu0 %v759, 32
  %v762 = vpop.permute.xlu0 %761
  %v764 = vadd.f32 %v754, %v762
  %v765 = vtanh.pop %v764
  %767 = vrot.lane.b32.xlu0 %v765, 64
  %v768 = vpop.permute.xlu0 %767
  %v770 = vmul.f32 %v752, %v768
  %s771 = smul.u32 8, 2
  %s772 = smul.addr %s771, 8
  %s773 = scalar_lea.vmem [#allocation2], %s772
  %v774 = vld [vmem:[%s773 + $0x8] sm:$0xff]
  %775 = vrot.lane.b32.xlu0 %v657, 32
  %v776 = vpop.permute.xlu0 %775
  %v777 = vsel %vm111, %v776, 0
  %779 = vmatprep.subr.mxu0 0.0
  %780 = vmatpush1.msra.mxu0 0.0
  %781 = vmatprep.subr.mxu0 0.0
  %782 = vmatpush1.msra.mxu0 0.0
  %783 = vmatprep.subr.mxu0 0.0
  %784 = vmatpush1.msra.mxu0 0.0
  %785 = vmatprep.subr.mxu0 0.0
  %786 = vmatpush1.msra.mxu0 0.0
  %787 = vmatprep.subr.mxu0 0.0
  %788 = vmatpush1.msra.mxu0 0.0
  %789 = vmatprep.subr.mxu0 0.0
  %790 = vmatpush1.msra.mxu0 0.0
  %791 = vmatprep.subr.mxu0 0.0
  %792 = vmatpush1.msra.mxu0 0.0
  %793 = vmatprep.subr.mxu0 0.0
  %794 = vmatpush1.msra.mxu0 0.0
  %795 = vmatprep.subr.mxu0 0.0
  %796 = vmatpush1.msra.mxu0 0.0
  %797 = vmatprep.subr.mxu0 0.0
  %798 = vmatpush1.msra.mxu0 0.0
  %799 = vmatprep.subr.mxu0 0.0
  %800 = vmatpush1.msra.mxu0 0.0
  %801 = vmatprep.subr.mxu0 0.0
  %802 = vmatpush1.msra.mxu0 0.0
  %803 = vmatprep.subr.mxu0 0.0
  %804 = vmatpush1.msra.mxu0 %v456
  %805 = vmatprep.subr.mxu0 0.0
  %806 = vmatpush1.msra.mxu0 %v455
  %807 = vmatprep.subr.mxu0 0.0
  %808 = vmatpush1.msra.mxu0 %v454
  %809 = vmatprep.subr.mxu0 0.0
  %810 = vmatpush1.msra.mxu0 %v453
  %811 = vmatprep.subr.mxu0 0.0
  %812 = vmatpush2.msra.mxu0 0.0
  %813 = vmatprep.subr.mxu0 0.0
  %814 = vmatpush2.msra.mxu0 0.0
  %815 = vmatprep.subr.mxu0 0.0
  %816 = vmatpush2.msra.mxu0 0.0
  %817 = vmatprep.subr.mxu0 0.0
  %818 = vmatpush2.msra.mxu0 0.0
  %819 = vmatprep.subr.mxu0 0.0
  %820 = vmatpush2.msra.mxu0 0.0
  %821 = vmatprep.subr.mxu0 0.0
  %822 = vmatpush2.msra.mxu0 0.0
  %823 = vmatprep.subr.mxu0 0.0
  %824 = vmatpush2.msra.mxu0 0.0
  %825 = vmatprep.subr.mxu0 0.0
  %826 = vmatpush2.msra.mxu0 0.0
  %827 = vmatprep.subr.mxu0 0.0
  %828 = vmatpush2.msra.mxu0 0.0
  %829 = vmatprep.subr.mxu0 0.0
  %830 = vmatpush2.msra.mxu0 0.0
  %831 = vmatprep.subr.mxu0 0.0
  %832 = vmatpush2.msra.mxu0 0.0
  %833 = vmatprep.subr.mxu0 0.0
  %834 = vmatpush2.msra.mxu0 0.0
  %835 = vmatprep.subr.mxu0 0.0
  %836 = vmatpush2.msra.mxu0 0.0
  %837 = vmatprep.subr.mxu0 0.0
  %838 = vmatpush2.msra.mxu0 0.0
  %839 = vmatprep.subr.mxu0 0.0
  %840 = vmatpush2.msra.mxu0 0.0
  %841 = vmatprep.subr.mxu0 0.0
  %842 = vmatpush2.msra.mxu0 0.0
  %843 = vmatprep.mubr.f32.mxu0 0.0
  %844 = vmatmul.mubr.f32.gmra.mxu0 %v777
  %v845 = vpop.f32.mrf.mxu0
  %v846 = vadd.f32 0.0, %v845
  %v847 = vpop.f32.mrf.mxu0
  %848 = vdwg.mxu0
  %v849 = vadd.f32 %v774, %v846
  %v850 = vxor.u32 %v849, 2147483648
  %v851 = vmul.f32 %v850, 1.442695
  %v852 = vpow.pop %v851
  %v853 = vadd.f32 %v852, 1.0
  %v854 = vrcp.pop %v853
  %v855 = vmul.f32 1.0, %v854
  %v856 = vtanh.pop %v849
  %v857 = vmul.f32 %v855, %v651
  %859 = vrot.lane.b32.xlu0 %v856, 64
  %v860 = vpop.permute.xlu0 %859
  %v862 = vmul.f32 %v855, %v860
  %864 = vrot.lane.b32.xlu0 %v862, 32
  %v865 = vpop.permute.xlu0 %864
  %v867 = vadd.f32 %v857, %v865
  %v868 = vtanh.pop %v867
  %870 = vrot.lane.b32.xlu0 %v868, 64
  %v871 = vpop.permute.xlu0 %870
  %v873 = vmul.f32 %v855, %v871
  %875 = vrot.lane.b32.xlu0 %v770, 32
  %v876 = vpop.permute.xlu0 %875
  %s878 = scalar_lea.vmem %s8, 8
  %879 = vst.msk [vmem:[%s878] sm:$0xff] %vm111, %v876
  %881 = vrot.lane.b32.xlu0 %v873, 64
  %v882 = vpop.permute.xlu0 %881
  %s884 = scalar_lea.vmem %s8, 64
  %885 = vst.msk [vmem:[%s884] sm:$0xff] %vm668, %v882
  %s886 = smul.u32 2, 2
  %s887 = smul.addr %s886, 8
  %s888 = scalar_lea.vmem [#allocation2], %s887
  %v889 = vld [vmem:[%s888] sm:$0xff]
  %v890 = vsel %vm111, %v876, 0
  %892 = vmatprep.subr.mxu0 0.0
  %893 = vmatpush1.msra.mxu0 0.0
  %894 = vmatprep.subr.mxu0 0.0
  %895 = vmatpush1.msra.mxu0 0.0
  %896 = vmatprep.subr.mxu0 0.0
  %897 = vmatpush1.msra.mxu0 0.0
  %898 = vmatprep.subr.mxu0 0.0
  %899 = vmatpush1.msra.mxu0 0.0
  %900 = vmatprep.subr.mxu0 0.0
  %901 = vmatpush1.msra.mxu0 0.0
  %902 = vmatprep.subr.mxu0 0.0
  %903 = vmatpush1.msra.mxu0 0.0
  %904 = vmatprep.subr.mxu0 0.0
  %905 = vmatpush1.msra.mxu0 0.0
  %906 = vmatprep.subr.mxu0 0.0
  %907 = vmatpush1.msra.mxu0 0.0
  %908 = vmatprep.subr.mxu0 0.0
  %909 = vmatpush1.msra.mxu0 0.0
  %910 = vmatprep.subr.mxu0 0.0
  %911 = vmatpush1.msra.mxu0 0.0
  %912 = vmatprep.subr.mxu0 0.0
  %913 = vmatpush1.msra.mxu0 0.0
  %914 = vmatprep.subr.mxu0 0.0
  %915 = vmatpush1.msra.mxu0 0.0
  %916 = vmatprep.subr.mxu0 0.0
  %917 = vmatpush1.msra.mxu0 %v452
  %918 = vmatprep.subr.mxu0 0.0
  %919 = vmatpush1.msra.mxu0 %v451
  %920 = vmatprep.subr.mxu0 0.0
  %921 = vmatpush1.msra.mxu0 %v450
  %922 = vmatprep.subr.mxu0 0.0
  %923 = vmatpush1.msra.mxu0 %v449
  %924 = vmatprep.subr.mxu0 0.0
  %925 = vmatpush2.msra.mxu0 0.0
  %926 = vmatprep.subr.mxu0 0.0
  %927 = vmatpush2.msra.mxu0 0.0
  %928 = vmatprep.subr.mxu0 0.0
  %929 = vmatpush2.msra.mxu0 0.0
  %930 = vmatprep.subr.mxu0 0.0
  %931 = vmatpush2.msra.mxu0 0.0
  %932 = vmatprep.subr.mxu0 0.0
  %933 = vmatpush2.msra.mxu0 0.0
  %934 = vmatprep.subr.mxu0 0.0
  %935 = vmatpush2.msra.mxu0 0.0
  %936 = vmatprep.subr.mxu0 0.0
  %937 = vmatpush2.msra.mxu0 0.0
  %938 = vmatprep.subr.mxu0 0.0
  %939 = vmatpush2.msra.mxu0 0.0
  %940 = vmatprep.subr.mxu0 0.0
  %941 = vmatpush2.msra.mxu0 0.0
  %942 = vmatprep.subr.mxu0 0.0
  %943 = vmatpush2.msra.mxu0 0.0
  %944 = vmatprep.subr.mxu0 0.0
  %945 = vmatpush2.msra.mxu0 0.0
  %946 = vmatprep.subr.mxu0 0.0
  %947 = vmatpush2.msra.mxu0 0.0
  %948 = vmatprep.subr.mxu0 0.0
  %949 = vmatpush2.msra.mxu0 0.0
  %950 = vmatprep.subr.mxu0 0.0
  %951 = vmatpush2.msra.mxu0 0.0
  %952 = vmatprep.subr.mxu0 0.0
  %953 = vmatpush2.msra.mxu0 0.0
  %954 = vmatprep.subr.mxu0 0.0
  %955 = vmatpush2.msra.mxu0 0.0
  %956 = vmatprep.mubr.f32.mxu0 0.0
  %957 = vmatmul.mubr.f32.gmra.mxu0 %v890
  %v958 = vpop.f32.mrf.mxu0
  %v959 = vadd.f32 0.0, %v958
  %v960 = vpop.f32.mrf.mxu0
  %961 = vdwg.mxu0
  %v962 = vadd.f32 %v889, %v959
  %v963 = vxor.u32 %v962, 2147483648
  %v964 = vmul.f32 %v963, 1.442695
  %v965 = vpow.pop %v964
  %v966 = vadd.f32 %v965, 1.0
  %v967 = vrcp.pop %v966
  %v968 = vmul.f32 1.0, %v967
  %v969 = vtanh.pop %v962
  %v970 = vmul.f32 %v968, %v764
  %972 = vrot.lane.b32.xlu0 %v969, 64
  %v973 = vpop.permute.xlu0 %972
  %v975 = vmul.f32 %v968, %v973
  %977 = vrot.lane.b32.xlu0 %v975, 32
  %v978 = vpop.permute.xlu0 %977
  %v980 = vadd.f32 %v970, %v978
  %v981 = vtanh.pop %v980
  %983 = vrot.lane.b32.xlu0 %v981, 64
  %v984 = vpop.permute.xlu0 %983
  %v986 = vmul.f32 %v968, %v984
  %s987 = smul.u32 7, 2
  %s988 = smul.addr %s987, 8
  %s989 = scalar_lea.vmem [#allocation2], %s988
  %v990 = vld [vmem:[%s989 + $0x8] sm:$0xff]
  %991 = vrot.lane.b32.xlu0 %v873, 32
  %v992 = vpop.permute.xlu0 %991
  %v993 = vsel %vm111, %v992, 0
  %995 = vmatprep.subr.mxu0 0.0
  %996 = vmatpush1.msra.mxu0 0.0
  %997 = vmatprep.subr.mxu0 0.0
  %998 = vmatpush1.msra.mxu0 0.0
  %999 = vmatprep.subr.mxu0 0.0
  %1000 = vmatpush1.msra.mxu0 0.0
  %1001 = vmatprep.subr.mxu0 0.0
  %1002 = vmatpush1.msra.mxu0 0.0
  %1003 = vmatprep.subr.mxu0 0.0
  %1004 = vmatpush1.msra.mxu0 0.0
  %1005 = vmatprep.subr.mxu0 0.0
  %1006 = vmatpush1.msra.mxu0 0.0
  %1007 = vmatprep.subr.mxu0 0.0
  %1008 = vmatpush1.msra.mxu0 0.0
  %1009 = vmatprep.subr.mxu0 0.0
  %1010 = vmatpush1.msra.mxu0 0.0
  %1011 = vmatprep.subr.mxu0 0.0
  %1012 = vmatpush1.msra.mxu0 0.0
  %1013 = vmatprep.subr.mxu0 0.0
  %1014 = vmatpush1.msra.mxu0 0.0
  %1015 = vmatprep.subr.mxu0 0.0
  %1016 = vmatpush1.msra.mxu0 0.0
  %1017 = vmatprep.subr.mxu0 0.0
  %1018 = vmatpush1.msra.mxu0 0.0
  %1019 = vmatprep.subr.mxu0 0.0
  %1020 = vmatpush1.msra.mxu0 %v456
  %1021 = vmatprep.subr.mxu0 0.0
  %1022 = vmatpush1.msra.mxu0 %v455
  %1023 = vmatprep.subr.mxu0 0.0
  %1024 = vmatpush1.msra.mxu0 %v454
  %1025 = vmatprep.subr.mxu0 0.0
  %1026 = vmatpush1.msra.mxu0 %v453
  %1027 = vmatprep.subr.mxu0 0.0
  %1028 = vmatpush2.msra.mxu0 0.0
  %1029 = vmatprep.subr.mxu0 0.0
  %1030 = vmatpush2.msra.mxu0 0.0
  %1031 = vmatprep.subr.mxu0 0.0
  %1032 = vmatpush2.msra.mxu0 0.0
  %1033 = vmatprep.subr.mxu0 0.0
  %1034 = vmatpush2.msra.mxu0 0.0
  %1035 = vmatprep.subr.mxu0 0.0
  %1036 = vmatpush2.msra.mxu0 0.0
  %1037 = vmatprep.subr.mxu0 0.0
  %1038 = vmatpush2.msra.mxu0 0.0
  %1039 = vmatprep.subr.mxu0 0.0
  %1040 = vmatpush2.msra.mxu0 0.0
  %1041 = vmatprep.subr.mxu0 0.0
  %1042 = vmatpush2.msra.mxu0 0.0
  %1043 = vmatprep.subr.mxu0 0.0
  %1044 = vmatpush2.msra.mxu0 0.0
  %1045 = vmatprep.subr.mxu0 0.0
  %1046 = vmatpush2.msra.mxu0 0.0
  %1047 = vmatprep.subr.mxu0 0.0
  %1048 = vmatpush2.msra.mxu0 0.0
  %1049 = vmatprep.subr.mxu0 0.0
  %1050 = vmatpush2.msra.mxu0 0.0
  %1051 = vmatprep.subr.mxu0 0.0
  %1052 = vmatpush2.msra.mxu0 0.0
  %1053 = vmatprep.subr.mxu0 0.0
  %1054 = vmatpush2.msra.mxu0 0.0
  %1055 = vmatprep.subr.mxu0 0.0
  %1056 = vmatpush2.msra.mxu0 0.0
  %1057 = vmatprep.subr.mxu0 0.0
  %1058 = vmatpush2.msra.mxu0 0.0
  %1059 = vmatprep.mubr.f32.mxu0 0.0
  %1060 = vmatmul.mubr.f32.gmra.mxu0 %v993
  %v1061 = vpop.f32.mrf.mxu0
  %v1062 = vadd.f32 0.0, %v1061
  %v1063 = vpop.f32.mrf.mxu0
  %1064 = vdwg.mxu0
  %v1065 = vadd.f32 %v990, %v1062
  %v1066 = vxor.u32 %v1065, 2147483648
  %v1067 = vmul.f32 %v1066, 1.442695
  %v1068 = vpow.pop %v1067
  %v1069 = vadd.f32 %v1068, 1.0
  %v1070 = vrcp.pop %v1069
  %v1071 = vmul.f32 1.0, %v1070
  %v1072 = vtanh.pop %v1065
  %v1073 = vmul.f32 %v1071, %v867
  %1075 = vrot.lane.b32.xlu0 %v1072, 64
  %v1076 = vpop.permute.xlu0 %1075
  %v1078 = vmul.f32 %v1071, %v1076
  %1080 = vrot.lane.b32.xlu0 %v1078, 32
  %v1081 = vpop.permute.xlu0 %1080
  %v1083 = vadd.f32 %v1073, %v1081
  %v1084 = vtanh.pop %v1083
  %1086 = vrot.lane.b32.xlu0 %v1084, 64
  %v1087 = vpop.permute.xlu0 %1086
  %v1089 = vmul.f32 %v1071, %v1087
  %1091 = vrot.lane.b32.xlu0 %v986, 32
  %v1092 = vpop.permute.xlu0 %1091
  %s1094 = scalar_lea.vmem %s8, 16
  %1095 = vst.msk [vmem:[%s1094] sm:$0xff] %vm111, %v1092
  %1097 = vrot.lane.b32.xlu0 %v1089, 64
  %v1098 = vpop.permute.xlu0 %1097
  %s1100 = scalar_lea.vmem %s8, 56
  %1101 = vst.msk [vmem:[%s1100] sm:$0xff] %vm668, %v1098
  %s1102 = smul.u32 3, 2
  %s1103 = smul.addr %s1102, 8
  %s1104 = scalar_lea.vmem [#allocation2], %s1103
  %v1105 = vld [vmem:[%s1104] sm:$0xff]
  %v1106 = vsel %vm111, %v1092, 0
  %1108 = vmatprep.subr.mxu0 0.0
  %1109 = vmatpush1.msra.mxu0 0.0
  %1110 = vmatprep.subr.mxu0 0.0
  %1111 = vmatpush1.msra.mxu0 0.0
  %1112 = vmatprep.subr.mxu0 0.0
  %1113 = vmatpush1.msra.mxu0 0.0
  %1114 = vmatprep.subr.mxu0 0.0
  %1115 = vmatpush1.msra.mxu0 0.0
  %1116 = vmatprep.subr.mxu0 0.0
  %1117 = vmatpush1.msra.mxu0 0.0
  %1118 = vmatprep.subr.mxu0 0.0
  %1119 = vmatpush1.msra.mxu0 0.0
  %1120 = vmatprep.subr.mxu0 0.0
  %1121 = vmatpush1.msra.mxu0 0.0
  %1122 = vmatprep.subr.mxu0 0.0
  %1123 = vmatpush1.msra.mxu0 0.0
  %1124 = vmatprep.subr.mxu0 0.0
  %1125 = vmatpush1.msra.mxu0 0.0
  %1126 = vmatprep.subr.mxu0 0.0
  %1127 = vmatpush1.msra.mxu0 0.0
  %1128 = vmatprep.subr.mxu0 0.0
  %1129 = vmatpush1.msra.mxu0 0.0
  %1130 = vmatprep.subr.mxu0 0.0
  %1131 = vmatpush1.msra.mxu0 0.0
  %1132 = vmatprep.subr.mxu0 0.0
  %1133 = vmatpush1.msra.mxu0 %v452
  %1134 = vmatprep.subr.mxu0 0.0
  %1135 = vmatpush1.msra.mxu0 %v451
  %1136 = vmatprep.subr.mxu0 0.0
  %1137 = vmatpush1.msra.mxu0 %v450
  %1138 = vmatprep.subr.mxu0 0.0
  %1139 = vmatpush1.msra.mxu0 %v449
  %1140 = vmatprep.subr.mxu0 0.0
  %1141 = vmatpush2.msra.mxu0 0.0
  %1142 = vmatprep.subr.mxu0 0.0
  %1143 = vmatpush2.msra.mxu0 0.0
  %1144 = vmatprep.subr.mxu0 0.0
  %1145 = vmatpush2.msra.mxu0 0.0
  %1146 = vmatprep.subr.mxu0 0.0
  %1147 = vmatpush2.msra.mxu0 0.0
  %1148 = vmatprep.subr.mxu0 0.0
  %1149 = vmatpush2.msra.mxu0 0.0
  %1150 = vmatprep.subr.mxu0 0.0
  %1151 = vmatpush2.msra.mxu0 0.0
  %1152 = vmatprep.subr.mxu0 0.0
  %1153 = vmatpush2.msra.mxu0 0.0
  %1154 = vmatprep.subr.mxu0 0.0
  %1155 = vmatpush2.msra.mxu0 0.0
  %1156 = vmatprep.subr.mxu0 0.0
  %1157 = vmatpush2.msra.mxu0 0.0
  %1158 = vmatprep.subr.mxu0 0.0
  %1159 = vmatpush2.msra.mxu0 0.0
  %1160 = vmatprep.subr.mxu0 0.0
  %1161 = vmatpush2.msra.mxu0 0.0
  %1162 = vmatprep.subr.mxu0 0.0
  %1163 = vmatpush2.msra.mxu0 0.0
  %1164 = vmatprep.subr.mxu0 0.0
  %1165 = vmatpush2.msra.mxu0 0.0
  %1166 = vmatprep.subr.mxu0 0.0
  %1167 = vmatpush2.msra.mxu0 0.0
  %1168 = vmatprep.subr.mxu0 0.0
  %1169 = vmatpush2.msra.mxu0 0.0
  %1170 = vmatprep.subr.mxu0 0.0
  %1171 = vmatpush2.msra.mxu0 0.0
  %1172 = vmatprep.mubr.f32.mxu0 0.0
  %1173 = vmatmul.mubr.f32.gmra.mxu0 %v1106
  %v1174 = vpop.f32.mrf.mxu0
  %v1175 = vadd.f32 0.0, %v1174
  %v1176 = vpop.f32.mrf.mxu0
  %1177 = vdwg.mxu0
  %v1178 = vadd.f32 %v1105, %v1175
  %v1179 = vxor.u32 %v1178, 2147483648
  %v1180 = vmul.f32 %v1179, 1.442695
  %v1181 = vpow.pop %v1180
  %v1182 = vadd.f32 %v1181, 1.0
  %v1183 = vrcp.pop %v1182
  %v1184 = vmul.f32 1.0, %v1183
  %v1185 = vtanh.pop %v1178
  %v1186 = vmul.f32 %v1184, %v980
  %1188 = vrot.lane.b32.xlu0 %v1185, 64
  %v1189 = vpop.permute.xlu0 %1188
  %v1191 = vmul.f32 %v1184, %v1189
  %1193 = vrot.lane.b32.xlu0 %v1191, 32
  %v1194 = vpop.permute.xlu0 %1193
  %v1196 = vadd.f32 %v1186, %v1194
  %v1197 = vtanh.pop %v1196
  %1199 = vrot.lane.b32.xlu0 %v1197, 64
  %v1200 = vpop.permute.xlu0 %1199
  %v1202 = vmul.f32 %v1184, %v1200
  %s1203 = smul.u32 6, 2
  %s1204 = smul.addr %s1203, 8
  %s1205 = scalar_lea.vmem [#allocation2], %s1204
  %v1206 = vld [vmem:[%s1205 + $0x8] sm:$0xff]
  %1207 = vrot.lane.b32.xlu0 %v1089, 32
  %v1208 = vpop.permute.xlu0 %1207
  %v1209 = vsel %vm111, %v1208, 0
  %1211 = vmatprep.subr.mxu0 0.0
  %1212 = vmatpush1.msra.mxu0 0.0
  %1213 = vmatprep.subr.mxu0 0.0
  %1214 = vmatpush1.msra.mxu0 0.0
  %1215 = vmatprep.subr.mxu0 0.0
  %1216 = vmatpush1.msra.mxu0 0.0
  %1217 = vmatprep.subr.mxu0 0.0
  %1218 = vmatpush1.msra.mxu0 0.0
  %1219 = vmatprep.subr.mxu0 0.0
  %1220 = vmatpush1.msra.mxu0 0.0
  %1221 = vmatprep.subr.mxu0 0.0
  %1222 = vmatpush1.msra.mxu0 0.0
  %1223 = vmatprep.subr.mxu0 0.0
  %1224 = vmatpush1.msra.mxu0 0.0
  %1225 = vmatprep.subr.mxu0 0.0
  %1226 = vmatpush1.msra.mxu0 0.0
  %1227 = vmatprep.subr.mxu0 0.0
  %1228 = vmatpush1.msra.mxu0 0.0
  %1229 = vmatprep.subr.mxu0 0.0
  %1230 = vmatpush1.msra.mxu0 0.0
  %1231 = vmatprep.subr.mxu0 0.0
  %1232 = vmatpush1.msra.mxu0 0.0
  %1233 = vmatprep.subr.mxu0 0.0
  %1234 = vmatpush1.msra.mxu0 0.0
  %1235 = vmatprep.subr.mxu0 0.0
  %1236 = vmatpush1.msra.mxu0 %v456
  %1237 = vmatprep.subr.mxu0 0.0
  %1238 = vmatpush1.msra.mxu0 %v455
  %1239 = vmatprep.subr.mxu0 0.0
  %1240 = vmatpush1.msra.mxu0 %v454
  %1241 = vmatprep.subr.mxu0 0.0
  %1242 = vmatpush1.msra.mxu0 %v453
  %1243 = vmatprep.subr.mxu0 0.0
  %1244 = vmatpush2.msra.mxu0 0.0
  %1245 = vmatprep.subr.mxu0 0.0
  %1246 = vmatpush2.msra.mxu0 0.0
  %1247 = vmatprep.subr.mxu0 0.0
  %1248 = vmatpush2.msra.mxu0 0.0
  %1249 = vmatprep.subr.mxu0 0.0
  %1250 = vmatpush2.msra.mxu0 0.0
  %1251 = vmatprep.subr.mxu0 0.0
  %1252 = vmatpush2.msra.mxu0 0.0
  %1253 = vmatprep.subr.mxu0 0.0
  %1254 = vmatpush2.msra.mxu0 0.0
  %1255 = vmatprep.subr.mxu0 0.0
  %1256 = vmatpush2.msra.mxu0 0.0
  %1257 = vmatprep.subr.mxu0 0.0
  %1258 = vmatpush2.msra.mxu0 0.0
  %1259 = vmatprep.subr.mxu0 0.0
  %1260 = vmatpush2.msra.mxu0 0.0
  %1261 = vmatprep.subr.mxu0 0.0
  %1262 = vmatpush2.msra.mxu0 0.0
  %1263 = vmatprep.subr.mxu0 0.0
  %1264 = vmatpush2.msra.mxu0 0.0
  %1265 = vmatprep.subr.mxu0 0.0
  %1266 = vmatpush2.msra.mxu0 0.0
  %1267 = vmatprep.subr.mxu0 0.0
  %1268 = vmatpush2.msra.mxu0 0.0
  %1269 = vmatprep.subr.mxu0 0.0
  %1270 = vmatpush2.msra.mxu0 0.0
  %1271 = vmatprep.subr.mxu0 0.0
  %1272 = vmatpush2.msra.mxu0 0.0
  %1273 = vmatprep.subr.mxu0 0.0
  %1274 = vmatpush2.msra.mxu0 0.0
  %1275 = vmatprep.mubr.f32.mxu0 0.0
  %1276 = vmatmul.mubr.f32.gmra.mxu0 %v1209
  %v1277 = vpop.f32.mrf.mxu0
  %v1278 = vadd.f32 0.0, %v1277
  %v1279 = vpop.f32.mrf.mxu0
  %1280 = vdwg.mxu0
  %v1281 = vadd.f32 %v1206, %v1278
  %v1282 = vxor.u32 %v1281, 2147483648
  %v1283 = vmul.f32 %v1282, 1.442695
  %v1284 = vpow.pop %v1283
  %v1285 = vadd.f32 %v1284, 1.0
  %v1286 = vrcp.pop %v1285
  %v1287 = vmul.f32 1.0, %v1286
  %v1288 = vtanh.pop %v1281
  %v1289 = vmul.f32 %v1287, %v1083
  %1291 = vrot.lane.b32.xlu0 %v1288, 64
  %v1292 = vpop.permute.xlu0 %1291
  %v1294 = vmul.f32 %v1287, %v1292
  %1296 = vrot.lane.b32.xlu0 %v1294, 32
  %v1297 = vpop.permute.xlu0 %1296
  %v1299 = vadd.f32 %v1289, %v1297
  %v1300 = vtanh.pop %v1299
  %1302 = vrot.lane.b32.xlu0 %v1300, 64
  %v1303 = vpop.permute.xlu0 %1302
  %v1305 = vmul.f32 %v1287, %v1303
  %1307 = vrot.lane.b32.xlu0 %v1202, 32
  %v1308 = vpop.permute.xlu0 %1307
  %s1310 = scalar_lea.vmem %s8, 24
  %1311 = vst.msk [vmem:[%s1310] sm:$0xff] %vm111, %v1308
  %1313 = vrot.lane.b32.xlu0 %v1305, 64
  %v1314 = vpop.permute.xlu0 %1313
  %s1316 = scalar_lea.vmem %s8, 48
  %1317 = vst.msk [vmem:[%s1316] sm:$0xff] %vm668, %v1314
  %s1318 = smul.u32 4, 2
  %s1319 = smul.addr %s1318, 8
  %s1320 = scalar_lea.vmem [#allocation2], %s1319
  %v1321 = vld [vmem:[%s1320] sm:$0xff]
  %v1322 = vsel %vm111, %v1308, 0
  %1324 = vmatprep.subr.mxu0 0.0
  %1325 = vmatpush1.msra.mxu0 0.0
  %1326 = vmatprep.subr.mxu0 0.0
  %1327 = vmatpush1.msra.mxu0 0.0
  %1328 = vmatprep.subr.mxu0 0.0
  %1329 = vmatpush1.msra.mxu0 0.0
  %1330 = vmatprep.subr.mxu0 0.0
  %1331 = vmatpush1.msra.mxu0 0.0
  %1332 = vmatprep.subr.mxu0 0.0
  %1333 = vmatpush1.msra.mxu0 0.0
  %1334 = vmatprep.subr.mxu0 0.0
  %1335 = vmatpush1.msra.mxu0 0.0
  %1336 = vmatprep.subr.mxu0 0.0
  %1337 = vmatpush1.msra.mxu0 0.0
  %1338 = vmatprep.subr.mxu0 0.0
  %1339 = vmatpush1.msra.mxu0 0.0
  %1340 = vmatprep.subr.mxu0 0.0
  %1341 = vmatpush1.msra.mxu0 0.0
  %1342 = vmatprep.subr.mxu0 0.0
  %1343 = vmatpush1.msra.mxu0 0.0
  %1344 = vmatprep.subr.mxu0 0.0
  %1345 = vmatpush1.msra.mxu0 0.0
  %1346 = vmatprep.subr.mxu0 0.0
  %1347 = vmatpush1.msra.mxu0 0.0
  %1348 = vmatprep.subr.mxu0 0.0
  %1349 = vmatpush1.msra.mxu0 %v452
  %1350 = vmatprep.subr.mxu0 0.0
  %1351 = vmatpush1.msra.mxu0 %v451
  %1352 = vmatprep.subr.mxu0 0.0
  %1353 = vmatpush1.msra.mxu0 %v450
  %1354 = vmatprep.subr.mxu0 0.0
  %1355 = vmatpush1.msra.mxu0 %v449
  %1356 = vmatprep.subr.mxu0 0.0
  %1357 = vmatpush2.msra.mxu0 0.0
  %1358 = vmatprep.subr.mxu0 0.0
  %1359 = vmatpush2.msra.mxu0 0.0
  %1360 = vmatprep.subr.mxu0 0.0
  %1361 = vmatpush2.msra.mxu0 0.0
  %1362 = vmatprep.subr.mxu0 0.0
  %1363 = vmatpush2.msra.mxu0 0.0
  %1364 = vmatprep.subr.mxu0 0.0
  %1365 = vmatpush2.msra.mxu0 0.0
  %1366 = vmatprep.subr.mxu0 0.0
  %1367 = vmatpush2.msra.mxu0 0.0
  %1368 = vmatprep.subr.mxu0 0.0
  %1369 = vmatpush2.msra.mxu0 0.0
  %1370 = vmatprep.subr.mxu0 0.0
  %1371 = vmatpush2.msra.mxu0 0.0
  %1372 = vmatprep.subr.mxu0 0.0
  %1373 = vmatpush2.msra.mxu0 0.0
  %1374 = vmatprep.subr.mxu0 0.0
  %1375 = vmatpush2.msra.mxu0 0.0
  %1376 = vmatprep.subr.mxu0 0.0
  %1377 = vmatpush2.msra.mxu0 0.0
  %1378 = vmatprep.subr.mxu0 0.0
  %1379 = vmatpush2.msra.mxu0 0.0
  %1380 = vmatprep.subr.mxu0 0.0
  %1381 = vmatpush2.msra.mxu0 0.0
  %1382 = vmatprep.subr.mxu0 0.0
  %1383 = vmatpush2.msra.mxu0 0.0
  %1384 = vmatprep.subr.mxu0 0.0
  %1385 = vmatpush2.msra.mxu0 0.0
  %1386 = vmatprep.subr.mxu0 0.0
  %1387 = vmatpush2.msra.mxu0 0.0
  %1388 = vmatprep.mubr.f32.mxu0 0.0
  %1389 = vmatmul.mubr.f32.gmra.mxu0 %v1322
  %v1390 = vpop.f32.mrf.mxu0
  %v1391 = vadd.f32 0.0, %v1390
  %v1392 = vpop.f32.mrf.mxu0
  %1393 = vdwg.mxu0
  %v1394 = vadd.f32 %v1321, %v1391
  %v1395 = vxor.u32 %v1394, 2147483648
  %v1396 = vmul.f32 %v1395, 1.442695
  %v1397 = vpow.pop %v1396
  %v1398 = vadd.f32 %v1397, 1.0
  %v1399 = vrcp.pop %v1398
  %v1400 = vmul.f32 1.0, %v1399
  %v1401 = vtanh.pop %v1394
  %v1402 = vmul.f32 %v1400, %v1196
  %1404 = vrot.lane.b32.xlu0 %v1401, 64
  %v1405 = vpop.permute.xlu0 %1404
  %v1407 = vmul.f32 %v1400, %v1405
  %1409 = vrot.lane.b32.xlu0 %v1407, 32
  %v1410 = vpop.permute.xlu0 %1409
  %v1412 = vadd.f32 %v1402, %v1410
  %v1413 = vtanh.pop %v1412
  %1415 = vrot.lane.b32.xlu0 %v1413, 64
  %v1416 = vpop.permute.xlu0 %1415
  %v1418 = vmul.f32 %v1400, %v1416
  %s1419 = smul.u32 5, 2
  %s1420 = smul.addr %s1419, 8
  %s1421 = scalar_lea.vmem [#allocation2], %s1420
  %v1422 = vld [vmem:[%s1421 + $0x8] sm:$0xff]
  %1423 = vrot.lane.b32.xlu0 %v1305, 32
  %v1424 = vpop.permute.xlu0 %1423
  %v1425 = vsel %vm111, %v1424, 0
  %1427 = vmatprep.subr.mxu0 0.0
  %1428 = vmatpush1.msra.mxu0 0.0
  %1429 = vmatprep.subr.mxu0 0.0
  %1430 = vmatpush1.msra.mxu0 0.0
  %1431 = vmatprep.subr.mxu0 0.0
  %1432 = vmatpush1.msra.mxu0 0.0
  %1433 = vmatprep.subr.mxu0 0.0
  %1434 = vmatpush1.msra.mxu0 0.0
  %1435 = vmatprep.subr.mxu0 0.0
  %1436 = vmatpush1.msra.mxu0 0.0
  %1437 = vmatprep.subr.mxu0 0.0
  %1438 = vmatpush1.msra.mxu0 0.0
  %1439 = vmatprep.subr.mxu0 0.0
  %1440 = vmatpush1.msra.mxu0 0.0
  %1441 = vmatprep.subr.mxu0 0.0
  %1442 = vmatpush1.msra.mxu0 0.0
  %1443 = vmatprep.subr.mxu0 0.0
  %1444 = vmatpush1.msra.mxu0 0.0
  %1445 = vmatprep.subr.mxu0 0.0
  %1446 = vmatpush1.msra.mxu0 0.0
  %1447 = vmatprep.subr.mxu0 0.0
  %1448 = vmatpush1.msra.mxu0 0.0
  %1449 = vmatprep.subr.mxu0 0.0
  %1450 = vmatpush1.msra.mxu0 0.0
  %1451 = vmatprep.subr.mxu0 0.0
  %1452 = vmatpush1.msra.mxu0 %v456
  %1453 = vmatprep.subr.mxu0 0.0
  %1454 = vmatpush1.msra.mxu0 %v455
  %1455 = vmatprep.subr.mxu0 0.0
  %1456 = vmatpush1.msra.mxu0 %v454
  %1457 = vmatprep.subr.mxu0 0.0
  %1458 = vmatpush1.msra.mxu0 %v453
  %1459 = vmatprep.subr.mxu0 0.0
  %1460 = vmatpush2.msra.mxu0 0.0
  %1461 = vmatprep.subr.mxu0 0.0
  %1462 = vmatpush2.msra.mxu0 0.0
  %1463 = vmatprep.subr.mxu0 0.0
  %1464 = vmatpush2.msra.mxu0 0.0
  %1465 = vmatprep.subr.mxu0 0.0
  %1466 = vmatpush2.msra.mxu0 0.0
  %1467 = vmatprep.subr.mxu0 0.0
  %1468 = vmatpush2.msra.mxu0 0.0
  %1469 = vmatprep.subr.mxu0 0.0
  %1470 = vmatpush2.msra.mxu0 0.0
  %1471 = vmatprep.subr.mxu0 0.0
  %1472 = vmatpush2.msra.mxu0 0.0
  %1473 = vmatprep.subr.mxu0 0.0
  %1474 = vmatpush2.msra.mxu0 0.0
  %1475 = vmatprep.subr.mxu0 0.0
  %1476 = vmatpush2.msra.mxu0 0.0
  %1477 = vmatprep.subr.mxu0 0.0
  %1478 = vmatpush2.msra.mxu0 0.0
  %1479 = vmatprep.subr.mxu0 0.0
  %1480 = vmatpush2.msra.mxu0 0.0
  %1481 = vmatprep.subr.mxu0 0.0
  %1482 = vmatpush2.msra.mxu0 0.0
  %1483 = vmatprep.subr.mxu0 0.0
  %1484 = vmatpush2.msra.mxu0 0.0
  %1485 = vmatprep.subr.mxu0 0.0
  %1486 = vmatpush2.msra.mxu0 0.0
  %1487 = vmatprep.subr.mxu0 0.0
  %1488 = vmatpush2.msra.mxu0 0.0
  %1489 = vmatprep.subr.mxu0 0.0
  %1490 = vmatpush2.msra.mxu0 0.0
  %1491 = vmatprep.mubr.f32.mxu0 0.0
  %1492 = vmatmul.mubr.f32.gmra.mxu0 %v1425
  %v1493 = vpop.f32.mrf.mxu0
  %v1494 = vadd.f32 0.0, %v1493
  %v1495 = vpop.f32.mrf.mxu0
  %1496 = vdwg.mxu0
  %v1497 = vadd.f32 %v1422, %v1494
  %v1498 = vxor.u32 %v1497, 2147483648
  %v1499 = vmul.f32 %v1498, 1.442695
  %v1500 = vpow.pop %v1499
  %v1501 = vadd.f32 %v1500, 1.0
  %v1502 = vrcp.pop %v1501
  %v1503 = vmul.f32 1.0, %v1502
  %v1504 = vtanh.pop %v1497
  %v1505 = vmul.f32 %v1503, %v1299
  %1507 = vrot.lane.b32.xlu0 %v1504, 64
  %v1508 = vpop.permute.xlu0 %1507
  %v1510 = vmul.f32 %v1503, %v1508
  %1512 = vrot.lane.b32.xlu0 %v1510, 32
  %v1513 = vpop.permute.xlu0 %1512
  %v1515 = vadd.f32 %v1505, %v1513
  %v1516 = vtanh.pop %v1515
  %1518 = vrot.lane.b32.xlu0 %v1516, 64
  %v1519 = vpop.permute.xlu0 %1518
  %v1521 = vmul.f32 %v1503, %v1519
  %1523 = vrot.lane.b32.xlu0 %v1418, 32
  %v1524 = vpop.permute.xlu0 %1523
  %s1526 = scalar_lea.vmem %s8, 32
  %1527 = vst.msk [vmem:[%s1526] sm:$0xff] %vm111, %v1524
  %1529 = vrot.lane.b32.xlu0 %v1521, 64
  %v1530 = vpop.permute.xlu0 %1529
  %s1532 = scalar_lea.vmem %s8, 40
  %1533 = vst.msk [vmem:[%s1532] sm:$0xff] %vm668, %v1530
  %v1534 = vld [vmem:[%s1421] sm:$0xff]
  %v1535 = vsel %vm111, %v1524, 0
  %1537 = vmatprep.subr.mxu0 0.0
  %1538 = vmatpush1.msra.mxu0 0.0
  %1539 = vmatprep.subr.mxu0 0.0
  %1540 = vmatpush1.msra.mxu0 0.0
  %1541 = vmatprep.subr.mxu0 0.0
  %1542 = vmatpush1.msra.mxu0 0.0
  %1543 = vmatprep.subr.mxu0 0.0
  %1544 = vmatpush1.msra.mxu0 0.0
  %1545 = vmatprep.subr.mxu0 0.0
  %1546 = vmatpush1.msra.mxu0 0.0
  %1547 = vmatprep.subr.mxu0 0.0
  %1548 = vmatpush1.msra.mxu0 0.0
  %1549 = vmatprep.subr.mxu0 0.0
  %1550 = vmatpush1.msra.mxu0 0.0
  %1551 = vmatprep.subr.mxu0 0.0
  %1552 = vmatpush1.msra.mxu0 0.0
  %1553 = vmatprep.subr.mxu0 0.0
  %1554 = vmatpush1.msra.mxu0 0.0
  %1555 = vmatprep.subr.mxu0 0.0
  %1556 = vmatpush1.msra.mxu0 0.0
  %1557 = vmatprep.subr.mxu0 0.0
  %1558 = vmatpush1.msra.mxu0 0.0
  %1559 = vmatprep.subr.mxu0 0.0
  %1560 = vmatpush1.msra.mxu0 0.0
  %1561 = vmatprep.subr.mxu0 0.0
  %1562 = vmatpush1.msra.mxu0 %v452
  %1563 = vmatprep.subr.mxu0 0.0
  %1564 = vmatpush1.msra.mxu0 %v451
  %1565 = vmatprep.subr.mxu0 0.0
  %1566 = vmatpush1.msra.mxu0 %v450
  %1567 = vmatprep.subr.mxu0 0.0
  %1568 = vmatpush1.msra.mxu0 %v449
  %1569 = vmatprep.subr.mxu0 0.0
  %1570 = vmatpush2.msra.mxu0 0.0
  %1571 = vmatprep.subr.mxu0 0.0
  %1572 = vmatpush2.msra.mxu0 0.0
  %1573 = vmatprep.subr.mxu0 0.0
  %1574 = vmatpush2.msra.mxu0 0.0
  %1575 = vmatprep.subr.mxu0 0.0
  %1576 = vmatpush2.msra.mxu0 0.0
  %1577 = vmatprep.subr.mxu0 0.0
  %1578 = vmatpush2.msra.mxu0 0.0
  %1579 = vmatprep.subr.mxu0 0.0
  %1580 = vmatpush2.msra.mxu0 0.0
  %1581 = vmatprep.subr.mxu0 0.0
  %1582 = vmatpush2.msra.mxu0 0.0
  %1583 = vmatprep.subr.mxu0 0.0
  %1584 = vmatpush2.msra.mxu0 0.0
  %1585 = vmatprep.subr.mxu0 0.0
  %1586 = vmatpush2.msra.mxu0 0.0
  %1587 = vmatprep.subr.mxu0 0.0
  %1588 = vmatpush2.msra.mxu0 0.0
  %1589 = vmatprep.subr.mxu0 0.0
  %1590 = vmatpush2.msra.mxu0 0.0
  %1591 = vmatprep.subr.mxu0 0.0
  %1592 = vmatpush2.msra.mxu0 0.0
  %1593 = vmatprep.subr.mxu0 0.0
  %1594 = vmatpush2.msra.mxu0 0.0
  %1595 = vmatprep.subr.mxu0 0.0
  %1596 = vmatpush2.msra.mxu0 0.0
  %1597 = vmatprep.subr.mxu0 0.0
  %1598 = vmatpush2.msra.mxu0 0.0
  %1599 = vmatprep.subr.mxu0 0.0
  %1600 = vmatpush2.msra.mxu0 0.0
  %1601 = vmatprep.mubr.f32.mxu0 0.0
  %1602 = vmatmul.mubr.f32.gmra.mxu0 %v1535
  %v1603 = vpop.f32.mrf.mxu0
  %v1604 = vadd.f32 0.0, %v1603
  %v1605 = vpop.f32.mrf.mxu0
  %1606 = vdwg.mxu0
  %v1607 = vadd.f32 %v1534, %v1604
  %v1608 = vxor.u32 %v1607, 2147483648
  %v1609 = vmul.f32 %v1608, 1.442695
  %v1610 = vpow.pop %v1609
  %v1611 = vadd.f32 %v1610, 1.0
  %v1612 = vrcp.pop %v1611
  %v1613 = vmul.f32 1.0, %v1612
  %v1614 = vtanh.pop %v1607
  %v1615 = vmul.f32 %v1613, %v1412
  %1617 = vrot.lane.b32.xlu0 %v1614, 64
  %v1618 = vpop.permute.xlu0 %1617
  %v1620 = vmul.f32 %v1613, %v1618
  %1622 = vrot.lane.b32.xlu0 %v1620, 32
  %v1623 = vpop.permute.xlu0 %1622
  %v1625 = vadd.f32 %v1615, %v1623
  %v1626 = vtanh.pop %v1625
  %1628 = vrot.lane.b32.xlu0 %v1626, 64
  %v1629 = vpop.permute.xlu0 %1628
  %v1631 = vmul.f32 %v1613, %v1629
  %v1632 = vld [vmem:[%s1320 + $0x8] sm:$0xff]
  %1633 = vrot.lane.b32.xlu0 %v1521, 32
  %v1634 = vpop.permute.xlu0 %1633
  %v1635 = vsel %vm111, %v1634, 0
  %1637 = vmatprep.subr.mxu0 0.0
  %1638 = vmatpush1.msra.mxu0 0.0
  %1639 = vmatprep.subr.mxu0 0.0
  %1640 = vmatpush1.msra.mxu0 0.0
  %1641 = vmatprep.subr.mxu0 0.0
  %1642 = vmatpush1.msra.mxu0 0.0
  %1643 = vmatprep.subr.mxu0 0.0
  %1644 = vmatpush1.msra.mxu0 0.0
  %1645 = vmatprep.subr.mxu0 0.0
  %1646 = vmatpush1.msra.mxu0 0.0
  %1647 = vmatprep.subr.mxu0 0.0
  %1648 = vmatpush1.msra.mxu0 0.0
  %1649 = vmatprep.subr.mxu0 0.0
  %1650 = vmatpush1.msra.mxu0 0.0
  %1651 = vmatprep.subr.mxu0 0.0
  %1652 = vmatpush1.msra.mxu0 0.0
  %1653 = vmatprep.subr.mxu0 0.0
  %1654 = vmatpush1.msra.mxu0 0.0
  %1655 = vmatprep.subr.mxu0 0.0
  %1656 = vmatpush1.msra.mxu0 0.0
  %1657 = vmatprep.subr.mxu0 0.0
  %1658 = vmatpush1.msra.mxu0 0.0
  %1659 = vmatprep.subr.mxu0 0.0
  %1660 = vmatpush1.msra.mxu0 0.0
  %1661 = vmatprep.subr.mxu0 0.0
  %1662 = vmatpush1.msra.mxu0 %v456
  %1663 = vmatprep.subr.mxu0 0.0
  %1664 = vmatpush1.msra.mxu0 %v455
  %1665 = vmatprep.subr.mxu0 0.0
  %1666 = vmatpush1.msra.mxu0 %v454
  %1667 = vmatprep.subr.mxu0 0.0
  %1668 = vmatpush1.msra.mxu0 %v453
  %1669 = vmatprep.subr.mxu0 0.0
  %1670 = vmatpush2.msra.mxu0 0.0
  %1671 = vmatprep.subr.mxu0 0.0
  %1672 = vmatpush2.msra.mxu0 0.0
  %1673 = vmatprep.subr.mxu0 0.0
  %1674 = vmatpush2.msra.mxu0 0.0
  %1675 = vmatprep.subr.mxu0 0.0
  %1676 = vmatpush2.msra.mxu0 0.0
  %1677 = vmatprep.subr.mxu0 0.0
  %1678 = vmatpush2.msra.mxu0 0.0
  %1679 = vmatprep.subr.mxu0 0.0
  %1680 = vmatpush2.msra.mxu0 0.0
  %1681 = vmatprep.subr.mxu0 0.0
  %1682 = vmatpush2.msra.mxu0 0.0
  %1683 = vmatprep.subr.mxu0 0.0
  %1684 = vmatpush2.msra.mxu0 0.0
  %1685 = vmatprep.subr.mxu0 0.0
  %1686 = vmatpush2.msra.mxu0 0.0
  %1687 = vmatprep.subr.mxu0 0.0
  %1688 = vmatpush2.msra.mxu0 0.0
  %1689 = vmatprep.subr.mxu0 0.0
  %1690 = vmatpush2.msra.mxu0 0.0
  %1691 = vmatprep.subr.mxu0 0.0
  %1692 = vmatpush2.msra.mxu0 0.0
  %1693 = vmatprep.subr.mxu0 0.0
  %1694 = vmatpush2.msra.mxu0 0.0
  %1695 = vmatprep.subr.mxu0 0.0
  %1696 = vmatpush2.msra.mxu0 0.0
  %1697 = vmatprep.subr.mxu0 0.0
  %1698 = vmatpush2.msra.mxu0 0.0
  %1699 = vmatprep.subr.mxu0 0.0
  %1700 = vmatpush2.msra.mxu0 0.0
  %1701 = vmatprep.mubr.f32.mxu0 0.0
  %1702 = vmatmul.mubr.f32.gmra.mxu0 %v1635
  %v1703 = vpop.f32.mrf.mxu0
  %v1704 = vadd.f32 0.0, %v1703
  %v1705 = vpop.f32.mrf.mxu0
  %1706 = vdwg.mxu0
  %v1707 = vadd.f32 %v1632, %v1704
  %v1708 = vxor.u32 %v1707, 2147483648
  %v1709 = vmul.f32 %v1708, 1.442695
  %v1710 = vpow.pop %v1709
  %v1711 = vadd.f32 %v1710, 1.0
  %v1712 = vrcp.pop %v1711
  %v1713 = vmul.f32 1.0, %v1712
  %v1714 = vtanh.pop %v1707
  %v1715 = vmul.f32 %v1713, %v1515
  %1717 = vrot.lane.b32.xlu0 %v1714, 64
  %v1718 = vpop.permute.xlu0 %1717
  %v1720 = vmul.f32 %v1713, %v1718
  %1722 = vrot.lane.b32.xlu0 %v1720, 32
  %v1723 = vpop.permute.xlu0 %1722
  %v1725 = vadd.f32 %v1715, %v1723
  %v1726 = vtanh.pop %v1725
  %1728 = vrot.lane.b32.xlu0 %v1726, 64
  %v1729 = vpop.permute.xlu0 %1728
  %v1731 = vmul.f32 %v1713, %v1729
  %1733 = vrot.lane.b32.xlu0 %v1631, 32
  %v1734 = vpop.permute.xlu0 %1733
  %1736 = vst.msk [vmem:[%s1532] sm:$0xff] %vm111, %v1734
  %1738 = vrot.lane.b32.xlu0 %v1731, 64
  %v1739 = vpop.permute.xlu0 %1738
  %1741 = vst.msk [vmem:[%s1526] sm:$0xff] %vm668, %v1739
  %v1742 = vld [vmem:[%s1205] sm:$0xff]
  %v1743 = vsel %vm111, %v1734, 0
  %1745 = vmatprep.subr.mxu0 0.0
  %1746 = vmatpush1.msra.mxu0 0.0
  %1747 = vmatprep.subr.mxu0 0.0
  %1748 = vmatpush1.msra.mxu0 0.0
  %1749 = vmatprep.subr.mxu0 0.0
  %1750 = vmatpush1.msra.mxu0 0.0
  %1751 = vmatprep.subr.mxu0 0.0
  %1752 = vmatpush1.msra.mxu0 0.0
  %1753 = vmatprep.subr.mxu0 0.0
  %1754 = vmatpush1.msra.mxu0 0.0
  %1755 = vmatprep.subr.mxu0 0.0
  %1756 = vmatpush1.msra.mxu0 0.0
  %1757 = vmatprep.subr.mxu0 0.0
  %1758 = vmatpush1.msra.mxu0 0.0
  %1759 = vmatprep.subr.mxu0 0.0
  %1760 = vmatpush1.msra.mxu0 0.0
  %1761 = vmatprep.subr.mxu0 0.0
  %1762 = vmatpush1.msra.mxu0 0.0
  %1763 = vmatprep.subr.mxu0 0.0
  %1764 = vmatpush1.msra.mxu0 0.0
  %1765 = vmatprep.subr.mxu0 0.0
  %1766 = vmatpush1.msra.mxu0 0.0
  %1767 = vmatprep.subr.mxu0 0.0
  %1768 = vmatpush1.msra.mxu0 0.0
  %1769 = vmatprep.subr.mxu0 0.0
  %1770 = vmatpush1.msra.mxu0 %v452
  %1771 = vmatprep.subr.mxu0 0.0
  %1772 = vmatpush1.msra.mxu0 %v451
  %1773 = vmatprep.subr.mxu0 0.0
  %1774 = vmatpush1.msra.mxu0 %v450
  %1775 = vmatprep.subr.mxu0 0.0
  %1776 = vmatpush1.msra.mxu0 %v449
  %1777 = vmatprep.subr.mxu0 0.0
  %1778 = vmatpush2.msra.mxu0 0.0
  %1779 = vmatprep.subr.mxu0 0.0
  %1780 = vmatpush2.msra.mxu0 0.0
  %1781 = vmatprep.subr.mxu0 0.0
  %1782 = vmatpush2.msra.mxu0 0.0
  %1783 = vmatprep.subr.mxu0 0.0
  %1784 = vmatpush2.msra.mxu0 0.0
  %1785 = vmatprep.subr.mxu0 0.0
  %1786 = vmatpush2.msra.mxu0 0.0
  %1787 = vmatprep.subr.mxu0 0.0
  %1788 = vmatpush2.msra.mxu0 0.0
  %1789 = vmatprep.subr.mxu0 0.0
  %1790 = vmatpush2.msra.mxu0 0.0
  %1791 = vmatprep.subr.mxu0 0.0
  %1792 = vmatpush2.msra.mxu0 0.0
  %1793 = vmatprep.subr.mxu0 0.0
  %1794 = vmatpush2.msra.mxu0 0.0
  %1795 = vmatprep.subr.mxu0 0.0
  %1796 = vmatpush2.msra.mxu0 0.0
  %1797 = vmatprep.subr.mxu0 0.0
  %1798 = vmatpush2.msra.mxu0 0.0
  %1799 = vmatprep.subr.mxu0 0.0
  %1800 = vmatpush2.msra.mxu0 0.0
  %1801 = vmatprep.subr.mxu0 0.0
  %1802 = vmatpush2.msra.mxu0 0.0
  %1803 = vmatprep.subr.mxu0 0.0
  %1804 = vmatpush2.msra.mxu0 0.0
  %1805 = vmatprep.subr.mxu0 0.0
  %1806 = vmatpush2.msra.mxu0 0.0
  %1807 = vmatprep.subr.mxu0 0.0
  %1808 = vmatpush2.msra.mxu0 0.0
  %1809 = vmatprep.mubr.f32.mxu0 0.0
  %1810 = vmatmul.mubr.f32.gmra.mxu0 %v1743
  %v1811 = vpop.f32.mrf.mxu0
  %v1812 = vadd.f32 0.0, %v1811
  %v1813 = vpop.f32.mrf.mxu0
  %1814 = vdwg.mxu0
  %v1815 = vadd.f32 %v1742, %v1812
  %v1816 = vxor.u32 %v1815, 2147483648
  %v1817 = vmul.f32 %v1816, 1.442695
  %v1818 = vpow.pop %v1817
  %v1819 = vadd.f32 %v1818, 1.0
  %v1820 = vrcp.pop %v1819
  %v1821 = vmul.f32 1.0, %v1820
  %v1822 = vtanh.pop %v1815
  %v1823 = vmul.f32 %v1821, %v1625
  %1825 = vrot.lane.b32.xlu0 %v1822, 64
  %v1826 = vpop.permute.xlu0 %1825
  %v1828 = vmul.f32 %v1821, %v1826
  %1830 = vrot.lane.b32.xlu0 %v1828, 32
  %v1831 = vpop.permute.xlu0 %1830
  %v1833 = vadd.f32 %v1823, %v1831
  %v1834 = vtanh.pop %v1833
  %1836 = vrot.lane.b32.xlu0 %v1834, 64
  %v1837 = vpop.permute.xlu0 %1836
  %v1839 = vmul.f32 %v1821, %v1837
  %v1840 = vld [vmem:[%s1104 + $0x8] sm:$0xff]
  %1841 = vrot.lane.b32.xlu0 %v1731, 32
  %v1842 = vpop.permute.xlu0 %1841
  %v1843 = vsel %vm111, %v1842, 0
  %1845 = vmatprep.subr.mxu0 0.0
  %1846 = vmatpush1.msra.mxu0 0.0
  %1847 = vmatprep.subr.mxu0 0.0
  %1848 = vmatpush1.msra.mxu0 0.0
  %1849 = vmatprep.subr.mxu0 0.0
  %1850 = vmatpush1.msra.mxu0 0.0
  %1851 = vmatprep.subr.mxu0 0.0
  %1852 = vmatpush1.msra.mxu0 0.0
  %1853 = vmatprep.subr.mxu0 0.0
  %1854 = vmatpush1.msra.mxu0 0.0
  %1855 = vmatprep.subr.mxu0 0.0
  %1856 = vmatpush1.msra.mxu0 0.0
  %1857 = vmatprep.subr.mxu0 0.0
  %1858 = vmatpush1.msra.mxu0 0.0
  %1859 = vmatprep.subr.mxu0 0.0
  %1860 = vmatpush1.msra.mxu0 0.0
  %1861 = vmatprep.subr.mxu0 0.0
  %1862 = vmatpush1.msra.mxu0 0.0
  %1863 = vmatprep.subr.mxu0 0.0
  %1864 = vmatpush1.msra.mxu0 0.0
  %1865 = vmatprep.subr.mxu0 0.0
  %1866 = vmatpush1.msra.mxu0 0.0
  %1867 = vmatprep.subr.mxu0 0.0
  %1868 = vmatpush1.msra.mxu0 0.0
  %1869 = vmatprep.subr.mxu0 0.0
  %1870 = vmatpush1.msra.mxu0 %v456
  %1871 = vmatprep.subr.mxu0 0.0
  %1872 = vmatpush1.msra.mxu0 %v455
  %1873 = vmatprep.subr.mxu0 0.0
  %1874 = vmatpush1.msra.mxu0 %v454
  %1875 = vmatprep.subr.mxu0 0.0
  %1876 = vmatpush1.msra.mxu0 %v453
  %1877 = vmatprep.subr.mxu0 0.0
  %1878 = vmatpush2.msra.mxu0 0.0
  %1879 = vmatprep.subr.mxu0 0.0
  %1880 = vmatpush2.msra.mxu0 0.0
  %1881 = vmatprep.subr.mxu0 0.0
  %1882 = vmatpush2.msra.mxu0 0.0
  %1883 = vmatprep.subr.mxu0 0.0
  %1884 = vmatpush2.msra.mxu0 0.0
  %1885 = vmatprep.subr.mxu0 0.0
  %1886 = vmatpush2.msra.mxu0 0.0
  %1887 = vmatprep.subr.mxu0 0.0
  %1888 = vmatpush2.msra.mxu0 0.0
  %1889 = vmatprep.subr.mxu0 0.0
  %1890 = vmatpush2.msra.mxu0 0.0
  %1891 = vmatprep.subr.mxu0 0.0
  %1892 = vmatpush2.msra.mxu0 0.0
  %1893 = vmatprep.subr.mxu0 0.0
  %1894 = vmatpush2.msra.mxu0 0.0
  %1895 = vmatprep.subr.mxu0 0.0
  %1896 = vmatpush2.msra.mxu0 0.0
  %1897 = vmatprep.subr.mxu0 0.0
  %1898 = vmatpush2.msra.mxu0 0.0
  %1899 = vmatprep.subr.mxu0 0.0
  %1900 = vmatpush2.msra.mxu0 0.0
  %1901 = vmatprep.subr.mxu0 0.0
  %1902 = vmatpush2.msra.mxu0 0.0
  %1903 = vmatprep.subr.mxu0 0.0
  %1904 = vmatpush2.msra.mxu0 0.0
  %1905 = vmatprep.subr.mxu0 0.0
  %1906 = vmatpush2.msra.mxu0 0.0
  %1907 = vmatprep.subr.mxu0 0.0
  %1908 = vmatpush2.msra.mxu0 0.0
  %1909 = vmatprep.mubr.f32.mxu0 0.0
  %1910 = vmatmul.mubr.f32.gmra.mxu0 %v1843
  %v1911 = vpop.f32.mrf.mxu0
  %v1912 = vadd.f32 0.0, %v1911
  %v1913 = vpop.f32.mrf.mxu0
  %1914 = vdwg.mxu0
  %v1915 = vadd.f32 %v1840, %v1912
  %v1916 = vxor.u32 %v1915, 2147483648
  %v1917 = vmul.f32 %v1916, 1.442695
  %v1918 = vpow.pop %v1917
  %v1919 = vadd.f32 %v1918, 1.0
  %v1920 = vrcp.pop %v1919
  %v1921 = vmul.f32 1.0, %v1920
  %v1922 = vtanh.pop %v1915
  %v1923 = vmul.f32 %v1921, %v1725
  %1925 = vrot.lane.b32.xlu0 %v1922, 64
  %v1926 = vpop.permute.xlu0 %1925
  %v1928 = vmul.f32 %v1921, %v1926
  %1930 = vrot.lane.b32.xlu0 %v1928, 32
  %v1931 = vpop.permute.xlu0 %1930
  %v1933 = vadd.f32 %v1923, %v1931
  %v1934 = vtanh.pop %v1933
  %1936 = vrot.lane.b32.xlu0 %v1934, 64
  %v1937 = vpop.permute.xlu0 %1936
  %v1939 = vmul.f32 %v1921, %v1937
  %1941 = vrot.lane.b32.xlu0 %v1839, 32
  %v1942 = vpop.permute.xlu0 %1941
  %1944 = vst.msk [vmem:[%s1316] sm:$0xff] %vm111, %v1942
  %1946 = vrot.lane.b32.xlu0 %v1939, 64
  %v1947 = vpop.permute.xlu0 %1946
  %1949 = vst.msk [vmem:[%s1310] sm:$0xff] %vm668, %v1947
  %v1950 = vld [vmem:[%s989] sm:$0xff]
  %v1951 = vsel %vm111, %v1942, 0
  %1953 = vmatprep.subr.mxu0 0.0
  %1954 = vmatpush1.msra.mxu0 0.0
  %1955 = vmatprep.subr.mxu0 0.0
  %1956 = vmatpush1.msra.mxu0 0.0
  %1957 = vmatprep.subr.mxu0 0.0
  %1958 = vmatpush1.msra.mxu0 0.0
  %1959 = vmatprep.subr.mxu0 0.0
  %1960 = vmatpush1.msra.mxu0 0.0
  %1961 = vmatprep.subr.mxu0 0.0
  %1962 = vmatpush1.msra.mxu0 0.0
  %1963 = vmatprep.subr.mxu0 0.0
  %1964 = vmatpush1.msra.mxu0 0.0
  %1965 = vmatprep.subr.mxu0 0.0
  %1966 = vmatpush1.msra.mxu0 0.0
  %1967 = vmatprep.subr.mxu0 0.0
  %1968 = vmatpush1.msra.mxu0 0.0
  %1969 = vmatprep.subr.mxu0 0.0
  %1970 = vmatpush1.msra.mxu0 0.0
  %1971 = vmatprep.subr.mxu0 0.0
  %1972 = vmatpush1.msra.mxu0 0.0
  %1973 = vmatprep.subr.mxu0 0.0
  %1974 = vmatpush1.msra.mxu0 0.0
  %1975 = vmatprep.subr.mxu0 0.0
  %1976 = vmatpush1.msra.mxu0 0.0
  %1977 = vmatprep.subr.mxu0 0.0
  %1978 = vmatpush1.msra.mxu0 %v452
  %1979 = vmatprep.subr.mxu0 0.0
  %1980 = vmatpush1.msra.mxu0 %v451
  %1981 = vmatprep.subr.mxu0 0.0
  %1982 = vmatpush1.msra.mxu0 %v450
  %1983 = vmatprep.subr.mxu0 0.0
  %1984 = vmatpush1.msra.mxu0 %v449
  %1985 = vmatprep.subr.mxu0 0.0
  %1986 = vmatpush2.msra.mxu0 0.0
  %1987 = vmatprep.subr.mxu0 0.0
  %1988 = vmatpush2.msra.mxu0 0.0
  %1989 = vmatprep.subr.mxu0 0.0
  %1990 = vmatpush2.msra.mxu0 0.0
  %1991 = vmatprep.subr.mxu0 0.0
  %1992 = vmatpush2.msra.mxu0 0.0
  %1993 = vmatprep.subr.mxu0 0.0
  %1994 = vmatpush2.msra.mxu0 0.0
  %1995 = vmatprep.subr.mxu0 0.0
  %1996 = vmatpush2.msra.mxu0 0.0
  %1997 = vmatprep.subr.mxu0 0.0
  %1998 = vmatpush2.msra.mxu0 0.0
  %1999 = vmatprep.subr.mxu0 0.0
  %2000 = vmatpush2.msra.mxu0 0.0
  %2001 = vmatprep.subr.mxu0 0.0
  %2002 = vmatpush2.msra.mxu0 0.0
  %2003 = vmatprep.subr.mxu0 0.0
  %2004 = vmatpush2.msra.mxu0 0.0
  %2005 = vmatprep.subr.mxu0 0.0
  %2006 = vmatpush2.msra.mxu0 0.0
  %2007 = vmatprep.subr.mxu0 0.0
  %2008 = vmatpush2.msra.mxu0 0.0
  %2009 = vmatprep.subr.mxu0 0.0
  %2010 = vmatpush2.msra.mxu0 0.0
  %2011 = vmatprep.subr.mxu0 0.0
  %2012 = vmatpush2.msra.mxu0 0.0
  %2013 = vmatprep.subr.mxu0 0.0
  %2014 = vmatpush2.msra.mxu0 0.0
  %2015 = vmatprep.subr.mxu0 0.0
  %2016 = vmatpush2.msra.mxu0 0.0
  %2017 = vmatprep.mubr.f32.mxu0 0.0
  %2018 = vmatmul.mubr.f32.gmra.mxu0 %v1951
  %v2019 = vpop.f32.mrf.mxu0
  %v2020 = vadd.f32 0.0, %v2019
  %v2021 = vpop.f32.mrf.mxu0
  %2022 = vdwg.mxu0
  %v2023 = vadd.f32 %v1950, %v2020
  %v2024 = vxor.u32 %v2023, 2147483648
  %v2025 = vmul.f32 %v2024, 1.442695
  %v2026 = vpow.pop %v2025
  %v2027 = vadd.f32 %v2026, 1.0
  %v2028 = vrcp.pop %v2027
  %v2029 = vmul.f32 1.0, %v2028
  %v2030 = vtanh.pop %v2023
  %v2031 = vmul.f32 %v2029, %v1833
  %2033 = vrot.lane.b32.xlu0 %v2030, 64
  %v2034 = vpop.permute.xlu0 %2033
  %v2036 = vmul.f32 %v2029, %v2034
  %2038 = vrot.lane.b32.xlu0 %v2036, 32
  %v2039 = vpop.permute.xlu0 %2038
  %v2041 = vadd.f32 %v2031, %v2039
  %v2042 = vtanh.pop %v2041
  %2044 = vrot.lane.b32.xlu0 %v2042, 64
  %v2045 = vpop.permute.xlu0 %2044
  %v2047 = vmul.f32 %v2029, %v2045
  %v2048 = vld [vmem:[%s888 + $0x8] sm:$0xff]
  %2049 = vrot.lane.b32.xlu0 %v1939, 32
  %v2050 = vpop.permute.xlu0 %2049
  %v2051 = vsel %vm111, %v2050, 0
  %2053 = vmatprep.subr.mxu0 0.0
  %2054 = vmatpush1.msra.mxu0 0.0
  %2055 = vmatprep.subr.mxu0 0.0
  %2056 = vmatpush1.msra.mxu0 0.0
  %2057 = vmatprep.subr.mxu0 0.0
  %2058 = vmatpush1.msra.mxu0 0.0
  %2059 = vmatprep.subr.mxu0 0.0
  %2060 = vmatpush1.msra.mxu0 0.0
  %2061 = vmatprep.subr.mxu0 0.0
  %2062 = vmatpush1.msra.mxu0 0.0
  %2063 = vmatprep.subr.mxu0 0.0
  %2064 = vmatpush1.msra.mxu0 0.0
  %2065 = vmatprep.subr.mxu0 0.0
  %2066 = vmatpush1.msra.mxu0 0.0
  %2067 = vmatprep.subr.mxu0 0.0
  %2068 = vmatpush1.msra.mxu0 0.0
  %2069 = vmatprep.subr.mxu0 0.0
  %2070 = vmatpush1.msra.mxu0 0.0
  %2071 = vmatprep.subr.mxu0 0.0
  %2072 = vmatpush1.msra.mxu0 0.0
  %2073 = vmatprep.subr.mxu0 0.0
  %2074 = vmatpush1.msra.mxu0 0.0
  %2075 = vmatprep.subr.mxu0 0.0
  %2076 = vmatpush1.msra.mxu0 0.0
  %2077 = vmatprep.subr.mxu0 0.0
  %2078 = vmatpush1.msra.mxu0 %v456
  %2079 = vmatprep.subr.mxu0 0.0
  %2080 = vmatpush1.msra.mxu0 %v455
  %2081 = vmatprep.subr.mxu0 0.0
  %2082 = vmatpush1.msra.mxu0 %v454
  %2083 = vmatprep.subr.mxu0 0.0
  %2084 = vmatpush1.msra.mxu0 %v453
  %2085 = vmatprep.subr.mxu0 0.0
  %2086 = vmatpush2.msra.mxu0 0.0
  %2087 = vmatprep.subr.mxu0 0.0
  %2088 = vmatpush2.msra.mxu0 0.0
  %2089 = vmatprep.subr.mxu0 0.0
  %2090 = vmatpush2.msra.mxu0 0.0
  %2091 = vmatprep.subr.mxu0 0.0
  %2092 = vmatpush2.msra.mxu0 0.0
  %2093 = vmatprep.subr.mxu0 0.0
  %2094 = vmatpush2.msra.mxu0 0.0
  %2095 = vmatprep.subr.mxu0 0.0
  %2096 = vmatpush2.msra.mxu0 0.0
  %2097 = vmatprep.subr.mxu0 0.0
  %2098 = vmatpush2.msra.mxu0 0.0
  %2099 = vmatprep.subr.mxu0 0.0
  %2100 = vmatpush2.msra.mxu0 0.0
  %2101 = vmatprep.subr.mxu0 0.0
  %2102 = vmatpush2.msra.mxu0 0.0
  %2103 = vmatprep.subr.mxu0 0.0
  %2104 = vmatpush2.msra.mxu0 0.0
  %2105 = vmatprep.subr.mxu0 0.0
  %2106 = vmatpush2.msra.mxu0 0.0
  %2107 = vmatprep.subr.mxu0 0.0
  %2108 = vmatpush2.msra.mxu0 0.0
  %2109 = vmatprep.subr.mxu0 0.0
  %2110 = vmatpush2.msra.mxu0 0.0
  %2111 = vmatprep.subr.mxu0 0.0
  %2112 = vmatpush2.msra.mxu0 0.0
  %2113 = vmatprep.subr.mxu0 0.0
  %2114 = vmatpush2.msra.mxu0 0.0
  %2115 = vmatprep.subr.mxu0 0.0
  %2116 = vmatpush2.msra.mxu0 0.0
  %2117 = vmatprep.mubr.f32.mxu0 0.0
  %2118 = vmatmul.mubr.f32.gmra.mxu0 %v2051
  %v2119 = vpop.f32.mrf.mxu0
  %v2120 = vadd.f32 0.0, %v2119
  %v2121 = vpop.f32.mrf.mxu0
  %2122 = vdwg.mxu0
  %v2123 = vadd.f32 %v2048, %v2120
  %v2124 = vxor.u32 %v2123, 2147483648
  %v2125 = vmul.f32 %v2124, 1.442695
  %v2126 = vpow.pop %v2125
  %v2127 = vadd.f32 %v2126, 1.0
  %v2128 = vrcp.pop %v2127
  %v2129 = vmul.f32 1.0, %v2128
  %v2130 = vtanh.pop %v2123
  %v2131 = vmul.f32 %v2129, %v1933
  %2133 = vrot.lane.b32.xlu0 %v2130, 64
  %v2134 = vpop.permute.xlu0 %2133
  %v2136 = vmul.f32 %v2129, %v2134
  %2138 = vrot.lane.b32.xlu0 %v2136, 32
  %v2139 = vpop.permute.xlu0 %2138
  %v2141 = vadd.f32 %v2131, %v2139
  %v2142 = vtanh.pop %v2141
  %2144 = vrot.lane.b32.xlu0 %v2142, 64
  %v2145 = vpop.permute.xlu0 %2144
  %v2147 = vmul.f32 %v2129, %v2145
  %2149 = vrot.lane.b32.xlu0 %v2047, 32
  %v2150 = vpop.permute.xlu0 %2149
  %2152 = vst.msk [vmem:[%s1100] sm:$0xff] %vm111, %v2150
  %2154 = vrot.lane.b32.xlu0 %v2147, 64
  %v2155 = vpop.permute.xlu0 %2154
  %2157 = vst.msk [vmem:[%s1094] sm:$0xff] %vm668, %v2155
  %v2158 = vld [vmem:[%s773] sm:$0xff]
  %v2159 = vsel %vm111, %v2150, 0
  %2161 = vmatprep.subr.mxu0 0.0
  %2162 = vmatpush1.msra.mxu0 0.0
  %2163 = vmatprep.subr.mxu0 0.0
  %2164 = vmatpush1.msra.mxu0 0.0
  %2165 = vmatprep.subr.mxu0 0.0
  %2166 = vmatpush1.msra.mxu0 0.0
  %2167 = vmatprep.subr.mxu0 0.0
  %2168 = vmatpush1.msra.mxu0 0.0
  %2169 = vmatprep.subr.mxu0 0.0
  %2170 = vmatpush1.msra.mxu0 0.0
  %2171 = vmatprep.subr.mxu0 0.0
  %2172 = vmatpush1.msra.mxu0 0.0
  %2173 = vmatprep.subr.mxu0 0.0
  %2174 = vmatpush1.msra.mxu0 0.0
  %2175 = vmatprep.subr.mxu0 0.0
  %2176 = vmatpush1.msra.mxu0 0.0
  %2177 = vmatprep.subr.mxu0 0.0
  %2178 = vmatpush1.msra.mxu0 0.0
  %2179 = vmatprep.subr.mxu0 0.0
  %2180 = vmatpush1.msra.mxu0 0.0
  %2181 = vmatprep.subr.mxu0 0.0
  %2182 = vmatpush1.msra.mxu0 0.0
  %2183 = vmatprep.subr.mxu0 0.0
  %2184 = vmatpush1.msra.mxu0 0.0
  %2185 = vmatprep.subr.mxu0 0.0
  %2186 = vmatpush1.msra.mxu0 %v452
  %2187 = vmatprep.subr.mxu0 0.0
  %2188 = vmatpush1.msra.mxu0 %v451
  %2189 = vmatprep.subr.mxu0 0.0
  %2190 = vmatpush1.msra.mxu0 %v450
  %2191 = vmatprep.subr.mxu0 0.0
  %2192 = vmatpush1.msra.mxu0 %v449
  %2193 = vmatprep.subr.mxu0 0.0
  %2194 = vmatpush2.msra.mxu0 0.0
  %2195 = vmatprep.subr.mxu0 0.0
  %2196 = vmatpush2.msra.mxu0 0.0
  %2197 = vmatprep.subr.mxu0 0.0
  %2198 = vmatpush2.msra.mxu0 0.0
  %2199 = vmatprep.subr.mxu0 0.0
  %2200 = vmatpush2.msra.mxu0 0.0
  %2201 = vmatprep.subr.mxu0 0.0
  %2202 = vmatpush2.msra.mxu0 0.0
  %2203 = vmatprep.subr.mxu0 0.0
  %2204 = vmatpush2.msra.mxu0 0.0
  %2205 = vmatprep.subr.mxu0 0.0
  %2206 = vmatpush2.msra.mxu0 0.0
  %2207 = vmatprep.subr.mxu0 0.0
  %2208 = vmatpush2.msra.mxu0 0.0
  %2209 = vmatprep.subr.mxu0 0.0
  %2210 = vmatpush2.msra.mxu0 0.0
  %2211 = vmatprep.subr.mxu0 0.0
  %2212 = vmatpush2.msra.mxu0 0.0
  %2213 = vmatprep.subr.mxu0 0.0
  %2214 = vmatpush2.msra.mxu0 0.0
  %2215 = vmatprep.subr.mxu0 0.0
  %2216 = vmatpush2.msra.mxu0 0.0
  %2217 = vmatprep.subr.mxu0 0.0
  %2218 = vmatpush2.msra.mxu0 0.0
  %2219 = vmatprep.subr.mxu0 0.0
  %2220 = vmatpush2.msra.mxu0 0.0
  %2221 = vmatprep.subr.mxu0 0.0
  %2222 = vmatpush2.msra.mxu0 0.0
  %2223 = vmatprep.subr.mxu0 0.0
  %2224 = vmatpush2.msra.mxu0 0.0
  %2225 = vmatprep.mubr.f32.mxu0 0.0
  %2226 = vmatmul.mubr.f32.gmra.mxu0 %v2159
  %v2227 = vpop.f32.mrf.mxu0
  %v2228 = vadd.f32 0.0, %v2227
  %v2229 = vpop.f32.mrf.mxu0
  %2230 = vdwg.mxu0
  %v2231 = vadd.f32 %v2158, %v2228
  %v2232 = vxor.u32 %v2231, 2147483648
  %v2233 = vmul.f32 %v2232, 1.442695
  %v2234 = vpow.pop %v2233
  %v2235 = vadd.f32 %v2234, 1.0
  %v2236 = vrcp.pop %v2235
  %v2237 = vmul.f32 1.0, %v2236
  %v2238 = vtanh.pop %v2231
  %v2239 = vmul.f32 %v2237, %v2041
  %2241 = vrot.lane.b32.xlu0 %v2238, 64
  %v2242 = vpop.permute.xlu0 %2241
  %v2244 = vmul.f32 %v2237, %v2242
  %2246 = vrot.lane.b32.xlu0 %v2244, 32
  %v2247 = vpop.permute.xlu0 %2246
  %v2249 = vadd.f32 %v2239, %v2247
  %v2250 = vtanh.pop %v2249
  %2252 = vrot.lane.b32.xlu0 %v2250, 64
  %v2253 = vpop.permute.xlu0 %2252
  %v2255 = vmul.f32 %v2237, %v2253
  %v2256 = vld [vmem:[%s672 + $0x8] sm:$0xff]
  %2257 = vrot.lane.b32.xlu0 %v2147, 32
  %v2258 = vpop.permute.xlu0 %2257
  %v2259 = vsel %vm111, %v2258, 0
  %2261 = vmatprep.subr.mxu0 0.0
  %2262 = vmatpush1.msra.mxu0 0.0
  %2263 = vmatprep.subr.mxu0 0.0
  %2264 = vmatpush1.msra.mxu0 0.0
  %2265 = vmatprep.subr.mxu0 0.0
  %2266 = vmatpush1.msra.mxu0 0.0
  %2267 = vmatprep.subr.mxu0 0.0
  %2268 = vmatpush1.msra.mxu0 0.0
  %2269 = vmatprep.subr.mxu0 0.0
  %2270 = vmatpush1.msra.mxu0 0.0
  %2271 = vmatprep.subr.mxu0 0.0
  %2272 = vmatpush1.msra.mxu0 0.0
  %2273 = vmatprep.subr.mxu0 0.0
  %2274 = vmatpush1.msra.mxu0 0.0
  %2275 = vmatprep.subr.mxu0 0.0
  %2276 = vmatpush1.msra.mxu0 0.0
  %2277 = vmatprep.subr.mxu0 0.0
  %2278 = vmatpush1.msra.mxu0 0.0
  %2279 = vmatprep.subr.mxu0 0.0
  %2280 = vmatpush1.msra.mxu0 0.0
  %2281 = vmatprep.subr.mxu0 0.0
  %2282 = vmatpush1.msra.mxu0 0.0
  %2283 = vmatprep.subr.mxu0 0.0
  %2284 = vmatpush1.msra.mxu0 0.0
  %2285 = vmatprep.subr.mxu0 0.0
  %2286 = vmatpush1.msra.mxu0 %v456
  %2287 = vmatprep.subr.mxu0 0.0
  %2288 = vmatpush1.msra.mxu0 %v455
  %2289 = vmatprep.subr.mxu0 0.0
  %2290 = vmatpush1.msra.mxu0 %v454
  %2291 = vmatprep.subr.mxu0 0.0
  %2292 = vmatpush1.msra.mxu0 %v453
  %2293 = vmatprep.subr.mxu0 0.0
  %2294 = vmatpush2.msra.mxu0 0.0
  %2295 = vmatprep.subr.mxu0 0.0
  %2296 = vmatpush2.msra.mxu0 0.0
  %2297 = vmatprep.subr.mxu0 0.0
  %2298 = vmatpush2.msra.mxu0 0.0
  %2299 = vmatprep.subr.mxu0 0.0
  %2300 = vmatpush2.msra.mxu0 0.0
  %2301 = vmatprep.subr.mxu0 0.0
  %2302 = vmatpush2.msra.mxu0 0.0
  %2303 = vmatprep.subr.mxu0 0.0
  %2304 = vmatpush2.msra.mxu0 0.0
  %2305 = vmatprep.subr.mxu0 0.0
  %2306 = vmatpush2.msra.mxu0 0.0
  %2307 = vmatprep.subr.mxu0 0.0
  %2308 = vmatpush2.msra.mxu0 0.0
  %2309 = vmatprep.subr.mxu0 0.0
  %2310 = vmatpush2.msra.mxu0 0.0
  %2311 = vmatprep.subr.mxu0 0.0
  %2312 = vmatpush2.msra.mxu0 0.0
  %2313 = vmatprep.subr.mxu0 0.0
  %2314 = vmatpush2.msra.mxu0 0.0
  %2315 = vmatprep.subr.mxu0 0.0
  %2316 = vmatpush2.msra.mxu0 0.0
  %2317 = vmatprep.subr.mxu0 0.0
  %2318 = vmatpush2.msra.mxu0 0.0
  %2319 = vmatprep.subr.mxu0 0.0
  %2320 = vmatpush2.msra.mxu0 0.0
  %2321 = vmatprep.subr.mxu0 0.0
  %2322 = vmatpush2.msra.mxu0 0.0
  %2323 = vmatprep.subr.mxu0 0.0
  %2324 = vmatpush2.msra.mxu0 0.0
  %2325 = vmatprep.mubr.f32.mxu0 0.0
  %2326 = vmatmul.mubr.f32.gmra.mxu0 %v2259
  %v2327 = vpop.f32.mrf.mxu0
  %v2328 = vadd.f32 0.0, %v2327
  %v2329 = vpop.f32.mrf.mxu0
  %2330 = vdwg.mxu0
  %v2331 = vadd.f32 %v2256, %v2328
  %v2332 = vxor.u32 %v2331, 2147483648
  %v2333 = vmul.f32 %v2332, 1.442695
  %v2334 = vpow.pop %v2333
  %v2335 = vadd.f32 %v2334, 1.0
  %v2336 = vrcp.pop %v2335
  %v2337 = vmul.f32 1.0, %v2336
  %v2338 = vtanh.pop %v2331
  %v2339 = vmul.f32 %v2337, %v2141
  %2341 = vrot.lane.b32.xlu0 %v2338, 64
  %v2342 = vpop.permute.xlu0 %2341
  %v2344 = vmul.f32 %v2337, %v2342
  %2346 = vrot.lane.b32.xlu0 %v2344, 32
  %v2347 = vpop.permute.xlu0 %2346
  %v2349 = vadd.f32 %v2339, %v2347
  %v2350 = vtanh.pop %v2349
  %2352 = vrot.lane.b32.xlu0 %v2350, 64
  %v2353 = vpop.permute.xlu0 %2352
  %v2355 = vmul.f32 %v2337, %v2353
  %2357 = vrot.lane.b32.xlu0 %v2255, 32
  %v2358 = vpop.permute.xlu0 %2357
  %2360 = vst.msk [vmem:[%s884] sm:$0xff] %vm111, %v2358
  %2362 = vrot.lane.b32.xlu0 %v2355, 64
  %v2363 = vpop.permute.xlu0 %2362
  %2365 = vst.msk [vmem:[%s878] sm:$0xff] %vm668, %v2363
  %v2366 = vld [vmem:[%s561] sm:$0xff]
  %v2367 = vsel %vm111, %v2358, 0
  %2369 = vmatprep.subr.mxu0 0.0
  %2370 = vmatpush1.msra.mxu0 0.0
  %2371 = vmatprep.subr.mxu0 0.0
  %2372 = vmatpush1.msra.mxu0 0.0
  %2373 = vmatprep.subr.mxu0 0.0
  %2374 = vmatpush1.msra.mxu0 0.0
  %2375 = vmatprep.subr.mxu0 0.0
  %2376 = vmatpush1.msra.mxu0 0.0
  %2377 = vmatprep.subr.mxu0 0.0
  %2378 = vmatpush1.msra.mxu0 0.0
  %2379 = vmatprep.subr.mxu0 0.0
  %2380 = vmatpush1.msra.mxu0 0.0
  %2381 = vmatprep.subr.mxu0 0.0
  %2382 = vmatpush1.msra.mxu0 0.0
  %2383 = vmatprep.subr.mxu0 0.0
  %2384 = vmatpush1.msra.mxu0 0.0
  %2385 = vmatprep.subr.mxu0 0.0
  %2386 = vmatpush1.msra.mxu0 0.0
  %2387 = vmatprep.subr.mxu0 0.0
  %2388 = vmatpush1.msra.mxu0 0.0
  %2389 = vmatprep.subr.mxu0 0.0
  %2390 = vmatpush1.msra.mxu0 0.0
  %2391 = vmatprep.subr.mxu0 0.0
  %2392 = vmatpush1.msra.mxu0 0.0
  %2393 = vmatprep.subr.mxu0 0.0
  %2394 = vmatpush1.msra.mxu0 %v452
  %2395 = vmatprep.subr.mxu0 0.0
  %2396 = vmatpush1.msra.mxu0 %v451
  %2397 = vmatprep.subr.mxu0 0.0
  %2398 = vmatpush1.msra.mxu0 %v450
  %2399 = vmatprep.subr.mxu0 0.0
  %2400 = vmatpush1.msra.mxu0 %v449
  %2401 = vmatprep.subr.mxu0 0.0
  %2402 = vmatpush2.msra.mxu0 0.0
  %2403 = vmatprep.subr.mxu0 0.0
  %2404 = vmatpush2.msra.mxu0 0.0
  %2405 = vmatprep.subr.mxu0 0.0
  %2406 = vmatpush2.msra.mxu0 0.0
  %2407 = vmatprep.subr.mxu0 0.0
  %2408 = vmatpush2.msra.mxu0 0.0
  %2409 = vmatprep.subr.mxu0 0.0
  %2410 = vmatpush2.msra.mxu0 0.0
  %2411 = vmatprep.subr.mxu0 0.0
  %2412 = vmatpush2.msra.mxu0 0.0
  %2413 = vmatprep.subr.mxu0 0.0
  %2414 = vmatpush2.msra.mxu0 0.0
  %2415 = vmatprep.subr.mxu0 0.0
  %2416 = vmatpush2.msra.mxu0 0.0
  %2417 = vmatprep.subr.mxu0 0.0
  %2418 = vmatpush2.msra.mxu0 0.0
  %2419 = vmatprep.subr.mxu0 0.0
  %2420 = vmatpush2.msra.mxu0 0.0
  %2421 = vmatprep.subr.mxu0 0.0
  %2422 = vmatpush2.msra.mxu0 0.0
  %2423 = vmatprep.subr.mxu0 0.0
  %2424 = vmatpush2.msra.mxu0 0.0
  %2425 = vmatprep.subr.mxu0 0.0
  %2426 = vmatpush2.msra.mxu0 0.0
  %2427 = vmatprep.subr.mxu0 0.0
  %2428 = vmatpush2.msra.mxu0 0.0
  %2429 = vmatprep.subr.mxu0 0.0
  %2430 = vmatpush2.msra.mxu0 0.0
  %2431 = vmatprep.subr.mxu0 0.0
  %2432 = vmatpush2.msra.mxu0 0.0
  %2433 = vmatprep.mubr.f32.mxu0 0.0
  %2434 = vmatmul.mubr.f32.gmra.mxu0 %v2367
  %v2435 = vpop.f32.mrf.mxu0
  %v2436 = vadd.f32 0.0, %v2435
  %v2437 = vpop.f32.mrf.mxu0
  %2438 = vdwg.mxu0
  %v2439 = vadd.f32 %v2366, %v2436
  %v2440 = vxor.u32 %v2439, 2147483648
  %v2441 = vmul.f32 %v2440, 1.442695
  %v2442 = vpow.pop %v2441
  %v2443 = vadd.f32 %v2442, 1.0
  %v2444 = vrcp.pop %v2443
  %v2445 = vmul.f32 1.0, %v2444
  %v2446 = vtanh.pop %v2439
  %v2447 = vmul.f32 %v2445, %v2249
  %2449 = vrot.lane.b32.xlu0 %v2446, 64
  %v2450 = vpop.permute.xlu0 %2449
  %v2452 = vmul.f32 %v2445, %v2450
  %2454 = vrot.lane.b32.xlu0 %v2452, 32
  %v2455 = vpop.permute.xlu0 %2454
  %v2457 = vadd.f32 %v2447, %v2455
  %v2458 = vtanh.pop %v2457
  %2460 = vrot.lane.b32.xlu0 %v2458, 64
  %v2461 = vpop.permute.xlu0 %2460
  %v2463 = vmul.f32 %v2445, %v2461
  %v2464 = vld [vmem:[%s459 + $0x8] sm:$0xff]
  %2465 = vrot.lane.b32.xlu0 %v2355, 32
  %v2466 = vpop.permute.xlu0 %2465
  %v2467 = vsel %vm111, %v2466, 0
  %2469 = vmatprep.subr.mxu0 0.0
  %2470 = vmatpush1.msra.mxu0 0.0
  %2471 = vmatprep.subr.mxu0 0.0
  %2472 = vmatpush1.msra.mxu0 0.0
  %2473 = vmatprep.subr.mxu0 0.0
  %2474 = vmatpush1.msra.mxu0 0.0
  %2475 = vmatprep.subr.mxu0 0.0
  %2476 = vmatpush1.msra.mxu0 0.0
  %2477 = vmatprep.subr.mxu0 0.0
  %2478 = vmatpush1.msra.mxu0 0.0
  %2479 = vmatprep.subr.mxu0 0.0
  %2480 = vmatpush1.msra.mxu0 0.0
  %2481 = vmatprep.subr.mxu0 0.0
  %2482 = vmatpush1.msra.mxu0 0.0
  %2483 = vmatprep.subr.mxu0 0.0
  %2484 = vmatpush1.msra.mxu0 0.0
  %2485 = vmatprep.subr.mxu0 0.0
  %2486 = vmatpush1.msra.mxu0 0.0
  %2487 = vmatprep.subr.mxu0 0.0
  %2488 = vmatpush1.msra.mxu0 0.0
  %2489 = vmatprep.subr.mxu0 0.0
  %2490 = vmatpush1.msra.mxu0 0.0
  %2491 = vmatprep.subr.mxu0 0.0
  %2492 = vmatpush1.msra.mxu0 0.0
  %2493 = vmatprep.subr.mxu0 0.0
  %2494 = vmatpush1.msra.mxu0 %v456
  %2495 = vmatprep.subr.mxu0 0.0
  %2496 = vmatpush1.msra.mxu0 %v455
  %2497 = vmatprep.subr.mxu0 0.0
  %2498 = vmatpush1.msra.mxu0 %v454
  %2499 = vmatprep.subr.mxu0 0.0
  %2500 = vmatpush1.msra.mxu0 %v453
  %2501 = vmatprep.subr.mxu0 0.0
  %2502 = vmatpush2.msra.mxu0 0.0
  %2503 = vmatprep.subr.mxu0 0.0
  %2504 = vmatpush2.msra.mxu0 0.0
  %2505 = vmatprep.subr.mxu0 0.0
  %2506 = vmatpush2.msra.mxu0 0.0
  %2507 = vmatprep.subr.mxu0 0.0
  %2508 = vmatpush2.msra.mxu0 0.0
  %2509 = vmatprep.subr.mxu0 0.0
  %2510 = vmatpush2.msra.mxu0 0.0
  %2511 = vmatprep.subr.mxu0 0.0
  %2512 = vmatpush2.msra.mxu0 0.0
  %2513 = vmatprep.subr.mxu0 0.0
  %2514 = vmatpush2.msra.mxu0 0.0
  %2515 = vmatprep.subr.mxu0 0.0
  %2516 = vmatpush2.msra.mxu0 0.0
  %2517 = vmatprep.subr.mxu0 0.0
  %2518 = vmatpush2.msra.mxu0 0.0
  %2519 = vmatprep.subr.mxu0 0.0
  %2520 = vmatpush2.msra.mxu0 0.0
  %2521 = vmatprep.subr.mxu0 0.0
  %2522 = vmatpush2.msra.mxu0 0.0
  %2523 = vmatprep.subr.mxu0 0.0
  %2524 = vmatpush2.msra.mxu0 0.0
  %2525 = vmatprep.subr.mxu0 0.0
  %2526 = vmatpush2.msra.mxu0 0.0
  %2527 = vmatprep.subr.mxu0 0.0
  %2528 = vmatpush2.msra.mxu0 0.0
  %2529 = vmatprep.subr.mxu0 0.0
  %2530 = vmatpush2.msra.mxu0 0.0
  %2531 = vmatprep.subr.mxu0 0.0
  %2532 = vmatpush2.msra.mxu0 0.0
  %2533 = vmatprep.mubr.f32.mxu0 0.0
  %2534 = vmatmul.mubr.f32.gmra.mxu0 %v2467
  %v2535 = vpop.f32.mrf.mxu0
  %v2536 = vadd.f32 0.0, %v2535
  %v2537 = vpop.f32.mrf.mxu0
  %2538 = vdwg.mxu0
  %v2539 = vadd.f32 %v2464, %v2536
  %v2540 = vxor.u32 %v2539, 2147483648
  %v2541 = vmul.f32 %v2540, 1.442695
  %v2542 = vpow.pop %v2541
  %v2543 = vadd.f32 %v2542, 1.0
  %v2544 = vrcp.pop %v2543
  %v2545 = vmul.f32 1.0, %v2544
  %v2546 = vtanh.pop %v2539
  %v2547 = vmul.f32 %v2545, %v2349
  %2549 = vrot.lane.b32.xlu0 %v2546, 64
  %v2550 = vpop.permute.xlu0 %2549
  %v2552 = vmul.f32 %v2545, %v2550
  %2554 = vrot.lane.b32.xlu0 %v2552, 32
  %v2555 = vpop.permute.xlu0 %2554
  %v2557 = vadd.f32 %v2547, %v2555
  %v2558 = vtanh.pop %v2557
  %2560 = vrot.lane.b32.xlu0 %v2558, 64
  %v2561 = vpop.permute.xlu0 %2560
  %v2563 = vmul.f32 %v2545, %v2561
  %2565 = vrot.lane.b32.xlu0 %v2463, 32
  %v2566 = vpop.permute.xlu0 %2565
  %2568 = vst.msk [vmem:[%s667] sm:$0xff] %vm111, %v2566
  %2570 = vrot.lane.b32.xlu0 %v2563, 64
  %v2571 = vpop.permute.xlu0 %2570
  %2573 = vst.msk [vmem:[%s8] sm:$0xff] %vm668, %v2571
  %2574 = vst.msk [vmem:[%s10] sm:$0xff] %vm111, %v2566
  %2576 = vrot.lane.b32.xlu0 %v2457, 96
  %v2577 = vpop.permute.xlu0 %2576
  %2579 = vst.msk [vmem:[%s11] sm:$0xff] %vm111, %v2577
  %2580 = vrot.lane.b32.xlu0 %v2563, 32
  %v2581 = vpop.permute.xlu0 %2580
  %2583 = vst.msk [vmem:[%s12] sm:$0xff] %vm111, %v2581
  %2585 = vrot.lane.b32.xlu0 %v2557, 96
  %v2586 = vpop.permute.xlu0 %2585
  %2588 = vst.msk [vmem:[%s13] sm:$0xff] %vm111, %v2586
  %v2589 = vld [vmem:[%s8] sm:$0xff]
  %v2590 = vld [vmem:[%s8 + $0x8] sm:$0xff]
  %v2591 = vld [vmem:[%s8 + $0x10] sm:$0xff]
  %v2592 = vld [vmem:[%s8 + $0x18] sm:$0xff]
  %v2593 = vld [vmem:[%s8 + $0x20] sm:$0xff]
  %v2594 = vld [vmem:[%s8 + $0x28] sm:$0xff]
  %v2595 = vld [vmem:[%s8 + $0x30] sm:$0xff]
  %v2596 = vld [vmem:[%s8 + $0x38] sm:$0xff]
  %v2597 = vld [vmem:[%s8 + $0x40] sm:$0xff]
  %v2598 = vld [vmem:[%s8 + $0x48] sm:$0xff]
  %v2599 = vld [vmem:[%s6] sm:$0xff]
  %v2600 = vld [vmem:[%s6 + $0x8] sm:$0xff]
  %v2601 = vld [vmem:[%s6 + $0x10] sm:$0xff]
  %v2602 = vld [vmem:[%s6 + $0x18] sm:$0xff]
  %v2603 = vld [vmem:[%s6 + $0x20] sm:$0xff]
  %v2604 = vld [vmem:[%s6 + $0x28] sm:$0xff]
  %v2605 = vld [vmem:[%s6 + $0x30] sm:$0xff]
  %v2606 = vld [vmem:[%s6 + $0x38] sm:$0xff]
  %v2607 = vld [vmem:[%s7] sm:$0x1]
  %v2609 = vlaneseq
  %v2610 = vshrl.u32 %v2609, 7
  %v2611 = vsub.s32 0, %v2610
  %v2612 = vrot.slane %v2607, %v2611
  %vm2614 = vcmask 523264
  %v2616 = vsel %vm2614, %v2589, 0
  %v2619 = vsel %vm2614, %v2590, 0
  %v2622 = vsel %vm2614, %v2591, 0
  %v2625 = vsel %vm2614, %v2592, 0
  %v2628 = vsel %vm2614, %v2593, 0
  %v2631 = vsel %vm2614, %v2594, 0
  %v2634 = vsel %vm2614, %v2595, 0
  %v2637 = vsel %vm2614, %v2596, 0
  %v2640 = vsel %vm2614, %v2597, 0
  %v2643 = vsel %vm2614, %v2598, 0
  %2645 = vmatprep.subr.mxu0 0.0
  %2646 = vmatpush1.msra.mxu0 0.0
  %2647 = vmatprep.subr.mxu0 0.0
  %2648 = vmatpush1.msra.mxu0 0.0
  %2649 = vmatprep.subr.mxu0 0.0
  %2650 = vmatpush1.msra.mxu0 0.0
  %2651 = vmatprep.subr.mxu0 0.0
  %2652 = vmatpush1.msra.mxu0 0.0
  %2653 = vmatprep.subr.mxu0 0.0
  %2654 = vmatpush1.msra.mxu0 0.0
  %2655 = vmatprep.subr.mxu0 0.0
  %2656 = vmatpush1.msra.mxu0 0.0
  %2657 = vmatprep.subr.mxu0 0.0
  %2658 = vmatpush1.msra.mxu0 0.0
  %2659 = vmatprep.subr.mxu0 0.0
  %2660 = vmatpush1.msra.mxu0 0.0
  %2661 = vmatprep.subr.mxu0 0.0
  %2662 = vmatpush1.msra.mxu0 %v2606
  %2663 = vmatprep.subr.mxu0 0.0
  %2664 = vmatpush1.msra.mxu0 %v2605
  %2665 = vmatprep.subr.mxu0 0.0
  %2666 = vmatpush1.msra.mxu0 %v2604
  %2667 = vmatprep.subr.mxu0 0.0
  %2668 = vmatpush1.msra.mxu0 %v2603
  %2669 = vmatprep.subr.mxu0 0.0
  %2670 = vmatpush1.msra.mxu0 %v2602
  %2671 = vmatprep.subr.mxu0 0.0
  %2672 = vmatpush1.msra.mxu0 %v2601
  %2673 = vmatprep.subr.mxu0 0.0
  %2674 = vmatpush1.msra.mxu0 %v2600
  %2675 = vmatprep.subr.mxu0 0.0
  %2676 = vmatpush1.msra.mxu0 %v2599
  %2677 = vmatprep.subr.mxu0 0.0
  %2678 = vmatpush2.msra.mxu0 0.0
  %2679 = vmatprep.subr.mxu0 0.0
  %2680 = vmatpush2.msra.mxu0 0.0
  %2681 = vmatprep.subr.mxu0 0.0
  %2682 = vmatpush2.msra.mxu0 0.0
  %2683 = vmatprep.subr.mxu0 0.0
  %2684 = vmatpush2.msra.mxu0 0.0
  %2685 = vmatprep.subr.mxu0 0.0
  %2686 = vmatpush2.msra.mxu0 0.0
  %2687 = vmatprep.subr.mxu0 0.0
  %2688 = vmatpush2.msra.mxu0 0.0
  %2689 = vmatprep.subr.mxu0 0.0
  %2690 = vmatpush2.msra.mxu0 0.0
  %2691 = vmatprep.subr.mxu0 0.0
  %2692 = vmatpush2.msra.mxu0 0.0
  %2693 = vmatprep.subr.mxu0 0.0
  %2694 = vmatpush2.msra.mxu0 0.0
  %2695 = vmatprep.subr.mxu0 0.0
  %2696 = vmatpush2.msra.mxu0 0.0
  %2697 = vmatprep.subr.mxu0 0.0
  %2698 = vmatpush2.msra.mxu0 0.0
  %2699 = vmatprep.subr.mxu0 0.0
  %2700 = vmatpush2.msra.mxu0 0.0
  %2701 = vmatprep.subr.mxu0 0.0
  %2702 = vmatpush2.msra.mxu0 0.0
  %2703 = vmatprep.subr.mxu0 0.0
  %2704 = vmatpush2.msra.mxu0 0.0
  %2705 = vmatprep.subr.mxu0 0.0
  %2706 = vmatpush2.msra.mxu0 0.0
  %2707 = vmatprep.subr.mxu0 0.0
  %2708 = vmatpush2.msra.mxu0 0.0
  %2709 = vmatprep.mubr.f32.mxu0 0.0
  %2710 = vmatmul.mubr.f32.gmra.mxu0 %v2616
  %v2711 = vpop.f32.mrf.mxu0
  %v2712 = vadd.f32 %v2612, %v2711
  %v2713 = vpop.f32.mrf.mxu0
  %2714 = vmatprep.mubr.f32.mxu0 0.0
  %2715 = vmatmul.mubr.f32.gmra.mxu0 %v2619
  %v2716 = vpop.f32.mrf.mxu0
  %v2717 = vadd.f32 %v2612, %v2716
  %v2718 = vpop.f32.mrf.mxu0
  %2719 = vmatprep.mubr.f32.mxu0 0.0
  %2720 = vmatmul.mubr.f32.gmra.mxu0 %v2622
  %v2721 = vpop.f32.mrf.mxu0
  %v2722 = vadd.f32 %v2612, %v2721
  %v2723 = vpop.f32.mrf.mxu0
  %2724 = vmatprep.mubr.f32.mxu0 0.0
  %2725 = vmatmul.mubr.f32.gmra.mxu0 %v2625
  %v2726 = vpop.f32.mrf.mxu0
  %v2727 = vadd.f32 %v2612, %v2726
  %v2728 = vpop.f32.mrf.mxu0
  %2729 = vmatprep.mubr.f32.mxu0 0.0
  %2730 = vmatmul.mubr.f32.gmra.mxu0 %v2628
  %v2731 = vpop.f32.mrf.mxu0
  %v2732 = vadd.f32 %v2612, %v2731
  %v2733 = vpop.f32.mrf.mxu0
  %2734 = vmatprep.mubr.f32.mxu0 0.0
  %2735 = vmatmul.mubr.f32.gmra.mxu0 %v2631
  %v2736 = vpop.f32.mrf.mxu0
  %v2737 = vadd.f32 %v2612, %v2736
  %v2738 = vpop.f32.mrf.mxu0
  %2739 = vmatprep.mubr.f32.mxu0 0.0
  %2740 = vmatmul.mubr.f32.gmra.mxu0 %v2634
  %v2741 = vpop.f32.mrf.mxu0
  %v2742 = vadd.f32 %v2612, %v2741
  %v2743 = vpop.f32.mrf.mxu0
  %2744 = vmatprep.mubr.f32.mxu0 0.0
  %2745 = vmatmul.mubr.f32.gmra.mxu0 %v2637
  %v2746 = vpop.f32.mrf.mxu0
  %v2747 = vadd.f32 %v2612, %v2746
  %v2748 = vpop.f32.mrf.mxu0
  %2749 = vmatprep.mubr.f32.mxu0 0.0
  %2750 = vmatmul.mubr.f32.gmra.mxu0 %v2640
  %v2751 = vpop.f32.mrf.mxu0
  %v2752 = vadd.f32 %v2612, %v2751
  %v2753 = vpop.f32.mrf.mxu0
  %2754 = vmatprep.mubr.f32.mxu0 0.0
  %2755 = vmatmul.mubr.f32.gmra.mxu0 %v2643
  %v2756 = vpop.f32.mrf.mxu0
  %v2757 = vadd.f32 %v2612, %v2756
  %v2758 = vpop.f32.mrf.mxu0
  %2759 = vdwg.mxu0
  %2760 = vst.msk [vmem:[%s9] sm:$0xff] %vm111, %v2712
  %2761 = vst.msk [vmem:[%s9 + $0x8] sm:$0xff] %vm111, %v2717
  %2762 = vst.msk [vmem:[%s9 + $0x10] sm:$0xff] %vm111, %v2722
  %2763 = vst.msk [vmem:[%s9 + $0x18] sm:$0xff] %vm111, %v2727
  %2764 = vst.msk [vmem:[%s9 + $0x20] sm:$0xff] %vm111, %v2732
  %2765 = vst.msk [vmem:[%s9 + $0x28] sm:$0xff] %vm111, %v2737
  %2766 = vst.msk [vmem:[%s9 + $0x30] sm:$0xff] %vm111, %v2742
  %2767 = vst.msk [vmem:[%s9 + $0x38] sm:$0xff] %vm111, %v2747
  %2768 = vst.msk [vmem:[%s9 + $0x40] sm:$0xff] %vm111, %v2752
  %2769 = vst.msk [vmem:[%s9 + $0x48] sm:$0xff] %vm111, %v2757
  // Predicated region
  $region34: #{seq2seq_forward.2} parent=0 // pred_check
    _
  $region35: #{seq2seq_forward.2} parent=0 // pred_check_branch
    %2771 = sbr.rel (0) target = $region37
  $region36: #{seq2seq_forward.2} parent=0 // pred_region
    _
  $region37: #{seq2seq_forward.2} parent=0 // pred_fallthru
    _
  // Predicated region
  $region38: #{seq2seq_forward.2} parent=0 // pred_check
    _
  $region39: #{seq2seq_forward.2} parent=0 // pred_check_branch
    %2773 = sbr.rel (0) target = $region41
  $region40: #{seq2seq_forward.2} parent=0 // pred_region
    _
  $region41: #{seq2seq_forward.2} parent=0 // pred_fallthru
    _
  // Predicated region
  $region42: #{seq2seq_forward.2} parent=0 // pred_check
    _
  $region43: #{seq2seq_forward.2} parent=0 // pred_check_branch
    %2775 = sbr.rel (0) target = $region45
  $region44: #{seq2seq_forward.2} parent=0 // pred_region
    _
  $region45: #{seq2seq_forward.2} parent=0 // pred_fallthru
    _
  // Predicated region
  $region46: #{seq2seq_forward.2} parent=0 // pred_check
    _
  $region47: #{seq2seq_forward.2} parent=0 // pred_check_branch
    %2777 = sbr.rel (0) target = $region49
  $region48: #{seq2seq_forward.2} parent=0 // pred_region
    _
  $region49: #{seq2seq_forward.2} parent=0 // pred_fallthru
    _
  // Predicated region
  $region50: #{seq2seq_forward.2} parent=0 // pred_check
    _
  $region51: #{seq2seq_forward.2} parent=0 // pred_check_branch
    %2779 = sbr.rel (0) target = $region53
  $region52: #{seq2seq_forward.2} parent=0 // pred_region
    _
  $region53: #{seq2seq_forward.2} parent=0 // pred_fallthru
    _
  // Predicated region
  $region54: #{seq2seq_forward.2} parent=0 // pred_check
    _
  $region55: #{seq2seq_forward.2} parent=0 // pred_check_branch
    %2781 = sbr.rel (0) target = $region57
  $region56: #{seq2seq_forward.2} parent=0 // pred_region
    _
  $region57: #{seq2seq_forward.2} parent=0 // pred_fallthru
    _
  // Predicated region
  $region58: #{seq2seq_forward.2} parent=0 // pred_check
    _
  $region59: #{seq2seq_forward.2} parent=0 // pred_check_branch
    %2783 = sbr.rel (0) target = $region61
  $region60: #{seq2seq_forward.2} parent=0 // pred_region
    _
  $region61: #{seq2seq_forward.2} parent=0 // pred_fallthru
    _
  // Predicated region
  $region62: #{seq2seq_forward.2} parent=0 // pred_check
    _
  $region63: #{seq2seq_forward.2} parent=0 // pred_check_branch
    %2785 = sbr.rel (0) target = $region65
  $region64: #{seq2seq_forward.2} parent=0 // pred_region
    _
  $region65: #{seq2seq_forward.2} parent=0 // pred_fallthru
    _
  // Predicated region
  $region66: #{seq2seq_forward.2} parent=0 // pred_check
    _
  $region67: #{seq2seq_forward.2} parent=0 // pred_check_branch
    %2787 = sbr.rel (0) target = $region69
  $region68: #{seq2seq_forward.2} parent=0 // pred_region
    _
  $region69: #{seq2seq_forward.2} parent=0 // pred_fallthru
    _
  // Predicated region
  $region70: #{seq2seq_forward.2} parent=0 // pred_check
    _
  $region71: #{seq2seq_forward.2} parent=0 // pred_check_branch
    %2789 = sbr.rel (0) target = $region73
  $region72: #{seq2seq_forward.2} parent=0 // pred_region
    _
  $region73: #{seq2seq_forward.2} parent=0 // pred_fallthru
    _
  // Predicated region
  $region74: #{seq2seq_forward.2} parent=0 // pred_check
    _
  $region75: #{seq2seq_forward.2} parent=0 // pred_check_branch
    %2791 = sbr.rel (0) target = $region77
  $region76: #{seq2seq_forward.2} parent=0 // pred_region
    _
  $region77: #{seq2seq_forward.2} parent=0 // pred_fallthru
    _
  // Predicated region
  $region78: #{seq2seq_forward.2} parent=0 // pred_check
    _
  $region79: #{seq2seq_forward.2} parent=0 // pred_check_branch
    %2793 = sbr.rel (0) target = $region81
  $region80: #{seq2seq_forward.2} parent=0 // pred_region
    _
  $region81: #{seq2seq_forward.2} parent=0 // pred_fallthru
    _

// kernel: seq2seq_forward.3
$region0: #{seq2seq_forward.3}
  #allocation0 [shape = 'u32[]', space=smem, size = 0x4, offset = 0x4, fixed_abs, tag = 'smem constant byte address 0x4 - core index']
  #allocation1 [shape = 'u32[144,128]{1,0:T(1,128)}', space=vmem, size = 0x12000, scoped, tag = 'internal scratch']
  #allocation2 [shape = 'f32[1,1]{1,0:T(1,128)S(1)}', space=vmem, size = 0x200, scoped, tag = 'scoped memory for seq2seq_forward.3']
  %s0 = inlined_call_operand.vmem [shape: s32[8], index: 0, kind: input, shape index: {}]
  %s1 = inlined_call_operand.vmem [shape: s32[8,8,1], index: 1, kind: input, shape index: {}]
  %s2 = inlined_call_operand.vmem [shape: f32[10,8,64], index: 2, kind: input, shape index: {}]
  %s3 = inlined_call_operand.vmem [shape: f32[10,8,32], index: 3, kind: input, shape index: {}]
  %s4 = inlined_call_operand.vmem [shape: f32[8,64], index: 4, kind: input, shape index: {}]
  %s5 = inlined_call_operand.vmem [shape: f32[8,64], index: 5, kind: input, shape index: {}]
  %s6 = inlined_call_operand.vmem [shape: f32[64,32], index: 6, kind: input, shape index: {}]
  %s7 = inlined_call_operand.vmem [shape: f32[1,32], index: 7, kind: input, shape index: {}]
  %s8 = inlined_call_operand.vmem [shape: f32[64,32], index: 8, kind: input, shape index: {}]
  %s9 = inlined_call_operand.vmem [shape: f32[1,32], index: 9, kind: input, shape index: {}]
  %s10 = inlined_call_operand.vmem [shape: f32[32,32], index: 10, kind: input, shape index: {}]
  %s11 = inlined_call_operand.vmem [shape: f32[1,32], index: 11, kind: input, shape index: {}]
  %s12 = inlined_call_operand.<no memory space> [shape: f32[1,1], index: 12, kind: input, shape index: {}]
  %s13 = inlined_call_operand.vmem [shape: f32[128,128], index: 13, kind: input, shape index: {}]
  %s14 = inlined_call_operand.vmem [shape: f32[96,128], index: 14, kind: input, shape index: {}]
  %s15 = inlined_call_operand.vmem [shape: f32[1,128], index: 15, kind: input, shape index: {}]
  %s16 = inlined_call_operand.vmem [shape: f32[128,128], index: 16, kind: input, shape index: {}]
  %s17 = inlined_call_operand.vmem [shape: f32[96,128], index: 17, kind: input, shape index: {}]
  %s18 = inlined_call_operand.vmem [shape: f32[1,128], index: 18, kind: input, shape index: {}]
  %s19 = inlined_call_operand.vmem [shape: f32[8,8,128], index: 19, kind: output, shape index: {}]
  %s20 = sld [smem:[#allocation0]]
  $region90: #{seq2seq_forward.3} parent=0
    _
  %s22 = ssub.s32 1, %s20
  %s23 = scalar_select 0, %s22, %s20
  %v24 = vstv %s12
  %25 = vst [vmem:[#allocation2] sm:$0x1] %v24
  $region1: #{seq2seq_forward.3} parent=0
    #allocation3 [shape = 'u8[512]{0}', space=smem, size = 0x200, scoped, tag = 'input window, operand 0, single buffered']
    #allocation4 [shape = 's32[1]{0}', space=sflag, size = 0x4, scoped, tag = 'scoped memory for seq2seq_forward.3']
    %26 = vsyncpa [#allocation4], 0
    // Predicated region
    $region2: #{seq2seq_forward.3} parent=1 // pred_check
      _
    $region3: #{seq2seq_forward.3} parent=1 // pred_check_branch
      %28 = sbr.rel (0) target = $region5
    $region4: #{seq2seq_forward.3} parent=1 // pred_region
      %s30 = ssub.s32 16, 16
      %31 = vsyncadd [#allocation4], %s30
      %s33 = sshll.u32 %s0, 4
      %s34 = int_to_ptr.vmem [resolvable:$true] %s33
      %36 = dma.vmem_to_smem %s34, 16, [#allocation3], [#allocation4]
    $region5: #{seq2seq_forward.3} parent=1 // pred_fallthru
      _
    // Predicated region
    $region6: #{seq2seq_forward.3} parent=1 // pred_check
      _
    $region7: #{seq2seq_forward.3} parent=1 // pred_check_branch
      %38 = sbr.rel (0) target = $region9
    $region8: #{seq2seq_forward.3} parent=1 // pred_region
      _
    $region9: #{seq2seq_forward.3} parent=1 // pred_fallthru
      _
    // Predicated region
    $region10: #{seq2seq_forward.3} parent=1 // pred_check
      _
    $region11: #{seq2seq_forward.3} parent=1 // pred_check_branch
      %40 = sbr.rel (0) target = $region13
    $region12: #{seq2seq_forward.3} parent=1 // pred_region
      _
    $region13: #{seq2seq_forward.3} parent=1 // pred_fallthru
      _
    // Predicated region
    $region14: #{seq2seq_forward.3} parent=1 // pred_check
      _
    $region15: #{seq2seq_forward.3} parent=1 // pred_check_branch
      %42 = sbr.rel (0) target = $region17
    $region16: #{seq2seq_forward.3} parent=1 // pred_region
      _
    $region17: #{seq2seq_forward.3} parent=1 // pred_fallthru
      _
    // Predicated region
    $region18: #{seq2seq_forward.3} parent=1 // pred_check
      _
    $region19: #{seq2seq_forward.3} parent=1 // pred_check_branch
      %44 = sbr.rel (0) target = $region21
    $region20: #{seq2seq_forward.3} parent=1 // pred_region
      _
    $region21: #{seq2seq_forward.3} parent=1 // pred_fallthru
      _
    // Predicated region
    $region22: #{seq2seq_forward.3} parent=1 // pred_check
      _
    $region23: #{seq2seq_forward.3} parent=1 // pred_check_branch
      %46 = sbr.rel (0) target = $region25
    $region24: #{seq2seq_forward.3} parent=1 // pred_region
      _
    $region25: #{seq2seq_forward.3} parent=1 // pred_fallthru
      _
    // Predicated region
    $region26: #{seq2seq_forward.3} parent=1 // pred_check
      _
    $region27: #{seq2seq_forward.3} parent=1 // pred_check_branch
      %48 = sbr.rel (0) target = $region29
    $region28: #{seq2seq_forward.3} parent=1 // pred_region
      _
    $region29: #{seq2seq_forward.3} parent=1 // pred_fallthru
      _
    // Predicated region
    $region30: #{seq2seq_forward.3} parent=1 // pred_check
      _
    $region31: #{seq2seq_forward.3} parent=1 // pred_check_branch
      %50 = sbr.rel (0) target = $region33
    $region32: #{seq2seq_forward.3} parent=1 // pred_region
      _
    $region33: #{seq2seq_forward.3} parent=1 // pred_fallthru
      _
    // Predicated region
    $region34: #{seq2seq_forward.3} parent=1 // pred_check
      _
    $region35: #{seq2seq_forward.3} parent=1 // pred_check_branch
      %52 = sbr.rel (0) target = $region37
    $region36: #{seq2seq_forward.3} parent=1 // pred_region
      _
    $region37: #{seq2seq_forward.3} parent=1 // pred_fallthru
      _
    // Predicated region
    $region38: #{seq2seq_forward.3} parent=1 // pred_check
      _
    $region39: #{seq2seq_forward.3} parent=1 // pred_check_branch
      %54 = sbr.rel (0) target = $region41
    $region40: #{seq2seq_forward.3} parent=1 // pred_region
      _
    $region41: #{seq2seq_forward.3} parent=1 // pred_fallthru
      _
    // Predicated region
    $region42: #{seq2seq_forward.3} parent=1 // pred_check
      _
    $region43: #{seq2seq_forward.3} parent=1 // pred_check_branch
      %56 = sbr.rel (0) target = $region45
    $region44: #{seq2seq_forward.3} parent=1 // pred_region
      _
    $region45: #{seq2seq_forward.3} parent=1 // pred_fallthru
      _
    // Predicated region
    $region46: #{seq2seq_forward.3} parent=1 // pred_check
      _
    $region47: #{seq2seq_forward.3} parent=1 // pred_check_branch
      %58 = sbr.rel (0) target = $region49
    $region48: #{seq2seq_forward.3} parent=1 // pred_region
      _
    $region49: #{seq2seq_forward.3} parent=1 // pred_fallthru
      _
    // Predicated region
    $region50: #{seq2seq_forward.3} parent=1 // pred_check
      _
    $region51: #{seq2seq_forward.3} parent=1 // pred_check_branch
      %60 = sbr.rel (0) target = $region53
    $region52: #{seq2seq_forward.3} parent=1 // pred_region
      _
    $region53: #{seq2seq_forward.3} parent=1 // pred_fallthru
      _
    // Predicated region
    $region54: #{seq2seq_forward.3} parent=1 // pred_check
      _
    $region55: #{seq2seq_forward.3} parent=1 // pred_check_branch
      %62 = sbr.rel (0) target = $region57
    $region56: #{seq2seq_forward.3} parent=1 // pred_region
      _
    $region57: #{seq2seq_forward.3} parent=1 // pred_fallthru
      _
    // Predicated region
    $region58: #{seq2seq_forward.3} parent=1 // pred_check
      _
    $region59: #{seq2seq_forward.3} parent=1 // pred_check_branch
      %64 = sbr.rel (0) target = $region61
    $region60: #{seq2seq_forward.3} parent=1 // pred_region
      _
    $region61: #{seq2seq_forward.3} parent=1 // pred_fallthru
      _
    // Predicated region
    $region62: #{seq2seq_forward.3} parent=1 // pred_check
      _
    $region63: #{seq2seq_forward.3} parent=1 // pred_check_branch
      %66 = sbr.rel (0) target = $region65
    $region64: #{seq2seq_forward.3} parent=1 // pred_region
      _
    $region65: #{seq2seq_forward.3} parent=1 // pred_fallthru
      _
    // Predicated region
    $region66: #{seq2seq_forward.3} parent=1 // pred_check
      _
    $region67: #{seq2seq_forward.3} parent=1 // pred_check_branch
      %68 = sbr.rel (0) target = $region69
    $region68: #{seq2seq_forward.3} parent=1 // pred_region
      _
    $region69: #{seq2seq_forward.3} parent=1 // pred_fallthru
      _
    // Predicated region
    $region70: #{seq2seq_forward.3} parent=1 // pred_check
      _
    $region71: #{seq2seq_forward.3} parent=1 // pred_check_branch
      %70 = sbr.rel (0) target = $region73
    $region72: #{seq2seq_forward.3} parent=1 // pred_region
      _
    $region73: #{seq2seq_forward.3} parent=1 // pred_fallthru
      _
    // Predicated region
    $region74: #{seq2seq_forward.3} parent=1 // pred_check
      _
    $region75: #{seq2seq_forward.3} parent=1 // pred_check_branch
      %72 = sbr.rel (0) target = $region77
    $region76: #{seq2seq_forward.3} parent=1 // pred_region
      _
    $region77: #{seq2seq_forward.3} parent=1 // pred_fallthru
      _
    // Predicated region
    $region78: #{seq2seq_forward.3} parent=1 // pred_check
      _
    $region79: #{seq2seq_forward.3} parent=1 // pred_check_branch
      %74 = sbr.rel (0) target = $region81
    $region80: #{seq2seq_forward.3} parent=1 // pred_region
      %75 = dma.done [#allocation4], 16
    $region81: #{seq2seq_forward.3} parent=1 // pred_fallthru
      _
    %76 = sfence
    %v77 = vld [vmem:[%s4] sm:$0xff]
    %v78 = vld [vmem:[%s6] sm:$0xff]
    %v79 = vld [vmem:[%s6 + $0x8] sm:$0xff]
    %v80 = vld [vmem:[%s6 + $0x10] sm:$0xff]
    %v81 = vld [vmem:[%s6 + $0x18] sm:$0xff]
    %v82 = vld [vmem:[%s6 + $0x20] sm:$0xff]
    %v83 = vld [vmem:[%s6 + $0x28] sm:$0xff]
    %v84 = vld [vmem:[%s6 + $0x30] sm:$0xff]
    %v85 = vld [vmem:[%s6 + $0x38] sm:$0xff]
    %v86 = vld [vmem:[%s7] sm:$0x1]
    %v88 = vlaneseq
    %v89 = vshrl.u32 %v88, 7
    %v90 = vsub.s32 0, %v89
    %v91 = vrot.slane %v86, %v90
    %vm93 = vcmask 523264
    %v95 = vsel %vm93, %v77, 0
    %97 = vmatprep.subr.mxu0 0.0
    %98 = vmatpush1.msra.mxu0 0.0
    %99 = vmatprep.subr.mxu0 0.0
    %100 = vmatpush1.msra.mxu0 0.0
    %101 = vmatprep.subr.mxu0 0.0
    %102 = vmatpush1.msra.mxu0 0.0
    %103 = vmatprep.subr.mxu0 0.0
    %104 = vmatpush1.msra.mxu0 0.0
    %105 = vmatprep.subr.mxu0 0.0
    %106 = vmatpush1.msra.mxu0 0.0
    %107 = vmatprep.subr.mxu0 0.0
    %108 = vmatpush1.msra.mxu0 0.0
    %109 = vmatprep.subr.mxu0 0.0
    %110 = vmatpush1.msra.mxu0 0.0
    %111 = vmatprep.subr.mxu0 0.0
    %112 = vmatpush1.msra.mxu0 0.0
    %113 = vmatprep.subr.mxu0 0.0
    %114 = vmatpush1.msra.mxu0 %v85
    %115 = vmatprep.subr.mxu0 0.0
    %116 = vmatpush1.msra.mxu0 %v84
    %117 = vmatprep.subr.mxu0 0.0
    %118 = vmatpush1.msra.mxu0 %v83
    %119 = vmatprep.subr.mxu0 0.0
    %120 = vmatpush1.msra.mxu0 %v82
    %121 = vmatprep.subr.mxu0 0.0
    %122 = vmatpush1.msra.mxu0 %v81
    %123 = vmatprep.subr.mxu0 0.0
    %124 = vmatpush1.msra.mxu0 %v80
    %125 = vmatprep.subr.mxu0 0.0
    %126 = vmatpush1.msra.mxu0 %v79
    %127 = vmatprep.subr.mxu0 0.0
    %128 = vmatpush1.msra.mxu0 %v78
    %129 = vmatprep.subr.mxu0 0.0
    %130 = vmatpush2.msra.mxu0 0.0
    %131 = vmatprep.subr.mxu0 0.0
    %132 = vmatpush2.msra.mxu0 0.0
    %133 = vmatprep.subr.mxu0 0.0
    %134 = vmatpush2.msra.mxu0 0.0
    %135 = vmatprep.subr.mxu0 0.0
    %136 = vmatpush2.msra.mxu0 0.0
    %137 = vmatprep.subr.mxu0 0.0
    %138 = vmatpush2.msra.mxu0 0.0
    %139 = vmatprep.subr.mxu0 0.0
    %140 = vmatpush2.msra.mxu0 0.0
    %141 = vmatprep.subr.mxu0 0.0
    %142 = vmatpush2.msra.mxu0 0.0
    %143 = vmatprep.subr.mxu0 0.0
    %144 = vmatpush2.msra.mxu0 0.0
    %145 = vmatprep.subr.mxu0 0.0
    %146 = vmatpush2.msra.mxu0 0.0
    %147 = vmatprep.subr.mxu0 0.0
    %148 = vmatpush2.msra.mxu0 0.0
    %149 = vmatprep.subr.mxu0 0.0
    %150 = vmatpush2.msra.mxu0 0.0
    %151 = vmatprep.subr.mxu0 0.0
    %152 = vmatpush2.msra.mxu0 0.0
    %153 = vmatprep.subr.mxu0 0.0
    %154 = vmatpush2.msra.mxu0 0.0
    %155 = vmatprep.subr.mxu0 0.0
    %156 = vmatpush2.msra.mxu0 0.0
    %157 = vmatprep.subr.mxu0 0.0
    %158 = vmatpush2.msra.mxu0 0.0
    %159 = vmatprep.subr.mxu0 0.0
    %160 = vmatpush2.msra.mxu0 0.0
    %161 = vmatprep.mubr.f32.mxu0 0.0
    %162 = vmatmul.mubr.f32.gmra.mxu0 %v95
    %v163 = vpop.f32.mrf.mxu0
    %v164 = vadd.f32 %v91, %v163
    %v165 = vpop.f32.mrf.mxu0
    %166 = vdwg.mxu0
    %v167 = vld [vmem:[%s5] sm:$0xff]
    %v168 = vld [vmem:[%s8] sm:$0xff]
    %v169 = vld [vmem:[%s8 + $0x8] sm:$0xff]
    %v170 = vld [vmem:[%s8 + $0x10] sm:$0xff]
    %v171 = vld [vmem:[%s8 + $0x18] sm:$0xff]
    %v172 = vld [vmem:[%s8 + $0x20] sm:$0xff]
    %v173 = vld [vmem:[%s8 + $0x28] sm:$0xff]
    %v174 = vld [vmem:[%s8 + $0x30] sm:$0xff]
    %v175 = vld [vmem:[%s8 + $0x38] sm:$0xff]
    %v176 = vld [vmem:[%s9] sm:$0x1]
    %v178 = vlaneseq
    %v179 = vshrl.u32 %v178, 7
    %v180 = vsub.s32 0, %v179
    %v181 = vrot.slane %v176, %v180
    %v184 = vsel %vm93, %v167, 0
    %186 = vmatprep.subr.mxu0 0.0
    %187 = vmatpush1.msra.mxu0 0.0
    %188 = vmatprep.subr.mxu0 0.0
    %189 = vmatpush1.msra.mxu0 0.0
    %190 = vmatprep.subr.mxu0 0.0
    %191 = vmatpush1.msra.mxu0 0.0
    %192 = vmatprep.subr.mxu0 0.0
    %193 = vmatpush1.msra.mxu0 0.0
    %194 = vmatprep.subr.mxu0 0.0
    %195 = vmatpush1.msra.mxu0 0.0
    %196 = vmatprep.subr.mxu0 0.0
    %197 = vmatpush1.msra.mxu0 0.0
    %198 = vmatprep.subr.mxu0 0.0
    %199 = vmatpush1.msra.mxu0 0.0
    %200 = vmatprep.subr.mxu0 0.0
    %201 = vmatpush1.msra.mxu0 0.0
    %202 = vmatprep.subr.mxu0 0.0
    %203 = vmatpush1.msra.mxu0 %v175
    %204 = vmatprep.subr.mxu0 0.0
    %205 = vmatpush1.msra.mxu0 %v174
    %206 = vmatprep.subr.mxu0 0.0
    %207 = vmatpush1.msra.mxu0 %v173
    %208 = vmatprep.subr.mxu0 0.0
    %209 = vmatpush1.msra.mxu0 %v172
    %210 = vmatprep.subr.mxu0 0.0
    %211 = vmatpush1.msra.mxu0 %v171
    %212 = vmatprep.subr.mxu0 0.0
    %213 = vmatpush1.msra.mxu0 %v170
    %214 = vmatprep.subr.mxu0 0.0
    %215 = vmatpush1.msra.mxu0 %v169
    %216 = vmatprep.subr.mxu0 0.0
    %217 = vmatpush1.msra.mxu0 %v168
    %218 = vmatprep.subr.mxu0 0.0
    %219 = vmatpush2.msra.mxu0 0.0
    %220 = vmatprep.subr.mxu0 0.0
    %221 = vmatpush2.msra.mxu0 0.0
    %222 = vmatprep.subr.mxu0 0.0
    %223 = vmatpush2.msra.mxu0 0.0
    %224 = vmatprep.subr.mxu0 0.0
    %225 = vmatpush2.msra.mxu0 0.0
    %226 = vmatprep.subr.mxu0 0.0
    %227 = vmatpush2.msra.mxu0 0.0
    %228 = vmatprep.subr.mxu0 0.0
    %229 = vmatpush2.msra.mxu0 0.0
    %230 = vmatprep.subr.mxu0 0.0
    %231 = vmatpush2.msra.mxu0 0.0
    %232 = vmatprep.subr.mxu0 0.0
    %233 = vmatpush2.msra.mxu0 0.0
    %234 = vmatprep.subr.mxu0 0.0
    %235 = vmatpush2.msra.mxu0 0.0
    %236 = vmatprep.subr.mxu0 0.0
    %237 = vmatpush2.msra.mxu0 0.0
    %238 = vmatprep.subr.mxu0 0.0
    %239 = vmatpush2.msra.mxu0 0.0
    %240 = vmatprep.subr.mxu0 0.0
    %241 = vmatpush2.msra.mxu0 0.0
    %242 = vmatprep.subr.mxu0 0.0
    %243 = vmatpush2.msra.mxu0 0.0
    %244 = vmatprep.subr.mxu0 0.0
    %245 = vmatpush2.msra.mxu0 0.0
    %246 = vmatprep.subr.mxu0 0.0
    %247 = vmatpush2.msra.mxu0 0.0
    %248 = vmatprep.subr.mxu0 0.0
    %249 = vmatpush2.msra.mxu0 0.0
    %250 = vmatprep.mubr.f32.mxu0 0.0
    %251 = vmatmul.mubr.f32.gmra.mxu0 %v184
    %v252 = vpop.f32.mrf.mxu0
    %v253 = vadd.f32 %v181, %v252
    %v254 = vpop.f32.mrf.mxu0
    %255 = vdwg.mxu0
    %v256 = vld [vmem:[%s2] sm:$0xff]
    %v257 = vld [vmem:[%s2 + $0x8] sm:$0xff]
    %v258 = vld [vmem:[%s2 + $0x10] sm:$0xff]
    %v259 = vld [vmem:[%s2 + $0x18] sm:$0xff]
    %v260 = vld [vmem:[%s2 + $0x20] sm:$0xff]
    %v261 = vld [vmem:[%s2 + $0x28] sm:$0xff]
    %v262 = vld [vmem:[%s2 + $0x30] sm:$0xff]
    %v263 = vld [vmem:[%s2 + $0x38] sm:$0xff]
    %v264 = vld [vmem:[%s2 + $0x40] sm:$0xff]
    %v265 = vld [vmem:[%s2 + $0x48] sm:$0xff]
    %v266 = vld [vmem:[%s3] sm:$0xff]
    %v267 = vld [vmem:[%s3 + $0x8] sm:$0xff]
    %v268 = vld [vmem:[%s3 + $0x10] sm:$0xff]
    %v269 = vld [vmem:[%s3 + $0x18] sm:$0xff]
    %v270 = vld [vmem:[%s3 + $0x20] sm:$0xff]
    %v271 = vld [vmem:[%s3 + $0x28] sm:$0xff]
    %v272 = vld [vmem:[%s3 + $0x30] sm:$0xff]
    %v273 = vld [vmem:[%s3 + $0x38] sm:$0xff]
    %v274 = vld [vmem:[%s3 + $0x40] sm:$0xff]
    %v275 = vld [vmem:[%s3 + $0x48] sm:$0xff]
    %v276 = vld [vmem:[%s10] sm:$0xff]
    %v277 = vld [vmem:[%s10 + $0x8] sm:$0xff]
    %v278 = vld [vmem:[%s10 + $0x10] sm:$0xff]
    %v279 = vld [vmem:[%s10 + $0x18] sm:$0xff]
    %v280 = vld [vmem:[%s11] sm:$0x1]
    %v281 = vld [vmem:[#allocation2] sm:$0x1]
    %v282 = vld [vmem:[%s15] sm:$0x1]
    %v283 = vld [vmem:[%s18] sm:$0x1]
    %v284 = vlaneseq
    %v285 = vand.u32 %v284, 127
    %286 = vst [vmem:[%s19] sm:$0xff] 0.0
    %v287 = vld [vmem:[%s1] sm:$0xff]
    %288 = vset.pattern.permute.xlu0 0
    %289 = vperm.xlu0 %288, %v287
    %v290 = vpop.permute.xlu0 %289
    %vm291 = vcmp.eq.s32.totalorder %v285, %v290
    %v292 = vsel %vm291, 1, 0
    %v293 = vcvt.s32.f32 %v292
    %vm294 = vcmask 261120
    %v296 = vsel %vm294, %v164, 0
    %298 = vmatprep.subr.mxu0 0.0
    %299 = vmatpush1.msra.mxu0 0.0
    %300 = vmatprep.subr.mxu0 0.0
    %301 = vmatpush1.msra.mxu0 0.0
    %302 = vmatprep.subr.mxu0 0.0
    %303 = vmatpush1.msra.mxu0 0.0
    %304 = vmatprep.subr.mxu0 0.0
    %305 = vmatpush1.msra.mxu0 0.0
    %306 = vmatprep.subr.mxu0 0.0
    %307 = vmatpush1.msra.mxu0 0.0
    %308 = vmatprep.subr.mxu0 0.0
    %309 = vmatpush1.msra.mxu0 0.0
    %310 = vmatprep.subr.mxu0 0.0
    %311 = vmatpush1.msra.mxu0 0.0
    %312 = vmatprep.subr.mxu0 0.0
    %313 = vmatpush1.msra.mxu0 0.0
    %314 = vmatprep.subr.mxu0 0.0
    %315 = vmatpush1.msra.mxu0 0.0
    %316 = vmatprep.subr.mxu0 0.0
    %317 = vmatpush1.msra.mxu0 0.0
    %318 = vmatprep.subr.mxu0 0.0
    %319 = vmatpush1.msra.mxu0 0.0
    %320 = vmatprep.subr.mxu0 0.0
    %321 = vmatpush1.msra.mxu0 0.0
    %322 = vmatprep.subr.mxu0 0.0
    %323 = vmatpush1.msra.mxu0 %v279
    %324 = vmatprep.subr.mxu0 0.0
    %325 = vmatpush1.msra.mxu0 %v278
    %326 = vmatprep.subr.mxu0 0.0
    %327 = vmatpush1.msra.mxu0 %v277
    %328 = vmatprep.subr.mxu0 0.0
    %329 = vmatpush1.msra.mxu0 %v276
    %330 = vmatprep.subr.mxu0 0.0
    %331 = vmatpush2.msra.mxu0 0.0
    %332 = vmatprep.subr.mxu0 0.0
    %333 = vmatpush2.msra.mxu0 0.0
    %334 = vmatprep.subr.mxu0 0.0
    %335 = vmatpush2.msra.mxu0 0.0
    %336 = vmatprep.subr.mxu0 0.0
    %337 = vmatpush2.msra.mxu0 0.0
    %338 = vmatprep.subr.mxu0 0.0
    %339 = vmatpush2.msra.mxu0 0.0
    %340 = vmatprep.subr.mxu0 0.0
    %341 = vmatpush2.msra.mxu0 0.0
    %342 = vmatprep.subr.mxu0 0.0
    %343 = vmatpush2.msra.mxu0 0.0
    %344 = vmatprep.subr.mxu0 0.0
    %345 = vmatpush2.msra.mxu0 0.0
    %346 = vmatprep.subr.mxu0 0.0
    %347 = vmatpush2.msra.mxu0 0.0
    %348 = vmatprep.subr.mxu0 0.0
    %349 = vmatpush2.msra.mxu0 0.0
    %350 = vmatprep.subr.mxu0 0.0
    %351 = vmatpush2.msra.mxu0 0.0
    %352 = vmatprep.subr.mxu0 0.0
    %353 = vmatpush2.msra.mxu0 0.0
    %354 = vmatprep.subr.mxu0 0.0
    %355 = vmatpush2.msra.mxu0 0.0
    %356 = vmatprep.subr.mxu0 0.0
    %357 = vmatpush2.msra.mxu0 0.0
    %358 = vmatprep.subr.mxu0 0.0
    %359 = vmatpush2.msra.mxu0 0.0
    %360 = vmatprep.subr.mxu0 0.0
    %361 = vmatpush2.msra.mxu0 0.0
    %362 = vmatprep.mubr.f32.mxu0 0.0
    %363 = vmatmul.mubr.f32.gmra.mxu0 %v296
    %v364 = vpop.f32.mrf.mxu0
    %v365 = vadd.f32 0.0, %v364
    %v366 = vpop.f32.mrf.mxu0
    %367 = vdwg.mxu0
    %v368 = vadd.f32 %v266, %v365
    %v369 = vadd.f32 %v267, %v365
    %v370 = vadd.f32 %v268, %v365
    %v371 = vadd.f32 %v269, %v365
    %v372 = vadd.f32 %v270, %v365
    %v373 = vadd.f32 %v271, %v365
    %v374 = vadd.f32 %v272, %v365
    %v375 = vadd.f32 %v273, %v365
    %v376 = vadd.f32 %v274, %v365
    %v377 = vadd.f32 %v275, %v365
    %v378 = vtanh.pop %v368
    %v379 = vtanh.pop %v369
    %v380 = vtanh.pop %v370
    %v381 = vtanh.pop %v371
    %v382 = vtanh.pop %v372
    %v383 = vtanh.pop %v373
    %v384 = vtanh.pop %v374
    %v385 = vtanh.pop %v375
    %v386 = vtanh.pop %v376
    %v387 = vtanh.pop %v377
    %v389 = vlaneseq
    %v390 = vshrl.u32 %v389, 7
    %v391 = vsub.s32 0, %v390
    %v392 = vrot.slane %v280, %v391
    %v394 = vmul.f32 %v378, %v392
    %v395 = vmul.f32 %v379, %v392
    %v396 = vmul.f32 %v380, %v392
    %v397 = vmul.f32 %v381, %v392
    %v398 = vmul.f32 %v382, %v392
    %v399 = vmul.f32 %v383, %v392
    %v400 = vmul.f32 %v384, %v392
    %v401 = vmul.f32 %v385, %v392
    %v402 = vmul.f32 %v386, %v392
    %v403 = vmul.f32 %v387, %v392
    %v404 = vsel %vm294, %v394, 0.0
    %405 = vadd.xlane.f32.xlu0 %v404
    %v406 = vpop.xlane.xlu0 %405
    %v407 = vsel %vm294, %v395, 0.0
    %408 = vadd.xlane.f32.xlu0 %v407
    %v409 = vpop.xlane.xlu0 %408
    %v410 = vsel %vm294, %v396, 0.0
    %411 = vadd.xlane.f32.xlu0 %v410
    %v412 = vpop.xlane.xlu0 %411
    %v413 = vsel %vm294, %v397, 0.0
    %414 = vadd.xlane.f32.xlu0 %v413
    %v415 = vpop.xlane.xlu0 %414
    %v416 = vsel %vm294, %v398, 0.0
    %417 = vadd.xlane.f32.xlu0 %v416
    %v418 = vpop.xlane.xlu0 %417
    %v419 = vsel %vm294, %v399, 0.0
    %420 = vadd.xlane.f32.xlu0 %v419
    %v421 = vpop.xlane.xlu0 %420
    %v422 = vsel %vm294, %v400, 0.0
    %423 = vadd.xlane.f32.xlu0 %v422
    %v424 = vpop.xlane.xlu0 %423
    %v425 = vsel %vm294, %v401, 0.0
    %426 = vadd.xlane.f32.xlu0 %v425
    %v427 = vpop.xlane.xlu0 %426
    %v428 = vsel %vm294, %v402, 0.0
    %429 = vadd.xlane.f32.xlu0 %v428
    %v430 = vpop.xlane.xlu0 %429
    %v431 = vsel %vm294, %v403, 0.0
    %432 = vadd.xlane.f32.xlu0 %v431
    %v433 = vpop.xlane.xlu0 %432
    %v435 = vlaneseq
    %v436 = vshrl.u32 %v435, 7
    %v437 = vsub.s32 0, %v436
    %v438 = vrot.slane %v281, %v437
    %v440 = vadd.f32 %v406, %v438
    %v441 = vadd.f32 %v409, %v438
    %v442 = vadd.f32 %v412, %v438
    %v443 = vadd.f32 %v415, %v438
    %v444 = vadd.f32 %v418, %v438
    %v445 = vadd.f32 %v421, %v438
    %v446 = vadd.f32 %v424, %v438
    %v447 = vadd.f32 %v427, %v438
    %v448 = vadd.f32 %v430, %v438
    %v449 = vadd.f32 %v433, %v438
    %vm450 = vcmask 7168
    %v451 = vsel %vm450, %v440, -inf
    %v452 = vsel %vm450, %v441, -inf
    %v453 = vsel %vm450, %v442, -inf
    %v454 = vsel %vm450, %v443, -inf
    %v455 = vsel %vm450, %v444, -inf
    %v456 = vmax.f32 %v451, %v455
    %v457 = vsel %vm450, %v445, -inf
    %v458 = vmax.f32 %v452, %v457
    %v459 = vsel %vm450, %v446, -inf
    %v460 = vmax.f32 %v453, %v459
    %v461 = vsel %vm450, %v447, -inf
    %v462 = vmax.f32 %v454, %v461
    %v463 = vsel %vm450, %v448, -inf
    %v464 = vmax.f32 %v456, %v463
    %v465 = vsel %vm450, %v449, -inf
    %v466 = vmax.f32 %v458, %v465
    %v467 = vmax.f32 %v464, %v466
    %v468 = vmax.f32 %v460, %v462
    %v469 = vmax.f32 %v467, %v468
    %v470 = vsub.f32 %v440, %v469
    %v471 = vsub.f32 %v441, %v469
    %v472 = vsub.f32 %v442, %v469
    %v473 = vsub.f32 %v443, %v469
    %v474 = vsub.f32 %v444, %v469
    %v475 = vsub.f32 %v445, %v469
    %v476 = vsub.f32 %v446, %v469
    %v477 = vsub.f32 %v447, %v469
    %v478 = vsub.f32 %v448, %v469
    %v479 = vsub.f32 %v449, %v469
    %v480 = vmul.f32 %v470, 1.442695
    %v481 = vpow.pop %v480
    %v482 = vmul.f32 %v471, 1.442695
    %v483 = vpow.pop %v482
    %v484 = vmul.f32 %v472, 1.442695
    %v485 = vpow.pop %v484
    %v486 = vmul.f32 %v473, 1.442695
    %v487 = vpow.pop %v486
    %v488 = vmul.f32 %v474, 1.442695
    %v489 = vpow.pop %v488
    %v490 = vmul.f32 %v475, 1.442695
    %v491 = vpow.pop %v490
    %v492 = vmul.f32 %v476, 1.442695
    %v493 = vpow.pop %v492
    %v494 = vmul.f32 %v477, 1.442695
    %v495 = vpow.pop %v494
    %v496 = vmul.f32 %v478, 1.442695
    %v497 = vpow.pop %v496
    %v498 = vmul.f32 %v479, 1.442695
    %v499 = vpow.pop %v498
    %v500 = vsel %vm450, %v481, 0.0
    %v501 = vsel %vm450, %v483, 0.0
    %v502 = vadd.f32 %v500, %v501
    %v503 = vsel %vm450, %v485, 0.0
    %v504 = vadd.f32 %v502, %v503
    %v505 = vsel %vm450, %v487, 0.0
    %v506 = vadd.f32 %v504, %v505
    %v507 = vsel %vm450, %v489, 0.0
    %v508 = vadd.f32 %v506, %v507
    %v509 = vsel %vm450, %v491, 0.0
    %v510 = vadd.f32 %v508, %v509
    %v511 = vsel %vm450, %v493, 0.0
    %v512 = vadd.f32 %v510, %v511
    %v513 = vsel %vm450, %v495, 0.0
    %v514 = vadd.f32 %v512, %v513
    %v515 = vsel %vm450, %v497, 0.0
    %v516 = vadd.f32 %v514, %v515
    %v517 = vsel %vm450, %v499, 0.0
    %v518 = vadd.f32 %v516, %v517
    %v519 = vrcp.pop %v518
    %v520 = vmul.f32 %v481, %v519
    %v521 = vmul.f32 %v483, %v519
    %v522 = vmul.f32 %v485, %v519
    %v523 = vmul.f32 %v487, %v519
    %v524 = vmul.f32 %v489, %v519
    %v525 = vmul.f32 %v491, %v519
    %v526 = vmul.f32 %v493, %v519
    %v527 = vmul.f32 %v495, %v519
    %v528 = vmul.f32 %v497, %v519
    %v529 = vmul.f32 %v499, %v519
    %531 = vset.pattern.permute.xlu0 0
    %532 = vperm.xlu0 %531, %v520
    %v533 = vpop.permute.xlu0 %532
    %536 = vset.pattern.permute.xlu0 0
    %537 = vperm.xlu0 %536, %v521
    %v538 = vpop.permute.xlu0 %537
    %541 = vset.pattern.permute.xlu0 0
    %542 = vperm.xlu0 %541, %v522
    %v543 = vpop.permute.xlu0 %542
    %546 = vset.pattern.permute.xlu0 0
    %547 = vperm.xlu0 %546, %v523
    %v548 = vpop.permute.xlu0 %547
    %551 = vset.pattern.permute.xlu0 0
    %552 = vperm.xlu0 %551, %v524
    %v553 = vpop.permute.xlu0 %552
    %556 = vset.pattern.permute.xlu0 0
    %557 = vperm.xlu0 %556, %v525
    %v558 = vpop.permute.xlu0 %557
    %561 = vset.pattern.permute.xlu0 0
    %562 = vperm.xlu0 %561, %v526
    %v563 = vpop.permute.xlu0 %562
    %566 = vset.pattern.permute.xlu0 0
    %567 = vperm.xlu0 %566, %v527
    %v568 = vpop.permute.xlu0 %567
    %571 = vset.pattern.permute.xlu0 0
    %572 = vperm.xlu0 %571, %v528
    %v573 = vpop.permute.xlu0 %572
    %576 = vset.pattern.permute.xlu0 0
    %577 = vperm.xlu0 %576, %v529
    %v578 = vpop.permute.xlu0 %577
    %v580 = vmul.f32 %v533, %v256
    %v581 = vmul.f32 %v538, %v257
    %v582 = vmul.f32 %v543, %v258
    %v583 = vmul.f32 %v548, %v259
    %v584 = vmul.f32 %v553, %v260
    %v585 = vmul.f32 %v558, %v261
    %v586 = vmul.f32 %v563, %v262
    %v587 = vmul.f32 %v568, %v263
    %v588 = vmul.f32 %v573, %v264
    %v589 = vmul.f32 %v578, %v265
    %v590 = vsel %vm93, %v580, 0.0
    %v591 = vsel %vm93, %v581, 0.0
    %v592 = vadd.f32 %v590, %v591
    %v593 = vsel %vm93, %v582, 0.0
    %v594 = vadd.f32 %v592, %v593
    %v595 = vsel %vm93, %v583, 0.0
    %v596 = vadd.f32 %v594, %v595
    %v597 = vsel %vm93, %v584, 0.0
    %v598 = vadd.f32 %v596, %v597
    %v599 = vsel %vm93, %v585, 0.0
    %v600 = vadd.f32 %v598, %v599
    %v601 = vsel %vm93, %v586, 0.0
    %v602 = vadd.f32 %v600, %v601
    %v603 = vsel %vm93, %v587, 0.0
    %v604 = vadd.f32 %v602, %v603
    %v605 = vsel %vm93, %v588, 0.0
    %v606 = vadd.f32 %v604, %v605
    %v607 = vsel %vm93, %v589, 0.0
    %v608 = vadd.f32 %v606, %v607
    %610 = vrot.lane.b32.xlu0 %v608, 32
    %v611 = vpop.permute.xlu0 %610
    %v613 = vsel %vm294, %v164, %v611
    %v614 = vld [vmem:[%s13] sm:$0xff]
    %v615 = vld [vmem:[%s13 + $0x8] sm:$0xff]
    %v616 = vld [vmem:[%s13 + $0x10] sm:$0xff]
    %v617 = vld [vmem:[%s13 + $0x18] sm:$0xff]
    %v618 = vld [vmem:[%s13 + $0x20] sm:$0xff]
    %v619 = vld [vmem:[%s13 + $0x28] sm:$0xff]
    %v620 = vld [vmem:[%s13 + $0x30] sm:$0xff]
    %v621 = vld [vmem:[%s13 + $0x38] sm:$0xff]
    %v622 = vld [vmem:[%s13 + $0x40] sm:$0xff]
    %v623 = vld [vmem:[%s13 + $0x48] sm:$0xff]
    %v624 = vld [vmem:[%s13 + $0x50] sm:$0xff]
    %v625 = vld [vmem:[%s13 + $0x58] sm:$0xff]
    %v626 = vld [vmem:[%s13 + $0x60] sm:$0xff]
    %v627 = vld [vmem:[%s13 + $0x68] sm:$0xff]
    %v628 = vld [vmem:[%s13 + $0x70] sm:$0xff]
    %v629 = vld [vmem:[%s13 + $0x78] sm:$0xff]
    %v630 = vld [vmem:[%s14] sm:$0xff]
    %v631 = vld [vmem:[%s14 + $0x8] sm:$0xff]
    %v632 = vld [vmem:[%s14 + $0x10] sm:$0xff]
    %v633 = vld [vmem:[%s14 + $0x18] sm:$0xff]
    %v634 = vld [vmem:[%s14 + $0x20] sm:$0xff]
    %v635 = vld [vmem:[%s14 + $0x28] sm:$0xff]
    %v636 = vld [vmem:[%s14 + $0x30] sm:$0xff]
    %v637 = vld [vmem:[%s14 + $0x38] sm:$0xff]
    %v638 = vld [vmem:[%s14 + $0x40] sm:$0xff]
    %v639 = vld [vmem:[%s14 + $0x48] sm:$0xff]
    %v640 = vld [vmem:[%s14 + $0x50] sm:$0xff]
    %v641 = vld [vmem:[%s14 + $0x58] sm:$0xff]
    %vm642 = vcmask 785408
    %v644 = vsel %vm642, %v613, 0
    %646 = vmatprep.subr.mxu0 0.0
    %647 = vmatpush1.msra.mxu0 0.0
    %648 = vmatprep.subr.mxu0 0.0
    %649 = vmatpush1.msra.mxu0 0.0
    %650 = vmatprep.subr.mxu0 0.0
    %651 = vmatpush1.msra.mxu0 0.0
    %652 = vmatprep.subr.mxu0 0.0
    %653 = vmatpush1.msra.mxu0 0.0
    %654 = vmatprep.subr.mxu0 0.0
    %655 = vmatpush1.msra.mxu0 %v641
    %656 = vmatprep.subr.mxu0 0.0
    %657 = vmatpush1.msra.mxu0 %v640
    %658 = vmatprep.subr.mxu0 0.0
    %659 = vmatpush1.msra.mxu0 %v639
    %660 = vmatprep.subr.mxu0 0.0
    %661 = vmatpush1.msra.mxu0 %v638
    %662 = vmatprep.subr.mxu0 0.0
    %663 = vmatpush1.msra.mxu0 %v637
    %664 = vmatprep.subr.mxu0 0.0
    %665 = vmatpush1.msra.mxu0 %v636
    %666 = vmatprep.subr.mxu0 0.0
    %667 = vmatpush1.msra.mxu0 %v635
    %668 = vmatprep.subr.mxu0 0.0
    %669 = vmatpush1.msra.mxu0 %v634
    %670 = vmatprep.subr.mxu0 0.0
    %671 = vmatpush1.msra.mxu0 %v633
    %672 = vmatprep.subr.mxu0 0.0
    %673 = vmatpush1.msra.mxu0 %v632
    %674 = vmatprep.subr.mxu0 0.0
    %675 = vmatpush1.msra.mxu0 %v631
    %676 = vmatprep.subr.mxu0 0.0
    %677 = vmatpush1.msra.mxu0 %v630
    %678 = vmatprep.subr.mxu0 0.0
    %679 = vmatpush2.msra.mxu0 0.0
    %680 = vmatprep.subr.mxu0 0.0
    %681 = vmatpush2.msra.mxu0 0.0
    %682 = vmatprep.subr.mxu0 0.0
    %683 = vmatpush2.msra.mxu0 0.0
    %684 = vmatprep.subr.mxu0 0.0
    %685 = vmatpush2.msra.mxu0 0.0
    %686 = vmatprep.subr.mxu0 0.0
    %687 = vmatpush2.msra.mxu0 0.0
    %688 = vmatprep.subr.mxu0 0.0
    %689 = vmatpush2.msra.mxu0 0.0
    %690 = vmatprep.subr.mxu0 0.0
    %691 = vmatpush2.msra.mxu0 0.0
    %692 = vmatprep.subr.mxu0 0.0
    %693 = vmatpush2.msra.mxu0 0.0
    %694 = vmatprep.subr.mxu0 0.0
    %695 = vmatpush2.msra.mxu0 0.0
    %696 = vmatprep.subr.mxu0 0.0
    %697 = vmatpush2.msra.mxu0 0.0
    %698 = vmatprep.subr.mxu0 0.0
    %699 = vmatpush2.msra.mxu0 0.0
    %700 = vmatprep.subr.mxu0 0.0
    %701 = vmatpush2.msra.mxu0 0.0
    %702 = vmatprep.subr.mxu0 0.0
    %703 = vmatpush2.msra.mxu0 0.0
    %704 = vmatprep.subr.mxu0 0.0
    %705 = vmatpush2.msra.mxu0 0.0
    %706 = vmatprep.subr.mxu0 0.0
    %707 = vmatpush2.msra.mxu0 0.0
    %708 = vmatprep.subr.mxu0 0.0
    %709 = vmatpush2.msra.mxu0 0.0
    %710 = vmatprep.mubr.f32.mxu0 0.0
    %711 = vmatmul.mubr.f32.gmra.mxu0 %v644
    %v712 = vpop.f32.mrf.mxu0
    %v713 = vadd.f32 0.0, %v712
    %v714 = vpop.f32.mrf.mxu0
    %715 = vdwg.mxu0
    %716 = vmatprep.subr.mxu0 0.0
    %717 = vmatpush1.msra.mxu0 %v629
    %718 = vmatprep.subr.mxu0 0.0
    %719 = vmatpush1.msra.mxu0 %v628
    %720 = vmatprep.subr.mxu0 0.0
    %721 = vmatpush1.msra.mxu0 %v627
    %722 = vmatprep.subr.mxu0 0.0
    %723 = vmatpush1.msra.mxu0 %v626
    %724 = vmatprep.subr.mxu0 0.0
    %725 = vmatpush1.msra.mxu0 %v625
    %726 = vmatprep.subr.mxu0 0.0
    %727 = vmatpush1.msra.mxu0 %v624
    %728 = vmatprep.subr.mxu0 0.0
    %729 = vmatpush1.msra.mxu0 %v623
    %730 = vmatprep.subr.mxu0 0.0
    %731 = vmatpush1.msra.mxu0 %v622
    %732 = vmatprep.subr.mxu0 0.0
    %733 = vmatpush1.msra.mxu0 %v621
    %734 = vmatprep.subr.mxu0 0.0
    %735 = vmatpush1.msra.mxu0 %v620
    %736 = vmatprep.subr.mxu0 0.0
    %737 = vmatpush1.msra.mxu0 %v619
    %738 = vmatprep.subr.mxu0 0.0
    %739 = vmatpush1.msra.mxu0 %v618
    %740 = vmatprep.subr.mxu0 0.0
    %741 = vmatpush1.msra.mxu0 %v617
    %742 = vmatprep.subr.mxu0 0.0
    %743 = vmatpush1.msra.mxu0 %v616
    %744 = vmatprep.subr.mxu0 0.0
    %745 = vmatpush1.msra.mxu0 %v615
    %746 = vmatprep.subr.mxu0 0.0
    %747 = vmatpush1.msra.mxu0 %v614
    %748 = vmatprep.subr.mxu0 0.0
    %749 = vmatpush2.msra.mxu0 0.0
    %750 = vmatprep.subr.mxu0 0.0
    %751 = vmatpush2.msra.mxu0 0.0
    %752 = vmatprep.subr.mxu0 0.0
    %753 = vmatpush2.msra.mxu0 0.0
    %754 = vmatprep.subr.mxu0 0.0
    %755 = vmatpush2.msra.mxu0 0.0
    %756 = vmatprep.subr.mxu0 0.0
    %757 = vmatpush2.msra.mxu0 0.0
    %758 = vmatprep.subr.mxu0 0.0
    %759 = vmatpush2.msra.mxu0 0.0
    %760 = vmatprep.subr.mxu0 0.0
    %761 = vmatpush2.msra.mxu0 0.0
    %762 = vmatprep.subr.mxu0 0.0
    %763 = vmatpush2.msra.mxu0 0.0
    %764 = vmatprep.subr.mxu0 0.0
    %765 = vmatpush2.msra.mxu0 0.0
    %766 = vmatprep.subr.mxu0 0.0
    %767 = vmatpush2.msra.mxu0 0.0
    %768 = vmatprep.subr.mxu0 0.0
    %769 = vmatpush2.msra.mxu0 0.0
    %770 = vmatprep.subr.mxu0 0.0
    %771 = vmatpush2.msra.mxu0 0.0
    %772 = vmatprep.subr.mxu0 0.0
    %773 = vmatpush2.msra.mxu0 0.0
    %774 = vmatprep.subr.mxu0 0.0
    %775 = vmatpush2.msra.mxu0 0.0
    %776 = vmatprep.subr.mxu0 0.0
    %777 = vmatpush2.msra.mxu0 0.0
    %778 = vmatprep.subr.mxu0 0.0
    %779 = vmatpush2.msra.mxu0 0.0
    %780 = vmatprep.mubr.f32.mxu0 0.0
    %781 = vmatmul.mubr.f32.gmra.mxu0 %v293
    %v782 = vpop.f32.mrf.mxu0
    %v783 = vadd.f32 %v713, %v782
    %v784 = vpop.f32.mrf.mxu0
    %785 = vdwg.mxu0
    %v787 = vlaneseq
    %v788 = vshrl.u32 %v787, 7
    %v789 = vsub.s32 0, %v788
    %v790 = vrot.slane %v282, %v789
    %v792 = vadd.f32 %v783, %v790
    %v793 = vxor.u32 %v792, 2147483648
    %v794 = vmul.f32 %v793, 1.442695
    %v795 = vpow.pop %v794
    %v796 = vadd.f32 %v795, 1.0
    %v797 = vrcp.pop %v796
    %v798 = vmul.f32 1.0, %v797
    %v799 = vtanh.pop %v792
    %801 = vrot.lane.b32.xlu0 %v253, 32
    %v802 = vpop.permute.xlu0 %801
    %v804 = vmul.f32 %v798, %v802
    %806 = vrot.lane.b32.xlu0 %v799, 64
    %v807 = vpop.permute.xlu0 %806
    %v809 = vmul.f32 %v798, %v807
    %811 = vrot.lane.b32.xlu0 %v809, 32
    %v812 = vpop.permute.xlu0 %811
    %v814 = vadd.f32 %v804, %v812
    %v815 = vtanh.pop %v814
    %817 = vrot.lane.b32.xlu0 %v815, 64
    %v818 = vpop.permute.xlu0 %817
    %v820 = vmul.f32 %v798, %v818
    %822 = vrot.lane.b32.xlu0 %v820, 32
    %v823 = vpop.permute.xlu0 %822
    %v825 = vsel %vm294, %v823, %v611
    %v826 = vld [vmem:[%s16] sm:$0xff]
    %v827 = vld [vmem:[%s16 + $0x8] sm:$0xff]
    %v828 = vld [vmem:[%s16 + $0x10] sm:$0xff]
    %v829 = vld [vmem:[%s16 + $0x18] sm:$0xff]
    %v830 = vld [vmem:[%s16 + $0x20] sm:$0xff]
    %v831 = vld [vmem:[%s16 + $0x28] sm:$0xff]
    %v832 = vld [vmem:[%s16 + $0x30] sm:$0xff]
    %v833 = vld [vmem:[%s16 + $0x38] sm:$0xff]
    %v834 = vld [vmem:[%s16 + $0x40] sm:$0xff]
    %v835 = vld [vmem:[%s16 + $0x48] sm:$0xff]
    %v836 = vld [vmem:[%s16 + $0x50] sm:$0xff]
    %v837 = vld [vmem:[%s16 + $0x58] sm:$0xff]
    %v838 = vld [vmem:[%s16 + $0x60] sm:$0xff]
    %v839 = vld [vmem:[%s16 + $0x68] sm:$0xff]
    %v840 = vld [vmem:[%s16 + $0x70] sm:$0xff]
    %v841 = vld [vmem:[%s16 + $0x78] sm:$0xff]
    %v842 = vld [vmem:[%s17] sm:$0xff]
    %v843 = vld [vmem:[%s17 + $0x8] sm:$0xff]
    %v844 = vld [vmem:[%s17 + $0x10] sm:$0xff]
    %v845 = vld [vmem:[%s17 + $0x18] sm:$0xff]
    %v846 = vld [vmem:[%s17 + $0x20] sm:$0xff]
    %v847 = vld [vmem:[%s17 + $0x28] sm:$0xff]
    %v848 = vld [vmem:[%s17 + $0x30] sm:$0xff]
    %v849 = vld [vmem:[%s17 + $0x38] sm:$0xff]
    %v850 = vld [vmem:[%s17 + $0x40] sm:$0xff]
    %v851 = vld [vmem:[%s17 + $0x48] sm:$0xff]
    %v852 = vld [vmem:[%s17 + $0x50] sm:$0xff]
    %v853 = vld [vmem:[%s17 + $0x58] sm:$0xff]
    %v855 = vsel %vm642, %v825, 0
    %857 = vmatprep.subr.mxu0 0.0
    %858 = vmatpush1.msra.mxu0 0.0
    %859 = vmatprep.subr.mxu0 0.0
    %860 = vmatpush1.msra.mxu0 0.0
    %861 = vmatprep.subr.mxu0 0.0
    %862 = vmatpush1.msra.mxu0 0.0
    %863 = vmatprep.subr.mxu0 0.0
    %864 = vmatpush1.msra.mxu0 0.0
    %865 = vmatprep.subr.mxu0 0.0
    %866 = vmatpush1.msra.mxu0 %v853
    %867 = vmatprep.subr.mxu0 0.0
    %868 = vmatpush1.msra.mxu0 %v852
    %869 = vmatprep.subr.mxu0 0.0
    %870 = vmatpush1.msra.mxu0 %v851
    %871 = vmatprep.subr.mxu0 0.0
    %872 = vmatpush1.msra.mxu0 %v850
    %873 = vmatprep.subr.mxu0 0.0
    %874 = vmatpush1.msra.mxu0 %v849
    %875 = vmatprep.subr.mxu0 0.0
    %876 = vmatpush1.msra.mxu0 %v848
    %877 = vmatprep.subr.mxu0 0.0
    %878 = vmatpush1.msra.mxu0 %v847
    %879 = vmatprep.subr.mxu0 0.0
    %880 = vmatpush1.msra.mxu0 %v846
    %881 = vmatprep.subr.mxu0 0.0
    %882 = vmatpush1.msra.mxu0 %v845
    %883 = vmatprep.subr.mxu0 0.0
    %884 = vmatpush1.msra.mxu0 %v844
    %885 = vmatprep.subr.mxu0 0.0
    %886 = vmatpush1.msra.mxu0 %v843
    %887 = vmatprep.subr.mxu0 0.0
    %888 = vmatpush1.msra.mxu0 %v842
    %889 = vmatprep.subr.mxu0 0.0
    %890 = vmatpush2.msra.mxu0 0.0
    %891 = vmatprep.subr.mxu0 0.0
    %892 = vmatpush2.msra.mxu0 0.0
    %893 = vmatprep.subr.mxu0 0.0
    %894 = vmatpush2.msra.mxu0 0.0
    %895 = vmatprep.subr.mxu0 0.0
    %896 = vmatpush2.msra.mxu0 0.0
    %897 = vmatprep.subr.mxu0 0.0
    %898 = vmatpush2.msra.mxu0 0.0
    %899 = vmatprep.subr.mxu0 0.0
    %900 = vmatpush2.msra.mxu0 0.0
    %901 = vmatprep.subr.mxu0 0.0
    %902 = vmatpush2.msra.mxu0 0.0
    %903 = vmatprep.subr.mxu0 0.0
    %904 = vmatpush2.msra.mxu0 0.0
    %905 = vmatprep.subr.mxu0 0.0
    %906 = vmatpush2.msra.mxu0 0.0
    %907 = vmatprep.subr.mxu0 0.0
    %908 = vmatpush2.msra.mxu0 0.0
    %909 = vmatprep.subr.mxu0 0.0
    %910 = vmatpush2.msra.mxu0 0.0
    %911 = vmatprep.subr.mxu0 0.0
    %912 = vmatpush2.msra.mxu0 0.0
    %913 = vmatprep.subr.mxu0 0.0
    %914 = vmatpush2.msra.mxu0 0.0
    %915 = vmatprep.subr.mxu0 0.0
    %916 = vmatpush2.msra.mxu0 0.0
    %917 = vmatprep.subr.mxu0 0.0
    %918 = vmatpush2.msra.mxu0 0.0
    %919 = vmatprep.subr.mxu0 0.0
    %920 = vmatpush2.msra.mxu0 0.0
    %921 = vmatprep.mubr.f32.mxu0 0.0
    %922 = vmatmul.mubr.f32.gmra.mxu0 %v855
    %v923 = vpop.f32.mrf.mxu0
    %v924 = vadd.f32 0.0, %v923
    %v925 = vpop.f32.mrf.mxu0
    %926 = vdwg.mxu0
    %927 = vmatprep.subr.mxu0 0.0
    %928 = vmatpush1.msra.mxu0 %v841
    %929 = vmatprep.subr.mxu0 0.0
    %930 = vmatpush1.msra.mxu0 %v840
    %931 = vmatprep.subr.mxu0 0.0
    %932 = vmatpush1.msra.mxu0 %v839
    %933 = vmatprep.subr.mxu0 0.0
    %934 = vmatpush1.msra.mxu0 %v838
    %935 = vmatprep.subr.mxu0 0.0
    %936 = vmatpush1.msra.mxu0 %v837
    %937 = vmatprep.subr.mxu0 0.0
    %938 = vmatpush1.msra.mxu0 %v836
    %939 = vmatprep.subr.mxu0 0.0
    %940 = vmatpush1.msra.mxu0 %v835
    %941 = vmatprep.subr.mxu0 0.0
    %942 = vmatpush1.msra.mxu0 %v834
    %943 = vmatprep.subr.mxu0 0.0
    %944 = vmatpush1.msra.mxu0 %v833
    %945 = vmatprep.subr.mxu0 0.0
    %946 = vmatpush1.msra.mxu0 %v832
    %947 = vmatprep.subr.mxu0 0.0
    %948 = vmatpush1.msra.mxu0 %v831
    %949 = vmatprep.subr.mxu0 0.0
    %950 = vmatpush1.msra.mxu0 %v830
    %951 = vmatprep.subr.mxu0 0.0
    %952 = vmatpush1.msra.mxu0 %v829
    %953 = vmatprep.subr.mxu0 0.0
    %954 = vmatpush1.msra.mxu0 %v828
    %955 = vmatprep.subr.mxu0 0.0
    %956 = vmatpush1.msra.mxu0 %v827
    %957 = vmatprep.subr.mxu0 0.0
    %958 = vmatpush1.msra.mxu0 %v826
    %959 = vmatprep.subr.mxu0 0.0
    %960 = vmatpush2.msra.mxu0 0.0
    %961 = vmatprep.subr.mxu0 0.0
    %962 = vmatpush2.msra.mxu0 0.0
    %963 = vmatprep.subr.mxu0 0.0
    %964 = vmatpush2.msra.mxu0 0.0
    %965 = vmatprep.subr.mxu0 0.0
    %966 = vmatpush2.msra.mxu0 0.0
    %967 = vmatprep.subr.mxu0 0.0
    %968 = vmatpush2.msra.mxu0 0.0
    %969 = vmatprep.subr.mxu0 0.0
    %970 = vmatpush2.msra.mxu0 0.0
    %971 = vmatprep.subr.mxu0 0.0
    %972 = vmatpush2.msra.mxu0 0.0
    %973 = vmatprep.subr.mxu0 0.0
    %974 = vmatpush2.msra.mxu0 0.0
    %975 = vmatprep.subr.mxu0 0.0
    %976 = vmatpush2.msra.mxu0 0.0
    %977 = vmatprep.subr.mxu0 0.0
    %978 = vmatpush2.msra.mxu0 0.0
    %979 = vmatprep.subr.mxu0 0.0
    %980 = vmatpush2.msra.mxu0 0.0
    %981 = vmatprep.subr.mxu0 0.0
    %982 = vmatpush2.msra.mxu0 0.0
    %983 = vmatprep.subr.mxu0 0.0
    %984 = vmatpush2.msra.mxu0 0.0
    %985 = vmatprep.subr.mxu0 0.0
    %986 = vmatpush2.msra.mxu0 0.0
    %987 = vmatprep.subr.mxu0 0.0
    %988 = vmatpush2.msra.mxu0 0.0
    %989 = vmatprep.subr.mxu0 0.0
    %990 = vmatpush2.msra.mxu0 0.0
    %991 = vmatprep.mubr.f32.mxu0 0.0
    %992 = vmatmul.mubr.f32.gmra.mxu0 %v293
    %v993 = vpop.f32.mrf.mxu0
    %v994 = vadd.f32 %v924, %v993
    %v995 = vpop.f32.mrf.mxu0
    %996 = vdwg.mxu0
    %v998 = vlaneseq
    %v999 = vshrl.u32 %v998, 7
    %v1000 = vsub.s32 0, %v999
    %v1001 = vrot.slane %v283, %v1000
    %v1003 = vadd.f32 %v994, %v1001
    %s1004 = scalar_lea.vmem %s19, 8
    %1005 = vst [vmem:[%s1004] sm:$0xff] %v1003
    %vm1006 = vcmp.lt.s32.totalorder %v285, 24
    %v1007 = vsel %vm1006, %v1003, -1e+30
    %1008 = vmax.xlane.f32.xlu0 %v1007
    %v1009 = vpop.xlane.xlu0 %1008
    %vm1010 = vcmp.eq.f32.partialorder %v1007, %v1009
    %v1011 = vsel %vm1010, %v285, 128
    %v1012 = vand.u32 %v1011, 65535
    %v1013 = vshra.s32 %v1011, 16
    %v1014 = vcvt.s32.f32 %v1012
    %v1015 = vcvt.s32.f32 %v1013
    %1016 = vmin.xlane.f32.xlu0 %v1015
    %v1017 = vpop.xlane.xlu0 %1016
    %vm1018 = vcmp.eq.f32.partialorder %v1015, %v1017
    %v1019 = vsel %vm1018, %v1014, inf
    %1020 = vmin.xlane.f32.xlu0 %v1019
    %v1021 = vpop.xlane.xlu0 %1020
    %v1022 = vcvt.f32.s32 %v1021
    %v1023 = vcvt.f32.s32 %v1017
    %v1024 = vshll.u32 %v1023, 16
    %v1025 = vadd.s32 %v1024, %v1022
    %vm1026 = vcmp.eq.s32.totalorder %v285, %v1025
    %v1027 = vsel %vm1026, 1, 0
    %v1028 = vcvt.s32.f32 %v1027
    %s1029 = sld [smem:[#allocation3 + $0x1]]
    %p1030 = scmp.ne.s32.totalorder %s1029, 0
    %s1031 = scalar_select %p1030, 1, 0
    %s1032 = scvt.s32.f32 %s1031
    %s1033 = scalar_lea.vmem %s1, 8
    %v1034 = vld [vmem:[%s1033] sm:$0xff]
    %1035 = vset.pattern.permute.xlu0 0
    %1036 = vperm.xlu0 %1035, %v1034
    %v1037 = vpop.permute.xlu0 %1036
    %vm1038 = vcmp.eq.s32.totalorder %v285, %v1037
    %v1039 = vsel %vm1038, 1, 0
    %v1040 = vcvt.s32.f32 %v1039
    %v1041 = vstv %s1032
    %v1042 = vmul.f32 %v1041, %v1040
    %s1043 = ssub.f32 1.0, %s1032
    %v1044 = vstv %s1043
    %v1045 = vmul.f32 %v1044, %v1028
    %v1046 = vadd.f32 %v1042, %v1045
    %v1047 = vsel %vm294, %v823, 0
    %1049 = vmatprep.subr.mxu0 0.0
    %1050 = vmatpush1.msra.mxu0 0.0
    %1051 = vmatprep.subr.mxu0 0.0
    %1052 = vmatpush1.msra.mxu0 0.0
    %1053 = vmatprep.subr.mxu0 0.0
    %1054 = vmatpush1.msra.mxu0 0.0
    %1055 = vmatprep.subr.mxu0 0.0
    %1056 = vmatpush1.msra.mxu0 0.0
    %1057 = vmatprep.subr.mxu0 0.0
    %1058 = vmatpush1.msra.mxu0 0.0
    %1059 = vmatprep.subr.mxu0 0.0
    %1060 = vmatpush1.msra.mxu0 0.0
    %1061 = vmatprep.subr.mxu0 0.0
    %1062 = vmatpush1.msra.mxu0 0.0
    %1063 = vmatprep.subr.mxu0 0.0
    %1064 = vmatpush1.msra.mxu0 0.0
    %1065 = vmatprep.subr.mxu0 0.0
    %1066 = vmatpush1.msra.mxu0 0.0
    %1067 = vmatprep.subr.mxu0 0.0
    %1068 = vmatpush1.msra.mxu0 0.0
    %1069 = vmatprep.subr.mxu0 0.0
    %1070 = vmatpush1.msra.mxu0 0.0
    %1071 = vmatprep.subr.mxu0 0.0
    %1072 = vmatpush1.msra.mxu0 0.0
    %1073 = vmatprep.subr.mxu0 0.0
    %1074 = vmatpush1.msra.mxu0 %v279
    %1075 = vmatprep.subr.mxu0 0.0
    %1076 = vmatpush1.msra.mxu0 %v278
    %1077 = vmatprep.subr.mxu0 0.0
    %1078 = vmatpush1.msra.mxu0 %v277
    %1079 = vmatprep.subr.mxu0 0.0
    %1080 = vmatpush1.msra.mxu0 %v276
    %1081 = vmatprep.subr.mxu0 0.0
    %1082 = vmatpush2.msra.mxu0 0.0
    %1083 = vmatprep.subr.mxu0 0.0
    %1084 = vmatpush2.msra.mxu0 0.0
    %1085 = vmatprep.subr.mxu0 0.0
    %1086 = vmatpush2.msra.mxu0 0.0
    %1087 = vmatprep.subr.mxu0 0.0
    %1088 = vmatpush2.msra.mxu0 0.0
    %1089 = vmatprep.subr.mxu0 0.0
    %1090 = vmatpush2.msra.mxu0 0.0
    %1091 = vmatprep.subr.mxu0 0.0
    %1092 = vmatpush2.msra.mxu0 0.0
    %1093 = vmatprep.subr.mxu0 0.0
    %1094 = vmatpush2.msra.mxu0 0.0
    %1095 = vmatprep.subr.mxu0 0.0
    %1096 = vmatpush2.msra.mxu0 0.0
    %1097 = vmatprep.subr.mxu0 0.0
    %1098 = vmatpush2.msra.mxu0 0.0
    %1099 = vmatprep.subr.mxu0 0.0
    %1100 = vmatpush2.msra.mxu0 0.0
    %1101 = vmatprep.subr.mxu0 0.0
    %1102 = vmatpush2.msra.mxu0 0.0
    %1103 = vmatprep.subr.mxu0 0.0
    %1104 = vmatpush2.msra.mxu0 0.0
    %1105 = vmatprep.subr.mxu0 0.0
    %1106 = vmatpush2.msra.mxu0 0.0
    %1107 = vmatprep.subr.mxu0 0.0
    %1108 = vmatpush2.msra.mxu0 0.0
    %1109 = vmatprep.subr.mxu0 0.0
    %1110 = vmatpush2.msra.mxu0 0.0
    %1111 = vmatprep.subr.mxu0 0.0
    %1112 = vmatpush2.msra.mxu0 0.0
    %1113 = vmatprep.mubr.f32.mxu0 0.0
    %1114 = vmatmul.mubr.f32.gmra.mxu0 %v1047
    %v1115 = vpop.f32.mrf.mxu0
    %v1116 = vadd.f32 0.0, %v1115
    %v1117 = vpop.f32.mrf.mxu0
    %1118 = vdwg.mxu0
    %v1119 = vadd.f32 %v266, %v1116
    %v1120 = vadd.f32 %v267, %v1116
    %v1121 = vadd.f32 %v268, %v1116
    %v1122 = vadd.f32 %v269, %v1116
    %v1123 = vadd.f32 %v270, %v1116
    %v1124 = vadd.f32 %v271, %v1116
    %v1125 = vadd.f32 %v272, %v1116
    %v1126 = vadd.f32 %v273, %v1116
    %v1127 = vadd.f32 %v274, %v1116
    %v1128 = vadd.f32 %v275, %v1116
    %v1129 = vtanh.pop %v1119
    %v1130 = vtanh.pop %v1120
    %v1131 = vtanh.pop %v1121
    %v1132 = vtanh.pop %v1122
    %v1133 = vtanh.pop %v1123
    %v1134 = vtanh.pop %v1124
    %v1135 = vtanh.pop %v1125
    %v1136 = vtanh.pop %v1126
    %v1137 = vtanh.pop %v1127
    %v1138 = vtanh.pop %v1128
    %v1139 = vmul.f32 %v1129, %v392
    %v1140 = vmul.f32 %v1130, %v392
    %v1141 = vmul.f32 %v1131, %v392
    %v1142 = vmul.f32 %v1132, %v392
    %v1143 = vmul.f32 %v1133, %v392
    %v1144 = vmul.f32 %v1134, %v392
    %v1145 = vmul.f32 %v1135, %v392
    %v1146 = vmul.f32 %v1136, %v392
    %v1147 = vmul.f32 %v1137, %v392
    %v1148 = vmul.f32 %v1138, %v392
    %v1149 = vsel %vm294, %v1139, 0.0
    %1150 = vadd.xlane.f32.xlu0 %v1149
    %v1151 = vpop.xlane.xlu0 %1150
    %v1152 = vsel %vm294, %v1140, 0.0
    %1153 = vadd.xlane.f32.xlu0 %v1152
    %v1154 = vpop.xlane.xlu0 %1153
    %v1155 = vsel %vm294, %v1141, 0.0
    %1156 = vadd.xlane.f32.xlu0 %v1155
    %v1157 = vpop.xlane.xlu0 %1156
    %v1158 = vsel %vm294, %v1142, 0.0
    %1159 = vadd.xlane.f32.xlu0 %v1158
    %v1160 = vpop.xlane.xlu0 %1159
    %v1161 = vsel %vm294, %v1143, 0.0
    %1162 = vadd.xlane.f32.xlu0 %v1161
    %v1163 = vpop.xlane.xlu0 %1162
    %v1164 = vsel %vm294, %v1144, 0.0
    %1165 = vadd.xlane.f32.xlu0 %v1164
    %v1166 = vpop.xlane.xlu0 %1165
    %v1167 = vsel %vm294, %v1145, 0.0
    %1168 = vadd.xlane.f32.xlu0 %v1167
    %v1169 = vpop.xlane.xlu0 %1168
    %v1170 = vsel %vm294, %v1146, 0.0
    %1171 = vadd.xlane.f32.xlu0 %v1170
    %v1172 = vpop.xlane.xlu0 %1171
    %v1173 = vsel %vm294, %v1147, 0.0
    %1174 = vadd.xlane.f32.xlu0 %v1173
    %v1175 = vpop.xlane.xlu0 %1174
    %v1176 = vsel %vm294, %v1148, 0.0
    %1177 = vadd.xlane.f32.xlu0 %v1176
    %v1178 = vpop.xlane.xlu0 %1177
    %v1179 = vadd.f32 %v1151, %v438
    %v1180 = vadd.f32 %v1154, %v438
    %v1181 = vadd.f32 %v1157, %v438
    %v1182 = vadd.f32 %v1160, %v438
    %v1183 = vadd.f32 %v1163, %v438
    %v1184 = vadd.f32 %v1166, %v438
    %v1185 = vadd.f32 %v1169, %v438
    %v1186 = vadd.f32 %v1172, %v438
    %v1187 = vadd.f32 %v1175, %v438
    %v1188 = vadd.f32 %v1178, %v438
    %v1189 = vsel %vm450, %v1179, -inf
    %v1190 = vsel %vm450, %v1180, -inf
    %v1191 = vsel %vm450, %v1181, -inf
    %v1192 = vsel %vm450, %v1182, -inf
    %v1193 = vsel %vm450, %v1183, -inf
    %v1194 = vmax.f32 %v1189, %v1193
    %v1195 = vsel %vm450, %v1184, -inf
    %v1196 = vmax.f32 %v1190, %v1195
    %v1197 = vsel %vm450, %v1185, -inf
    %v1198 = vmax.f32 %v1191, %v1197
    %v1199 = vsel %vm450, %v1186, -inf
    %v1200 = vmax.f32 %v1192, %v1199
    %v1201 = vsel %vm450, %v1187, -inf
    %v1202 = vmax.f32 %v1194, %v1201
    %v1203 = vsel %vm450, %v1188, -inf
    %v1204 = vmax.f32 %v1196, %v1203
    %v1205 = vmax.f32 %v1202, %v1204
    %v1206 = vmax.f32 %v1198, %v1200
    %v1207 = vmax.f32 %v1205, %v1206
    %v1208 = vsub.f32 %v1179, %v1207
    %v1209 = vsub.f32 %v1180, %v1207
    %v1210 = vsub.f32 %v1181, %v1207
    %v1211 = vsub.f32 %v1182, %v1207
    %v1212 = vsub.f32 %v1183, %v1207
    %v1213 = vsub.f32 %v1184, %v1207
    %v1214 = vsub.f32 %v1185, %v1207
    %v1215 = vsub.f32 %v1186, %v1207
    %v1216 = vsub.f32 %v1187, %v1207
    %v1217 = vsub.f32 %v1188, %v1207
    %v1218 = vmul.f32 %v1208, 1.442695
    %v1219 = vpow.pop %v1218
    %v1220 = vmul.f32 %v1209, 1.442695
    %v1221 = vpow.pop %v1220
    %v1222 = vmul.f32 %v1210, 1.442695
    %v1223 = vpow.pop %v1222
    %v1224 = vmul.f32 %v1211, 1.442695
    %v1225 = vpow.pop %v1224
    %v1226 = vmul.f32 %v1212, 1.442695
    %v1227 = vpow.pop %v1226
    %v1228 = vmul.f32 %v1213, 1.442695
    %v1229 = vpow.pop %v1228
    %v1230 = vmul.f32 %v1214, 1.442695
    %v1231 = vpow.pop %v1230
    %v1232 = vmul.f32 %v1215, 1.442695
    %v1233 = vpow.pop %v1232
    %v1234 = vmul.f32 %v1216, 1.442695
    %v1235 = vpow.pop %v1234
    %v1236 = vmul.f32 %v1217, 1.442695
    %v1237 = vpow.pop %v1236
    %v1238 = vsel %vm450, %v1219, 0.0
    %v1239 = vsel %vm450, %v1221, 0.0
    %v1240 = vadd.f32 %v1238, %v1239
    %v1241 = vsel %vm450, %v1223, 0.0
    %v1242 = vadd.f32 %v1240, %v1241
    %v1243 = vsel %vm450, %v1225, 0.0
    %v1244 = vadd.f32 %v1242, %v1243
    %v1245 = vsel %vm450, %v1227, 0.0
    %v1246 = vadd.f32 %v1244, %v1245
    %v1247 = vsel %vm450, %v1229, 0.0
    %v1248 = vadd.f32 %v1246, %v1247
    %v1249 = vsel %vm450, %v1231, 0.0
    %v1250 = vadd.f32 %v1248, %v1249
    %v1251 = vsel %vm450, %v1233, 0.0
    %v1252 = vadd.f32 %v1250, %v1251
    %v1253 = vsel %vm450, %v1235, 0.0
    %v1254 = vadd.f32 %v1252, %v1253
    %v1255 = vsel %vm450, %v1237, 0.0
    %v1256 = vadd.f32 %v1254, %v1255
    %v1257 = vrcp.pop %v1256
    %v1258 = vmul.f32 %v1219, %v1257
    %v1259 = vmul.f32 %v1221, %v1257
    %v1260 = vmul.f32 %v1223, %v1257
    %v1261 = vmul.f32 %v1225, %v1257
    %v1262 = vmul.f32 %v1227, %v1257
    %v1263 = vmul.f32 %v1229, %v1257
    %v1264 = vmul.f32 %v1231, %v1257
    %v1265 = vmul.f32 %v1233, %v1257
    %v1266 = vmul.f32 %v1235, %v1257
    %v1267 = vmul.f32 %v1237, %v1257
    %1269 = vset.pattern.permute.xlu0 0
    %1270 = vperm.xlu0 %1269, %v1258
    %v1271 = vpop.permute.xlu0 %1270
    %1274 = vset.pattern.permute.xlu0 0
    %1275 = vperm.xlu0 %1274, %v1259
    %v1276 = vpop.permute.xlu0 %1275
    %1279 = vset.pattern.permute.xlu0 0
    %1280 = vperm.xlu0 %1279, %v1260
    %v1281 = vpop.permute.xlu0 %1280
    %1284 = vset.pattern.permute.xlu0 0
    %1285 = vperm.xlu0 %1284, %v1261
    %v1286 = vpop.permute.xlu0 %1285
    %1289 = vset.pattern.permute.xlu0 0
    %1290 = vperm.xlu0 %1289, %v1262
    %v1291 = vpop.permute.xlu0 %1290
    %1294 = vset.pattern.permute.xlu0 0
    %1295 = vperm.xlu0 %1294, %v1263
    %v1296 = vpop.permute.xlu0 %1295
    %1299 = vset.pattern.permute.xlu0 0
    %1300 = vperm.xlu0 %1299, %v1264
    %v1301 = vpop.permute.xlu0 %1300
    %1304 = vset.pattern.permute.xlu0 0
    %1305 = vperm.xlu0 %1304, %v1265
    %v1306 = vpop.permute.xlu0 %1305
    %1309 = vset.pattern.permute.xlu0 0
    %1310 = vperm.xlu0 %1309, %v1266
    %v1311 = vpop.permute.xlu0 %1310
    %1314 = vset.pattern.permute.xlu0 0
    %1315 = vperm.xlu0 %1314, %v1267
    %v1316 = vpop.permute.xlu0 %1315
    %v1318 = vmul.f32 %v1271, %v256
    %v1319 = vmul.f32 %v1276, %v257
    %v1320 = vmul.f32 %v1281, %v258
    %v1321 = vmul.f32 %v1286, %v259
    %v1322 = vmul.f32 %v1291, %v260
    %v1323 = vmul.f32 %v1296, %v261
    %v1324 = vmul.f32 %v1301, %v262
    %v1325 = vmul.f32 %v1306, %v263
    %v1326 = vmul.f32 %v1311, %v264
    %v1327 = vmul.f32 %v1316, %v265
    %v1328 = vsel %vm93, %v1318, 0.0
    %v1329 = vsel %vm93, %v1319, 0.0
    %v1330 = vadd.f32 %v1328, %v1329
    %v1331 = vsel %vm93, %v1320, 0.0
    %v1332 = vadd.f32 %v1330, %v1331
    %v1333 = vsel %vm93, %v1321, 0.0
    %v1334 = vadd.f32 %v1332, %v1333
    %v1335 = vsel %vm93, %v1322, 0.0
    %v1336 = vadd.f32 %v1334, %v1335
    %v1337 = vsel %vm93, %v1323, 0.0
    %v1338 = vadd.f32 %v1336, %v1337
    %v1339 = vsel %vm93, %v1324, 0.0
    %v1340 = vadd.f32 %v1338, %v1339
    %v1341 = vsel %vm93, %v1325, 0.0
    %v1342 = vadd.f32 %v1340, %v1341
    %v1343 = vsel %vm93, %v1326, 0.0
    %v1344 = vadd.f32 %v1342, %v1343
    %v1345 = vsel %vm93, %v1327, 0.0
    %v1346 = vadd.f32 %v1344, %v1345
    %1348 = vrot.lane.b32.xlu0 %v1346, 32
    %v1349 = vpop.permute.xlu0 %1348
    %v1351 = vsel %vm294, %v823, %v1349
    %v1352 = vld [vmem:[%s13] sm:$0xff]
    %v1353 = vld [vmem:[%s13 + $0x8] sm:$0xff]
    %v1354 = vld [vmem:[%s13 + $0x10] sm:$0xff]
    %v1355 = vld [vmem:[%s13 + $0x18] sm:$0xff]
    %v1356 = vld [vmem:[%s13 + $0x20] sm:$0xff]
    %v1357 = vld [vmem:[%s13 + $0x28] sm:$0xff]
    %v1358 = vld [vmem:[%s13 + $0x30] sm:$0xff]
    %v1359 = vld [vmem:[%s13 + $0x38] sm:$0xff]
    %v1360 = vld [vmem:[%s13 + $0x40] sm:$0xff]
    %v1361 = vld [vmem:[%s13 + $0x48] sm:$0xff]
    %v1362 = vld [vmem:[%s13 + $0x50] sm:$0xff]
    %v1363 = vld [vmem:[%s13 + $0x58] sm:$0xff]
    %v1364 = vld [vmem:[%s13 + $0x60] sm:$0xff]
    %v1365 = vld [vmem:[%s13 + $0x68] sm:$0xff]
    %v1366 = vld [vmem:[%s13 + $0x70] sm:$0xff]
    %v1367 = vld [vmem:[%s13 + $0x78] sm:$0xff]
    %v1368 = vld [vmem:[%s14] sm:$0xff]
    %v1369 = vld [vmem:[%s14 + $0x8] sm:$0xff]
    %v1370 = vld [vmem:[%s14 + $0x10] sm:$0xff]
    %v1371 = vld [vmem:[%s14 + $0x18] sm:$0xff]
    %v1372 = vld [vmem:[%s14 + $0x20] sm:$0xff]
    %v1373 = vld [vmem:[%s14 + $0x28] sm:$0xff]
    %v1374 = vld [vmem:[%s14 + $0x30] sm:$0xff]
    %v1375 = vld [vmem:[%s14 + $0x38] sm:$0xff]
    %v1376 = vld [vmem:[%s14 + $0x40] sm:$0xff]
    %v1377 = vld [vmem:[%s14 + $0x48] sm:$0xff]
    %v1378 = vld [vmem:[%s14 + $0x50] sm:$0xff]
    %v1379 = vld [vmem:[%s14 + $0x58] sm:$0xff]
    %v1381 = vsel %vm642, %v1351, 0
    %1383 = vmatprep.subr.mxu0 0.0
    %1384 = vmatpush1.msra.mxu0 0.0
    %1385 = vmatprep.subr.mxu0 0.0
    %1386 = vmatpush1.msra.mxu0 0.0
    %1387 = vmatprep.subr.mxu0 0.0
    %1388 = vmatpush1.msra.mxu0 0.0
    %1389 = vmatprep.subr.mxu0 0.0
    %1390 = vmatpush1.msra.mxu0 0.0
    %1391 = vmatprep.subr.mxu0 0.0
    %1392 = vmatpush1.msra.mxu0 %v1379
    %1393 = vmatprep.subr.mxu0 0.0
    %1394 = vmatpush1.msra.mxu0 %v1378
    %1395 = vmatprep.subr.mxu0 0.0
    %1396 = vmatpush1.msra.mxu0 %v1377
    %1397 = vmatprep.subr.mxu0 0.0
    %1398 = vmatpush1.msra.mxu0 %v1376
    %1399 = vmatprep.subr.mxu0 0.0
    %1400 = vmatpush1.msra.mxu0 %v1375
    %1401 = vmatprep.subr.mxu0 0.0
    %1402 = vmatpush1.msra.mxu0 %v1374
    %1403 = vmatprep.subr.mxu0 0.0
    %1404 = vmatpush1.msra.mxu0 %v1373
    %1405 = vmatprep.subr.mxu0 0.0
    %1406 = vmatpush1.msra.mxu0 %v1372
    %1407 = vmatprep.subr.mxu0 0.0
    %1408 = vmatpush1.msra.mxu0 %v1371
    %1409 = vmatprep.subr.mxu0 0.0
    %1410 = vmatpush1.msra.mxu0 %v1370
    %1411 = vmatprep.subr.mxu0 0.0
    %1412 = vmatpush1.msra.mxu0 %v1369
    %1413 = vmatprep.subr.mxu0 0.0
    %1414 = vmatpush1.msra.mxu0 %v1368
    %1415 = vmatprep.subr.mxu0 0.0
    %1416 = vmatpush2.msra.mxu0 0.0
    %1417 = vmatprep.subr.mxu0 0.0
    %1418 = vmatpush2.msra.mxu0 0.0
    %1419 = vmatprep.subr.mxu0 0.0
    %1420 = vmatpush2.msra.mxu0 0.0
    %1421 = vmatprep.subr.mxu0 0.0
    %1422 = vmatpush2.msra.mxu0 0.0
    %1423 = vmatprep.subr.mxu0 0.0
    %1424 = vmatpush2.msra.mxu0 0.0
    %1425 = vmatprep.subr.mxu0 0.0
    %1426 = vmatpush2.msra.mxu0 0.0
    %1427 = vmatprep.subr.mxu0 0.0
    %1428 = vmatpush2.msra.mxu0 0.0
    %1429 = vmatprep.subr.mxu0 0.0
    %1430 = vmatpush2.msra.mxu0 0.0
    %1431 = vmatprep.subr.mxu0 0.0
    %1432 = vmatpush2.msra.mxu0 0.0
    %1433 = vmatprep.subr.mxu0 0.0
    %1434 = vmatpush2.msra.mxu0 0.0
    %1435 = vmatprep.subr.mxu0 0.0
    %1436 = vmatpush2.msra.mxu0 0.0
    %1437 = vmatprep.subr.mxu0 0.0
    %1438 = vmatpush2.msra.mxu0 0.0
    %1439 = vmatprep.subr.mxu0 0.0
    %1440 = vmatpush2.msra.mxu0 0.0
    %1441 = vmatprep.subr.mxu0 0.0
    %1442 = vmatpush2.msra.mxu0 0.0
    %1443 = vmatprep.subr.mxu0 0.0
    %1444 = vmatpush2.msra.mxu0 0.0
    %1445 = vmatprep.subr.mxu0 0.0
    %1446 = vmatpush2.msra.mxu0 0.0
    %1447 = vmatprep.mubr.f32.mxu0 0.0
    %1448 = vmatmul.mubr.f32.gmra.mxu0 %v1381
    %v1449 = vpop.f32.mrf.mxu0
    %v1450 = vadd.f32 0.0, %v1449
    %v1451 = vpop.f32.mrf.mxu0
    %1452 = vdwg.mxu0
    %1453 = vmatprep.subr.mxu0 0.0
    %1454 = vmatpush1.msra.mxu0 %v1367
    %1455 = vmatprep.subr.mxu0 0.0
    %1456 = vmatpush1.msra.mxu0 %v1366
    %1457 = vmatprep.subr.mxu0 0.0
    %1458 = vmatpush1.msra.mxu0 %v1365
    %1459 = vmatprep.subr.mxu0 0.0
    %1460 = vmatpush1.msra.mxu0 %v1364
    %1461 = vmatprep.subr.mxu0 0.0
    %1462 = vmatpush1.msra.mxu0 %v1363
    %1463 = vmatprep.subr.mxu0 0.0
    %1464 = vmatpush1.msra.mxu0 %v1362
    %1465 = vmatprep.subr.mxu0 0.0
    %1466 = vmatpush1.msra.mxu0 %v1361
    %1467 = vmatprep.subr.mxu0 0.0
    %1468 = vmatpush1.msra.mxu0 %v1360
    %1469 = vmatprep.subr.mxu0 0.0
    %1470 = vmatpush1.msra.mxu0 %v1359
    %1471 = vmatprep.subr.mxu0 0.0
    %1472 = vmatpush1.msra.mxu0 %v1358
    %1473 = vmatprep.subr.mxu0 0.0
    %1474 = vmatpush1.msra.mxu0 %v1357
    %1475 = vmatprep.subr.mxu0 0.0
    %1476 = vmatpush1.msra.mxu0 %v1356
    %1477 = vmatprep.subr.mxu0 0.0
    %1478 = vmatpush1.msra.mxu0 %v1355
    %1479 = vmatprep.subr.mxu0 0.0
    %1480 = vmatpush1.msra.mxu0 %v1354
    %1481 = vmatprep.subr.mxu0 0.0
    %1482 = vmatpush1.msra.mxu0 %v1353
    %1483 = vmatprep.subr.mxu0 0.0
    %1484 = vmatpush1.msra.mxu0 %v1352
    %1485 = vmatprep.subr.mxu0 0.0
    %1486 = vmatpush2.msra.mxu0 0.0
    %1487 = vmatprep.subr.mxu0 0.0
    %1488 = vmatpush2.msra.mxu0 0.0
    %1489 = vmatprep.subr.mxu0 0.0
    %1490 = vmatpush2.msra.mxu0 0.0
    %1491 = vmatprep.subr.mxu0 0.0
    %1492 = vmatpush2.msra.mxu0 0.0
    %1493 = vmatprep.subr.mxu0 0.0
    %1494 = vmatpush2.msra.mxu0 0.0
    %1495 = vmatprep.subr.mxu0 0.0
    %1496 = vmatpush2.msra.mxu0 0.0
    %1497 = vmatprep.subr.mxu0 0.0
    %1498 = vmatpush2.msra.mxu0 0.0
    %1499 = vmatprep.subr.mxu0 0.0
    %1500 = vmatpush2.msra.mxu0 0.0
    %1501 = vmatprep.subr.mxu0 0.0
    %1502 = vmatpush2.msra.mxu0 0.0
    %1503 = vmatprep.subr.mxu0 0.0
    %1504 = vmatpush2.msra.mxu0 0.0
    %1505 = vmatprep.subr.mxu0 0.0
    %1506 = vmatpush2.msra.mxu0 0.0
    %1507 = vmatprep.subr.mxu0 0.0
    %1508 = vmatpush2.msra.mxu0 0.0
    %1509 = vmatprep.subr.mxu0 0.0
    %1510 = vmatpush2.msra.mxu0 0.0
    %1511 = vmatprep.subr.mxu0 0.0
    %1512 = vmatpush2.msra.mxu0 0.0
    %1513 = vmatprep.subr.mxu0 0.0
    %1514 = vmatpush2.msra.mxu0 0.0
    %1515 = vmatprep.subr.mxu0 0.0
    %1516 = vmatpush2.msra.mxu0 0.0
    %1517 = vmatprep.mubr.f32.mxu0 0.0
    %1518 = vmatmul.mubr.f32.gmra.mxu0 %v1046
    %v1519 = vpop.f32.mrf.mxu0
    %v1520 = vadd.f32 %v1450, %v1519
    %v1521 = vpop.f32.mrf.mxu0
    %1522 = vdwg.mxu0
    %v1523 = vadd.f32 %v1520, %v790
    %v1524 = vxor.u32 %v1523, 2147483648
    %v1525 = vmul.f32 %v1524, 1.442695
    %v1526 = vpow.pop %v1525
    %v1527 = vadd.f32 %v1526, 1.0
    %v1528 = vrcp.pop %v1527
    %v1529 = vmul.f32 1.0, %v1528
    %v1530 = vtanh.pop %v1523
    %v1531 = vmul.f32 %v1529, %v814
    %1533 = vrot.lane.b32.xlu0 %v1530, 64
    %v1534 = vpop.permute.xlu0 %1533
    %v1536 = vmul.f32 %v1529, %v1534
    %1538 = vrot.lane.b32.xlu0 %v1536, 32
    %v1539 = vpop.permute.xlu0 %1538
    %v1541 = vadd.f32 %v1531, %v1539
    %v1542 = vtanh.pop %v1541
    %1544 = vrot.lane.b32.xlu0 %v1542, 64
    %v1545 = vpop.permute.xlu0 %1544
    %v1547 = vmul.f32 %v1529, %v1545
    %1549 = vrot.lane.b32.xlu0 %v1547, 32
    %v1550 = vpop.permute.xlu0 %1549
    %v1552 = vsel %vm294, %v1550, %v1349
    %v1553 = vld [vmem:[%s16] sm:$0xff]
    %v1554 = vld [vmem:[%s16 + $0x8] sm:$0xff]
    %v1555 = vld [vmem:[%s16 + $0x10] sm:$0xff]
    %v1556 = vld [vmem:[%s16 + $0x18] sm:$0xff]
    %v1557 = vld [vmem:[%s16 + $0x20] sm:$0xff]
    %v1558 = vld [vmem:[%s16 + $0x28] sm:$0xff]
    %v1559 = vld [vmem:[%s16 + $0x30] sm:$0xff]
    %v1560 = vld [vmem:[%s16 + $0x38] sm:$0xff]
    %v1561 = vld [vmem:[%s16 + $0x40] sm:$0xff]
    %v1562 = vld [vmem:[%s16 + $0x48] sm:$0xff]
    %v1563 = vld [vmem:[%s16 + $0x50] sm:$0xff]
    %v1564 = vld [vmem:[%s16 + $0x58] sm:$0xff]
    %v1565 = vld [vmem:[%s16 + $0x60] sm:$0xff]
    %v1566 = vld [vmem:[%s16 + $0x68] sm:$0xff]
    %v1567 = vld [vmem:[%s16 + $0x70] sm:$0xff]
    %v1568 = vld [vmem:[%s16 + $0x78] sm:$0xff]
    %v1569 = vld [vmem:[%s17] sm:$0xff]
    %v1570 = vld [vmem:[%s17 + $0x8] sm:$0xff]
    %v1571 = vld [vmem:[%s17 + $0x10] sm:$0xff]
    %v1572 = vld [vmem:[%s17 + $0x18] sm:$0xff]
    %v1573 = vld [vmem:[%s17 + $0x20] sm:$0xff]
    %v1574 = vld [vmem:[%s17 + $0x28] sm:$0xff]
    %v1575 = vld [vmem:[%s17 + $0x30] sm:$0xff]
    %v1576 = vld [vmem:[%s17 + $0x38] sm:$0xff]
    %v1577 = vld [vmem:[%s17 + $0x40] sm:$0xff]
    %v1578 = vld [vmem:[%s17 + $0x48] sm:$0xff]
    %v1579 = vld [vmem:[%s17 + $0x50] sm:$0xff]
    %v1580 = vld [vmem:[%s17 + $0x58] sm:$0xff]
    %v1582 = vsel %vm642, %v1552, 0
    %1584 = vmatprep.subr.mxu0 0.0
    %1585 = vmatpush1.msra.mxu0 0.0
    %1586 = vmatprep.subr.mxu0 0.0
    %1587 = vmatpush1.msra.mxu0 0.0
    %1588 = vmatprep.subr.mxu0 0.0
    %1589 = vmatpush1.msra.mxu0 0.0
    %1590 = vmatprep.subr.mxu0 0.0
    %1591 = vmatpush1.msra.mxu0 0.0
    %1592 = vmatprep.subr.mxu0 0.0
    %1593 = vmatpush1.msra.mxu0 %v1580
    %1594 = vmatprep.subr.mxu0 0.0
    %1595 = vmatpush1.msra.mxu0 %v1579
    %1596 = vmatprep.subr.mxu0 0.0
    %1597 = vmatpush1.msra.mxu0 %v1578
    %1598 = vmatprep.subr.mxu0 0.0
    %1599 = vmatpush1.msra.mxu0 %v1577
    %1600 = vmatprep.subr.mxu0 0.0
    %1601 = vmatpush1.msra.mxu0 %v1576
    %1602 = vmatprep.subr.mxu0 0.0
    %1603 = vmatpush1.msra.mxu0 %v1575
    %1604 = vmatprep.subr.mxu0 0.0
    %1605 = vmatpush1.msra.mxu0 %v1574
    %1606 = vmatprep.subr.mxu0 0.0
    %1607 = vmatpush1.msra.mxu0 %v1573
    %1608 = vmatprep.subr.mxu0 0.0
    %1609 = vmatpush1.msra.mxu0 %v1572
    %1610 = vmatprep.subr.mxu0 0.0
    %1611 = vmatpush1.msra.mxu0 %v1571
    %1612 = vmatprep.subr.mxu0 0.0
    %1613 = vmatpush1.msra.mxu0 %v1570
    %1614 = vmatprep.subr.mxu0 0.0
    %1615 = vmatpush1.msra.mxu0 %v1569
    %1616 = vmatprep.subr.mxu0 0.0
    %1617 = vmatpush2.msra.mxu0 0.0
    %1618 = vmatprep.subr.mxu0 0.0
    %1619 = vmatpush2.msra.mxu0 0.0
    %1620 = vmatprep.subr.mxu0 0.0
    %1621 = vmatpush2.msra.mxu0 0.0
    %1622 = vmatprep.subr.mxu0 0.0
    %1623 = vmatpush2.msra.mxu0 0.0
    %1624 = vmatprep.subr.mxu0 0.0
    %1625 = vmatpush2.msra.mxu0 0.0
    %1626 = vmatprep.subr.mxu0 0.0
    %1627 = vmatpush2.msra.mxu0 0.0
    %1628 = vmatprep.subr.mxu0 0.0
    %1629 = vmatpush2.msra.mxu0 0.0
    %1630 = vmatprep.subr.mxu0 0.0
    %1631 = vmatpush2.msra.mxu0 0.0
    %1632 = vmatprep.subr.mxu0 0.0
    %1633 = vmatpush2.msra.mxu0 0.0
    %1634 = vmatprep.subr.mxu0 0.0
    %1635 = vmatpush2.msra.mxu0 0.0
    %1636 = vmatprep.subr.mxu0 0.0
    %1637 = vmatpush2.msra.mxu0 0.0
    %1638 = vmatprep.subr.mxu0 0.0
    %1639 = vmatpush2.msra.mxu0 0.0
    %1640 = vmatprep.subr.mxu0 0.0
    %1641 = vmatpush2.msra.mxu0 0.0
    %1642 = vmatprep.subr.mxu0 0.0
    %1643 = vmatpush2.msra.mxu0 0.0
    %1644 = vmatprep.subr.mxu0 0.0
    %1645 = vmatpush2.msra.mxu0 0.0
    %1646 = vmatprep.subr.mxu0 0.0
    %1647 = vmatpush2.msra.mxu0 0.0
    %1648 = vmatprep.mubr.f32.mxu0 0.0
    %1649 = vmatmul.mubr.f32.gmra.mxu0 %v1582
    %v1650 = vpop.f32.mrf.mxu0
    %v1651 = vadd.f32 0.0, %v1650
    %v1652 = vpop.f32.mrf.mxu0
    %1653 = vdwg.mxu0
    %1654 = vmatprep.subr.mxu0 0.0
    %1655 = vmatpush1.msra.mxu0 %v1568
    %1656 = vmatprep.subr.mxu0 0.0
    %1657 = vmatpush1.msra.mxu0 %v1567
    %1658 = vmatprep.subr.mxu0 0.0
    %1659 = vmatpush1.msra.mxu0 %v1566
    %1660 = vmatprep.subr.mxu0 0.0
    %1661 = vmatpush1.msra.mxu0 %v1565
    %1662 = vmatprep.subr.mxu0 0.0
    %1663 = vmatpush1.msra.mxu0 %v1564
    %1664 = vmatprep.subr.mxu0 0.0
    %1665 = vmatpush1.msra.mxu0 %v1563
    %1666 = vmatprep.subr.mxu0 0.0
    %1667 = vmatpush1.msra.mxu0 %v1562
    %1668 = vmatprep.subr.mxu0 0.0
    %1669 = vmatpush1.msra.mxu0 %v1561
    %1670 = vmatprep.subr.mxu0 0.0
    %1671 = vmatpush1.msra.mxu0 %v1560
    %1672 = vmatprep.subr.mxu0 0.0
    %1673 = vmatpush1.msra.mxu0 %v1559
    %1674 = vmatprep.subr.mxu0 0.0
    %1675 = vmatpush1.msra.mxu0 %v1558
    %1676 = vmatprep.subr.mxu0 0.0
    %1677 = vmatpush1.msra.mxu0 %v1557
    %1678 = vmatprep.subr.mxu0 0.0
    %1679 = vmatpush1.msra.mxu0 %v1556
    %1680 = vmatprep.subr.mxu0 0.0
    %1681 = vmatpush1.msra.mxu0 %v1555
    %1682 = vmatprep.subr.mxu0 0.0
    %1683 = vmatpush1.msra.mxu0 %v1554
    %1684 = vmatprep.subr.mxu0 0.0
    %1685 = vmatpush1.msra.mxu0 %v1553
    %1686 = vmatprep.subr.mxu0 0.0
    %1687 = vmatpush2.msra.mxu0 0.0
    %1688 = vmatprep.subr.mxu0 0.0
    %1689 = vmatpush2.msra.mxu0 0.0
    %1690 = vmatprep.subr.mxu0 0.0
    %1691 = vmatpush2.msra.mxu0 0.0
    %1692 = vmatprep.subr.mxu0 0.0
    %1693 = vmatpush2.msra.mxu0 0.0
    %1694 = vmatprep.subr.mxu0 0.0
    %1695 = vmatpush2.msra.mxu0 0.0
    %1696 = vmatprep.subr.mxu0 0.0
    %1697 = vmatpush2.msra.mxu0 0.0
    %1698 = vmatprep.subr.mxu0 0.0
    %1699 = vmatpush2.msra.mxu0 0.0
    %1700 = vmatprep.subr.mxu0 0.0
    %1701 = vmatpush2.msra.mxu0 0.0
    %1702 = vmatprep.subr.mxu0 0.0
    %1703 = vmatpush2.msra.mxu0 0.0
    %1704 = vmatprep.subr.mxu0 0.0
    %1705 = vmatpush2.msra.mxu0 0.0
    %1706 = vmatprep.subr.mxu0 0.0
    %1707 = vmatpush2.msra.mxu0 0.0
    %1708 = vmatprep.subr.mxu0 0.0
    %1709 = vmatpush2.msra.mxu0 0.0
    %1710 = vmatprep.subr.mxu0 0.0
    %1711 = vmatpush2.msra.mxu0 0.0
    %1712 = vmatprep.subr.mxu0 0.0
    %1713 = vmatpush2.msra.mxu0 0.0
    %1714 = vmatprep.subr.mxu0 0.0
    %1715 = vmatpush2.msra.mxu0 0.0
    %1716 = vmatprep.subr.mxu0 0.0
    %1717 = vmatpush2.msra.mxu0 0.0
    %1718 = vmatprep.mubr.f32.mxu0 0.0
    %1719 = vmatmul.mubr.f32.gmra.mxu0 %v1046
    %v1720 = vpop.f32.mrf.mxu0
    %v1721 = vadd.f32 %v1651, %v1720
    %v1722 = vpop.f32.mrf.mxu0
    %1723 = vdwg.mxu0
    %v1724 = vadd.f32 %v1721, %v1001
    %s1725 = scalar_lea.vmem %s19, 16
    %1726 = vst [vmem:[%s1725] sm:$0xff] %v1724
    %v1727 = vsel %vm1006, %v1724, -1e+30
    %1728 = vmax.xlane.f32.xlu0 %v1727
    %v1729 = vpop.xlane.xlu0 %1728
    %vm1730 = vcmp.eq.f32.partialorder %v1727, %v1729
    %v1731 = vsel %vm1730, %v285, 128
    %v1732 = vand.u32 %v1731, 65535
    %v1733 = vshra.s32 %v1731, 16
    %v1734 = vcvt.s32.f32 %v1732
    %v1735 = vcvt.s32.f32 %v1733
    %1736 = vmin.xlane.f32.xlu0 %v1735
    %v1737 = vpop.xlane.xlu0 %1736
    %vm1738 = vcmp.eq.f32.partialorder %v1735, %v1737
    %v1739 = vsel %vm1738, %v1734, inf
    %1740 = vmin.xlane.f32.xlu0 %v1739
    %v1741 = vpop.xlane.xlu0 %1740
    %v1742 = vcvt.f32.s32 %v1741
    %v1743 = vcvt.f32.s32 %v1737
    %v1744 = vshll.u32 %v1743, 16
    %v1745 = vadd.s32 %v1744, %v1742
    %vm1746 = vcmp.eq.s32.totalorder %v285, %v1745
    %v1747 = vsel %vm1746, 1, 0
    %v1748 = vcvt.s32.f32 %v1747
    %s1749 = sld [smem:[#allocation3 + $0x2]]
    %p1750 = scmp.ne.s32.totalorder %s1749, 0
    %s1751 = scalar_select %p1750, 1, 0
    %s1752 = scvt.s32.f32 %s1751
    %s1753 = scalar_lea.vmem %s1, 16
    %v1754 = vld [vmem:[%s1753] sm:$0xff]
    %1755 = vset.pattern.permute.xlu0 0
    %1756 = vperm.xlu0 %1755, %v1754
    %v1757 = vpop.permute.xlu0 %1756
    %vm1758 = vcmp.eq.s32.totalorder %v285, %v1757
    %v1759 = vsel %vm1758, 1, 0
    %v1760 = vcvt.s32.f32 %v1759
    %v1761 = vstv %s1752
    %v1762 = vmul.f32 %v1761, %v1760
    %s1763 = ssub.f32 1.0, %s1752
    %v1764 = vstv %s1763
    %v1765 = vmul.f32 %v1764, %v1748
    %v1766 = vadd.f32 %v1762, %v1765
    %v1767 = vsel %vm294, %v1550, 0
    %1769 = vmatprep.subr.mxu0 0.0
    %1770 = vmatpush1.msra.mxu0 0.0
    %1771 = vmatprep.subr.mxu0 0.0
    %1772 = vmatpush1.msra.mxu0 0.0
    %1773 = vmatprep.subr.mxu0 0.0
    %1774 = vmatpush1.msra.mxu0 0.0
    %1775 = vmatprep.subr.mxu0 0.0
    %1776 = vmatpush1.msra.mxu0 0.0
    %1777 = vmatprep.subr.mxu0 0.0
    %1778 = vmatpush1.msra.mxu0 0.0
    %1779 = vmatprep.subr.mxu0 0.0
    %1780 = vmatpush1.msra.mxu0 0.0
    %1781 = vmatprep.subr.mxu0 0.0
    %1782 = vmatpush1.msra.mxu0 0.0
    %1783 = vmatprep.subr.mxu0 0.0
    %1784 = vmatpush1.msra.mxu0 0.0
    %1785 = vmatprep.subr.mxu0 0.0
    %1786 = vmatpush1.msra.mxu0 0.0
    %1787 = vmatprep.subr.mxu0 0.0
    %1788 = vmatpush1.msra.mxu0 0.0
    %1789 = vmatprep.subr.mxu0 0.0
    %1790 = vmatpush1.msra.mxu0 0.0
    %1791 = vmatprep.subr.mxu0 0.0
    %1792 = vmatpush1.msra.mxu0 0.0
    %1793 = vmatprep.subr.mxu0 0.0
    %1794 = vmatpush1.msra.mxu0 %v279
    %1795 = vmatprep.subr.mxu0 0.0
    %1796 = vmatpush1.msra.mxu0 %v278
    %1797 = vmatprep.subr.mxu0 0.0
    %1798 = vmatpush1.msra.mxu0 %v277
    %1799 = vmatprep.subr.mxu0 0.0
    %1800 = vmatpush1.msra.mxu0 %v276
    %1801 = vmatprep.subr.mxu0 0.0
    %1802 = vmatpush2.msra.mxu0 0.0
    %1803 = vmatprep.subr.mxu0 0.0
    %1804 = vmatpush2.msra.mxu0 0.0
    %1805 = vmatprep.subr.mxu0 0.0
    %1806 = vmatpush2.msra.mxu0 0.0
    %1807 = vmatprep.subr.mxu0 0.0
    %1808 = vmatpush2.msra.mxu0 0.0
    %1809 = vmatprep.subr.mxu0 0.0
    %1810 = vmatpush2.msra.mxu0 0.0
    %1811 = vmatprep.subr.mxu0 0.0
    %1812 = vmatpush2.msra.mxu0 0.0
    %1813 = vmatprep.subr.mxu0 0.0
    %1814 = vmatpush2.msra.mxu0 0.0
    %1815 = vmatprep.subr.mxu0 0.0
    %1816 = vmatpush2.msra.mxu0 0.0
    %1817 = vmatprep.subr.mxu0 0.0
    %1818 = vmatpush2.msra.mxu0 0.0
    %1819 = vmatprep.subr.mxu0 0.0
    %1820 = vmatpush2.msra.mxu0 0.0
    %1821 = vmatprep.subr.mxu0 0.0
    %1822 = vmatpush2.msra.mxu0 0.0
    %1823 = vmatprep.subr.mxu0 0.0
    %1824 = vmatpush2.msra.mxu0 0.0
    %1825 = vmatprep.subr.mxu0 0.0
    %1826 = vmatpush2.msra.mxu0 0.0
    %1827 = vmatprep.subr.mxu0 0.0
    %1828 = vmatpush2.msra.mxu0 0.0
    %1829 = vmatprep.subr.mxu0 0.0
    %1830 = vmatpush2.msra.mxu0 0.0
    %1831 = vmatprep.subr.mxu0 0.0
    %1832 = vmatpush2.msra.mxu0 0.0
    %1833 = vmatprep.mubr.f32.mxu0 0.0
    %1834 = vmatmul.mubr.f32.gmra.mxu0 %v1767
    %v1835 = vpop.f32.mrf.mxu0
    %v1836 = vadd.f32 0.0, %v1835
    %v1837 = vpop.f32.mrf.mxu0
    %1838 = vdwg.mxu0
    %v1839 = vadd.f32 %v266, %v1836
    %v1840 = vadd.f32 %v267, %v1836
    %v1841 = vadd.f32 %v268, %v1836
    %v1842 = vadd.f32 %v269, %v1836
    %v1843 = vadd.f32 %v270, %v1836
    %v1844 = vadd.f32 %v271, %v1836
    %v1845 = vadd.f32 %v272, %v1836
    %v1846 = vadd.f32 %v273, %v1836
    %v1847 = vadd.f32 %v274, %v1836
    %v1848 = vadd.f32 %v275, %v1836
    %v1849 = vtanh.pop %v1839
    %v1850 = vtanh.pop %v1840
    %v1851 = vtanh.pop %v1841
    %v1852 = vtanh.pop %v1842
    %v1853 = vtanh.pop %v1843
    %v1854 = vtanh.pop %v1844
    %v1855 = vtanh.pop %v1845
    %v1856 = vtanh.pop %v1846
    %v1857 = vtanh.pop %v1847
    %v1858 = vtanh.pop %v1848
    %v1859 = vmul.f32 %v1849, %v392
    %v1860 = vmul.f32 %v1850, %v392
    %v1861 = vmul.f32 %v1851, %v392
    %v1862 = vmul.f32 %v1852, %v392
    %v1863 = vmul.f32 %v1853, %v392
    %v1864 = vmul.f32 %v1854, %v392
    %v1865 = vmul.f32 %v1855, %v392
    %v1866 = vmul.f32 %v1856, %v392
    %v1867 = vmul.f32 %v1857, %v392
    %v1868 = vmul.f32 %v1858, %v392
    %v1869 = vsel %vm294, %v1859, 0.0
    %1870 = vadd.xlane.f32.xlu0 %v1869
    %v1871 = vpop.xlane.xlu0 %1870
    %v1872 = vsel %vm294, %v1860, 0.0
    %1873 = vadd.xlane.f32.xlu0 %v1872
    %v1874 = vpop.xlane.xlu0 %1873
    %v1875 = vsel %vm294, %v1861, 0.0
    %1876 = vadd.xlane.f32.xlu0 %v1875
    %v1877 = vpop.xlane.xlu0 %1876
    %v1878 = vsel %vm294, %v1862, 0.0
    %1879 = vadd.xlane.f32.xlu0 %v1878
    %v1880 = vpop.xlane.xlu0 %1879
    %v1881 = vsel %vm294, %v1863, 0.0
    %1882 = vadd.xlane.f32.xlu0 %v1881
    %v1883 = vpop.xlane.xlu0 %1882
    %v1884 = vsel %vm294, %v1864, 0.0
    %1885 = vadd.xlane.f32.xlu0 %v1884
    %v1886 = vpop.xlane.xlu0 %1885
    %v1887 = vsel %vm294, %v1865, 0.0
    %1888 = vadd.xlane.f32.xlu0 %v1887
    %v1889 = vpop.xlane.xlu0 %1888
    %v1890 = vsel %vm294, %v1866, 0.0
    %1891 = vadd.xlane.f32.xlu0 %v1890
    %v1892 = vpop.xlane.xlu0 %1891
    %v1893 = vsel %vm294, %v1867, 0.0
    %1894 = vadd.xlane.f32.xlu0 %v1893
    %v1895 = vpop.xlane.xlu0 %1894
    %v1896 = vsel %vm294, %v1868, 0.0
    %1897 = vadd.xlane.f32.xlu0 %v1896
    %v1898 = vpop.xlane.xlu0 %1897
    %v1899 = vadd.f32 %v1871, %v438
    %v1900 = vadd.f32 %v1874, %v438
    %v1901 = vadd.f32 %v1877, %v438
    %v1902 = vadd.f32 %v1880, %v438
    %v1903 = vadd.f32 %v1883, %v438
    %v1904 = vadd.f32 %v1886, %v438
    %v1905 = vadd.f32 %v1889, %v438
    %v1906 = vadd.f32 %v1892, %v438
    %v1907 = vadd.f32 %v1895, %v438
    %v1908 = vadd.f32 %v1898, %v438
    %v1909 = vsel %vm450, %v1899, -inf
    %v1910 = vsel %vm450, %v1900, -inf
    %v1911 = vsel %vm450, %v1901, -inf
    %v1912 = vsel %vm450, %v1902, -inf
    %v1913 = vsel %vm450, %v1903, -inf
    %v1914 = vmax.f32 %v1909, %v1913
    %v1915 = vsel %vm450, %v1904, -inf
    %v1916 = vmax.f32 %v1910, %v1915
    %v1917 = vsel %vm450, %v1905, -inf
    %v1918 = vmax.f32 %v1911, %v1917
    %v1919 = vsel %vm450, %v1906, -inf
    %v1920 = vmax.f32 %v1912, %v1919
    %v1921 = vsel %vm450, %v1907, -inf
    %v1922 = vmax.f32 %v1914, %v1921
    %v1923 = vsel %vm450, %v1908, -inf
    %v1924 = vmax.f32 %v1916, %v1923
    %v1925 = vmax.f32 %v1922, %v1924
    %v1926 = vmax.f32 %v1918, %v1920
    %v1927 = vmax.f32 %v1925, %v1926
    %v1928 = vsub.f32 %v1899, %v1927
    %v1929 = vsub.f32 %v1900, %v1927
    %v1930 = vsub.f32 %v1901, %v1927
    %v1931 = vsub.f32 %v1902, %v1927
    %v1932 = vsub.f32 %v1903, %v1927
    %v1933 = vsub.f32 %v1904, %v1927
    %v1934 = vsub.f32 %v1905, %v1927
    %v1935 = vsub.f32 %v1906, %v1927
    %v1936 = vsub.f32 %v1907, %v1927
    %v1937 = vsub.f32 %v1908, %v1927
    %v1938 = vmul.f32 %v1928, 1.442695
    %v1939 = vpow.pop %v1938
    %v1940 = vmul.f32 %v1929, 1.442695
    %v1941 = vpow.pop %v1940
    %v1942 = vmul.f32 %v1930, 1.442695
    %v1943 = vpow.pop %v1942
    %v1944 = vmul.f32 %v1931, 1.442695
    %v1945 = vpow.pop %v1944
    %v1946 = vmul.f32 %v1932, 1.442695
    %v1947 = vpow.pop %v1946
    %v1948 = vmul.f32 %v1933, 1.442695
    %v1949 = vpow.pop %v1948
    %v1950 = vmul.f32 %v1934, 1.442695
    %v1951 = vpow.pop %v1950
    %v1952 = vmul.f32 %v1935, 1.442695
    %v1953 = vpow.pop %v1952
    %v1954 = vmul.f32 %v1936, 1.442695
    %v1955 = vpow.pop %v1954
    %v1956 = vmul.f32 %v1937, 1.442695
    %v1957 = vpow.pop %v1956
    %v1958 = vsel %vm450, %v1939, 0.0
    %v1959 = vsel %vm450, %v1941, 0.0
    %v1960 = vadd.f32 %v1958, %v1959
    %v1961 = vsel %vm450, %v1943, 0.0
    %v1962 = vadd.f32 %v1960, %v1961
    %v1963 = vsel %vm450, %v1945, 0.0
    %v1964 = vadd.f32 %v1962, %v1963
    %v1965 = vsel %vm450, %v1947, 0.0
    %v1966 = vadd.f32 %v1964, %v1965
    %v1967 = vsel %vm450, %v1949, 0.0
    %v1968 = vadd.f32 %v1966, %v1967
    %v1969 = vsel %vm450, %v1951, 0.0
    %v1970 = vadd.f32 %v1968, %v1969
    %v1971 = vsel %vm450, %v1953, 0.0
    %v1972 = vadd.f32 %v1970, %v1971
    %v1973 = vsel %vm450, %v1955, 0.0
    %v1974 = vadd.f32 %v1972, %v1973
    %v1975 = vsel %vm450, %v1957, 0.0
    %v1976 = vadd.f32 %v1974, %v1975
    %v1977 = vrcp.pop %v1976
    %v1978 = vmul.f32 %v1939, %v1977
    %v1979 = vmul.f32 %v1941, %v1977
    %v1980 = vmul.f32 %v1943, %v1977
    %v1981 = vmul.f32 %v1945, %v1977
    %v1982 = vmul.f32 %v1947, %v1977
    %v1983 = vmul.f32 %v1949, %v1977
    %v1984 = vmul.f32 %v1951, %v1977
    %v1985 = vmul.f32 %v1953, %v1977
    %v1986 = vmul.f32 %v1955, %v1977
    %v1987 = vmul.f32 %v1957, %v1977
    %1989 = vset.pattern.permute.xlu0 0
    %1990 = vperm.xlu0 %1989, %v1978
    %v1991 = vpop.permute.xlu0 %1990
    %1994 = vset.pattern.permute.xlu0 0
    %1995 = vperm.xlu0 %1994, %v1979
    %v1996 = vpop.permute.xlu0 %1995
    %1999 = vset.pattern.permute.xlu0 0
    %2000 = vperm.xlu0 %1999, %v1980
    %v2001 = vpop.permute.xlu0 %2000
    %2004 = vset.pattern.permute.xlu0 0
    %2005 = vperm.xlu0 %2004, %v1981
    %v2006 = vpop.permute.xlu0 %2005
    %2009 = vset.pattern.permute.xlu0 0
    %2010 = vperm.xlu0 %2009, %v1982
    %v2011 = vpop.permute.xlu0 %2010
    %2014 = vset.pattern.permute.xlu0 0
    %2015 = vperm.xlu0 %2014, %v1983
    %v2016 = vpop.permute.xlu0 %2015
    %2019 = vset.pattern.permute.xlu0 0
    %2020 = vperm.xlu0 %2019, %v1984
    %v2021 = vpop.permute.xlu0 %2020
    %2024 = vset.pattern.permute.xlu0 0
    %2025 = vperm.xlu0 %2024, %v1985
    %v2026 = vpop.permute.xlu0 %2025
    %2029 = vset.pattern.permute.xlu0 0
    %2030 = vperm.xlu0 %2029, %v1986
    %v2031 = vpop.permute.xlu0 %2030
    %2034 = vset.pattern.permute.xlu0 0
    %2035 = vperm.xlu0 %2034, %v1987
    %v2036 = vpop.permute.xlu0 %2035
    %v2038 = vmul.f32 %v1991, %v256
    %v2039 = vmul.f32 %v1996, %v257
    %v2040 = vmul.f32 %v2001, %v258
    %v2041 = vmul.f32 %v2006, %v259
    %v2042 = vmul.f32 %v2011, %v260
    %v2043 = vmul.f32 %v2016, %v261
    %v2044 = vmul.f32 %v2021, %v262
    %v2045 = vmul.f32 %v2026, %v263
    %v2046 = vmul.f32 %v2031, %v264
    %v2047 = vmul.f32 %v2036, %v265
    %v2048 = vsel %vm93, %v2038, 0.0
    %v2049 = vsel %vm93, %v2039, 0.0
    %v2050 = vadd.f32 %v2048, %v2049
    %v2051 = vsel %vm93, %v2040, 0.0
    %v2052 = vadd.f32 %v2050, %v2051
    %v2053 = vsel %vm93, %v2041, 0.0
    %v2054 = vadd.f32 %v2052, %v2053
    %v2055 = vsel %vm93, %v2042, 0.0
    %v2056 = vadd.f32 %v2054, %v2055
    %v2057 = vsel %vm93, %v2043, 0.0
    %v2058 = vadd.f32 %v2056, %v2057
    %v2059 = vsel %vm93, %v2044, 0.0
    %v2060 = vadd.f32 %v2058, %v2059
    %v2061 = vsel %vm93, %v2045, 0.0
    %v2062 = vadd.f32 %v2060, %v2061
    %v2063 = vsel %vm93, %v2046, 0.0
    %v2064 = vadd.f32 %v2062, %v2063
    %v2065 = vsel %vm93, %v2047, 0.0
    %v2066 = vadd.f32 %v2064, %v2065
    %2068 = vrot.lane.b32.xlu0 %v2066, 32
    %v2069 = vpop.permute.xlu0 %2068
    %v2071 = vsel %vm294, %v1550, %v2069
    %v2072 = vld [vmem:[%s13] sm:$0xff]
    %v2073 = vld [vmem:[%s13 + $0x8] sm:$0xff]
    %v2074 = vld [vmem:[%s13 + $0x10] sm:$0xff]
    %v2075 = vld [vmem:[%s13 + $0x18] sm:$0xff]
    %v2076 = vld [vmem:[%s13 + $0x20] sm:$0xff]
    %v2077 = vld [vmem:[%s13 + $0x28] sm:$0xff]
    %v2078 = vld [vmem:[%s13 + $0x30] sm:$0xff]
    %v2079 = vld [vmem:[%s13 + $0x38] sm:$0xff]
    %v2080 = vld [vmem:[%s13 + $0x40] sm:$0xff]
    %v2081 = vld [vmem:[%s13 + $0x48] sm:$0xff]
    %v2082 = vld [vmem:[%s13 + $0x50] sm:$0xff]
    %v2083 = vld [vmem:[%s13 + $0x58] sm:$0xff]
    %v2084 = vld [vmem:[%s13 + $0x60] sm:$0xff]
    %v2085 = vld [vmem:[%s13 + $0x68] sm:$0xff]
    %v2086 = vld [vmem:[%s13 + $0x70] sm:$0xff]
    %v2087 = vld [vmem:[%s13 + $0x78] sm:$0xff]
    %v2088 = vld [vmem:[%s14] sm:$0xff]
    %v2089 = vld [vmem:[%s14 + $0x8] sm:$0xff]
    %v2090 = vld [vmem:[%s14 + $0x10] sm:$0xff]
    %v2091 = vld [vmem:[%s14 + $0x18] sm:$0xff]
    %v2092 = vld [vmem:[%s14 + $0x20] sm:$0xff]
    %v2093 = vld [vmem:[%s14 + $0x28] sm:$0xff]
    %v2094 = vld [vmem:[%s14 + $0x30] sm:$0xff]
    %v2095 = vld [vmem:[%s14 + $0x38] sm:$0xff]
    %v2096 = vld [vmem:[%s14 + $0x40] sm:$0xff]
    %v2097 = vld [vmem:[%s14 + $0x48] sm:$0xff]
    %v2098 = vld [vmem:[%s14 + $0x50] sm:$0xff]
    %v2099 = vld [vmem:[%s14 + $0x58] sm:$0xff]
    %v2101 = vsel %vm642, %v2071, 0
    %2103 = vmatprep.subr.mxu0 0.0
    %2104 = vmatpush1.msra.mxu0 0.0
    %2105 = vmatprep.subr.mxu0 0.0
    %2106 = vmatpush1.msra.mxu0 0.0
    %2107 = vmatprep.subr.mxu0 0.0
    %2108 = vmatpush1.msra.mxu0 0.0
    %2109 = vmatprep.subr.mxu0 0.0
    %2110 = vmatpush1.msra.mxu0 0.0
    %2111 = vmatprep.subr.mxu0 0.0
    %2112 = vmatpush1.msra.mxu0 %v2099
    %2113 = vmatprep.subr.mxu0 0.0
    %2114 = vmatpush1.msra.mxu0 %v2098
    %2115 = vmatprep.subr.mxu0 0.0
    %2116 = vmatpush1.msra.mxu0 %v2097
    %2117 = vmatprep.subr.mxu0 0.0
    %2118 = vmatpush1.msra.mxu0 %v2096
    %2119 = vmatprep.subr.mxu0 0.0
    %2120 = vmatpush1.msra.mxu0 %v2095
    %2121 = vmatprep.subr.mxu0 0.0
    %2122 = vmatpush1.msra.mxu0 %v2094
    %2123 = vmatprep.subr.mxu0 0.0
    %2124 = vmatpush1.msra.mxu0 %v2093
    %2125 = vmatprep.subr.mxu0 0.0
    %2126 = vmatpush1.msra.mxu0 %v2092
    %2127 = vmatprep.subr.mxu0 0.0
    %2128 = vmatpush1.msra.mxu0 %v2091
    %2129 = vmatprep.subr.mxu0 0.0
    %2130 = vmatpush1.msra.mxu0 %v2090
    %2131 = vmatprep.subr.mxu0 0.0
    %2132 = vmatpush1.msra.mxu0 %v2089
    %2133 = vmatprep.subr.mxu0 0.0
    %2134 = vmatpush1.msra.mxu0 %v2088
    %2135 = vmatprep.subr.mxu0 0.0
    %2136 = vmatpush2.msra.mxu0 0.0
    %2137 = vmatprep.subr.mxu0 0.0
    %2138 = vmatpush2.msra.mxu0 0.0
    %2139 = vmatprep.subr.mxu0 0.0
    %2140 = vmatpush2.msra.mxu0 0.0
    %2141 = vmatprep.subr.mxu0 0.0
    %2142 = vmatpush2.msra.mxu0 0.0
    %2143 = vmatprep.subr.mxu0 0.0
    %2144 = vmatpush2.msra.mxu0 0.0
    %2145 = vmatprep.subr.mxu0 0.0
    %2146 = vmatpush2.msra.mxu0 0.0
    %2147 = vmatprep.subr.mxu0 0.0
    %2148 = vmatpush2.msra.mxu0 0.0
    %2149 = vmatprep.subr.mxu0 0.0
    %2150 = vmatpush2.msra.mxu0 0.0
    %2151 = vmatprep.subr.mxu0 0.0
    %2152 = vmatpush2.msra.mxu0 0.0
    %2153 = vmatprep.subr.mxu0 0.0
    %2154 = vmatpush2.msra.mxu0 0.0
    %2155 = vmatprep.subr.mxu0 0.0
    %2156 = vmatpush2.msra.mxu0 0.0
    %2157 = vmatprep.subr.mxu0 0.0
    %2158 = vmatpush2.msra.mxu0 0.0
    %2159 = vmatprep.subr.mxu0 0.0
    %2160 = vmatpush2.msra.mxu0 0.0
    %2161 = vmatprep.subr.mxu0 0.0
    %2162 = vmatpush2.msra.mxu0 0.0
    %2163 = vmatprep.subr.mxu0 0.0
    %2164 = vmatpush2.msra.mxu0 0.0
    %2165 = vmatprep.subr.mxu0 0.0
    %2166 = vmatpush2.msra.mxu0 0.0
    %2167 = vmatprep.mubr.f32.mxu0 0.0
    %2168 = vmatmul.mubr.f32.gmra.mxu0 %v2101
    %v2169 = vpop.f32.mrf.mxu0
    %v2170 = vadd.f32 0.0, %v2169
    %v2171 = vpop.f32.mrf.mxu0
    %2172 = vdwg.mxu0
    %2173 = vmatprep.subr.mxu0 0.0
    %2174 = vmatpush1.msra.mxu0 %v2087
    %2175 = vmatprep.subr.mxu0 0.0
    %2176 = vmatpush1.msra.mxu0 %v2086
    %2177 = vmatprep.subr.mxu0 0.0
    %2178 = vmatpush1.msra.mxu0 %v2085
    %2179 = vmatprep.subr.mxu0 0.0
    %2180 = vmatpush1.msra.mxu0 %v2084
    %2181 = vmatprep.subr.mxu0 0.0
    %2182 = vmatpush1.msra.mxu0 %v2083
    %2183 = vmatprep.subr.mxu0 0.0
    %2184 = vmatpush1.msra.mxu0 %v2082
    %2185 = vmatprep.subr.mxu0 0.0
    %2186 = vmatpush1.msra.mxu0 %v2081
    %2187 = vmatprep.subr.mxu0 0.0
    %2188 = vmatpush1.msra.mxu0 %v2080
    %2189 = vmatprep.subr.mxu0 0.0
    %2190 = vmatpush1.msra.mxu0 %v2079
    %2191 = vmatprep.subr.mxu0 0.0
    %2192 = vmatpush1.msra.mxu0 %v2078
    %2193 = vmatprep.subr.mxu0 0.0
    %2194 = vmatpush1.msra.mxu0 %v2077
    %2195 = vmatprep.subr.mxu0 0.0
    %2196 = vmatpush1.msra.mxu0 %v2076
    %2197 = vmatprep.subr.mxu0 0.0
    %2198 = vmatpush1.msra.mxu0 %v2075
    %2199 = vmatprep.subr.mxu0 0.0
    %2200 = vmatpush1.msra.mxu0 %v2074
    %2201 = vmatprep.subr.mxu0 0.0
    %2202 = vmatpush1.msra.mxu0 %v2073
    %2203 = vmatprep.subr.mxu0 0.0
    %2204 = vmatpush1.msra.mxu0 %v2072
    %2205 = vmatprep.subr.mxu0 0.0
    %2206 = vmatpush2.msra.mxu0 0.0
    %2207 = vmatprep.subr.mxu0 0.0
    %2208 = vmatpush2.msra.mxu0 0.0
    %2209 = vmatprep.subr.mxu0 0.0
    %2210 = vmatpush2.msra.mxu0 0.0
    %2211 = vmatprep.subr.mxu0 0.0
    %2212 = vmatpush2.msra.mxu0 0.0
    %2213 = vmatprep.subr.mxu0 0.0
    %2214 = vmatpush2.msra.mxu0 0.0
    %2215 = vmatprep.subr.mxu0 0.0
    %2216 = vmatpush2.msra.mxu0 0.0
    %2217 = vmatprep.subr.mxu0 0.0
    %2218 = vmatpush2.msra.mxu0 0.0
    %2219 = vmatprep.subr.mxu0 0.0
    %2220 = vmatpush2.msra.mxu0 0.0
    %2221 = vmatprep.subr.mxu0 0.0
    %2222 = vmatpush2.msra.mxu0 0.0
    %2223 = vmatprep.subr.mxu0 0.0
    %2224 = vmatpush2.msra.mxu0 0.0
    %2225 = vmatprep.subr.mxu0 0.0
    %2226 = vmatpush2.msra.mxu0 0.0
    %2227 = vmatprep.subr.mxu0 0.0
    %2228 = vmatpush2.msra.mxu0 0.0
    %2229 = vmatprep.subr.mxu0 0.0
    %2230 = vmatpush2.msra.mxu0 0.0
    %2231 = vmatprep.subr.mxu0 0.0
    %2232 = vmatpush2.msra.mxu0 0.0
    %2233 = vmatprep.subr.mxu0 0.0
    %2234 = vmatpush2.msra.mxu0 0.0
    %2235 = vmatprep.subr.mxu0 0.0
    %2236 = vmatpush2.msra.mxu0 0.0
    %2237 = vmatprep.mubr.f32.mxu0 0.0
    %2238 = vmatmul.mubr.f32.gmra.mxu0 %v1766
    %v2239 = vpop.f32.mrf.mxu0
    %v2240 = vadd.f32 %v2170, %v2239
    %v2241 = vpop.f32.mrf.mxu0
    %2242 = vdwg.mxu0
    %v2243 = vadd.f32 %v2240, %v790
    %v2244 = vxor.u32 %v2243, 2147483648
    %v2245 = vmul.f32 %v2244, 1.442695
    %v2246 = vpow.pop %v2245
    %v2247 = vadd.f32 %v2246, 1.0
    %v2248 = vrcp.pop %v2247
    %v2249 = vmul.f32 1.0, %v2248
    %v2250 = vtanh.pop %v2243
    %v2251 = vmul.f32 %v2249, %v1541
    %2253 = vrot.lane.b32.xlu0 %v2250, 64
    %v2254 = vpop.permute.xlu0 %2253
    %v2256 = vmul.f32 %v2249, %v2254
    %2258 = vrot.lane.b32.xlu0 %v2256, 32
    %v2259 = vpop.permute.xlu0 %2258
    %v2261 = vadd.f32 %v2251, %v2259
    %v2262 = vtanh.pop %v2261
    %2264 = vrot.lane.b32.xlu0 %v2262, 64
    %v2265 = vpop.permute.xlu0 %2264
    %v2267 = vmul.f32 %v2249, %v2265
    %2269 = vrot.lane.b32.xlu0 %v2267, 32
    %v2270 = vpop.permute.xlu0 %2269
    %v2272 = vsel %vm294, %v2270, %v2069
    %v2273 = vld [vmem:[%s16] sm:$0xff]
    %v2274 = vld [vmem:[%s16 + $0x8] sm:$0xff]
    %v2275 = vld [vmem:[%s16 + $0x10] sm:$0xff]
    %v2276 = vld [vmem:[%s16 + $0x18] sm:$0xff]
    %v2277 = vld [vmem:[%s16 + $0x20] sm:$0xff]
    %v2278 = vld [vmem:[%s16 + $0x28] sm:$0xff]
    %v2279 = vld [vmem:[%s16 + $0x30] sm:$0xff]
    %v2280 = vld [vmem:[%s16 + $0x38] sm:$0xff]
    %v2281 = vld [vmem:[%s16 + $0x40] sm:$0xff]
    %v2282 = vld [vmem:[%s16 + $0x48] sm:$0xff]
    %v2283 = vld [vmem:[%s16 + $0x50] sm:$0xff]
    %v2284 = vld [vmem:[%s16 + $0x58] sm:$0xff]
    %v2285 = vld [vmem:[%s16 + $0x60] sm:$0xff]
    %v2286 = vld [vmem:[%s16 + $0x68] sm:$0xff]
    %v2287 = vld [vmem:[%s16 + $0x70] sm:$0xff]
    %v2288 = vld [vmem:[%s16 + $0x78] sm:$0xff]
    %v2289 = vld [vmem:[%s17] sm:$0xff]
    %v2290 = vld [vmem:[%s17 + $0x8] sm:$0xff]
    %v2291 = vld [vmem:[%s17 + $0x10] sm:$0xff]
    %v2292 = vld [vmem:[%s17 + $0x18] sm:$0xff]
    %v2293 = vld [vmem:[%s17 + $0x20] sm:$0xff]
    %v2294 = vld [vmem:[%s17 + $0x28] sm:$0xff]
    %v2295 = vld [vmem:[%s17 + $0x30] sm:$0xff]
    %v2296 = vld [vmem:[%s17 + $0x38] sm:$0xff]
    %v2297 = vld [vmem:[%s17 + $0x40] sm:$0xff]
    %v2298 = vld [vmem:[%s17 + $0x48] sm:$0xff]
    %v2299 = vld [vmem:[%s17 + $0x50] sm:$0xff]
    %v2300 = vld [vmem:[%s17 + $0x58] sm:$0xff]
    %v2302 = vsel %vm642, %v2272, 0
    %2304 = vmatprep.subr.mxu0 0.0
    %2305 = vmatpush1.msra.mxu0 0.0
    %2306 = vmatprep.subr.mxu0 0.0
    %2307 = vmatpush1.msra.mxu0 0.0
    %2308 = vmatprep.subr.mxu0 0.0
    %2309 = vmatpush1.msra.mxu0 0.0
    %2310 = vmatprep.subr.mxu0 0.0
    %2311 = vmatpush1.msra.mxu0 0.0
    %2312 = vmatprep.subr.mxu0 0.0
    %2313 = vmatpush1.msra.mxu0 %v2300
    %2314 = vmatprep.subr.mxu0 0.0
    %2315 = vmatpush1.msra.mxu0 %v2299
    %2316 = vmatprep.subr.mxu0 0.0
    %2317 = vmatpush1.msra.mxu0 %v2298
    %2318 = vmatprep.subr.mxu0 0.0
    %2319 = vmatpush1.msra.mxu0 %v2297
    %2320 = vmatprep.subr.mxu0 0.0
    %2321 = vmatpush1.msra.mxu0 %v2296
    %2322 = vmatprep.subr.mxu0 0.0
    %2323 = vmatpush1.msra.mxu0 %v2295
    %2324 = vmatprep.subr.mxu0 0.0
    %2325 = vmatpush1.msra.mxu0 %v2294
    %2326 = vmatprep.subr.mxu0 0.0
    %2327 = vmatpush1.msra.mxu0 %v2293
    %2328 = vmatprep.subr.mxu0 0.0
    %2329 = vmatpush1.msra.mxu0 %v2292
    %2330 = vmatprep.subr.mxu0 0.0
    %2331 = vmatpush1.msra.mxu0 %v2291
    %2332 = vmatprep.subr.mxu0 0.0
    %2333 = vmatpush1.msra.mxu0 %v2290
    %2334 = vmatprep.subr.mxu0 0.0
    %2335 = vmatpush1.msra.mxu0 %v2289
    %2336 = vmatprep.subr.mxu0 0.0
    %2337 = vmatpush2.msra.mxu0 0.0
    %2338 = vmatprep.subr.mxu0 0.0
    %2339 = vmatpush2.msra.mxu0 0.0
    %2340 = vmatprep.subr.mxu0 0.0
    %2341 = vmatpush2.msra.mxu0 0.0
    %2342 = vmatprep.subr.mxu0 0.0
    %2343 = vmatpush2.msra.mxu0 0.0
    %2344 = vmatprep.subr.mxu0 0.0
    %2345 = vmatpush2.msra.mxu0 0.0
    %2346 = vmatprep.subr.mxu0 0.0
    %2347 = vmatpush2.msra.mxu0 0.0
    %2348 = vmatprep.subr.mxu0 0.0
    %2349 = vmatpush2.msra.mxu0 0.0
    %2350 = vmatprep.subr.mxu0 0.0
    %2351 = vmatpush2.msra.mxu0 0.0
    %2352 = vmatprep.subr.mxu0 0.0
    %2353 = vmatpush2.msra.mxu0 0.0
    %2354 = vmatprep.subr.mxu0 0.0
    %2355 = vmatpush2.msra.mxu0 0.0
    %2356 = vmatprep.subr.mxu0 0.0
    %2357 = vmatpush2.msra.mxu0 0.0
    %2358 = vmatprep.subr.mxu0 0.0
    %2359 = vmatpush2.msra.mxu0 0.0
    %2360 = vmatprep.subr.mxu0 0.0
    %2361 = vmatpush2.msra.mxu0 0.0
    %2362 = vmatprep.subr.mxu0 0.0
    %2363 = vmatpush2.msra.mxu0 0.0
    %2364 = vmatprep.subr.mxu0 0.0
    %2365 = vmatpush2.msra.mxu0 0.0
    %2366 = vmatprep.subr.mxu0 0.0
    %2367 = vmatpush2.msra.mxu0 0.0
    %2368 = vmatprep.mubr.f32.mxu0 0.0
    %2369 = vmatmul.mubr.f32.gmra.mxu0 %v2302
    %v2370 = vpop.f32.mrf.mxu0
    %v2371 = vadd.f32 0.0, %v2370
    %v2372 = vpop.f32.mrf.mxu0
    %2373 = vdwg.mxu0
    %2374 = vmatprep.subr.mxu0 0.0
    %2375 = vmatpush1.msra.mxu0 %v2288
    %2376 = vmatprep.subr.mxu0 0.0
    %2377 = vmatpush1.msra.mxu0 %v2287
    %2378 = vmatprep.subr.mxu0 0.0
    %2379 = vmatpush1.msra.mxu0 %v2286
    %2380 = vmatprep.subr.mxu0 0.0
    %2381 = vmatpush1.msra.mxu0 %v2285
    %2382 = vmatprep.subr.mxu0 0.0
    %2383 = vmatpush1.msra.mxu0 %v2284
    %2384 = vmatprep.subr.mxu0 0.0
    %2385 = vmatpush1.msra.mxu0 %v2283
    %2386 = vmatprep.subr.mxu0 0.0
    %2387 = vmatpush1.msra.mxu0 %v2282
    %2388 = vmatprep.subr.mxu0 0.0
    %2389 = vmatpush1.msra.mxu0 %v2281
    %2390 = vmatprep.subr.mxu0 0.0
    %2391 = vmatpush1.msra.mxu0 %v2280
    %2392 = vmatprep.subr.mxu0 0.0
    %2393 = vmatpush1.msra.mxu0 %v2279
    %2394 = vmatprep.subr.mxu0 0.0
    %2395 = vmatpush1.msra.mxu0 %v2278
    %2396 = vmatprep.subr.mxu0 0.0
    %2397 = vmatpush1.msra.mxu0 %v2277
    %2398 = vmatprep.subr.mxu0 0.0
    %2399 = vmatpush1.msra.mxu0 %v2276
    %2400 = vmatprep.subr.mxu0 0.0
    %2401 = vmatpush1.msra.mxu0 %v2275
    %2402 = vmatprep.subr.mxu0 0.0
    %2403 = vmatpush1.msra.mxu0 %v2274
    %2404 = vmatprep.subr.mxu0 0.0
    %2405 = vmatpush1.msra.mxu0 %v2273
    %2406 = vmatprep.subr.mxu0 0.0
    %2407 = vmatpush2.msra.mxu0 0.0
    %2408 = vmatprep.subr.mxu0 0.0
    %2409 = vmatpush2.msra.mxu0 0.0
    %2410 = vmatprep.subr.mxu0 0.0
    %2411 = vmatpush2.msra.mxu0 0.0
    %2412 = vmatprep.subr.mxu0 0.0
    %2413 = vmatpush2.msra.mxu0 0.0
    %2414 = vmatprep.subr.mxu0 0.0
    %2415 = vmatpush2.msra.mxu0 0.0
    %2416 = vmatprep.subr.mxu0 0.0
    %2417 = vmatpush2.msra.mxu0 0.0
    %2418 = vmatprep.subr.mxu0 0.0
    %2419 = vmatpush2.msra.mxu0 0.0
    %2420 = vmatprep.subr.mxu0 0.0
    %2421 = vmatpush2.msra.mxu0 0.0
    %2422 = vmatprep.subr.mxu0 0.0
    %2423 = vmatpush2.msra.mxu0 0.0
    %2424 = vmatprep.subr.mxu0 0.0
    %2425 = vmatpush2.msra.mxu0 0.0
    %2426 = vmatprep.subr.mxu0 0.0
    %2427 = vmatpush2.msra.mxu0 0.0
    %2428 = vmatprep.subr.mxu0 0.0
    %2429 = vmatpush2.msra.mxu0 0.0
    %2430 = vmatprep.subr.mxu0 0.0
    %2431 = vmatpush2.msra.mxu0 0.0
    %2432 = vmatprep.subr.mxu0 0.0
    %2433 = vmatpush2.msra.mxu0 0.0
    %2434 = vmatprep.subr.mxu0 0.0
    %2435 = vmatpush2.msra.mxu0 0.0
    %2436 = vmatprep.subr.mxu0 0.0
    %2437 = vmatpush2.msra.mxu0 0.0
    %2438 = vmatprep.mubr.f32.mxu0 0.0
    %2439 = vmatmul.mubr.f32.gmra.mxu0 %v1766
    %v2440 = vpop.f32.mrf.mxu0
    %v2441 = vadd.f32 %v2371, %v2440
    %v2442 = vpop.f32.mrf.mxu0
    %2443 = vdwg.mxu0
    %v2444 = vadd.f32 %v2441, %v1001
    %s2445 = scalar_lea.vmem %s19, 24
    %2446 = vst [vmem:[%s2445] sm:$0xff] %v2444
    %v2447 = vsel %vm1006, %v2444, -1e+30
    %2448 = vmax.xlane.f32.xlu0 %v2447
    %v2449 = vpop.xlane.xlu0 %2448
    %vm2450 = vcmp.eq.f32.partialorder %v2447, %v2449
    %v2451 = vsel %vm2450, %v285, 128
    %v2452 = vand.u32 %v2451, 65535
    %v2453 = vshra.s32 %v2451, 16
    %v2454 = vcvt.s32.f32 %v2452
    %v2455 = vcvt.s32.f32 %v2453
    %2456 = vmin.xlane.f32.xlu0 %v2455
    %v2457 = vpop.xlane.xlu0 %2456
    %vm2458 = vcmp.eq.f32.partialorder %v2455, %v2457
    %v2459 = vsel %vm2458, %v2454, inf
    %2460 = vmin.xlane.f32.xlu0 %v2459
    %v2461 = vpop.xlane.xlu0 %2460
    %v2462 = vcvt.f32.s32 %v2461
    %v2463 = vcvt.f32.s32 %v2457
    %v2464 = vshll.u32 %v2463, 16
    %v2465 = vadd.s32 %v2464, %v2462
    %vm2466 = vcmp.eq.s32.totalorder %v285, %v2465
    %v2467 = vsel %vm2466, 1, 0
    %v2468 = vcvt.s32.f32 %v2467
    %s2469 = sld [smem:[#allocation3 + $0x3]]
    %p2470 = scmp.ne.s32.totalorder %s2469, 0
    %s2471 = scalar_select %p2470, 1, 0
    %s2472 = scvt.s32.f32 %s2471
    %s2473 = scalar_lea.vmem %s1, 24
    %v2474 = vld [vmem:[%s2473] sm:$0xff]
    %2475 = vset.pattern.permute.xlu0 0
    %2476 = vperm.xlu0 %2475, %v2474
    %v2477 = vpop.permute.xlu0 %2476
    %vm2478 = vcmp.eq.s32.totalorder %v285, %v2477
    %v2479 = vsel %vm2478, 1, 0
    %v2480 = vcvt.s32.f32 %v2479
    %v2481 = vstv %s2472
    %v2482 = vmul.f32 %v2481, %v2480
    %s2483 = ssub.f32 1.0, %s2472
    %v2484 = vstv %s2483
    %v2485 = vmul.f32 %v2484, %v2468
    %v2486 = vadd.f32 %v2482, %v2485
    %v2487 = vsel %vm294, %v2270, 0
    %2489 = vmatprep.subr.mxu0 0.0
    %2490 = vmatpush1.msra.mxu0 0.0
    %2491 = vmatprep.subr.mxu0 0.0
    %2492 = vmatpush1.msra.mxu0 0.0
    %2493 = vmatprep.subr.mxu0 0.0
    %2494 = vmatpush1.msra.mxu0 0.0
    %2495 = vmatprep.subr.mxu0 0.0
    %2496 = vmatpush1.msra.mxu0 0.0
    %2497 = vmatprep.subr.mxu0 0.0
    %2498 = vmatpush1.msra.mxu0 0.0
    %2499 = vmatprep.subr.mxu0 0.0
    %2500 = vmatpush1.msra.mxu0 0.0
    %2501 = vmatprep.subr.mxu0 0.0
    %2502 = vmatpush1.msra.mxu0 0.0
    %2503 = vmatprep.subr.mxu0 0.0
    %2504 = vmatpush1.msra.mxu0 0.0
    %2505 = vmatprep.subr.mxu0 0.0
    %2506 = vmatpush1.msra.mxu0 0.0
    %2507 = vmatprep.subr.mxu0 0.0
    %2508 = vmatpush1.msra.mxu0 0.0
    %2509 = vmatprep.subr.mxu0 0.0
    %2510 = vmatpush1.msra.mxu0 0.0
    %2511 = vmatprep.subr.mxu0 0.0
    %2512 = vmatpush1.msra.mxu0 0.0
    %2513 = vmatprep.subr.mxu0 0.0
    %2514 = vmatpush1.msra.mxu0 %v279
    %2515 = vmatprep.subr.mxu0 0.0
    %2516 = vmatpush1.msra.mxu0 %v278
    %2517 = vmatprep.subr.mxu0 0.0
    %2518 = vmatpush1.msra.mxu0 %v277
    %2519 = vmatprep.subr.mxu0 0.0
    %2520 = vmatpush1.msra.mxu0 %v276
    %2521 = vmatprep.subr.mxu0 0.0
    %2522 = vmatpush2.msra.mxu0 0.0
    %2523 = vmatprep.subr.mxu0 0.0
    %2524 = vmatpush2.msra.mxu0 0.0
    %2525 = vmatprep.subr.mxu0 0.0
    %2526 = vmatpush2.msra.mxu0 0.0
    %2527 = vmatprep.subr.mxu0 0.0
    %2528 = vmatpush2.msra.mxu0 0.0
    %2529 = vmatprep.subr.mxu0 0.0
    %2530 = vmatpush2.msra.mxu0 0.0
    %2531 = vmatprep.subr.mxu0 0.0
    %2532 = vmatpush2.msra.mxu0 0.0
    %2533 = vmatprep.subr.mxu0 0.0
    %2534 = vmatpush2.msra.mxu0 0.0
    %2535 = vmatprep.subr.mxu0 0.0
    %2536 = vmatpush2.msra.mxu0 0.0
    %2537 = vmatprep.subr.mxu0 0.0
    %2538 = vmatpush2.msra.mxu0 0.0
    %2539 = vmatprep.subr.mxu0 0.0
    %2540 = vmatpush2.msra.mxu0 0.0
    %2541 = vmatprep.subr.mxu0 0.0
    %2542 = vmatpush2.msra.mxu0 0.0
    %2543 = vmatprep.subr.mxu0 0.0
    %2544 = vmatpush2.msra.mxu0 0.0
    %2545 = vmatprep.subr.mxu0 0.0
    %2546 = vmatpush2.msra.mxu0 0.0
    %2547 = vmatprep.subr.mxu0 0.0
    %2548 = vmatpush2.msra.mxu0 0.0
    %2549 = vmatprep.subr.mxu0 0.0
    %2550 = vmatpush2.msra.mxu0 0.0
    %2551 = vmatprep.subr.mxu0 0.0
    %2552 = vmatpush2.msra.mxu0 0.0
    %2553 = vmatprep.mubr.f32.mxu0 0.0
    %2554 = vmatmul.mubr.f32.gmra.mxu0 %v2487
    %v2555 = vpop.f32.mrf.mxu0
    %v2556 = vadd.f32 0.0, %v2555
    %v2557 = vpop.f32.mrf.mxu0
    %2558 = vdwg.mxu0
    %v2559 = vadd.f32 %v266, %v2556
    %v2560 = vadd.f32 %v267, %v2556
    %v2561 = vadd.f32 %v268, %v2556
    %v2562 = vadd.f32 %v269, %v2556
    %v2563 = vadd.f32 %v270, %v2556
    %v2564 = vadd.f32 %v271, %v2556
    %v2565 = vadd.f32 %v272, %v2556
    %v2566 = vadd.f32 %v273, %v2556
    %v2567 = vadd.f32 %v274, %v2556
    %v2568 = vadd.f32 %v275, %v2556
    %v2569 = vtanh.pop %v2559
    %v2570 = vtanh.pop %v2560
    %v2571 = vtanh.pop %v2561
    %v2572 = vtanh.pop %v2562
    %v2573 = vtanh.pop %v2563
    %v2574 = vtanh.pop %v2564
    %v2575 = vtanh.pop %v2565
    %v2576 = vtanh.pop %v2566
    %v2577 = vtanh.pop %v2567
    %v2578 = vtanh.pop %v2568
    %v2579 = vmul.f32 %v2569, %v392
    %v2580 = vmul.f32 %v2570, %v392
    %v2581 = vmul.f32 %v2571, %v392
    %v2582 = vmul.f32 %v2572, %v392
    %v2583 = vmul.f32 %v2573, %v392
    %v2584 = vmul.f32 %v2574, %v392
    %v2585 = vmul.f32 %v2575, %v392
    %v2586 = vmul.f32 %v2576, %v392
    %v2587 = vmul.f32 %v2577, %v392
    %v2588 = vmul.f32 %v2578, %v392
    %v2589 = vsel %vm294, %v2579, 0.0
    %2590 = vadd.xlane.f32.xlu0 %v2589
    %v2591 = vpop.xlane.xlu0 %2590
    %v2592 = vsel %vm294, %v2580, 0.0
    %2593 = vadd.xlane.f32.xlu0 %v2592
    %v2594 = vpop.xlane.xlu0 %2593
    %v2595 = vsel %vm294, %v2581, 0.0
    %2596 = vadd.xlane.f32.xlu0 %v2595
    %v2597 = vpop.xlane.xlu0 %2596
    %v2598 = vsel %vm294, %v2582, 0.0
    %2599 = vadd.xlane.f32.xlu0 %v2598
    %v2600 = vpop.xlane.xlu0 %2599
    %v2601 = vsel %vm294, %v2583, 0.0
    %2602 = vadd.xlane.f32.xlu0 %v2601
    %v2603 = vpop.xlane.xlu0 %2602
    %v2604 = vsel %vm294, %v2584, 0.0
    %2605 = vadd.xlane.f32.xlu0 %v2604
    %v2606 = vpop.xlane.xlu0 %2605
    %v2607 = vsel %vm294, %v2585, 0.0
    %2608 = vadd.xlane.f32.xlu0 %v2607
    %v2609 = vpop.xlane.xlu0 %2608
    %v2610 = vsel %vm294, %v2586, 0.0
    %2611 = vadd.xlane.f32.xlu0 %v2610
    %v2612 = vpop.xlane.xlu0 %2611
    %v2613 = vsel %vm294, %v2587, 0.0
    %2614 = vadd.xlane.f32.xlu0 %v2613
    %v2615 = vpop.xlane.xlu0 %2614
    %v2616 = vsel %vm294, %v2588, 0.0
    %2617 = vadd.xlane.f32.xlu0 %v2616
    %v2618 = vpop.xlane.xlu0 %2617
    %v2619 = vadd.f32 %v2591, %v438
    %v2620 = vadd.f32 %v2594, %v438
    %v2621 = vadd.f32 %v2597, %v438
    %v2622 = vadd.f32 %v2600, %v438
    %v2623 = vadd.f32 %v2603, %v438
    %v2624 = vadd.f32 %v2606, %v438
    %v2625 = vadd.f32 %v2609, %v438
    %v2626 = vadd.f32 %v2612, %v438
    %v2627 = vadd.f32 %v2615, %v438
    %v2628 = vadd.f32 %v2618, %v438
    %v2629 = vsel %vm450, %v2619, -inf
    %v2630 = vsel %vm450, %v2620, -inf
    %v2631 = vsel %vm450, %v2621, -inf
    %v2632 = vsel %vm450, %v2622, -inf
    %v2633 = vsel %vm450, %v2623, -inf
    %v2634 = vmax.f32 %v2629, %v2633
    %v2635 = vsel %vm450, %v2624, -inf
    %v2636 = vmax.f32 %v2630, %v2635
    %v2637 = vsel %vm450, %v2625, -inf
    %v2638 = vmax.f32 %v2631, %v2637
    %v2639 = vsel %vm450, %v2626, -inf
    %v2640 = vmax.f32 %v2632, %v2639
    %v2641 = vsel %vm450, %v2627, -inf
    %v2642 = vmax.f32 %v2634, %v2641
    %v2643 = vsel %vm450, %v2628, -inf
    %v2644 = vmax.f32 %v2636, %v2643
    %v2645 = vmax.f32 %v2642, %v2644
    %v2646 = vmax.f32 %v2638, %v2640
    %v2647 = vmax.f32 %v2645, %v2646
    %v2648 = vsub.f32 %v2619, %v2647
    %v2649 = vsub.f32 %v2620, %v2647
    %v2650 = vsub.f32 %v2621, %v2647
    %v2651 = vsub.f32 %v2622, %v2647
    %v2652 = vsub.f32 %v2623, %v2647
    %v2653 = vsub.f32 %v2624, %v2647
    %v2654 = vsub.f32 %v2625, %v2647
    %v2655 = vsub.f32 %v2626, %v2647
    %v2656 = vsub.f32 %v2627, %v2647
    %v2657 = vsub.f32 %v2628, %v2647
    %v2658 = vmul.f32 %v2648, 1.442695
    %v2659 = vpow.pop %v2658
    %v2660 = vmul.f32 %v2649, 1.442695
    %v2661 = vpow.pop %v2660
    %v2662 = vmul.f32 %v2650, 1.442695
    %v2663 = vpow.pop %v2662
    %v2664 = vmul.f32 %v2651, 1.442695
    %v2665 = vpow.pop %v2664
    %v2666 = vmul.f32 %v2652, 1.442695
    %v2667 = vpow.pop %v2666
    %v2668 = vmul.f32 %v2653, 1.442695
    %v2669 = vpow.pop %v2668
    %v2670 = vmul.f32 %v2654, 1.442695
    %v2671 = vpow.pop %v2670
    %v2672 = vmul.f32 %v2655, 1.442695
    %v2673 = vpow.pop %v2672
    %v2674 = vmul.f32 %v2656, 1.442695
    %v2675 = vpow.pop %v2674
    %v2676 = vmul.f32 %v2657, 1.442695
    %v2677 = vpow.pop %v2676
    %v2678 = vsel %vm450, %v2659, 0.0
    %v2679 = vsel %vm450, %v2661, 0.0
    %v2680 = vadd.f32 %v2678, %v2679
    %v2681 = vsel %vm450, %v2663, 0.0
    %v2682 = vadd.f32 %v2680, %v2681
    %v2683 = vsel %vm450, %v2665, 0.0
    %v2684 = vadd.f32 %v2682, %v2683
    %v2685 = vsel %vm450, %v2667, 0.0
    %v2686 = vadd.f32 %v2684, %v2685
    %v2687 = vsel %vm450, %v2669, 0.0
    %v2688 = vadd.f32 %v2686, %v2687
    %v2689 = vsel %vm450, %v2671, 0.0
    %v2690 = vadd.f32 %v2688, %v2689
    %v2691 = vsel %vm450, %v2673, 0.0
    %v2692 = vadd.f32 %v2690, %v2691
    %v2693 = vsel %vm450, %v2675, 0.0
    %v2694 = vadd.f32 %v2692, %v2693
    %v2695 = vsel %vm450, %v2677, 0.0
    %v2696 = vadd.f32 %v2694, %v2695
    %v2697 = vrcp.pop %v2696
    %v2698 = vmul.f32 %v2659, %v2697
    %v2699 = vmul.f32 %v2661, %v2697
    %v2700 = vmul.f32 %v2663, %v2697
    %v2701 = vmul.f32 %v2665, %v2697
    %v2702 = vmul.f32 %v2667, %v2697
    %v2703 = vmul.f32 %v2669, %v2697
    %v2704 = vmul.f32 %v2671, %v2697
    %v2705 = vmul.f32 %v2673, %v2697
    %v2706 = vmul.f32 %v2675, %v2697
    %v2707 = vmul.f32 %v2677, %v2697
    %2709 = vset.pattern.permute.xlu0 0
    %2710 = vperm.xlu0 %2709, %v2698
    %v2711 = vpop.permute.xlu0 %2710
    %2714 = vset.pattern.permute.xlu0 0
    %2715 = vperm.xlu0 %2714, %v2699
    %v2716 = vpop.permute.xlu0 %2715
    %2719 = vset.pattern.permute.xlu0 0
    %2720 = vperm.xlu0 %2719, %v2700
    %v2721 = vpop.permute.xlu0 %2720
    %2724 = vset.pattern.permute.xlu0 0
    %2725 = vperm.xlu0 %2724, %v2701
    %v2726 = vpop.permute.xlu0 %2725
    %2729 = vset.pattern.permute.xlu0 0
    %2730 = vperm.xlu0 %2729, %v2702
    %v2731 = vpop.permute.xlu0 %2730
    %2734 = vset.pattern.permute.xlu0 0
    %2735 = vperm.xlu0 %2734, %v2703
    %v2736 = vpop.permute.xlu0 %2735
    %2739 = vset.pattern.permute.xlu0 0
    %2740 = vperm.xlu0 %2739, %v2704
    %v2741 = vpop.permute.xlu0 %2740
    %2744 = vset.pattern.permute.xlu0 0
    %2745 = vperm.xlu0 %2744, %v2705
    %v2746 = vpop.permute.xlu0 %2745
    %2749 = vset.pattern.permute.xlu0 0
    %2750 = vperm.xlu0 %2749, %v2706
    %v2751 = vpop.permute.xlu0 %2750
    %2754 = vset.pattern.permute.xlu0 0
    %2755 = vperm.xlu0 %2754, %v2707
    %v2756 = vpop.permute.xlu0 %2755
    %v2758 = vmul.f32 %v2711, %v256
    %v2759 = vmul.f32 %v2716, %v257
    %v2760 = vmul.f32 %v2721, %v258
    %v2761 = vmul.f32 %v2726, %v259
    %v2762 = vmul.f32 %v2731, %v260
    %v2763 = vmul.f32 %v2736, %v261
    %v2764 = vmul.f32 %v2741, %v262
    %v2765 = vmul.f32 %v2746, %v263
    %v2766 = vmul.f32 %v2751, %v264
    %v2767 = vmul.f32 %v2756, %v265
    %v2768 = vsel %vm93, %v2758, 0.0
    %v2769 = vsel %vm93, %v2759, 0.0
    %v2770 = vadd.f32 %v2768, %v2769
    %v2771 = vsel %vm93, %v2760, 0.0
    %v2772 = vadd.f32 %v2770, %v2771
    %v2773 = vsel %vm93, %v2761, 0.0
    %v2774 = vadd.f32 %v2772, %v2773
    %v2775 = vsel %vm93, %v2762, 0.0
    %v2776 = vadd.f32 %v2774, %v2775
    %v2777 = vsel %vm93, %v2763, 0.0
    %v2778 = vadd.f32 %v2776, %v2777
    %v2779 = vsel %vm93, %v2764, 0.0
    %v2780 = vadd.f32 %v2778, %v2779
    %v2781 = vsel %vm93, %v2765, 0.0
    %v2782 = vadd.f32 %v2780, %v2781
    %v2783 = vsel %vm93, %v2766, 0.0
    %v2784 = vadd.f32 %v2782, %v2783
    %v2785 = vsel %vm93, %v2767, 0.0
    %v2786 = vadd.f32 %v2784, %v2785
    %2788 = vrot.lane.b32.xlu0 %v2786, 32
    %v2789 = vpop.permute.xlu0 %2788
    %v2791 = vsel %vm294, %v2270, %v2789
    %v2792 = vld [vmem:[%s13] sm:$0xff]
    %v2793 = vld [vmem:[%s13 + $0x8] sm:$0xff]
    %v2794 = vld [vmem:[%s13 + $0x10] sm:$0xff]
    %v2795 = vld [vmem:[%s13 + $0x18] sm:$0xff]
    %v2796 = vld [vmem:[%s13 + $0x20] sm:$0xff]
    %v2797 = vld [vmem:[%s13 + $0x28] sm:$0xff]
    %v2798 = vld [vmem:[%s13 + $0x30] sm:$0xff]
    %v2799 = vld [vmem:[%s13 + $0x38] sm:$0xff]
    %v2800 = vld [vmem:[%s13 + $0x40] sm:$0xff]
    %v2801 = vld [vmem:[%s13 + $0x48] sm:$0xff]
    %v2802 = vld [vmem:[%s13 + $0x50] sm:$0xff]
    %v2803 = vld [vmem:[%s13 + $0x58] sm:$0xff]
    %v2804 = vld [vmem:[%s13 + $0x60] sm:$0xff]
    %v2805 = vld [vmem:[%s13 + $0x68] sm:$0xff]
    %v2806 = vld [vmem:[%s13 + $0x70] sm:$0xff]
    %v2807 = vld [vmem:[%s13 + $0x78] sm:$0xff]
    %v2808 = vld [vmem:[%s14] sm:$0xff]
    %v2809 = vld [vmem:[%s14 + $0x8] sm:$0xff]
    %v2810 = vld [vmem:[%s14 + $0x10] sm:$0xff]
    %v2811 = vld [vmem:[%s14 + $0x18] sm:$0xff]
    %v2812 = vld [vmem:[%s14 + $0x20] sm:$0xff]
    %v2813 = vld [vmem:[%s14 + $0x28] sm:$0xff]
    %v2814 = vld [vmem:[%s14 + $0x30] sm:$0xff]
    %v2815 = vld [vmem:[%s14 + $0x38] sm:$0xff]
    %v2816 = vld [vmem:[%s14 + $0x40] sm:$0xff]
    %v2817 = vld [vmem:[%s14 + $0x48] sm:$0xff]
    %v2818 = vld [vmem:[%s14 + $0x50] sm:$0xff]
    %v2819 = vld [vmem:[%s14 + $0x58] sm:$0xff]
    %v2821 = vsel %vm642, %v2791, 0
    %2823 = vmatprep.subr.mxu0 0.0
    %2824 = vmatpush1.msra.mxu0 0.0
    %2825 = vmatprep.subr.mxu0 0.0
    %2826 = vmatpush1.msra.mxu0 0.0
    %2827 = vmatprep.subr.mxu0 0.0
    %2828 = vmatpush1.msra.mxu0 0.0
    %2829 = vmatprep.subr.mxu0 0.0
    %2830 = vmatpush1.msra.mxu0 0.0
    %2831 = vmatprep.subr.mxu0 0.0
    %2832 = vmatpush1.msra.mxu0 %v2819
    %2833 = vmatprep.subr.mxu0 0.0
    %2834 = vmatpush1.msra.mxu0 %v2818
    %2835 = vmatprep.subr.mxu0 0.0
    %2836 = vmatpush1.msra.mxu0 %v2817
    %2837 = vmatprep.subr.mxu0 0.0
    %2838 = vmatpush1.msra.mxu0 %v2816
    %2839 = vmatprep.subr.mxu0 0.0
    %2840 = vmatpush1.msra.mxu0 %v2815
    %2841 = vmatprep.subr.mxu0 0.0
    %2842 = vmatpush1.msra.mxu0 %v2814
    %2843 = vmatprep.subr.mxu0 0.0
    %2844 = vmatpush1.msra.mxu0 %v2813
    %2845 = vmatprep.subr.mxu0 0.0
    %2846 = vmatpush1.msra.mxu0 %v2812
    %2847 = vmatprep.subr.mxu0 0.0
    %2848 = vmatpush1.msra.mxu0 %v2811
    %2849 = vmatprep.subr.mxu0 0.0
    %2850 = vmatpush1.msra.mxu0 %v2810
    %2851 = vmatprep.subr.mxu0 0.0
    %2852 = vmatpush1.msra.mxu0 %v2809
    %2853 = vmatprep.subr.mxu0 0.0
    %2854 = vmatpush1.msra.mxu0 %v2808
    %2855 = vmatprep.subr.mxu0 0.0
    %2856 = vmatpush2.msra.mxu0 0.0
    %2857 = vmatprep.subr.mxu0 0.0
    %2858 = vmatpush2.msra.mxu0 0.0
    %2859 = vmatprep.subr.mxu0 0.0
    %2860 = vmatpush2.msra.mxu0 0.0
    %2861 = vmatprep.subr.mxu0 0.0
    %2862 = vmatpush2.msra.mxu0 0.0
    %2863 = vmatprep.subr.mxu0 0.0
    %2864 = vmatpush2.msra.mxu0 0.0
    %2865 = vmatprep.subr.mxu0 0.0
    %2866 = vmatpush2.msra.mxu0 0.0
    %2867 = vmatprep.subr.mxu0 0.0
    %2868 = vmatpush2.msra.mxu0 0.0
    %2869 = vmatprep.subr.mxu0 0.0
    %2870 = vmatpush2.msra.mxu0 0.0
    %2871 = vmatprep.subr.mxu0 0.0
    %2872 = vmatpush2.msra.mxu0 0.0
    %2873 = vmatprep.subr.mxu0 0.0
    %2874 = vmatpush2.msra.mxu0 0.0
    %2875 = vmatprep.subr.mxu0 0.0
    %2876 = vmatpush2.msra.mxu0 0.0
    %2877 = vmatprep.subr.mxu0 0.0
    %2878 = vmatpush2.msra.mxu0 0.0
    %2879 = vmatprep.subr.mxu0 0.0
    %2880 = vmatpush2.msra.mxu0 0.0
    %2881 = vmatprep.subr.mxu0 0.0
    %2882 = vmatpush2.msra.mxu0 0.0
    %2883 = vmatprep.subr.mxu0 0.0
    %2884 = vmatpush2.msra.mxu0 0.0
    %2885 = vmatprep.subr.mxu0 0.0
    %2886 = vmatpush2.msra.mxu0 0.0
    %2887 = vmatprep.mubr.f32.mxu0 0.0
    %2888 = vmatmul.mubr.f32.gmra.mxu0 %v2821
    %v2889 = vpop.f32.mrf.mxu0
    %v2890 = vadd.f32 0.0, %v2889
    %v2891 = vpop.f32.mrf.mxu0
    %2892 = vdwg.mxu0
    %2893 = vmatprep.subr.mxu0 0.0
    %2894 = vmatpush1.msra.mxu0 %v2807
    %2895 = vmatprep.subr.mxu0 0.0
    %2896 = vmatpush1.msra.mxu0 %v2806
    %2897 = vmatprep.subr.mxu0 0.0
    %2898 = vmatpush1.msra.mxu0 %v2805
    %2899 = vmatprep.subr.mxu0 0.0
    %2900 = vmatpush1.msra.mxu0 %v2804
    %2901 = vmatprep.subr.mxu0 0.0
    %2902 = vmatpush1.msra.mxu0 %v2803
    %2903 = vmatprep.subr.mxu0 0.0
    %2904 = vmatpush1.msra.mxu0 %v2802
    %2905 = vmatprep.subr.mxu0 0.0
    %2906 = vmatpush1.msra.mxu0 %v2801
    %2907 = vmatprep.subr.mxu0 0.0
    %2908 = vmatpush1.msra.mxu0 %v2800
    %2909 = vmatprep.subr.mxu0 0.0
    %2910 = vmatpush1.msra.mxu0 %v2799
    %2911 = vmatprep.subr.mxu0 0.0
    %2912 = vmatpush1.msra.mxu0 %v2798
    %2913 = vmatprep.subr.mxu0 0.0
    %2914 = vmatpush1.msra.mxu0 %v2797
    %2915 = vmatprep.subr.mxu0 0.0
    %2916 = vmatpush1.msra.mxu0 %v2796
    %2917 = vmatprep.subr.mxu0 0.0
    %2918 = vmatpush1.msra.mxu0 %v2795
    %2919 = vmatprep.subr.mxu0 0.0
    %2920 = vmatpush1.msra.mxu0 %v2794
    %2921 = vmatprep.subr.mxu0 0.0
    %2922 = vmatpush1.msra.mxu0 %v2793
    %2923 = vmatprep.subr.mxu0 0.0
    %2924 = vmatpush1.msra.mxu0 %v2792
    %2925 = vmatprep.subr.mxu0 0.0
    %2926 = vmatpush2.msra.mxu0 0.0
    %2927 = vmatprep.subr.mxu0 0.0
    %2928 = vmatpush2.msra.mxu0 0.0
    %2929 = vmatprep.subr.mxu0 0.0
    %2930 = vmatpush2.msra.mxu0 0.0
    %2931 = vmatprep.subr.mxu0 0.0
    %2932 = vmatpush2.msra.mxu0 0.0
    %2933 = vmatprep.subr.mxu0 0.0
    %2934 = vmatpush2.msra.mxu0 0.0
    %2935 = vmatprep.subr.mxu0 0.0
    %2936 = vmatpush2.msra.mxu0 0.0
    %2937 = vmatprep.subr.mxu0 0.0
    %2938 = vmatpush2.msra.mxu0 0.0
    %2939 = vmatprep.subr.mxu0 0.0
    %2940 = vmatpush2.msra.mxu0 0.0
    %2941 = vmatprep.subr.mxu0 0.0
    %2942 = vmatpush2.msra.mxu0 0.0
    %2943 = vmatprep.subr.mxu0 0.0
    %2944 = vmatpush2.msra.mxu0 0.0
    %2945 = vmatprep.subr.mxu0 0.0
    %2946 = vmatpush2.msra.mxu0 0.0
    %2947 = vmatprep.subr.mxu0 0.0
    %2948 = vmatpush2.msra.mxu0 0.0
    %2949 = vmatprep.subr.mxu0 0.0
    %2950 = vmatpush2.msra.mxu0 0.0
    %2951 = vmatprep.subr.mxu0 0.0
    %2952 = vmatpush2.msra.mxu0 0.0
    %2953 = vmatprep.subr.mxu0 0.0
    %2954 = vmatpush2.msra.mxu0 0.0
    %2955 = vmatprep.subr.mxu0 0.0
    %2956 = vmatpush2.msra.mxu0 0.0
    %2957 = vmatprep.mubr.f32.mxu0 0.0
    %2958 = vmatmul.mubr.f32.gmra.mxu0 %v2486
    %v2959 = vpop.f32.mrf.mxu0
    %v2960 = vadd.f32 %v2890, %v2959
    %v2961 = vpop.f32.mrf.mxu0
    %2962 = vdwg.mxu0
    %v2963 = vadd.f32 %v2960, %v790
    %v2964 = vxor.u32 %v2963, 2147483648
    %v2965 = vmul.f32 %v2964, 1.442695
    %v2966 = vpow.pop %v2965
    %v2967 = vadd.f32 %v2966, 1.0
    %v2968 = vrcp.pop %v2967
    %v2969 = vmul.f32 1.0, %v2968
    %v2970 = vtanh.pop %v2963
    %v2971 = vmul.f32 %v2969, %v2261
    %2973 = vrot.lane.b32.xlu0 %v2970, 64
    %v2974 = vpop.permute.xlu0 %2973
    %v2976 = vmul.f32 %v2969, %v2974
    %2978 = vrot.lane.b32.xlu0 %v2976, 32
    %v2979 = vpop.permute.xlu0 %2978
    %v2981 = vadd.f32 %v2971, %v2979
    %v2982 = vtanh.pop %v2981
    %2984 = vrot.lane.b32.xlu0 %v2982, 64
    %v2985 = vpop.permute.xlu0 %2984
    %v2987 = vmul.f32 %v2969, %v2985
    %2989 = vrot.lane.b32.xlu0 %v2987, 32
    %v2990 = vpop.permute.xlu0 %2989
    %v2992 = vsel %vm294, %v2990, %v2789
    %v2993 = vld [vmem:[%s16] sm:$0xff]
    %v2994 = vld [vmem:[%s16 + $0x8] sm:$0xff]
    %v2995 = vld [vmem:[%s16 + $0x10] sm:$0xff]
    %v2996 = vld [vmem:[%s16 + $0x18] sm:$0xff]
    %v2997 = vld [vmem:[%s16 + $0x20] sm:$0xff]
    %v2998 = vld [vmem:[%s16 + $0x28] sm:$0xff]
    %v2999 = vld [vmem:[%s16 + $0x30] sm:$0xff]
    %v3000 = vld [vmem:[%s16 + $0x38] sm:$0xff]
    %v3001 = vld [vmem:[%s16 + $0x40] sm:$0xff]
    %v3002 = vld [vmem:[%s16 + $0x48] sm:$0xff]
    %v3003 = vld [vmem:[%s16 + $0x50] sm:$0xff]
    %v3004 = vld [vmem:[%s16 + $0x58] sm:$0xff]
    %v3005 = vld [vmem:[%s16 + $0x60] sm:$0xff]
    %v3006 = vld [vmem:[%s16 + $0x68] sm:$0xff]
    %v3007 = vld [vmem:[%s16 + $0x70] sm:$0xff]
    %v3008 = vld [vmem:[%s16 + $0x78] sm:$0xff]
    %v3009 = vld [vmem:[%s17] sm:$0xff]
    %v3010 = vld [vmem:[%s17 + $0x8] sm:$0xff]
    %v3011 = vld [vmem:[%s17 + $0x10] sm:$0xff]
    %v3012 = vld [vmem:[%s17 + $0x18] sm:$0xff]
    %v3013 = vld [vmem:[%s17 + $0x20] sm:$0xff]
    %v3014 = vld [vmem:[%s17 + $0x28] sm:$0xff]
    %v3015 = vld [vmem:[%s17 + $0x30] sm:$0xff]
    %v3016 = vld [vmem:[%s17 + $0x38] sm:$0xff]
    %v3017 = vld [vmem:[%s17 + $0x40] sm:$0xff]
    %v3018 = vld [vmem:[%s17 + $0x48] sm:$0xff]
    %v3019 = vld [vmem:[%s17 + $0x50] sm:$0xff]
    %v3020 = vld [vmem:[%s17 + $0x58] sm:$0xff]
    %v3022 = vsel %vm642, %v2992, 0
    %3024 = vmatprep.subr.mxu0 0.0
    %3025 = vmatpush1.msra.mxu0 0.0
    %3026 = vmatprep.subr.mxu0 0.0
    %3027 = vmatpush1.msra.mxu0 0.0
    %3028 = vmatprep.subr.mxu0 0.0
    %3029 = vmatpush1.msra.mxu0 0.0
    %3030 = vmatprep.subr.mxu0 0.0
    %3031 = vmatpush1.msra.mxu0 0.0
    %3032 = vmatprep.subr.mxu0 0.0
    %3033 = vmatpush1.msra.mxu0 %v3020
    %3034 = vmatprep.subr.mxu0 0.0
    %3035 = vmatpush1.msra.mxu0 %v3019
    %3036 = vmatprep.subr.mxu0 0.0
    %3037 = vmatpush1.msra.mxu0 %v3018
    %3038 = vmatprep.subr.mxu0 0.0
    %3039 = vmatpush1.msra.mxu0 %v3017
    %3040 = vmatprep.subr.mxu0 0.0
    %3041 = vmatpush1.msra.mxu0 %v3016
    %3042 = vmatprep.subr.mxu0 0.0
    %3043 = vmatpush1.msra.mxu0 %v3015
    %3044 = vmatprep.subr.mxu0 0.0
    %3045 = vmatpush1.msra.mxu0 %v3014
    %3046 = vmatprep.subr.mxu0 0.0
    %3047 = vmatpush1.msra.mxu0 %v3013
    %3048 = vmatprep.subr.mxu0 0.0
    %3049 = vmatpush1.msra.mxu0 %v3012
    %3050 = vmatprep.subr.mxu0 0.0
    %3051 = vmatpush1.msra.mxu0 %v3011
    %3052 = vmatprep.subr.mxu0 0.0
    %3053 = vmatpush1.msra.mxu0 %v3010
    %3054 = vmatprep.subr.mxu0 0.0
    %3055 = vmatpush1.msra.mxu0 %v3009
    %3056 = vmatprep.subr.mxu0 0.0
    %3057 = vmatpush2.msra.mxu0 0.0
    %3058 = vmatprep.subr.mxu0 0.0
    %3059 = vmatpush2.msra.mxu0 0.0
    %3060 = vmatprep.subr.mxu0 0.0
    %3061 = vmatpush2.msra.mxu0 0.0
    %3062 = vmatprep.subr.mxu0 0.0
    %3063 = vmatpush2.msra.mxu0 0.0
    %3064 = vmatprep.subr.mxu0 0.0
    %3065 = vmatpush2.msra.mxu0 0.0
    %3066 = vmatprep.subr.mxu0 0.0
    %3067 = vmatpush2.msra.mxu0 0.0
    %3068 = vmatprep.subr.mxu0 0.0
    %3069 = vmatpush2.msra.mxu0 0.0
    %3070 = vmatprep.subr.mxu0 0.0
    %3071 = vmatpush2.msra.mxu0 0.0
    %3072 = vmatprep.subr.mxu0 0.0
    %3073 = vmatpush2.msra.mxu0 0.0
    %3074 = vmatprep.subr.mxu0 0.0
    %3075 = vmatpush2.msra.mxu0 0.0
    %3076 = vmatprep.subr.mxu0 0.0
    %3077 = vmatpush2.msra.mxu0 0.0
    %3078 = vmatprep.subr.mxu0 0.0
    %3079 = vmatpush2.msra.mxu0 0.0
    %3080 = vmatprep.subr.mxu0 0.0
    %3081 = vmatpush2.msra.mxu0 0.0
    %3082 = vmatprep.subr.mxu0 0.0
    %3083 = vmatpush2.msra.mxu0 0.0
    %3084 = vmatprep.subr.mxu0 0.0
    %3085 = vmatpush2.msra.mxu0 0.0
    %3086 = vmatprep.subr.mxu0 0.0
    %3087 = vmatpush2.msra.mxu0 0.0
    %3088 = vmatprep.mubr.f32.mxu0 0.0
    %3089 = vmatmul.mubr.f32.gmra.mxu0 %v3022
    %v3090 = vpop.f32.mrf.mxu0
    %v3091 = vadd.f32 0.0, %v3090
    %v3092 = vpop.f32.mrf.mxu0
    %3093 = vdwg.mxu0
    %3094 = vmatprep.subr.mxu0 0.0
    %3095 = vmatpush1.msra.mxu0 %v3008
    %3096 = vmatprep.subr.mxu0 0.0
    %3097 = vmatpush1.msra.mxu0 %v3007
    %3098 = vmatprep.subr.mxu0 0.0
    %3099 = vmatpush1.msra.mxu0 %v3006
    %3100 = vmatprep.subr.mxu0 0.0
    %3101 = vmatpush1.msra.mxu0 %v3005
    %3102 = vmatprep.subr.mxu0 0.0
    %3103 = vmatpush1.msra.mxu0 %v3004
    %3104 = vmatprep.subr.mxu0 0.0
    %3105 = vmatpush1.msra.mxu0 %v3003
    %3106 = vmatprep.subr.mxu0 0.0
    %3107 = vmatpush1.msra.mxu0 %v3002
    %3108 = vmatprep.subr.mxu0 0.0
    %3109 = vmatpush1.msra.mxu0 %v3001
    %3110 = vmatprep.subr.mxu0 0.0
    %3111 = vmatpush1.msra.mxu0 %v3000
    %3112 = vmatprep.subr.mxu0 0.0
    %3113 = vmatpush1.msra.mxu0 %v2999
    %3114 = vmatprep.subr.mxu0 0.0
    %3115 = vmatpush1.msra.mxu0 %v2998
    %3116 = vmatprep.subr.mxu0 0.0
    %3117 = vmatpush1.msra.mxu0 %v2997
    %3118 = vmatprep.subr.mxu0 0.0
    %3119 = vmatpush1.msra.mxu0 %v2996
    %3120 = vmatprep.subr.mxu0 0.0
    %3121 = vmatpush1.msra.mxu0 %v2995
    %3122 = vmatprep.subr.mxu0 0.0
    %3123 = vmatpush1.msra.mxu0 %v2994
    %3124 = vmatprep.subr.mxu0 0.0
    %3125 = vmatpush1.msra.mxu0 %v2993
    %3126 = vmatprep.subr.mxu0 0.0
    %3127 = vmatpush2.msra.mxu0 0.0
    %3128 = vmatprep.subr.mxu0 0.0
    %3129 = vmatpush2.msra.mxu0 0.0
    %3130 = vmatprep.subr.mxu0 0.0
    %3131 = vmatpush2.msra.mxu0 0.0
    %3132 = vmatprep.subr.mxu0 0.0
    %3133 = vmatpush2.msra.mxu0 0.0
    %3134 = vmatprep.subr.mxu0 0.0
    %3135 = vmatpush2.msra.mxu0 0.0
    %3136 = vmatprep.subr.mxu0 0.0
    %3137 = vmatpush2.msra.mxu0 0.0
    %3138 = vmatprep.subr.mxu0 0.0
    %3139 = vmatpush2.msra.mxu0 0.0
    %3140 = vmatprep.subr.mxu0 0.0
    %3141 = vmatpush2.msra.mxu0 0.0
    %3142 = vmatprep.subr.mxu0 0.0
    %3143 = vmatpush2.msra.mxu0 0.0
    %3144 = vmatprep.subr.mxu0 0.0
    %3145 = vmatpush2.msra.mxu0 0.0
    %3146 = vmatprep.subr.mxu0 0.0
    %3147 = vmatpush2.msra.mxu0 0.0
    %3148 = vmatprep.subr.mxu0 0.0
    %3149 = vmatpush2.msra.mxu0 0.0
    %3150 = vmatprep.subr.mxu0 0.0
    %3151 = vmatpush2.msra.mxu0 0.0
    %3152 = vmatprep.subr.mxu0 0.0
    %3153 = vmatpush2.msra.mxu0 0.0
    %3154 = vmatprep.subr.mxu0 0.0
    %3155 = vmatpush2.msra.mxu0 0.0
    %3156 = vmatprep.subr.mxu0 0.0
    %3157 = vmatpush2.msra.mxu0 0.0
    %3158 = vmatprep.mubr.f32.mxu0 0.0
    %3159 = vmatmul.mubr.f32.gmra.mxu0 %v2486
    %v3160 = vpop.f32.mrf.mxu0
    %v3161 = vadd.f32 %v3091, %v3160
    %v3162 = vpop.f32.mrf.mxu0
    %3163 = vdwg.mxu0
    %v3164 = vadd.f32 %v3161, %v1001
    %s3165 = scalar_lea.vmem %s19, 32
    %3166 = vst [vmem:[%s3165] sm:$0xff] %v3164
    %v3167 = vsel %vm1006, %v3164, -1e+30
    %3168 = vmax.xlane.f32.xlu0 %v3167
    %v3169 = vpop.xlane.xlu0 %3168
    %vm3170 = vcmp.eq.f32.partialorder %v3167, %v3169
    %v3171 = vsel %vm3170, %v285, 128
    %v3172 = vand.u32 %v3171, 65535
    %v3173 = vshra.s32 %v3171, 16
    %v3174 = vcvt.s32.f32 %v3172
    %v3175 = vcvt.s32.f32 %v3173
    %3176 = vmin.xlane.f32.xlu0 %v3175
    %v3177 = vpop.xlane.xlu0 %3176
    %vm3178 = vcmp.eq.f32.partialorder %v3175, %v3177
    %v3179 = vsel %vm3178, %v3174, inf
    %3180 = vmin.xlane.f32.xlu0 %v3179
    %v3181 = vpop.xlane.xlu0 %3180
    %v3182 = vcvt.f32.s32 %v3181
    %v3183 = vcvt.f32.s32 %v3177
    %v3184 = vshll.u32 %v3183, 16
    %v3185 = vadd.s32 %v3184, %v3182
    %vm3186 = vcmp.eq.s32.totalorder %v285, %v3185
    %v3187 = vsel %vm3186, 1, 0
    %v3188 = vcvt.s32.f32 %v3187
    %s3189 = sld [smem:[#allocation3 + $0x4]]
    %p3190 = scmp.ne.s32.totalorder %s3189, 0
    %s3191 = scalar_select %p3190, 1, 0
    %s3192 = scvt.s32.f32 %s3191
    %s3193 = scalar_lea.vmem %s1, 32
    %v3194 = vld [vmem:[%s3193] sm:$0xff]
    %3195 = vset.pattern.permute.xlu0 0
    %3196 = vperm.xlu0 %3195, %v3194
    %v3197 = vpop.permute.xlu0 %3196
    %vm3198 = vcmp.eq.s32.totalorder %v285, %v3197
    %v3199 = vsel %vm3198, 1, 0
    %v3200 = vcvt.s32.f32 %v3199
    %v3201 = vstv %s3192
    %v3202 = vmul.f32 %v3201, %v3200
    %s3203 = ssub.f32 1.0, %s3192
    %v3204 = vstv %s3203
    %v3205 = vmul.f32 %v3204, %v3188
    %v3206 = vadd.f32 %v3202, %v3205
    %v3207 = vsel %vm294, %v2990, 0
    %3209 = vmatprep.subr.mxu0 0.0
    %3210 = vmatpush1.msra.mxu0 0.0
    %3211 = vmatprep.subr.mxu0 0.0
    %3212 = vmatpush1.msra.mxu0 0.0
    %3213 = vmatprep.subr.mxu0 0.0
    %3214 = vmatpush1.msra.mxu0 0.0
    %3215 = vmatprep.subr.mxu0 0.0
    %3216 = vmatpush1.msra.mxu0 0.0
    %3217 = vmatprep.subr.mxu0 0.0
    %3218 = vmatpush1.msra.mxu0 0.0
    %3219 = vmatprep.subr.mxu0 0.0
    %3220 = vmatpush1.msra.mxu0 0.0
    %3221 = vmatprep.subr.mxu0 0.0
    %3222 = vmatpush1.msra.mxu0 0.0
    %3223 = vmatprep.subr.mxu0 0.0
    %3224 = vmatpush1.msra.mxu0 0.0
    %3225 = vmatprep.subr.mxu0 0.0
    %3226 = vmatpush1.msra.mxu0 0.0
    %3227 = vmatprep.subr.mxu0 0.0
    %3228 = vmatpush1.msra.mxu0 0.0
    %3229 = vmatprep.subr.mxu0 0.0
    %3230 = vmatpush1.msra.mxu0 0.0
    %3231 = vmatprep.subr.mxu0 0.0
    %3232 = vmatpush1.msra.mxu0 0.0
    %3233 = vmatprep.subr.mxu0 0.0
    %3234 = vmatpush1.msra.mxu0 %v279
    %3235 = vmatprep.subr.mxu0 0.0
    %3236 = vmatpush1.msra.mxu0 %v278
    %3237 = vmatprep.subr.mxu0 0.0
    %3238 = vmatpush1.msra.mxu0 %v277
    %3239 = vmatprep.subr.mxu0 0.0
    %3240 = vmatpush1.msra.mxu0 %v276
    %3241 = vmatprep.subr.mxu0 0.0
    %3242 = vmatpush2.msra.mxu0 0.0
    %3243 = vmatprep.subr.mxu0 0.0
    %3244 = vmatpush2.msra.mxu0 0.0
    %3245 = vmatprep.subr.mxu0 0.0
    %3246 = vmatpush2.msra.mxu0 0.0
    %3247 = vmatprep.subr.mxu0 0.0
    %3248 = vmatpush2.msra.mxu0 0.0
    %3249 = vmatprep.subr.mxu0 0.0
    %3250 = vmatpush2.msra.mxu0 0.0
    %3251 = vmatprep.subr.mxu0 0.0
    %3252 = vmatpush2.msra.mxu0 0.0
    %3253 = vmatprep.subr.mxu0 0.0
    %3254 = vmatpush2.msra.mxu0 0.0
    %3255 = vmatprep.subr.mxu0 0.0
    %3256 = vmatpush2.msra.mxu0 0.0
    %3257 = vmatprep.subr.mxu0 0.0
    %3258 = vmatpush2.msra.mxu0 0.0
    %3259 = vmatprep.subr.mxu0 0.0
    %3260 = vmatpush2.msra.mxu0 0.0
    %3261 = vmatprep.subr.mxu0 0.0
    %3262 = vmatpush2.msra.mxu0 0.0
    %3263 = vmatprep.subr.mxu0 0.0
    %3264 = vmatpush2.msra.mxu0 0.0
    %3265 = vmatprep.subr.mxu0 0.0
    %3266 = vmatpush2.msra.mxu0 0.0
    %3267 = vmatprep.subr.mxu0 0.0
    %3268 = vmatpush2.msra.mxu0 0.0
    %3269 = vmatprep.subr.mxu0 0.0
    %3270 = vmatpush2.msra.mxu0 0.0
    %3271 = vmatprep.subr.mxu0 0.0
    %3272 = vmatpush2.msra.mxu0 0.0
    %3273 = vmatprep.mubr.f32.mxu0 0.0
    %3274 = vmatmul.mubr.f32.gmra.mxu0 %v3207
    %v3275 = vpop.f32.mrf.mxu0
    %v3276 = vadd.f32 0.0, %v3275
    %v3277 = vpop.f32.mrf.mxu0
    %3278 = vdwg.mxu0
    %v3279 = vadd.f32 %v266, %v3276
    %v3280 = vadd.f32 %v267, %v3276
    %v3281 = vadd.f32 %v268, %v3276
    %v3282 = vadd.f32 %v269, %v3276
    %v3283 = vadd.f32 %v270, %v3276
    %v3284 = vadd.f32 %v271, %v3276
    %v3285 = vadd.f32 %v272, %v3276
    %v3286 = vadd.f32 %v273, %v3276
    %v3287 = vadd.f32 %v274, %v3276
    %v3288 = vadd.f32 %v275, %v3276
    %v3289 = vtanh.pop %v3279
    %v3290 = vtanh.pop %v3280
    %v3291 = vtanh.pop %v3281
    %v3292 = vtanh.pop %v3282
    %v3293 = vtanh.pop %v3283
    %v3294 = vtanh.pop %v3284
    %v3295 = vtanh.pop %v3285
    %v3296 = vtanh.pop %v3286
    %v3297 = vtanh.pop %v3287
    %v3298 = vtanh.pop %v3288
    %v3299 = vmul.f32 %v3289, %v392
    %v3300 = vmul.f32 %v3290, %v392
    %v3301 = vmul.f32 %v3291, %v392
    %v3302 = vmul.f32 %v3292, %v392
    %v3303 = vmul.f32 %v3293, %v392
    %v3304 = vmul.f32 %v3294, %v392
    %v3305 = vmul.f32 %v3295, %v392
    %v3306 = vmul.f32 %v3296, %v392
    %v3307 = vmul.f32 %v3297, %v392
    %v3308 = vmul.f32 %v3298, %v392
    %v3309 = vsel %vm294, %v3299, 0.0
    %3310 = vadd.xlane.f32.xlu0 %v3309
    %v3311 = vpop.xlane.xlu0 %3310
    %v3312 = vsel %vm294, %v3300, 0.0
    %3313 = vadd.xlane.f32.xlu0 %v3312
    %v3314 = vpop.xlane.xlu0 %3313
    %v3315 = vsel %vm294, %v3301, 0.0
    %3316 = vadd.xlane.f32.xlu0 %v3315
    %v3317 = vpop.xlane.xlu0 %3316
    %v3318 = vsel %vm294, %v3302, 0.0
    %3319 = vadd.xlane.f32.xlu0 %v3318
    %v3320 = vpop.xlane.xlu0 %3319
    %v3321 = vsel %vm294, %v3303, 0.0
    %3322 = vadd.xlane.f32.xlu0 %v3321
    %v3323 = vpop.xlane.xlu0 %3322
    %v3324 = vsel %vm294, %v3304, 0.0
    %3325 = vadd.xlane.f32.xlu0 %v3324
    %v3326 = vpop.xlane.xlu0 %3325
    %v3327 = vsel %vm294, %v3305, 0.0
    %3328 = vadd.xlane.f32.xlu0 %v3327
    %v3329 = vpop.xlane.xlu0 %3328
    %v3330 = vsel %vm294, %v3306, 0.0
    %3331 = vadd.xlane.f32.xlu0 %v3330
    %v3332 = vpop.xlane.xlu0 %3331
    %v3333 = vsel %vm294, %v3307, 0.0
    %3334 = vadd.xlane.f32.xlu0 %v3333
    %v3335 = vpop.xlane.xlu0 %3334
    %v3336 = vsel %vm294, %v3308, 0.0
    %3337 = vadd.xlane.f32.xlu0 %v3336
    %v3338 = vpop.xlane.xlu0 %3337
    %v3339 = vadd.f32 %v3311, %v438
    %v3340 = vadd.f32 %v3314, %v438
    %v3341 = vadd.f32 %v3317, %v438
    %v3342 = vadd.f32 %v3320, %v438
    %v3343 = vadd.f32 %v3323, %v438
    %v3344 = vadd.f32 %v3326, %v438
    %v3345 = vadd.f32 %v3329, %v438
    %v3346 = vadd.f32 %v3332, %v438
    %v3347 = vadd.f32 %v3335, %v438
    %v3348 = vadd.f32 %v3338, %v438
    %v3349 = vsel %vm450, %v3339, -inf
    %v3350 = vsel %vm450, %v3340, -inf
    %v3351 = vsel %vm450, %v3341, -inf
    %v3352 = vsel %vm450, %v3342, -inf
    %v3353 = vsel %vm450, %v3343, -inf
    %v3354 = vmax.f32 %v3349, %v3353
    %v3355 = vsel %vm450, %v3344, -inf
    %v3356 = vmax.f32 %v3350, %v3355
    %v3357 = vsel %vm450, %v3345, -inf
    %v3358 = vmax.f32 %v3351, %v3357
    %v3359 = vsel %vm450, %v3346, -inf
    %v3360 = vmax.f32 %v3352, %v3359
    %v3361 = vsel %vm450, %v3347, -inf
    %v3362 = vmax.f32 %v3354, %v3361
    %v3363 = vsel %vm450, %v3348, -inf
    %v3364 = vmax.f32 %v3356, %v3363
    %v3365 = vmax.f32 %v3362, %v3364
    %v3366 = vmax.f32 %v3358, %v3360
    %v3367 = vmax.f32 %v3365, %v3366
    %v3368 = vsub.f32 %v3339, %v3367
    %v3369 = vsub.f32 %v3340, %v3367
    %v3370 = vsub.f32 %v3341, %v3367
    %v3371 = vsub.f32 %v3342, %v3367
    %v3372 = vsub.f32 %v3343, %v3367
    %v3373 = vsub.f32 %v3344, %v3367
    %v3374 = vsub.f32 %v3345, %v3367
    %v3375 = vsub.f32 %v3346, %v3367
    %v3376 = vsub.f32 %v3347, %v3367
    %v3377 = vsub.f32 %v3348, %v3367
    %v3378 = vmul.f32 %v3368, 1.442695
    %v3379 = vpow.pop %v3378
    %v3380 = vmul.f32 %v3369, 1.442695
    %v3381 = vpow.pop %v3380
    %v3382 = vmul.f32 %v3370, 1.442695
    %v3383 = vpow.pop %v3382
    %v3384 = vmul.f32 %v3371, 1.442695
    %v3385 = vpow.pop %v3384
    %v3386 = vmul.f32 %v3372, 1.442695
    %v3387 = vpow.pop %v3386
    %v3388 = vmul.f32 %v3373, 1.442695
    %v3389 = vpow.pop %v3388
    %v3390 = vmul.f32 %v3374, 1.442695
    %v3391 = vpow.pop %v3390
    %v3392 = vmul.f32 %v3375, 1.442695
    %v3393 = vpow.pop %v3392
    %v3394 = vmul.f32 %v3376, 1.442695
    %v3395 = vpow.pop %v3394
    %v3396 = vmul.f32 %v3377, 1.442695
    %v3397 = vpow.pop %v3396
    %v3398 = vsel %vm450, %v3379, 0.0
    %v3399 = vsel %vm450, %v3381, 0.0
    %v3400 = vadd.f32 %v3398, %v3399
    %v3401 = vsel %vm450, %v3383, 0.0
    %v3402 = vadd.f32 %v3400, %v3401
    %v3403 = vsel %vm450, %v3385, 0.0
    %v3404 = vadd.f32 %v3402, %v3403
    %v3405 = vsel %vm450, %v3387, 0.0
    %v3406 = vadd.f32 %v3404, %v3405
    %v3407 = vsel %vm450, %v3389, 0.0
    %v3408 = vadd.f32 %v3406, %v3407
    %v3409 = vsel %vm450, %v3391, 0.0
    %v3410 = vadd.f32 %v3408, %v3409
    %v3411 = vsel %vm450, %v3393, 0.0
    %v3412 = vadd.f32 %v3410, %v3411
    %v3413 = vsel %vm450, %v3395, 0.0
    %v3414 = vadd.f32 %v3412, %v3413
    %v3415 = vsel %vm450, %v3397, 0.0
    %v3416 = vadd.f32 %v3414, %v3415
    %v3417 = vrcp.pop %v3416
    %v3418 = vmul.f32 %v3379, %v3417
    %v3419 = vmul.f32 %v3381, %v3417
    %v3420 = vmul.f32 %v3383, %v3417
    %v3421 = vmul.f32 %v3385, %v3417
    %v3422 = vmul.f32 %v3387, %v3417
    %v3423 = vmul.f32 %v3389, %v3417
    %v3424 = vmul.f32 %v3391, %v3417
    %v3425 = vmul.f32 %v3393, %v3417
    %v3426 = vmul.f32 %v3395, %v3417
    %v3427 = vmul.f32 %v3397, %v3417
    %3429 = vset.pattern.permute.xlu0 0
    %3430 = vperm.xlu0 %3429, %v3418
    %v3431 = vpop.permute.xlu0 %3430
    %3434 = vset.pattern.permute.xlu0 0
    %3435 = vperm.xlu0 %3434, %v3419
    %v3436 = vpop.permute.xlu0 %3435
    %3439 = vset.pattern.permute.xlu0 0
    %3440 = vperm.xlu0 %3439, %v3420
    %v3441 = vpop.permute.xlu0 %3440
    %3444 = vset.pattern.permute.xlu0 0
    %3445 = vperm.xlu0 %3444, %v3421
    %v3446 = vpop.permute.xlu0 %3445
    %3449 = vset.pattern.permute.xlu0 0
    %3450 = vperm.xlu0 %3449, %v3422
    %v3451 = vpop.permute.xlu0 %3450
    %3454 = vset.pattern.permute.xlu0 0
    %3455 = vperm.xlu0 %3454, %v3423
    %v3456 = vpop.permute.xlu0 %3455
    %3459 = vset.pattern.permute.xlu0 0
    %3460 = vperm.xlu0 %3459, %v3424
    %v3461 = vpop.permute.xlu0 %3460
    %3464 = vset.pattern.permute.xlu0 0
    %3465 = vperm.xlu0 %3464, %v3425
    %v3466 = vpop.permute.xlu0 %3465
    %3469 = vset.pattern.permute.xlu0 0
    %3470 = vperm.xlu0 %3469, %v3426
    %v3471 = vpop.permute.xlu0 %3470
    %3474 = vset.pattern.permute.xlu0 0
    %3475 = vperm.xlu0 %3474, %v3427
    %v3476 = vpop.permute.xlu0 %3475
    %v3478 = vmul.f32 %v3431, %v256
    %v3479 = vmul.f32 %v3436, %v257
    %v3480 = vmul.f32 %v3441, %v258
    %v3481 = vmul.f32 %v3446, %v259
    %v3482 = vmul.f32 %v3451, %v260
    %v3483 = vmul.f32 %v3456, %v261
    %v3484 = vmul.f32 %v3461, %v262
    %v3485 = vmul.f32 %v3466, %v263
    %v3486 = vmul.f32 %v3471, %v264
    %v3487 = vmul.f32 %v3476, %v265
    %v3488 = vsel %vm93, %v3478, 0.0
    %v3489 = vsel %vm93, %v3479, 0.0
    %v3490 = vadd.f32 %v3488, %v3489
    %v3491 = vsel %vm93, %v3480, 0.0
    %v3492 = vadd.f32 %v3490, %v3491
    %v3493 = vsel %vm93, %v3481, 0.0
    %v3494 = vadd.f32 %v3492, %v3493
    %v3495 = vsel %vm93, %v3482, 0.0
    %v3496 = vadd.f32 %v3494, %v3495
    %v3497 = vsel %vm93, %v3483, 0.0
    %v3498 = vadd.f32 %v3496, %v3497
    %v3499 = vsel %vm93, %v3484, 0.0
    %v3500 = vadd.f32 %v3498, %v3499
    %v3501 = vsel %vm93, %v3485, 0.0
    %v3502 = vadd.f32 %v3500, %v3501
    %v3503 = vsel %vm93, %v3486, 0.0
    %v3504 = vadd.f32 %v3502, %v3503
    %v3505 = vsel %vm93, %v3487, 0.0
    %v3506 = vadd.f32 %v3504, %v3505
    %3508 = vrot.lane.b32.xlu0 %v3506, 32
    %v3509 = vpop.permute.xlu0 %3508
    %v3511 = vsel %vm294, %v2990, %v3509
    %v3512 = vld [vmem:[%s13] sm:$0xff]
    %v3513 = vld [vmem:[%s13 + $0x8] sm:$0xff]
    %v3514 = vld [vmem:[%s13 + $0x10] sm:$0xff]
    %v3515 = vld [vmem:[%s13 + $0x18] sm:$0xff]
    %v3516 = vld [vmem:[%s13 + $0x20] sm:$0xff]
    %v3517 = vld [vmem:[%s13 + $0x28] sm:$0xff]
    %v3518 = vld [vmem:[%s13 + $0x30] sm:$0xff]
    %v3519 = vld [vmem:[%s13 + $0x38] sm:$0xff]
    %v3520 = vld [vmem:[%s13 + $0x40] sm:$0xff]
    %v3521 = vld [vmem:[%s13 + $0x48] sm:$0xff]
    %v3522 = vld [vmem:[%s13 + $0x50] sm:$0xff]
    %v3523 = vld [vmem:[%s13 + $0x58] sm:$0xff]
    %v3524 = vld [vmem:[%s13 + $0x60] sm:$0xff]
    %v3525 = vld [vmem:[%s13 + $0x68] sm:$0xff]
    %v3526 = vld [vmem:[%s13 + $0x70] sm:$0xff]
    %v3527 = vld [vmem:[%s13 + $0x78] sm:$0xff]
    %v3528 = vld [vmem:[%s14] sm:$0xff]
    %v3529 = vld [vmem:[%s14 + $0x8] sm:$0xff]
    %v3530 = vld [vmem:[%s14 + $0x10] sm:$0xff]
    %v3531 = vld [vmem:[%s14 + $0x18] sm:$0xff]
    %v3532 = vld [vmem:[%s14 + $0x20] sm:$0xff]
    %v3533 = vld [vmem:[%s14 + $0x28] sm:$0xff]
    %v3534 = vld [vmem:[%s14 + $0x30] sm:$0xff]
    %v3535 = vld [vmem:[%s14 + $0x38] sm:$0xff]
    %v3536 = vld [vmem:[%s14 + $0x40] sm:$0xff]
    %v3537 = vld [vmem:[%s14 + $0x48] sm:$0xff]
    %v3538 = vld [vmem:[%s14 + $0x50] sm:$0xff]
    %v3539 = vld [vmem:[%s14 + $0x58] sm:$0xff]
    %v3541 = vsel %vm642, %v3511, 0
    %3543 = vmatprep.subr.mxu0 0.0
    %3544 = vmatpush1.msra.mxu0 0.0
    %3545 = vmatprep.subr.mxu0 0.0
    %3546 = vmatpush1.msra.mxu0 0.0
    %3547 = vmatprep.subr.mxu0 0.0
    %3548 = vmatpush1.msra.mxu0 0.0
    %3549 = vmatprep.subr.mxu0 0.0
    %3550 = vmatpush1.msra.mxu0 0.0
    %3551 = vmatprep.subr.mxu0 0.0
    %3552 = vmatpush1.msra.mxu0 %v3539
    %3553 = vmatprep.subr.mxu0 0.0
    %3554 = vmatpush1.msra.mxu0 %v3538
    %3555 = vmatprep.subr.mxu0 0.0
    %3556 = vmatpush1.msra.mxu0 %v3537
    %3557 = vmatprep.subr.mxu0 0.0
    %3558 = vmatpush1.msra.mxu0 %v3536
    %3559 = vmatprep.subr.mxu0 0.0
    %3560 = vmatpush1.msra.mxu0 %v3535
    %3561 = vmatprep.subr.mxu0 0.0
    %3562 = vmatpush1.msra.mxu0 %v3534
    %3563 = vmatprep.subr.mxu0 0.0
    %3564 = vmatpush1.msra.mxu0 %v3533
    %3565 = vmatprep.subr.mxu0 0.0
    %3566 = vmatpush1.msra.mxu0 %v3532
    %3567 = vmatprep.subr.mxu0 0.0
    %3568 = vmatpush1.msra.mxu0 %v3531
    %3569 = vmatprep.subr.mxu0 0.0
    %3570 = vmatpush1.msra.mxu0 %v3530
    %3571 = vmatprep.subr.mxu0 0.0
    %3572 = vmatpush1.msra.mxu0 %v3529
    %3573 = vmatprep.subr.mxu0 0.0
    %3574 = vmatpush1.msra.mxu0 %v3528
    %3575 = vmatprep.subr.mxu0 0.0
    %3576 = vmatpush2.msra.mxu0 0.0
    %3577 = vmatprep.subr.mxu0 0.0
    %3578 = vmatpush2.msra.mxu0 0.0
    %3579 = vmatprep.subr.mxu0 0.0
    %3580 = vmatpush2.msra.mxu0 0.0
    %3581 = vmatprep.subr.mxu0 0.0
    %3582 = vmatpush2.msra.mxu0 0.0
    %3583 = vmatprep.subr.mxu0 0.0
    %3584 = vmatpush2.msra.mxu0 0.0
    %3585 = vmatprep.subr.mxu0 0.0
    %3586 = vmatpush2.msra.mxu0 0.0
    %3587 = vmatprep.subr.mxu0 0.0
    %3588 = vmatpush2.msra.mxu0 0.0
    %3589 = vmatprep.subr.mxu0 0.0
    %3590 = vmatpush2.msra.mxu0 0.0
    %3591 = vmatprep.subr.mxu0 0.0
    %3592 = vmatpush2.msra.mxu0 0.0
    %3593 = vmatprep.subr.mxu0 0.0
    %3594 = vmatpush2.msra.mxu0 0.0
    %3595 = vmatprep.subr.mxu0 0.0
    %3596 = vmatpush2.msra.mxu0 0.0
    %3597 = vmatprep.subr.mxu0 0.0
    %3598 = vmatpush2.msra.mxu0 0.0
    %3599 = vmatprep.subr.mxu0 0.0
    %3600 = vmatpush2.msra.mxu0 0.0
    %3601 = vmatprep.subr.mxu0 0.0
    %3602 = vmatpush2.msra.mxu0 0.0
    %3603 = vmatprep.subr.mxu0 0.0
    %3604 = vmatpush2.msra.mxu0 0.0
    %3605 = vmatprep.subr.mxu0 0.0
    %3606 = vmatpush2.msra.mxu0 0.0
    %3607 = vmatprep.mubr.f32.mxu0 0.0
    %3608 = vmatmul.mubr.f32.gmra.mxu0 %v3541
    %v3609 = vpop.f32.mrf.mxu0
    %v3610 = vadd.f32 0.0, %v3609
    %v3611 = vpop.f32.mrf.mxu0
    %3612 = vdwg.mxu0
    %3613 = vmatprep.subr.mxu0 0.0
    %3614 = vmatpush1.msra.mxu0 %v3527
    %3615 = vmatprep.subr.mxu0 0.0
    %3616 = vmatpush1.msra.mxu0 %v3526
    %3617 = vmatprep.subr.mxu0 0.0
    %3618 = vmatpush1.msra.mxu0 %v3525
    %3619 = vmatprep.subr.mxu0 0.0
    %3620 = vmatpush1.msra.mxu0 %v3524
    %3621 = vmatprep.subr.mxu0 0.0
    %3622 = vmatpush1.msra.mxu0 %v3523
    %3623 = vmatprep.subr.mxu0 0.0
    %3624 = vmatpush1.msra.mxu0 %v3522
    %3625 = vmatprep.subr.mxu0 0.0
    %3626 = vmatpush1.msra.mxu0 %v3521
    %3627 = vmatprep.subr.mxu0 0.0
    %3628 = vmatpush1.msra.mxu0 %v3520
    %3629 = vmatprep.subr.mxu0 0.0
    %3630 = vmatpush1.msra.mxu0 %v3519
    %3631 = vmatprep.subr.mxu0 0.0
    %3632 = vmatpush1.msra.mxu0 %v3518
    %3633 = vmatprep.subr.mxu0 0.0
    %3634 = vmatpush1.msra.mxu0 %v3517
    %3635 = vmatprep.subr.mxu0 0.0
    %3636 = vmatpush1.msra.mxu0 %v3516
    %3637 = vmatprep.subr.mxu0 0.0
    %3638 = vmatpush1.msra.mxu0 %v3515
    %3639 = vmatprep.subr.mxu0 0.0
    %3640 = vmatpush1.msra.mxu0 %v3514
    %3641 = vmatprep.subr.mxu0 0.0
    %3642 = vmatpush1.msra.mxu0 %v3513
    %3643 = vmatprep.subr.mxu0 0.0
    %3644 = vmatpush1.msra.mxu0 %v3512
    %3645 = vmatprep.subr.mxu0 0.0
    %3646 = vmatpush2.msra.mxu0 0.0
    %3647 = vmatprep.subr.mxu0 0.0
    %3648 = vmatpush2.msra.mxu0 0.0
    %3649 = vmatprep.subr.mxu0 0.0
    %3650 = vmatpush2.msra.mxu0 0.0
    %3651 = vmatprep.subr.mxu0 0.0
    %3652 = vmatpush2.msra.mxu0 0.0
    %3653 = vmatprep.subr.mxu0 0.0
    %3654 = vmatpush2.msra.mxu0 0.0
    %3655 = vmatprep.subr.mxu0 0.0
    %3656 = vmatpush2.msra.mxu0 0.0
    %3657 = vmatprep.subr.mxu0 0.0
    %3658 = vmatpush2.msra.mxu0 0.0
    %3659 = vmatprep.subr.mxu0 0.0
    %3660 = vmatpush2.msra.mxu0 0.0
    %3661 = vmatprep.subr.mxu0 0.0
    %3662 = vmatpush2.msra.mxu0 0.0
    %3663 = vmatprep.subr.mxu0 0.0
    %3664 = vmatpush2.msra.mxu0 0.0
    %3665 = vmatprep.subr.mxu0 0.0
    %3666 = vmatpush2.msra.mxu0 0.0
    %3667 = vmatprep.subr.mxu0 0.0
    %3668 = vmatpush2.msra.mxu0 0.0
    %3669 = vmatprep.subr.mxu0 0.0
    %3670 = vmatpush2.msra.mxu0 0.0
    %3671 = vmatprep.subr.mxu0 0.0
    %3672 = vmatpush2.msra.mxu0 0.0
    %3673 = vmatprep.subr.mxu0 0.0
    %3674 = vmatpush2.msra.mxu0 0.0
    %3675 = vmatprep.subr.mxu0 0.0
    %3676 = vmatpush2.msra.mxu0 0.0
    %3677 = vmatprep.mubr.f32.mxu0 0.0
    %3678 = vmatmul.mubr.f32.gmra.mxu0 %v3206
    %v3679 = vpop.f32.mrf.mxu0
    %v3680 = vadd.f32 %v3610, %v3679
    %v3681 = vpop.f32.mrf.mxu0
    %3682 = vdwg.mxu0
    %v3683 = vadd.f32 %v3680, %v790
    %v3684 = vxor.u32 %v3683, 2147483648
    %v3685 = vmul.f32 %v3684, 1.442695
    %v3686 = vpow.pop %v3685
    %v3687 = vadd.f32 %v3686, 1.0
    %v3688 = vrcp.pop %v3687
    %v3689 = vmul.f32 1.0, %v3688
    %v3690 = vtanh.pop %v3683
    %v3691 = vmul.f32 %v3689, %v2981
    %3693 = vrot.lane.b32.xlu0 %v3690, 64
    %v3694 = vpop.permute.xlu0 %3693
    %v3696 = vmul.f32 %v3689, %v3694
    %3698 = vrot.lane.b32.xlu0 %v3696, 32
    %v3699 = vpop.permute.xlu0 %3698
    %v3701 = vadd.f32 %v3691, %v3699
    %v3702 = vtanh.pop %v3701
    %3704 = vrot.lane.b32.xlu0 %v3702, 64
    %v3705 = vpop.permute.xlu0 %3704
    %v3707 = vmul.f32 %v3689, %v3705
    %3709 = vrot.lane.b32.xlu0 %v3707, 32
    %v3710 = vpop.permute.xlu0 %3709
    %v3712 = vsel %vm294, %v3710, %v3509
    %v3713 = vld [vmem:[%s16] sm:$0xff]
    %v3714 = vld [vmem:[%s16 + $0x8] sm:$0xff]
    %v3715 = vld [vmem:[%s16 + $0x10] sm:$0xff]
    %v3716 = vld [vmem:[%s16 + $0x18] sm:$0xff]
    %v3717 = vld [vmem:[%s16 + $0x20] sm:$0xff]
    %v3718 = vld [vmem:[%s16 + $0x28] sm:$0xff]
    %v3719 = vld [vmem:[%s16 + $0x30] sm:$0xff]
    %v3720 = vld [vmem:[%s16 + $0x38] sm:$0xff]
    %v3721 = vld [vmem:[%s16 + $0x40] sm:$0xff]
    %v3722 = vld [vmem:[%s16 + $0x48] sm:$0xff]
    %v3723 = vld [vmem:[%s16 + $0x50] sm:$0xff]
    %v3724 = vld [vmem:[%s16 + $0x58] sm:$0xff]
    %v3725 = vld [vmem:[%s16 + $0x60] sm:$0xff]
    %v3726 = vld [vmem:[%s16 + $0x68] sm:$0xff]
    %v3727 = vld [vmem:[%s16 + $0x70] sm:$0xff]
    %v3728 = vld [vmem:[%s16 + $0x78] sm:$0xff]
    %v3729 = vld [vmem:[%s17] sm:$0xff]
    %v3730 = vld [vmem:[%s17 + $0x8] sm:$0xff]
    %v3731 = vld [vmem:[%s17 + $0x10] sm:$0xff]
    %v3732 = vld [vmem:[%s17 + $0x18] sm:$0xff]
    %v3733 = vld [vmem:[%s17 + $0x20] sm:$0xff]
    %v3734 = vld [vmem:[%s17 + $0x28] sm:$0xff]
    %v3735 = vld [vmem:[%s17 + $0x30] sm:$0xff]
    %v3736 = vld [vmem:[%s17 + $0x38] sm:$0xff]
    %v3737 = vld [vmem:[%s17 + $0x40] sm:$0xff]
    %v3738 = vld [vmem:[%s17 + $0x48] sm:$0xff]
    %v3739 = vld [vmem:[%s17 + $0x50] sm:$0xff]
    %v3740 = vld [vmem:[%s17 + $0x58] sm:$0xff]
    %v3742 = vsel %vm642, %v3712, 0
    %3744 = vmatprep.subr.mxu0 0.0
    %3745 = vmatpush1.msra.mxu0 0.0
    %3746 = vmatprep.subr.mxu0 0.0
    %3747 = vmatpush1.msra.mxu0 0.0
    %3748 = vmatprep.subr.mxu0 0.0
    %3749 = vmatpush1.msra.mxu0 0.0
    %3750 = vmatprep.subr.mxu0 0.0
    %3751 = vmatpush1.msra.mxu0 0.0
    %3752 = vmatprep.subr.mxu0 0.0
    %3753 = vmatpush1.msra.mxu0 %v3740
    %3754 = vmatprep.subr.mxu0 0.0
    %3755 = vmatpush1.msra.mxu0 %v3739
    %3756 = vmatprep.subr.mxu0 0.0
    %3757 = vmatpush1.msra.mxu0 %v3738
    %3758 = vmatprep.subr.mxu0 0.0
    %3759 = vmatpush1.msra.mxu0 %v3737
    %3760 = vmatprep.subr.mxu0 0.0
    %3761 = vmatpush1.msra.mxu0 %v3736
    %3762 = vmatprep.subr.mxu0 0.0
    %3763 = vmatpush1.msra.mxu0 %v3735
    %3764 = vmatprep.subr.mxu0 0.0
    %3765 = vmatpush1.msra.mxu0 %v3734
    %3766 = vmatprep.subr.mxu0 0.0
    %3767 = vmatpush1.msra.mxu0 %v3733
    %3768 = vmatprep.subr.mxu0 0.0
    %3769 = vmatpush1.msra.mxu0 %v3732
    %3770 = vmatprep.subr.mxu0 0.0
    %3771 = vmatpush1.msra.mxu0 %v3731
    %3772 = vmatprep.subr.mxu0 0.0
    %3773 = vmatpush1.msra.mxu0 %v3730
    %3774 = vmatprep.subr.mxu0 0.0
    %3775 = vmatpush1.msra.mxu0 %v3729
    %3776 = vmatprep.subr.mxu0 0.0
    %3777 = vmatpush2.msra.mxu0 0.0
    %3778 = vmatprep.subr.mxu0 0.0
    %3779 = vmatpush2.msra.mxu0 0.0
    %3780 = vmatprep.subr.mxu0 0.0
    %3781 = vmatpush2.msra.mxu0 0.0
    %3782 = vmatprep.subr.mxu0 0.0
    %3783 = vmatpush2.msra.mxu0 0.0
    %3784 = vmatprep.subr.mxu0 0.0
    %3785 = vmatpush2.msra.mxu0 0.0
    %3786 = vmatprep.subr.mxu0 0.0
    %3787 = vmatpush2.msra.mxu0 0.0
    %3788 = vmatprep.subr.mxu0 0.0
    %3789 = vmatpush2.msra.mxu0 0.0
    %3790 = vmatprep.subr.mxu0 0.0
    %3791 = vmatpush2.msra.mxu0 0.0
    %3792 = vmatprep.subr.mxu0 0.0
    %3793 = vmatpush2.msra.mxu0 0.0
    %3794 = vmatprep.subr.mxu0 0.0
    %3795 = vmatpush2.msra.mxu0 0.0
    %3796 = vmatprep.subr.mxu0 0.0
    %3797 = vmatpush2.msra.mxu0 0.0
    %3798 = vmatprep.subr.mxu0 0.0
    %3799 = vmatpush2.msra.mxu0 0.0
    %3800 = vmatprep.subr.mxu0 0.0
    %3801 = vmatpush2.msra.mxu0 0.0
    %3802 = vmatprep.subr.mxu0 0.0
    %3803 = vmatpush2.msra.mxu0 0.0
    %3804 = vmatprep.subr.mxu0 0.0
    %3805 = vmatpush2.msra.mxu0 0.0
    %3806 = vmatprep.subr.mxu0 0.0
    %3807 = vmatpush2.msra.mxu0 0.0
    %3808 = vmatprep.mubr.f32.mxu0 0.0
    %3809 = vmatmul.mubr.f32.gmra.mxu0 %v3742
    %v3810 = vpop.f32.mrf.mxu0
    %v3811 = vadd.f32 0.0, %v3810
    %v3812 = vpop.f32.mrf.mxu0
    %3813 = vdwg.mxu0
    %3814 = vmatprep.subr.mxu0 0.0
    %3815 = vmatpush1.msra.mxu0 %v3728
    %3816 = vmatprep.subr.mxu0 0.0
    %3817 = vmatpush1.msra.mxu0 %v3727
    %3818 = vmatprep.subr.mxu0 0.0
    %3819 = vmatpush1.msra.mxu0 %v3726
    %3820 = vmatprep.subr.mxu0 0.0
    %3821 = vmatpush1.msra.mxu0 %v3725
    %3822 = vmatprep.subr.mxu0 0.0
    %3823 = vmatpush1.msra.mxu0 %v3724
    %3824 = vmatprep.subr.mxu0 0.0
    %3825 = vmatpush1.msra.mxu0 %v3723
    %3826 = vmatprep.subr.mxu0 0.0
    %3827 = vmatpush1.msra.mxu0 %v3722
    %3828 = vmatprep.subr.mxu0 0.0
    %3829 = vmatpush1.msra.mxu0 %v3721
    %3830 = vmatprep.subr.mxu0 0.0
    %3831 = vmatpush1.msra.mxu0 %v3720
    %3832 = vmatprep.subr.mxu0 0.0
    %3833 = vmatpush1.msra.mxu0 %v3719
    %3834 = vmatprep.subr.mxu0 0.0
    %3835 = vmatpush1.msra.mxu0 %v3718
    %3836 = vmatprep.subr.mxu0 0.0
    %3837 = vmatpush1.msra.mxu0 %v3717
    %3838 = vmatprep.subr.mxu0 0.0
    %3839 = vmatpush1.msra.mxu0 %v3716
    %3840 = vmatprep.subr.mxu0 0.0
    %3841 = vmatpush1.msra.mxu0 %v3715
    %3842 = vmatprep.subr.mxu0 0.0
    %3843 = vmatpush1.msra.mxu0 %v3714
    %3844 = vmatprep.subr.mxu0 0.0
    %3845 = vmatpush1.msra.mxu0 %v3713
    %3846 = vmatprep.subr.mxu0 0.0
    %3847 = vmatpush2.msra.mxu0 0.0
    %3848 = vmatprep.subr.mxu0 0.0
    %3849 = vmatpush2.msra.mxu0 0.0
    %3850 = vmatprep.subr.mxu0 0.0
    %3851 = vmatpush2.msra.mxu0 0.0
    %3852 = vmatprep.subr.mxu0 0.0
    %3853 = vmatpush2.msra.mxu0 0.0
    %3854 = vmatprep.subr.mxu0 0.0
    %3855 = vmatpush2.msra.mxu0 0.0
    %3856 = vmatprep.subr.mxu0 0.0
    %3857 = vmatpush2.msra.mxu0 0.0
    %3858 = vmatprep.subr.mxu0 0.0
    %3859 = vmatpush2.msra.mxu0 0.0
    %3860 = vmatprep.subr.mxu0 0.0
    %3861 = vmatpush2.msra.mxu0 0.0
    %3862 = vmatprep.subr.mxu0 0.0
    %3863 = vmatpush2.msra.mxu0 0.0
    %3864 = vmatprep.subr.mxu0 0.0
    %3865 = vmatpush2.msra.mxu0 0.0
    %3866 = vmatprep.subr.mxu0 0.0
    %3867 = vmatpush2.msra.mxu0 0.0
    %3868 = vmatprep.subr.mxu0 0.0
    %3869 = vmatpush2.msra.mxu0 0.0
    %3870 = vmatprep.subr.mxu0 0.0
    %3871 = vmatpush2.msra.mxu0 0.0
    %3872 = vmatprep.subr.mxu0 0.0
    %3873 = vmatpush2.msra.mxu0 0.0
    %3874 = vmatprep.subr.mxu0 0.0
    %3875 = vmatpush2.msra.mxu0 0.0
    %3876 = vmatprep.subr.mxu0 0.0
    %3877 = vmatpush2.msra.mxu0 0.0
    %3878 = vmatprep.mubr.f32.mxu0 0.0
    %3879 = vmatmul.mubr.f32.gmra.mxu0 %v3206
    %v3880 = vpop.f32.mrf.mxu0
    %v3881 = vadd.f32 %v3811, %v3880
    %v3882 = vpop.f32.mrf.mxu0
    %3883 = vdwg.mxu0
    %v3884 = vadd.f32 %v3881, %v1001
    %s3885 = scalar_lea.vmem %s19, 40
    %3886 = vst [vmem:[%s3885] sm:$0xff] %v3884
    %v3887 = vsel %vm1006, %v3884, -1e+30
    %3888 = vmax.xlane.f32.xlu0 %v3887
    %v3889 = vpop.xlane.xlu0 %3888
    %vm3890 = vcmp.eq.f32.partialorder %v3887, %v3889
    %v3891 = vsel %vm3890, %v285, 128
    %v3892 = vand.u32 %v3891, 65535
    %v3893 = vshra.s32 %v3891, 16
    %v3894 = vcvt.s32.f32 %v3892
    %v3895 = vcvt.s32.f32 %v3893
    %3896 = vmin.xlane.f32.xlu0 %v3895
    %v3897 = vpop.xlane.xlu0 %3896
    %vm3898 = vcmp.eq.f32.partialorder %v3895, %v3897
    %v3899 = vsel %vm3898, %v3894, inf
    %3900 = vmin.xlane.f32.xlu0 %v3899
    %v3901 = vpop.xlane.xlu0 %3900
    %v3902 = vcvt.f32.s32 %v3901
    %v3903 = vcvt.f32.s32 %v3897
    %v3904 = vshll.u32 %v3903, 16
    %v3905 = vadd.s32 %v3904, %v3902
    %vm3906 = vcmp.eq.s32.totalorder %v285, %v3905
    %v3907 = vsel %vm3906, 1, 0
    %v3908 = vcvt.s32.f32 %v3907
    %s3909 = sld [smem:[#allocation3 + $0x5]]
    %p3910 = scmp.ne.s32.totalorder %s3909, 0
    %s3911 = scalar_select %p3910, 1, 0
    %s3912 = scvt.s32.f32 %s3911
    %s3913 = scalar_lea.vmem %s1, 40
    %v3914 = vld [vmem:[%s3913] sm:$0xff]
    %3915 = vset.pattern.permute.xlu0 0
    %3916 = vperm.xlu0 %3915, %v3914
    %v3917 = vpop.permute.xlu0 %3916
    %vm3918 = vcmp.eq.s32.totalorder %v285, %v3917
    %v3919 = vsel %vm3918, 1, 0
    %v3920 = vcvt.s32.f32 %v3919
    %v3921 = vstv %s3912
    %v3922 = vmul.f32 %v3921, %v3920
    %s3923 = ssub.f32 1.0, %s3912
    %v3924 = vstv %s3923
    %v3925 = vmul.f32 %v3924, %v3908
    %v3926 = vadd.f32 %v3922, %v3925
    %v3927 = vsel %vm294, %v3710, 0
    %3929 = vmatprep.subr.mxu0 0.0
    %3930 = vmatpush1.msra.mxu0 0.0
    %3931 = vmatprep.subr.mxu0 0.0
    %3932 = vmatpush1.msra.mxu0 0.0
    %3933 = vmatprep.subr.mxu0 0.0
    %3934 = vmatpush1.msra.mxu0 0.0
    %3935 = vmatprep.subr.mxu0 0.0
    %3936 = vmatpush1.msra.mxu0 0.0
    %3937 = vmatprep.subr.mxu0 0.0
    %3938 = vmatpush1.msra.mxu0 0.0
    %3939 = vmatprep.subr.mxu0 0.0
    %3940 = vmatpush1.msra.mxu0 0.0
    %3941 = vmatprep.subr.mxu0 0.0
    %3942 = vmatpush1.msra.mxu0 0.0
    %3943 = vmatprep.subr.mxu0 0.0
    %3944 = vmatpush1.msra.mxu0 0.0
    %3945 = vmatprep.subr.mxu0 0.0
    %3946 = vmatpush1.msra.mxu0 0.0
    %3947 = vmatprep.subr.mxu0 0.0
    %3948 = vmatpush1.msra.mxu0 0.0
    %3949 = vmatprep.subr.mxu0 0.0
    %3950 = vmatpush1.msra.mxu0 0.0
    %3951 = vmatprep.subr.mxu0 0.0
    %3952 = vmatpush1.msra.mxu0 0.0
    %3953 = vmatprep.subr.mxu0 0.0
    %3954 = vmatpush1.msra.mxu0 %v279
    %3955 = vmatprep.subr.mxu0 0.0
    %3956 = vmatpush1.msra.mxu0 %v278
    %3957 = vmatprep.subr.mxu0 0.0
    %3958 = vmatpush1.msra.mxu0 %v277
    %3959 = vmatprep.subr.mxu0 0.0
    %3960 = vmatpush1.msra.mxu0 %v276
    %3961 = vmatprep.subr.mxu0 0.0
    %3962 = vmatpush2.msra.mxu0 0.0
    %3963 = vmatprep.subr.mxu0 0.0
    %3964 = vmatpush2.msra.mxu0 0.0
    %3965 = vmatprep.subr.mxu0 0.0
    %3966 = vmatpush2.msra.mxu0 0.0
    %3967 = vmatprep.subr.mxu0 0.0
    %3968 = vmatpush2.msra.mxu0 0.0
    %3969 = vmatprep.subr.mxu0 0.0
    %3970 = vmatpush2.msra.mxu0 0.0
    %3971 = vmatprep.subr.mxu0 0.0
    %3972 = vmatpush2.msra.mxu0 0.0
    %3973 = vmatprep.subr.mxu0 0.0
    %3974 = vmatpush2.msra.mxu0 0.0
    %3975 = vmatprep.subr.mxu0 0.0
    %3976 = vmatpush2.msra.mxu0 0.0
    %3977 = vmatprep.subr.mxu0 0.0
    %3978 = vmatpush2.msra.mxu0 0.0
    %3979 = vmatprep.subr.mxu0 0.0
    %3980 = vmatpush2.msra.mxu0 0.0
    %3981 = vmatprep.subr.mxu0 0.0
    %3982 = vmatpush2.msra.mxu0 0.0
    %3983 = vmatprep.subr.mxu0 0.0
    %3984 = vmatpush2.msra.mxu0 0.0
    %3985 = vmatprep.subr.mxu0 0.0
    %3986 = vmatpush2.msra.mxu0 0.0
    %3987 = vmatprep.subr.mxu0 0.0
    %3988 = vmatpush2.msra.mxu0 0.0
    %3989 = vmatprep.subr.mxu0 0.0
    %3990 = vmatpush2.msra.mxu0 0.0
    %3991 = vmatprep.subr.mxu0 0.0
    %3992 = vmatpush2.msra.mxu0 0.0
    %3993 = vmatprep.mubr.f32.mxu0 0.0
    %3994 = vmatmul.mubr.f32.gmra.mxu0 %v3927
    %v3995 = vpop.f32.mrf.mxu0
    %v3996 = vadd.f32 0.0, %v3995
    %v3997 = vpop.f32.mrf.mxu0
    %3998 = vdwg.mxu0
    %v3999 = vadd.f32 %v266, %v3996
    %v4000 = vadd.f32 %v267, %v3996
    %v4001 = vadd.f32 %v268, %v3996
    %v4002 = vadd.f32 %v269, %v3996
    %v4003 = vadd.f32 %v270, %v3996
    %v4004 = vadd.f32 %v271, %v3996
    %v4005 = vadd.f32 %v272, %v3996
    %v4006 = vadd.f32 %v273, %v3996
    %v4007 = vadd.f32 %v274, %v3996
    %v4008 = vadd.f32 %v275, %v3996
    %v4009 = vtanh.pop %v3999
    %v4010 = vtanh.pop %v4000
    %v4011 = vtanh.pop %v4001
    %v4012 = vtanh.pop %v4002
    %v4013 = vtanh.pop %v4003
    %v4014 = vtanh.pop %v4004
    %v4015 = vtanh.pop %v4005
    %v4016 = vtanh.pop %v4006
    %v4017 = vtanh.pop %v4007
    %v4018 = vtanh.pop %v4008
    %v4019 = vmul.f32 %v4009, %v392
    %v4020 = vmul.f32 %v4010, %v392
    %v4021 = vmul.f32 %v4011, %v392
    %v4022 = vmul.f32 %v4012, %v392
    %v4023 = vmul.f32 %v4013, %v392
    %v4024 = vmul.f32 %v4014, %v392
    %v4025 = vmul.f32 %v4015, %v392
    %v4026 = vmul.f32 %v4016, %v392
    %v4027 = vmul.f32 %v4017, %v392
    %v4028 = vmul.f32 %v4018, %v392
    %v4029 = vsel %vm294, %v4019, 0.0
    %4030 = vadd.xlane.f32.xlu0 %v4029
    %v4031 = vpop.xlane.xlu0 %4030
    %v4032 = vsel %vm294, %v4020, 0.0
    %4033 = vadd.xlane.f32.xlu0 %v4032
    %v4034 = vpop.xlane.xlu0 %4033
    %v4035 = vsel %vm294, %v4021, 0.0
    %4036 = vadd.xlane.f32.xlu0 %v4035
    %v4037 = vpop.xlane.xlu0 %4036
    %v4038 = vsel %vm294, %v4022, 0.0
    %4039 = vadd.xlane.f32.xlu0 %v4038
    %v4040 = vpop.xlane.xlu0 %4039
    %v4041 = vsel %vm294, %v4023, 0.0
    %4042 = vadd.xlane.f32.xlu0 %v4041
    %v4043 = vpop.xlane.xlu0 %4042
    %v4044 = vsel %vm294, %v4024, 0.0
    %4045 = vadd.xlane.f32.xlu0 %v4044
    %v4046 = vpop.xlane.xlu0 %4045
    %v4047 = vsel %vm294, %v4025, 0.0
    %4048 = vadd.xlane.f32.xlu0 %v4047
    %v4049 = vpop.xlane.xlu0 %4048
    %v4050 = vsel %vm294, %v4026, 0.0
    %4051 = vadd.xlane.f32.xlu0 %v4050
    %v4052 = vpop.xlane.xlu0 %4051
    %v4053 = vsel %vm294, %v4027, 0.0
    %4054 = vadd.xlane.f32.xlu0 %v4053
    %v4055 = vpop.xlane.xlu0 %4054
    %v4056 = vsel %vm294, %v4028, 0.0
    %4057 = vadd.xlane.f32.xlu0 %v4056
    %v4058 = vpop.xlane.xlu0 %4057
    %v4059 = vadd.f32 %v4031, %v438
    %v4060 = vadd.f32 %v4034, %v438
    %v4061 = vadd.f32 %v4037, %v438
    %v4062 = vadd.f32 %v4040, %v438
    %v4063 = vadd.f32 %v4043, %v438
    %v4064 = vadd.f32 %v4046, %v438
    %v4065 = vadd.f32 %v4049, %v438
    %v4066 = vadd.f32 %v4052, %v438
    %v4067 = vadd.f32 %v4055, %v438
    %v4068 = vadd.f32 %v4058, %v438
    %v4069 = vsel %vm450, %v4059, -inf
    %v4070 = vsel %vm450, %v4060, -inf
    %v4071 = vsel %vm450, %v4061, -inf
    %v4072 = vsel %vm450, %v4062, -inf
    %v4073 = vsel %vm450, %v4063, -inf
    %v4074 = vmax.f32 %v4069, %v4073
    %v4075 = vsel %vm450, %v4064, -inf
    %v4076 = vmax.f32 %v4070, %v4075
    %v4077 = vsel %vm450, %v4065, -inf
    %v4078 = vmax.f32 %v4071, %v4077
    %v4079 = vsel %vm450, %v4066, -inf
    %v4080 = vmax.f32 %v4072, %v4079
    %v4081 = vsel %vm450, %v4067, -inf
    %v4082 = vmax.f32 %v4074, %v4081
    %v4083 = vsel %vm450, %v4068, -inf
    %v4084 = vmax.f32 %v4076, %v4083
    %v4085 = vmax.f32 %v4082, %v4084
    %v4086 = vmax.f32 %v4078, %v4080
    %v4087 = vmax.f32 %v4085, %v4086
    %v4088 = vsub.f32 %v4059, %v4087
    %v4089 = vsub.f32 %v4060, %v4087
    %v4090 = vsub.f32 %v4061, %v4087
    %v4091 = vsub.f32 %v4062, %v4087
    %v4092 = vsub.f32 %v4063, %v4087
    %v4093 = vsub.f32 %v4064, %v4087
    %v4094 = vsub.f32 %v4065, %v4087
    %v4095 = vsub.f32 %v4066, %v4087
    %v4096 = vsub.f32 %v4067, %v4087
    %v4097 = vsub.f32 %v4068, %v4087
    %v4098 = vmul.f32 %v4088, 1.442695
    %v4099 = vpow.pop %v4098
    %v4100 = vmul.f32 %v4089, 1.442695
    %v4101 = vpow.pop %v4100
    %v4102 = vmul.f32 %v4090, 1.442695
    %v4103 = vpow.pop %v4102
    %v4104 = vmul.f32 %v4091, 1.442695
    %v4105 = vpow.pop %v4104
    %v4106 = vmul.f32 %v4092, 1.442695
    %v4107 = vpow.pop %v4106
    %v4108 = vmul.f32 %v4093, 1.442695
    %v4109 = vpow.pop %v4108
    %v4110 = vmul.f32 %v4094, 1.442695
    %v4111 = vpow.pop %v4110
    %v4112 = vmul.f32 %v4095, 1.442695
    %v4113 = vpow.pop %v4112
    %v4114 = vmul.f32 %v4096, 1.442695
    %v4115 = vpow.pop %v4114
    %v4116 = vmul.f32 %v4097, 1.442695
    %v4117 = vpow.pop %v4116
    %v4118 = vsel %vm450, %v4099, 0.0
    %v4119 = vsel %vm450, %v4101, 0.0
    %v4120 = vadd.f32 %v4118, %v4119
    %v4121 = vsel %vm450, %v4103, 0.0
    %v4122 = vadd.f32 %v4120, %v4121
    %v4123 = vsel %vm450, %v4105, 0.0
    %v4124 = vadd.f32 %v4122, %v4123
    %v4125 = vsel %vm450, %v4107, 0.0
    %v4126 = vadd.f32 %v4124, %v4125
    %v4127 = vsel %vm450, %v4109, 0.0
    %v4128 = vadd.f32 %v4126, %v4127
    %v4129 = vsel %vm450, %v4111, 0.0
    %v4130 = vadd.f32 %v4128, %v4129
    %v4131 = vsel %vm450, %v4113, 0.0
    %v4132 = vadd.f32 %v4130, %v4131
    %v4133 = vsel %vm450, %v4115, 0.0
    %v4134 = vadd.f32 %v4132, %v4133
    %v4135 = vsel %vm450, %v4117, 0.0
    %v4136 = vadd.f32 %v4134, %v4135
    %v4137 = vrcp.pop %v4136
    %v4138 = vmul.f32 %v4099, %v4137
    %v4139 = vmul.f32 %v4101, %v4137
    %v4140 = vmul.f32 %v4103, %v4137
    %v4141 = vmul.f32 %v4105, %v4137
    %v4142 = vmul.f32 %v4107, %v4137
    %v4143 = vmul.f32 %v4109, %v4137
    %v4144 = vmul.f32 %v4111, %v4137
    %v4145 = vmul.f32 %v4113, %v4137
    %v4146 = vmul.f32 %v4115, %v4137
    %v4147 = vmul.f32 %v4117, %v4137
    %4149 = vset.pattern.permute.xlu0 0
    %4150 = vperm.xlu0 %4149, %v4138
    %v4151 = vpop.permute.xlu0 %4150
    %4154 = vset.pattern.permute.xlu0 0
    %4155 = vperm.xlu0 %4154, %v4139
    %v4156 = vpop.permute.xlu0 %4155
    %4159 = vset.pattern.permute.xlu0 0
    %4160 = vperm.xlu0 %4159, %v4140
    %v4161 = vpop.permute.xlu0 %4160
    %4164 = vset.pattern.permute.xlu0 0
    %4165 = vperm.xlu0 %4164, %v4141
    %v4166 = vpop.permute.xlu0 %4165
    %4169 = vset.pattern.permute.xlu0 0
    %4170 = vperm.xlu0 %4169, %v4142
    %v4171 = vpop.permute.xlu0 %4170
    %4174 = vset.pattern.permute.xlu0 0
    %4175 = vperm.xlu0 %4174, %v4143
    %v4176 = vpop.permute.xlu0 %4175
    %4179 = vset.pattern.permute.xlu0 0
    %4180 = vperm.xlu0 %4179, %v4144
    %v4181 = vpop.permute.xlu0 %4180
    %4184 = vset.pattern.permute.xlu0 0
    %4185 = vperm.xlu0 %4184, %v4145
    %v4186 = vpop.permute.xlu0 %4185
    %4189 = vset.pattern.permute.xlu0 0
    %4190 = vperm.xlu0 %4189, %v4146
    %v4191 = vpop.permute.xlu0 %4190
    %4194 = vset.pattern.permute.xlu0 0
    %4195 = vperm.xlu0 %4194, %v4147
    %v4196 = vpop.permute.xlu0 %4195
    %v4198 = vmul.f32 %v4151, %v256
    %v4199 = vmul.f32 %v4156, %v257
    %v4200 = vmul.f32 %v4161, %v258
    %v4201 = vmul.f32 %v4166, %v259
    %v4202 = vmul.f32 %v4171, %v260
    %v4203 = vmul.f32 %v4176, %v261
    %v4204 = vmul.f32 %v4181, %v262
    %v4205 = vmul.f32 %v4186, %v263
    %v4206 = vmul.f32 %v4191, %v264
    %v4207 = vmul.f32 %v4196, %v265
    %v4208 = vsel %vm93, %v4198, 0.0
    %v4209 = vsel %vm93, %v4199, 0.0
    %v4210 = vadd.f32 %v4208, %v4209
    %v4211 = vsel %vm93, %v4200, 0.0
    %v4212 = vadd.f32 %v4210, %v4211
    %v4213 = vsel %vm93, %v4201, 0.0
    %v4214 = vadd.f32 %v4212, %v4213
    %v4215 = vsel %vm93, %v4202, 0.0
    %v4216 = vadd.f32 %v4214, %v4215
    %v4217 = vsel %vm93, %v4203, 0.0
    %v4218 = vadd.f32 %v4216, %v4217
    %v4219 = vsel %vm93, %v4204, 0.0
    %v4220 = vadd.f32 %v4218, %v4219
    %v4221 = vsel %vm93, %v4205, 0.0
    %v4222 = vadd.f32 %v4220, %v4221
    %v4223 = vsel %vm93, %v4206, 0.0
    %v4224 = vadd.f32 %v4222, %v4223
    %v4225 = vsel %vm93, %v4207, 0.0
    %v4226 = vadd.f32 %v4224, %v4225
    %4228 = vrot.lane.b32.xlu0 %v4226, 32
    %v4229 = vpop.permute.xlu0 %4228
    %v4231 = vsel %vm294, %v3710, %v4229
    %v4232 = vld [vmem:[%s13] sm:$0xff]
    %v4233 = vld [vmem:[%s13 + $0x8] sm:$0xff]
    %v4234 = vld [vmem:[%s13 + $0x10] sm:$0xff]
    %v4235 = vld [vmem:[%s13 + $0x18] sm:$0xff]
    %v4236 = vld [vmem:[%s13 + $0x20] sm:$0xff]
    %v4237 = vld [vmem:[%s13 + $0x28] sm:$0xff]
    %v4238 = vld [vmem:[%s13 + $0x30] sm:$0xff]
    %v4239 = vld [vmem:[%s13 + $0x38] sm:$0xff]
    %v4240 = vld [vmem:[%s13 + $0x40] sm:$0xff]
    %v4241 = vld [vmem:[%s13 + $0x48] sm:$0xff]
    %v4242 = vld [vmem:[%s13 + $0x50] sm:$0xff]
    %v4243 = vld [vmem:[%s13 + $0x58] sm:$0xff]
    %v4244 = vld [vmem:[%s13 + $0x60] sm:$0xff]
    %v4245 = vld [vmem:[%s13 + $0x68] sm:$0xff]
    %v4246 = vld [vmem:[%s13 + $0x70] sm:$0xff]
    %v4247 = vld [vmem:[%s13 + $0x78] sm:$0xff]
    %v4248 = vld [vmem:[%s14] sm:$0xff]
    %v4249 = vld [vmem:[%s14 + $0x8] sm:$0xff]
    %v4250 = vld [vmem:[%s14 + $0x10] sm:$0xff]
    %v4251 = vld [vmem:[%s14 + $0x18] sm:$0xff]
    %v4252 = vld [vmem:[%s14 + $0x20] sm:$0xff]
    %v4253 = vld [vmem:[%s14 + $0x28] sm:$0xff]
    %v4254 = vld [vmem:[%s14 + $0x30] sm:$0xff]
    %v4255 = vld [vmem:[%s14 + $0x38] sm:$0xff]
    %v4256 = vld [vmem:[%s14 + $0x40] sm:$0xff]
    %v4257 = vld [vmem:[%s14 + $0x48] sm:$0xff]
    %v4258 = vld [vmem:[%s14 + $0x50] sm:$0xff]
    %v4259 = vld [vmem:[%s14 + $0x58] sm:$0xff]
    %v4261 = vsel %vm642, %v4231, 0
    %4263 = vmatprep.subr.mxu0 0.0
    %4264 = vmatpush1.msra.mxu0 0.0
    %4265 = vmatprep.subr.mxu0 0.0
    %4266 = vmatpush1.msra.mxu0 0.0
    %4267 = vmatprep.subr.mxu0 0.0
    %4268 = vmatpush1.msra.mxu0 0.0
    %4269 = vmatprep.subr.mxu0 0.0
    %4270 = vmatpush1.msra.mxu0 0.0
    %4271 = vmatprep.subr.mxu0 0.0
    %4272 = vmatpush1.msra.mxu0 %v4259
    %4273 = vmatprep.subr.mxu0 0.0
    %4274 = vmatpush1.msra.mxu0 %v4258
    %4275 = vmatprep.subr.mxu0 0.0
    %4276 = vmatpush1.msra.mxu0 %v4257
    %4277 = vmatprep.subr.mxu0 0.0
    %4278 = vmatpush1.msra.mxu0 %v4256
    %4279 = vmatprep.subr.mxu0 0.0
    %4280 = vmatpush1.msra.mxu0 %v4255
    %4281 = vmatprep.subr.mxu0 0.0
    %4282 = vmatpush1.msra.mxu0 %v4254
    %4283 = vmatprep.subr.mxu0 0.0
    %4284 = vmatpush1.msra.mxu0 %v4253
    %4285 = vmatprep.subr.mxu0 0.0
    %4286 = vmatpush1.msra.mxu0 %v4252
    %4287 = vmatprep.subr.mxu0 0.0
    %4288 = vmatpush1.msra.mxu0 %v4251
    %4289 = vmatprep.subr.mxu0 0.0
    %4290 = vmatpush1.msra.mxu0 %v4250
    %4291 = vmatprep.subr.mxu0 0.0
    %4292 = vmatpush1.msra.mxu0 %v4249
    %4293 = vmatprep.subr.mxu0 0.0
    %4294 = vmatpush1.msra.mxu0 %v4248
    %4295 = vmatprep.subr.mxu0 0.0
    %4296 = vmatpush2.msra.mxu0 0.0
    %4297 = vmatprep.subr.mxu0 0.0
    %4298 = vmatpush2.msra.mxu0 0.0
    %4299 = vmatprep.subr.mxu0 0.0
    %4300 = vmatpush2.msra.mxu0 0.0
    %4301 = vmatprep.subr.mxu0 0.0
    %4302 = vmatpush2.msra.mxu0 0.0
    %4303 = vmatprep.subr.mxu0 0.0
    %4304 = vmatpush2.msra.mxu0 0.0
    %4305 = vmatprep.subr.mxu0 0.0
    %4306 = vmatpush2.msra.mxu0 0.0
    %4307 = vmatprep.subr.mxu0 0.0
    %4308 = vmatpush2.msra.mxu0 0.0
    %4309 = vmatprep.subr.mxu0 0.0
    %4310 = vmatpush2.msra.mxu0 0.0
    %4311 = vmatprep.subr.mxu0 0.0
    %4312 = vmatpush2.msra.mxu0 0.0
    %4313 = vmatprep.subr.mxu0 0.0
    %4314 = vmatpush2.msra.mxu0 0.0
    %4315 = vmatprep.subr.mxu0 0.0
    %4316 = vmatpush2.msra.mxu0 0.0
    %4317 = vmatprep.subr.mxu0 0.0
    %4318 = vmatpush2.msra.mxu0 0.0
    %4319 = vmatprep.subr.mxu0 0.0
    %4320 = vmatpush2.msra.mxu0 0.0
    %4321 = vmatprep.subr.mxu0 0.0
    %4322 = vmatpush2.msra.mxu0 0.0
    %4323 = vmatprep.subr.mxu0 0.0
    %4324 = vmatpush2.msra.mxu0 0.0
    %4325 = vmatprep.subr.mxu0 0.0
    %4326 = vmatpush2.msra.mxu0 0.0
    %4327 = vmatprep.mubr.f32.mxu0 0.0
    %4328 = vmatmul.mubr.f32.gmra.mxu0 %v4261
    %v4329 = vpop.f32.mrf.mxu0
    %v4330 = vadd.f32 0.0, %v4329
    %v4331 = vpop.f32.mrf.mxu0
    %4332 = vdwg.mxu0
    %4333 = vmatprep.subr.mxu0 0.0
    %4334 = vmatpush1.msra.mxu0 %v4247
    %4335 = vmatprep.subr.mxu0 0.0
    %4336 = vmatpush1.msra.mxu0 %v4246
    %4337 = vmatprep.subr.mxu0 0.0
    %4338 = vmatpush1.msra.mxu0 %v4245
    %4339 = vmatprep.subr.mxu0 0.0
    %4340 = vmatpush1.msra.mxu0 %v4244
    %4341 = vmatprep.subr.mxu0 0.0
    %4342 = vmatpush1.msra.mxu0 %v4243
    %4343 = vmatprep.subr.mxu0 0.0
    %4344 = vmatpush1.msra.mxu0 %v4242
    %4345 = vmatprep.subr.mxu0 0.0
    %4346 = vmatpush1.msra.mxu0 %v4241
    %4347 = vmatprep.subr.mxu0 0.0
    %4348 = vmatpush1.msra.mxu0 %v4240
    %4349 = vmatprep.subr.mxu0 0.0
    %4350 = vmatpush1.msra.mxu0 %v4239
    %4351 = vmatprep.subr.mxu0 0.0
    %4352 = vmatpush1.msra.mxu0 %v4238
    %4353 = vmatprep.subr.mxu0 0.0
    %4354 = vmatpush1.msra.mxu0 %v4237
    %4355 = vmatprep.subr.mxu0 0.0
    %4356 = vmatpush1.msra.mxu0 %v4236
    %4357 = vmatprep.subr.mxu0 0.0
    %4358 = vmatpush1.msra.mxu0 %v4235
    %4359 = vmatprep.subr.mxu0 0.0
    %4360 = vmatpush1.msra.mxu0 %v4234
    %4361 = vmatprep.subr.mxu0 0.0
    %4362 = vmatpush1.msra.mxu0 %v4233
    %4363 = vmatprep.subr.mxu0 0.0
    %4364 = vmatpush1.msra.mxu0 %v4232
    %4365 = vmatprep.subr.mxu0 0.0
    %4366 = vmatpush2.msra.mxu0 0.0
    %4367 = vmatprep.subr.mxu0 0.0
    %4368 = vmatpush2.msra.mxu0 0.0
    %4369 = vmatprep.subr.mxu0 0.0
    %4370 = vmatpush2.msra.mxu0 0.0
    %4371 = vmatprep.subr.mxu0 0.0
    %4372 = vmatpush2.msra.mxu0 0.0
    %4373 = vmatprep.subr.mxu0 0.0
    %4374 = vmatpush2.msra.mxu0 0.0
    %4375 = vmatprep.subr.mxu0 0.0
    %4376 = vmatpush2.msra.mxu0 0.0
    %4377 = vmatprep.subr.mxu0 0.0
    %4378 = vmatpush2.msra.mxu0 0.0
    %4379 = vmatprep.subr.mxu0 0.0
    %4380 = vmatpush2.msra.mxu0 0.0
    %4381 = vmatprep.subr.mxu0 0.0
    %4382 = vmatpush2.msra.mxu0 0.0
    %4383 = vmatprep.subr.mxu0 0.0
    %4384 = vmatpush2.msra.mxu0 0.0
    %4385 = vmatprep.subr.mxu0 0.0
    %4386 = vmatpush2.msra.mxu0 0.0
    %4387 = vmatprep.subr.mxu0 0.0
    %4388 = vmatpush2.msra.mxu0 0.0
    %4389 = vmatprep.subr.mxu0 0.0
    %4390 = vmatpush2.msra.mxu0 0.0
    %4391 = vmatprep.subr.mxu0 0.0
    %4392 = vmatpush2.msra.mxu0 0.0
    %4393 = vmatprep.subr.mxu0 0.0
    %4394 = vmatpush2.msra.mxu0 0.0
    %4395 = vmatprep.subr.mxu0 0.0
    %4396 = vmatpush2.msra.mxu0 0.0
    %4397 = vmatprep.mubr.f32.mxu0 0.0
    %4398 = vmatmul.mubr.f32.gmra.mxu0 %v3926
    %v4399 = vpop.f32.mrf.mxu0
    %v4400 = vadd.f32 %v4330, %v4399
    %v4401 = vpop.f32.mrf.mxu0
    %4402 = vdwg.mxu0
    %v4403 = vadd.f32 %v4400, %v790
    %v4404 = vxor.u32 %v4403, 2147483648
    %v4405 = vmul.f32 %v4404, 1.442695
    %v4406 = vpow.pop %v4405
    %v4407 = vadd.f32 %v4406, 1.0
    %v4408 = vrcp.pop %v4407
    %v4409 = vmul.f32 1.0, %v4408
    %v4410 = vtanh.pop %v4403
    %v4411 = vmul.f32 %v4409, %v3701
    %4413 = vrot.lane.b32.xlu0 %v4410, 64
    %v4414 = vpop.permute.xlu0 %4413
    %v4416 = vmul.f32 %v4409, %v4414
    %4418 = vrot.lane.b32.xlu0 %v4416, 32
    %v4419 = vpop.permute.xlu0 %4418
    %v4421 = vadd.f32 %v4411, %v4419
    %v4422 = vtanh.pop %v4421
    %4424 = vrot.lane.b32.xlu0 %v4422, 64
    %v4425 = vpop.permute.xlu0 %4424
    %v4427 = vmul.f32 %v4409, %v4425
    %4429 = vrot.lane.b32.xlu0 %v4427, 32
    %v4430 = vpop.permute.xlu0 %4429
    %v4432 = vsel %vm294, %v4430, %v4229
    %v4433 = vld [vmem:[%s16] sm:$0xff]
    %v4434 = vld [vmem:[%s16 + $0x8] sm:$0xff]
    %v4435 = vld [vmem:[%s16 + $0x10] sm:$0xff]
    %v4436 = vld [vmem:[%s16 + $0x18] sm:$0xff]
    %v4437 = vld [vmem:[%s16 + $0x20] sm:$0xff]
    %v4438 = vld [vmem:[%s16 + $0x28] sm:$0xff]
    %v4439 = vld [vmem:[%s16 + $0x30] sm:$0xff]
    %v4440 = vld [vmem:[%s16 + $0x38] sm:$0xff]
    %v4441 = vld [vmem:[%s16 + $0x40] sm:$0xff]
    %v4442 = vld [vmem:[%s16 + $0x48] sm:$0xff]
    %v4443 = vld [vmem:[%s16 + $0x50] sm:$0xff]
    %v4444 = vld [vmem:[%s16 + $0x58] sm:$0xff]
    %v4445 = vld [vmem:[%s16 + $0x60] sm:$0xff]
    %v4446 = vld [vmem:[%s16 + $0x68] sm:$0xff]
    %v4447 = vld [vmem:[%s16 + $0x70] sm:$0xff]
    %v4448 = vld [vmem:[%s16 + $0x78] sm:$0xff]
    %v4449 = vld [vmem:[%s17] sm:$0xff]
    %v4450 = vld [vmem:[%s17 + $0x8] sm:$0xff]
    %v4451 = vld [vmem:[%s17 + $0x10] sm:$0xff]
    %v4452 = vld [vmem:[%s17 + $0x18] sm:$0xff]
    %v4453 = vld [vmem:[%s17 + $0x20] sm:$0xff]
    %v4454 = vld [vmem:[%s17 + $0x28] sm:$0xff]
    %v4455 = vld [vmem:[%s17 + $0x30] sm:$0xff]
    %v4456 = vld [vmem:[%s17 + $0x38] sm:$0xff]
    %v4457 = vld [vmem:[%s17 + $0x40] sm:$0xff]
    %v4458 = vld [vmem:[%s17 + $0x48] sm:$0xff]
    %v4459 = vld [vmem:[%s17 + $0x50] sm:$0xff]
    %v4460 = vld [vmem:[%s17 + $0x58] sm:$0xff]
    %v4462 = vsel %vm642, %v4432, 0
    %4464 = vmatprep.subr.mxu0 0.0
    %4465 = vmatpush1.msra.mxu0 0.0
    %4466 = vmatprep.subr.mxu0 0.0
    %4467 = vmatpush1.msra.mxu0 0.0
    %4468 = vmatprep.subr.mxu0 0.0
    %4469 = vmatpush1.msra.mxu0 0.0
    %4470 = vmatprep.subr.mxu0 0.0
    %4471 = vmatpush1.msra.mxu0 0.0
    %4472 = vmatprep.subr.mxu0 0.0
    %4473 = vmatpush1.msra.mxu0 %v4460
    %4474 = vmatprep.subr.mxu0 0.0
    %4475 = vmatpush1.msra.mxu0 %v4459
    %4476 = vmatprep.subr.mxu0 0.0
    %4477 = vmatpush1.msra.mxu0 %v4458
    %4478 = vmatprep.subr.mxu0 0.0
    %4479 = vmatpush1.msra.mxu0 %v4457
    %4480 = vmatprep.subr.mxu0 0.0
    %4481 = vmatpush1.msra.mxu0 %v4456
    %4482 = vmatprep.subr.mxu0 0.0
    %4483 = vmatpush1.msra.mxu0 %v4455
    %4484 = vmatprep.subr.mxu0 0.0
    %4485 = vmatpush1.msra.mxu0 %v4454
    %4486 = vmatprep.subr.mxu0 0.0
    %4487 = vmatpush1.msra.mxu0 %v4453
    %4488 = vmatprep.subr.mxu0 0.0
    %4489 = vmatpush1.msra.mxu0 %v4452
    %4490 = vmatprep.subr.mxu0 0.0
    %4491 = vmatpush1.msra.mxu0 %v4451
    %4492 = vmatprep.subr.mxu0 0.0
    %4493 = vmatpush1.msra.mxu0 %v4450
    %4494 = vmatprep.subr.mxu0 0.0
    %4495 = vmatpush1.msra.mxu0 %v4449
    %4496 = vmatprep.subr.mxu0 0.0
    %4497 = vmatpush2.msra.mxu0 0.0
    %4498 = vmatprep.subr.mxu0 0.0
    %4499 = vmatpush2.msra.mxu0 0.0
    %4500 = vmatprep.subr.mxu0 0.0
    %4501 = vmatpush2.msra.mxu0 0.0
    %4502 = vmatprep.subr.mxu0 0.0
    %4503 = vmatpush2.msra.mxu0 0.0
    %4504 = vmatprep.subr.mxu0 0.0
    %4505 = vmatpush2.msra.mxu0 0.0
    %4506 = vmatprep.subr.mxu0 0.0
    %4507 = vmatpush2.msra.mxu0 0.0
    %4508 = vmatprep.subr.mxu0 0.0
    %4509 = vmatpush2.msra.mxu0 0.0
    %4510 = vmatprep.subr.mxu0 0.0
    %4511 = vmatpush2.msra.mxu0 0.0
    %4512 = vmatprep.subr.mxu0 0.0
    %4513 = vmatpush2.msra.mxu0 0.0
    %4514 = vmatprep.subr.mxu0 0.0
    %4515 = vmatpush2.msra.mxu0 0.0
    %4516 = vmatprep.subr.mxu0 0.0
    %4517 = vmatpush2.msra.mxu0 0.0
    %4518 = vmatprep.subr.mxu0 0.0
    %4519 = vmatpush2.msra.mxu0 0.0
    %4520 = vmatprep.subr.mxu0 0.0
    %4521 = vmatpush2.msra.mxu0 0.0
    %4522 = vmatprep.subr.mxu0 0.0
    %4523 = vmatpush2.msra.mxu0 0.0
    %4524 = vmatprep.subr.mxu0 0.0
    %4525 = vmatpush2.msra.mxu0 0.0
    %4526 = vmatprep.subr.mxu0 0.0
    %4527 = vmatpush2.msra.mxu0 0.0
    %4528 = vmatprep.mubr.f32.mxu0 0.0
    %4529 = vmatmul.mubr.f32.gmra.mxu0 %v4462
    %v4530 = vpop.f32.mrf.mxu0
    %v4531 = vadd.f32 0.0, %v4530
    %v4532 = vpop.f32.mrf.mxu0
    %4533 = vdwg.mxu0
    %4534 = vmatprep.subr.mxu0 0.0
    %4535 = vmatpush1.msra.mxu0 %v4448
    %4536 = vmatprep.subr.mxu0 0.0
    %4537 = vmatpush1.msra.mxu0 %v4447
    %4538 = vmatprep.subr.mxu0 0.0
    %4539 = vmatpush1.msra.mxu0 %v4446
    %4540 = vmatprep.subr.mxu0 0.0
    %4541 = vmatpush1.msra.mxu0 %v4445
    %4542 = vmatprep.subr.mxu0 0.0
    %4543 = vmatpush1.msra.mxu0 %v4444
    %4544 = vmatprep.subr.mxu0 0.0
    %4545 = vmatpush1.msra.mxu0 %v4443
    %4546 = vmatprep.subr.mxu0 0.0
    %4547 = vmatpush1.msra.mxu0 %v4442
    %4548 = vmatprep.subr.mxu0 0.0
    %4549 = vmatpush1.msra.mxu0 %v4441
    %4550 = vmatprep.subr.mxu0 0.0
    %4551 = vmatpush1.msra.mxu0 %v4440
    %4552 = vmatprep.subr.mxu0 0.0
    %4553 = vmatpush1.msra.mxu0 %v4439
    %4554 = vmatprep.subr.mxu0 0.0
    %4555 = vmatpush1.msra.mxu0 %v4438
    %4556 = vmatprep.subr.mxu0 0.0
    %4557 = vmatpush1.msra.mxu0 %v4437
    %4558 = vmatprep.subr.mxu0 0.0
    %4559 = vmatpush1.msra.mxu0 %v4436
    %4560 = vmatprep.subr.mxu0 0.0
    %4561 = vmatpush1.msra.mxu0 %v4435
    %4562 = vmatprep.subr.mxu0 0.0
    %4563 = vmatpush1.msra.mxu0 %v4434
    %4564 = vmatprep.subr.mxu0 0.0
    %4565 = vmatpush1.msra.mxu0 %v4433
    %4566 = vmatprep.subr.mxu0 0.0
    %4567 = vmatpush2.msra.mxu0 0.0
    %4568 = vmatprep.subr.mxu0 0.0
    %4569 = vmatpush2.msra.mxu0 0.0
    %4570 = vmatprep.subr.mxu0 0.0
    %4571 = vmatpush2.msra.mxu0 0.0
    %4572 = vmatprep.subr.mxu0 0.0
    %4573 = vmatpush2.msra.mxu0 0.0
    %4574 = vmatprep.subr.mxu0 0.0
    %4575 = vmatpush2.msra.mxu0 0.0
    %4576 = vmatprep.subr.mxu0 0.0
    %4577 = vmatpush2.msra.mxu0 0.0
    %4578 = vmatprep.subr.mxu0 0.0
    %4579 = vmatpush2.msra.mxu0 0.0
    %4580 = vmatprep.subr.mxu0 0.0
    %4581 = vmatpush2.msra.mxu0 0.0
    %4582 = vmatprep.subr.mxu0 0.0
    %4583 = vmatpush2.msra.mxu0 0.0
    %4584 = vmatprep.subr.mxu0 0.0
    %4585 = vmatpush2.msra.mxu0 0.0
    %4586 = vmatprep.subr.mxu0 0.0
    %4587 = vmatpush2.msra.mxu0 0.0
    %4588 = vmatprep.subr.mxu0 0.0
    %4589 = vmatpush2.msra.mxu0 0.0
    %4590 = vmatprep.subr.mxu0 0.0
    %4591 = vmatpush2.msra.mxu0 0.0
    %4592 = vmatprep.subr.mxu0 0.0
    %4593 = vmatpush2.msra.mxu0 0.0
    %4594 = vmatprep.subr.mxu0 0.0
    %4595 = vmatpush2.msra.mxu0 0.0
    %4596 = vmatprep.subr.mxu0 0.0
    %4597 = vmatpush2.msra.mxu0 0.0
    %4598 = vmatprep.mubr.f32.mxu0 0.0
    %4599 = vmatmul.mubr.f32.gmra.mxu0 %v3926
    %v4600 = vpop.f32.mrf.mxu0
    %v4601 = vadd.f32 %v4531, %v4600
    %v4602 = vpop.f32.mrf.mxu0
    %4603 = vdwg.mxu0
    %v4604 = vadd.f32 %v4601, %v1001
    %s4605 = scalar_lea.vmem %s19, 48
    %4606 = vst [vmem:[%s4605] sm:$0xff] %v4604
    %v4607 = vsel %vm1006, %v4604, -1e+30
    %4608 = vmax.xlane.f32.xlu0 %v4607
    %v4609 = vpop.xlane.xlu0 %4608
    %vm4610 = vcmp.eq.f32.partialorder %v4607, %v4609
    %v4611 = vsel %vm4610, %v285, 128
    %v4612 = vand.u32 %v4611, 65535
    %v4613 = vshra.s32 %v4611, 16
    %v4614 = vcvt.s32.f32 %v4612
    %v4615 = vcvt.s32.f32 %v4613
    %4616 = vmin.xlane.f32.xlu0 %v4615
    %v4617 = vpop.xlane.xlu0 %4616
    %vm4618 = vcmp.eq.f32.partialorder %v4615, %v4617
    %v4619 = vsel %vm4618, %v4614, inf
    %4620 = vmin.xlane.f32.xlu0 %v4619
    %v4621 = vpop.xlane.xlu0 %4620
    %v4622 = vcvt.f32.s32 %v4621
    %v4623 = vcvt.f32.s32 %v4617
    %v4624 = vshll.u32 %v4623, 16
    %v4625 = vadd.s32 %v4624, %v4622
    %vm4626 = vcmp.eq.s32.totalorder %v285, %v4625
    %v4627 = vsel %vm4626, 1, 0
    %v4628 = vcvt.s32.f32 %v4627
    %s4629 = sld [smem:[#allocation3 + $0x6]]
    %p4630 = scmp.ne.s32.totalorder %s4629, 0
    %s4631 = scalar_select %p4630, 1, 0
    %s4632 = scvt.s32.f32 %s4631
    %s4633 = scalar_lea.vmem %s1, 48
    %v4634 = vld [vmem:[%s4633] sm:$0xff]
    %4635 = vset.pattern.permute.xlu0 0
    %4636 = vperm.xlu0 %4635, %v4634
    %v4637 = vpop.permute.xlu0 %4636
    %vm4638 = vcmp.eq.s32.totalorder %v285, %v4637
    %v4639 = vsel %vm4638, 1, 0
    %v4640 = vcvt.s32.f32 %v4639
    %v4641 = vstv %s4632
    %v4642 = vmul.f32 %v4641, %v4640
    %s4643 = ssub.f32 1.0, %s4632
    %v4644 = vstv %s4643
    %v4645 = vmul.f32 %v4644, %v4628
    %v4646 = vadd.f32 %v4642, %v4645
    %v4647 = vsel %vm294, %v4430, 0
    %4649 = vmatprep.subr.mxu0 0.0
    %4650 = vmatpush1.msra.mxu0 0.0
    %4651 = vmatprep.subr.mxu0 0.0
    %4652 = vmatpush1.msra.mxu0 0.0
    %4653 = vmatprep.subr.mxu0 0.0
    %4654 = vmatpush1.msra.mxu0 0.0
    %4655 = vmatprep.subr.mxu0 0.0
    %4656 = vmatpush1.msra.mxu0 0.0
    %4657 = vmatprep.subr.mxu0 0.0
    %4658 = vmatpush1.msra.mxu0 0.0
    %4659 = vmatprep.subr.mxu0 0.0
    %4660 = vmatpush1.msra.mxu0 0.0
    %4661 = vmatprep.subr.mxu0 0.0
    %4662 = vmatpush1.msra.mxu0 0.0
    %4663 = vmatprep.subr.mxu0 0.0
    %4664 = vmatpush1.msra.mxu0 0.0
    %4665 = vmatprep.subr.mxu0 0.0
    %4666 = vmatpush1.msra.mxu0 0.0
    %4667 = vmatprep.subr.mxu0 0.0
    %4668 = vmatpush1.msra.mxu0 0.0
    %4669 = vmatprep.subr.mxu0 0.0
    %4670 = vmatpush1.msra.mxu0 0.0
    %4671 = vmatprep.subr.mxu0 0.0
    %4672 = vmatpush1.msra.mxu0 0.0
    %4673 = vmatprep.subr.mxu0 0.0
    %4674 = vmatpush1.msra.mxu0 %v279
    %4675 = vmatprep.subr.mxu0 0.0
    %4676 = vmatpush1.msra.mxu0 %v278
    %4677 = vmatprep.subr.mxu0 0.0
    %4678 = vmatpush1.msra.mxu0 %v277
    %4679 = vmatprep.subr.mxu0 0.0
    %4680 = vmatpush1.msra.mxu0 %v276
    %4681 = vmatprep.subr.mxu0 0.0
    %4682 = vmatpush2.msra.mxu0 0.0
    %4683 = vmatprep.subr.mxu0 0.0
    %4684 = vmatpush2.msra.mxu0 0.0
    %4685 = vmatprep.subr.mxu0 0.0
    %4686 = vmatpush2.msra.mxu0 0.0
    %4687 = vmatprep.subr.mxu0 0.0
    %4688 = vmatpush2.msra.mxu0 0.0
    %4689 = vmatprep.subr.mxu0 0.0
    %4690 = vmatpush2.msra.mxu0 0.0
    %4691 = vmatprep.subr.mxu0 0.0
    %4692 = vmatpush2.msra.mxu0 0.0
    %4693 = vmatprep.subr.mxu0 0.0
    %4694 = vmatpush2.msra.mxu0 0.0
    %4695 = vmatprep.subr.mxu0 0.0
    %4696 = vmatpush2.msra.mxu0 0.0
    %4697 = vmatprep.subr.mxu0 0.0
    %4698 = vmatpush2.msra.mxu0 0.0
    %4699 = vmatprep.subr.mxu0 0.0
    %4700 = vmatpush2.msra.mxu0 0.0
    %4701 = vmatprep.subr.mxu0 0.0
    %4702 = vmatpush2.msra.mxu0 0.0
    %4703 = vmatprep.subr.mxu0 0.0
    %4704 = vmatpush2.msra.mxu0 0.0
    %4705 = vmatprep.subr.mxu0 0.0
    %4706 = vmatpush2.msra.mxu0 0.0
    %4707 = vmatprep.subr.mxu0 0.0
    %4708 = vmatpush2.msra.mxu0 0.0
    %4709 = vmatprep.subr.mxu0 0.0
    %4710 = vmatpush2.msra.mxu0 0.0
    %4711 = vmatprep.subr.mxu0 0.0
    %4712 = vmatpush2.msra.mxu0 0.0
    %4713 = vmatprep.mubr.f32.mxu0 0.0
    %4714 = vmatmul.mubr.f32.gmra.mxu0 %v4647
    %v4715 = vpop.f32.mrf.mxu0
    %v4716 = vadd.f32 0.0, %v4715
    %v4717 = vpop.f32.mrf.mxu0
    %4718 = vdwg.mxu0
    %v4719 = vadd.f32 %v266, %v4716
    %v4720 = vadd.f32 %v267, %v4716
    %v4721 = vadd.f32 %v268, %v4716
    %v4722 = vadd.f32 %v269, %v4716
    %v4723 = vadd.f32 %v270, %v4716
    %v4724 = vadd.f32 %v271, %v4716
    %v4725 = vadd.f32 %v272, %v4716
    %v4726 = vadd.f32 %v273, %v4716
    %v4727 = vadd.f32 %v274, %v4716
    %v4728 = vadd.f32 %v275, %v4716
    %v4729 = vtanh.pop %v4719
    %v4730 = vtanh.pop %v4720
    %v4731 = vtanh.pop %v4721
    %v4732 = vtanh.pop %v4722
    %v4733 = vtanh.pop %v4723
    %v4734 = vtanh.pop %v4724
    %v4735 = vtanh.pop %v4725
    %v4736 = vtanh.pop %v4726
    %v4737 = vtanh.pop %v4727
    %v4738 = vtanh.pop %v4728
    %v4739 = vmul.f32 %v4729, %v392
    %v4740 = vmul.f32 %v4730, %v392
    %v4741 = vmul.f32 %v4731, %v392
    %v4742 = vmul.f32 %v4732, %v392
    %v4743 = vmul.f32 %v4733, %v392
    %v4744 = vmul.f32 %v4734, %v392
    %v4745 = vmul.f32 %v4735, %v392
    %v4746 = vmul.f32 %v4736, %v392
    %v4747 = vmul.f32 %v4737, %v392
    %v4748 = vmul.f32 %v4738, %v392
    %v4749 = vsel %vm294, %v4739, 0.0
    %4750 = vadd.xlane.f32.xlu0 %v4749
    %v4751 = vpop.xlane.xlu0 %4750
    %v4752 = vsel %vm294, %v4740, 0.0
    %4753 = vadd.xlane.f32.xlu0 %v4752
    %v4754 = vpop.xlane.xlu0 %4753
    %v4755 = vsel %vm294, %v4741, 0.0
    %4756 = vadd.xlane.f32.xlu0 %v4755
    %v4757 = vpop.xlane.xlu0 %4756
    %v4758 = vsel %vm294, %v4742, 0.0
    %4759 = vadd.xlane.f32.xlu0 %v4758
    %v4760 = vpop.xlane.xlu0 %4759
    %v4761 = vsel %vm294, %v4743, 0.0
    %4762 = vadd.xlane.f32.xlu0 %v4761
    %v4763 = vpop.xlane.xlu0 %4762
    %v4764 = vsel %vm294, %v4744, 0.0
    %4765 = vadd.xlane.f32.xlu0 %v4764
    %v4766 = vpop.xlane.xlu0 %4765
    %v4767 = vsel %vm294, %v4745, 0.0
    %4768 = vadd.xlane.f32.xlu0 %v4767
    %v4769 = vpop.xlane.xlu0 %4768
    %v4770 = vsel %vm294, %v4746, 0.0
    %4771 = vadd.xlane.f32.xlu0 %v4770
    %v4772 = vpop.xlane.xlu0 %4771
    %v4773 = vsel %vm294, %v4747, 0.0
    %4774 = vadd.xlane.f32.xlu0 %v4773
    %v4775 = vpop.xlane.xlu0 %4774
    %v4776 = vsel %vm294, %v4748, 0.0
    %4777 = vadd.xlane.f32.xlu0 %v4776
    %v4778 = vpop.xlane.xlu0 %4777
    %v4779 = vadd.f32 %v4751, %v438
    %v4780 = vadd.f32 %v4754, %v438
    %v4781 = vadd.f32 %v4757, %v438
    %v4782 = vadd.f32 %v4760, %v438
    %v4783 = vadd.f32 %v4763, %v438
    %v4784 = vadd.f32 %v4766, %v438
    %v4785 = vadd.f32 %v4769, %v438
    %v4786 = vadd.f32 %v4772, %v438
    %v4787 = vadd.f32 %v4775, %v438
    %v4788 = vadd.f32 %v4778, %v438
    %v4789 = vsel %vm450, %v4779, -inf
    %v4790 = vsel %vm450, %v4780, -inf
    %v4791 = vsel %vm450, %v4781, -inf
    %v4792 = vsel %vm450, %v4782, -inf
    %v4793 = vsel %vm450, %v4783, -inf
    %v4794 = vmax.f32 %v4789, %v4793
    %v4795 = vsel %vm450, %v4784, -inf
    %v4796 = vmax.f32 %v4790, %v4795
    %v4797 = vsel %vm450, %v4785, -inf
    %v4798 = vmax.f32 %v4791, %v4797
    %v4799 = vsel %vm450, %v4786, -inf
    %v4800 = vmax.f32 %v4792, %v4799
    %v4801 = vsel %vm450, %v4787, -inf
    %v4802 = vmax.f32 %v4794, %v4801
    %v4803 = vsel %vm450, %v4788, -inf
    %v4804 = vmax.f32 %v4796, %v4803
    %v4805 = vmax.f32 %v4802, %v4804
    %v4806 = vmax.f32 %v4798, %v4800
    %v4807 = vmax.f32 %v4805, %v4806
    %v4808 = vsub.f32 %v4779, %v4807
    %v4809 = vsub.f32 %v4780, %v4807
    %v4810 = vsub.f32 %v4781, %v4807
    %v4811 = vsub.f32 %v4782, %v4807
    %v4812 = vsub.f32 %v4783, %v4807
    %v4813 = vsub.f32 %v4784, %v4807
    %v4814 = vsub.f32 %v4785, %v4807
    %v4815 = vsub.f32 %v4786, %v4807
    %v4816 = vsub.f32 %v4787, %v4807
    %v4817 = vsub.f32 %v4788, %v4807
    %v4818 = vmul.f32 %v4808, 1.442695
    %v4819 = vpow.pop %v4818
    %v4820 = vmul.f32 %v4809, 1.442695
    %v4821 = vpow.pop %v4820
    %v4822 = vmul.f32 %v4810, 1.442695
    %v4823 = vpow.pop %v4822
    %v4824 = vmul.f32 %v4811, 1.442695
    %v4825 = vpow.pop %v4824
    %v4826 = vmul.f32 %v4812, 1.442695
    %v4827 = vpow.pop %v4826
    %v4828 = vmul.f32 %v4813, 1.442695
    %v4829 = vpow.pop %v4828
    %v4830 = vmul.f32 %v4814, 1.442695
    %v4831 = vpow.pop %v4830
    %v4832 = vmul.f32 %v4815, 1.442695
    %v4833 = vpow.pop %v4832
    %v4834 = vmul.f32 %v4816, 1.442695
    %v4835 = vpow.pop %v4834
    %v4836 = vmul.f32 %v4817, 1.442695
    %v4837 = vpow.pop %v4836
    %v4838 = vsel %vm450, %v4819, 0.0
    %v4839 = vsel %vm450, %v4821, 0.0
    %v4840 = vadd.f32 %v4838, %v4839
    %v4841 = vsel %vm450, %v4823, 0.0
    %v4842 = vadd.f32 %v4840, %v4841
    %v4843 = vsel %vm450, %v4825, 0.0
    %v4844 = vadd.f32 %v4842, %v4843
    %v4845 = vsel %vm450, %v4827, 0.0
    %v4846 = vadd.f32 %v4844, %v4845
    %v4847 = vsel %vm450, %v4829, 0.0
    %v4848 = vadd.f32 %v4846, %v4847
    %v4849 = vsel %vm450, %v4831, 0.0
    %v4850 = vadd.f32 %v4848, %v4849
    %v4851 = vsel %vm450, %v4833, 0.0
    %v4852 = vadd.f32 %v4850, %v4851
    %v4853 = vsel %vm450, %v4835, 0.0
    %v4854 = vadd.f32 %v4852, %v4853
    %v4855 = vsel %vm450, %v4837, 0.0
    %v4856 = vadd.f32 %v4854, %v4855
    %v4857 = vrcp.pop %v4856
    %v4858 = vmul.f32 %v4819, %v4857
    %v4859 = vmul.f32 %v4821, %v4857
    %v4860 = vmul.f32 %v4823, %v4857
    %v4861 = vmul.f32 %v4825, %v4857
    %v4862 = vmul.f32 %v4827, %v4857
    %v4863 = vmul.f32 %v4829, %v4857
    %v4864 = vmul.f32 %v4831, %v4857
    %v4865 = vmul.f32 %v4833, %v4857
    %v4866 = vmul.f32 %v4835, %v4857
    %v4867 = vmul.f32 %v4837, %v4857
    %4869 = vset.pattern.permute.xlu0 0
    %4870 = vperm.xlu0 %4869, %v4858
    %v4871 = vpop.permute.xlu0 %4870
    %4874 = vset.pattern.permute.xlu0 0
    %4875 = vperm.xlu0 %4874, %v4859
    %v4876 = vpop.permute.xlu0 %4875
    %4879 = vset.pattern.permute.xlu0 0
    %4880 = vperm.xlu0 %4879, %v4860
    %v4881 = vpop.permute.xlu0 %4880
    %4884 = vset.pattern.permute.xlu0 0
    %4885 = vperm.xlu0 %4884, %v4861
    %v4886 = vpop.permute.xlu0 %4885
    %4889 = vset.pattern.permute.xlu0 0
    %4890 = vperm.xlu0 %4889, %v4862
    %v4891 = vpop.permute.xlu0 %4890
    %4894 = vset.pattern.permute.xlu0 0
    %4895 = vperm.xlu0 %4894, %v4863
    %v4896 = vpop.permute.xlu0 %4895
    %4899 = vset.pattern.permute.xlu0 0
    %4900 = vperm.xlu0 %4899, %v4864
    %v4901 = vpop.permute.xlu0 %4900
    %4904 = vset.pattern.permute.xlu0 0
    %4905 = vperm.xlu0 %4904, %v4865
    %v4906 = vpop.permute.xlu0 %4905
    %4909 = vset.pattern.permute.xlu0 0
    %4910 = vperm.xlu0 %4909, %v4866
    %v4911 = vpop.permute.xlu0 %4910
    %4914 = vset.pattern.permute.xlu0 0
    %4915 = vperm.xlu0 %4914, %v4867
    %v4916 = vpop.permute.xlu0 %4915
    %v4918 = vmul.f32 %v4871, %v256
    %v4919 = vmul.f32 %v4876, %v257
    %v4920 = vmul.f32 %v4881, %v258
    %v4921 = vmul.f32 %v4886, %v259
    %v4922 = vmul.f32 %v4891, %v260
    %v4923 = vmul.f32 %v4896, %v261
    %v4924 = vmul.f32 %v4901, %v262
    %v4925 = vmul.f32 %v4906, %v263
    %v4926 = vmul.f32 %v4911, %v264
    %v4927 = vmul.f32 %v4916, %v265
    %v4928 = vsel %vm93, %v4918, 0.0
    %v4929 = vsel %vm93, %v4919, 0.0
    %v4930 = vadd.f32 %v4928, %v4929
    %v4931 = vsel %vm93, %v4920, 0.0
    %v4932 = vadd.f32 %v4930, %v4931
    %v4933 = vsel %vm93, %v4921, 0.0
    %v4934 = vadd.f32 %v4932, %v4933
    %v4935 = vsel %vm93, %v4922, 0.0
    %v4936 = vadd.f32 %v4934, %v4935
    %v4937 = vsel %vm93, %v4923, 0.0
    %v4938 = vadd.f32 %v4936, %v4937
    %v4939 = vsel %vm93, %v4924, 0.0
    %v4940 = vadd.f32 %v4938, %v4939
    %v4941 = vsel %vm93, %v4925, 0.0
    %v4942 = vadd.f32 %v4940, %v4941
    %v4943 = vsel %vm93, %v4926, 0.0
    %v4944 = vadd.f32 %v4942, %v4943
    %v4945 = vsel %vm93, %v4927, 0.0
    %v4946 = vadd.f32 %v4944, %v4945
    %4948 = vrot.lane.b32.xlu0 %v4946, 32
    %v4949 = vpop.permute.xlu0 %4948
    %v4951 = vsel %vm294, %v4430, %v4949
    %v4952 = vld [vmem:[%s13] sm:$0xff]
    %v4953 = vld [vmem:[%s13 + $0x8] sm:$0xff]
    %v4954 = vld [vmem:[%s13 + $0x10] sm:$0xff]
    %v4955 = vld [vmem:[%s13 + $0x18] sm:$0xff]
    %v4956 = vld [vmem:[%s13 + $0x20] sm:$0xff]
    %v4957 = vld [vmem:[%s13 + $0x28] sm:$0xff]
    %v4958 = vld [vmem:[%s13 + $0x30] sm:$0xff]
    %v4959 = vld [vmem:[%s13 + $0x38] sm:$0xff]
    %v4960 = vld [vmem:[%s13 + $0x40] sm:$0xff]
    %v4961 = vld [vmem:[%s13 + $0x48] sm:$0xff]
    %v4962 = vld [vmem:[%s13 + $0x50] sm:$0xff]
    %v4963 = vld [vmem:[%s13 + $0x58] sm:$0xff]
    %v4964 = vld [vmem:[%s13 + $0x60] sm:$0xff]
    %v4965 = vld [vmem:[%s13 + $0x68] sm:$0xff]
    %v4966 = vld [vmem:[%s13 + $0x70] sm:$0xff]
    %v4967 = vld [vmem:[%s13 + $0x78] sm:$0xff]
    %v4968 = vld [vmem:[%s14] sm:$0xff]
    %v4969 = vld [vmem:[%s14 + $0x8] sm:$0xff]
    %v4970 = vld [vmem:[%s14 + $0x10] sm:$0xff]
    %v4971 = vld [vmem:[%s14 + $0x18] sm:$0xff]
    %v4972 = vld [vmem:[%s14 + $0x20] sm:$0xff]
    %v4973 = vld [vmem:[%s14 + $0x28] sm:$0xff]
    %v4974 = vld [vmem:[%s14 + $0x30] sm:$0xff]
    %v4975 = vld [vmem:[%s14 + $0x38] sm:$0xff]
    %v4976 = vld [vmem:[%s14 + $0x40] sm:$0xff]
    %v4977 = vld [vmem:[%s14 + $0x48] sm:$0xff]
    %v4978 = vld [vmem:[%s14 + $0x50] sm:$0xff]
    %v4979 = vld [vmem:[%s14 + $0x58] sm:$0xff]
    %v4981 = vsel %vm642, %v4951, 0
    %4983 = vmatprep.subr.mxu0 0.0
    %4984 = vmatpush1.msra.mxu0 0.0
    %4985 = vmatprep.subr.mxu0 0.0
    %4986 = vmatpush1.msra.mxu0 0.0
    %4987 = vmatprep.subr.mxu0 0.0
    %4988 = vmatpush1.msra.mxu0 0.0
    %4989 = vmatprep.subr.mxu0 0.0
    %4990 = vmatpush1.msra.mxu0 0.0
    %4991 = vmatprep.subr.mxu0 0.0
    %4992 = vmatpush1.msra.mxu0 %v4979
    %4993 = vmatprep.subr.mxu0 0.0
    %4994 = vmatpush1.msra.mxu0 %v4978
    %4995 = vmatprep.subr.mxu0 0.0
    %4996 = vmatpush1.msra.mxu0 %v4977
    %4997 = vmatprep.subr.mxu0 0.0
    %4998 = vmatpush1.msra.mxu0 %v4976
    %4999 = vmatprep.subr.mxu0 0.0
    %5000 = vmatpush1.msra.mxu0 %v4975
    %5001 = vmatprep.subr.mxu0 0.0
    %5002 = vmatpush1.msra.mxu0 %v4974
    %5003 = vmatprep.subr.mxu0 0.0
    %5004 = vmatpush1.msra.mxu0 %v4973
    %5005 = vmatprep.subr.mxu0 0.0
    %5006 = vmatpush1.msra.mxu0 %v4972
    %5007 = vmatprep.subr.mxu0 0.0
    %5008 = vmatpush1.msra.mxu0 %v4971
    %5009 = vmatprep.subr.mxu0 0.0
    %5010 = vmatpush1.msra.mxu0 %v4970
    %5011 = vmatprep.subr.mxu0 0.0
    %5012 = vmatpush1.msra.mxu0 %v4969
    %5013 = vmatprep.subr.mxu0 0.0
    %5014 = vmatpush1.msra.mxu0 %v4968
    %5015 = vmatprep.subr.mxu0 0.0
    %5016 = vmatpush2.msra.mxu0 0.0
    %5017 = vmatprep.subr.mxu0 0.0
    %5018 = vmatpush2.msra.mxu0 0.0
    %5019 = vmatprep.subr.mxu0 0.0
    %5020 = vmatpush2.msra.mxu0 0.0
    %5021 = vmatprep.subr.mxu0 0.0
    %5022 = vmatpush2.msra.mxu0 0.0
    %5023 = vmatprep.subr.mxu0 0.0
    %5024 = vmatpush2.msra.mxu0 0.0
    %5025 = vmatprep.subr.mxu0 0.0
    %5026 = vmatpush2.msra.mxu0 0.0
    %5027 = vmatprep.subr.mxu0 0.0
    %5028 = vmatpush2.msra.mxu0 0.0
    %5029 = vmatprep.subr.mxu0 0.0
    %5030 = vmatpush2.msra.mxu0 0.0
    %5031 = vmatprep.subr.mxu0 0.0
    %5032 = vmatpush2.msra.mxu0 0.0
    %5033 = vmatprep.subr.mxu0 0.0
    %5034 = vmatpush2.msra.mxu0 0.0
    %5035 = vmatprep.subr.mxu0 0.0
    %5036 = vmatpush2.msra.mxu0 0.0
    %5037 = vmatprep.subr.mxu0 0.0
    %5038 = vmatpush2.msra.mxu0 0.0
    %5039 = vmatprep.subr.mxu0 0.0
    %5040 = vmatpush2.msra.mxu0 0.0
    %5041 = vmatprep.subr.mxu0 0.0
    %5042 = vmatpush2.msra.mxu0 0.0
    %5043 = vmatprep.subr.mxu0 0.0
    %5044 = vmatpush2.msra.mxu0 0.0
    %5045 = vmatprep.subr.mxu0 0.0
    %5046 = vmatpush2.msra.mxu0 0.0
    %5047 = vmatprep.mubr.f32.mxu0 0.0
    %5048 = vmatmul.mubr.f32.gmra.mxu0 %v4981
    %v5049 = vpop.f32.mrf.mxu0
    %v5050 = vadd.f32 0.0, %v5049
    %v5051 = vpop.f32.mrf.mxu0
    %5052 = vdwg.mxu0
    %5053 = vmatprep.subr.mxu0 0.0
    %5054 = vmatpush1.msra.mxu0 %v4967
    %5055 = vmatprep.subr.mxu0 0.0
    %5056 = vmatpush1.msra.mxu0 %v4966
    %5057 = vmatprep.subr.mxu0 0.0
    %5058 = vmatpush1.msra.mxu0 %v4965
    %5059 = vmatprep.subr.mxu0 0.0
    %5060 = vmatpush1.msra.mxu0 %v4964
    %5061 = vmatprep.subr.mxu0 0.0
    %5062 = vmatpush1.msra.mxu0 %v4963
    %5063 = vmatprep.subr.mxu0 0.0
    %5064 = vmatpush1.msra.mxu0 %v4962
    %5065 = vmatprep.subr.mxu0 0.0
    %5066 = vmatpush1.msra.mxu0 %v4961
    %5067 = vmatprep.subr.mxu0 0.0
    %5068 = vmatpush1.msra.mxu0 %v4960
    %5069 = vmatprep.subr.mxu0 0.0
    %5070 = vmatpush1.msra.mxu0 %v4959
    %5071 = vmatprep.subr.mxu0 0.0
    %5072 = vmatpush1.msra.mxu0 %v4958
    %5073 = vmatprep.subr.mxu0 0.0
    %5074 = vmatpush1.msra.mxu0 %v4957
    %5075 = vmatprep.subr.mxu0 0.0
    %5076 = vmatpush1.msra.mxu0 %v4956
    %5077 = vmatprep.subr.mxu0 0.0
    %5078 = vmatpush1.msra.mxu0 %v4955
    %5079 = vmatprep.subr.mxu0 0.0
    %5080 = vmatpush1.msra.mxu0 %v4954
    %5081 = vmatprep.subr.mxu0 0.0
    %5082 = vmatpush1.msra.mxu0 %v4953
    %5083 = vmatprep.subr.mxu0 0.0
    %5084 = vmatpush1.msra.mxu0 %v4952
    %5085 = vmatprep.subr.mxu0 0.0
    %5086 = vmatpush2.msra.mxu0 0.0
    %5087 = vmatprep.subr.mxu0 0.0
    %5088 = vmatpush2.msra.mxu0 0.0
    %5089 = vmatprep.subr.mxu0 0.0
    %5090 = vmatpush2.msra.mxu0 0.0
    %5091 = vmatprep.subr.mxu0 0.0
    %5092 = vmatpush2.msra.mxu0 0.0
    %5093 = vmatprep.subr.mxu0 0.0
    %5094 = vmatpush2.msra.mxu0 0.0
    %5095 = vmatprep.subr.mxu0 0.0
    %5096 = vmatpush2.msra.mxu0 0.0
    %5097 = vmatprep.subr.mxu0 0.0
    %5098 = vmatpush2.msra.mxu0 0.0
    %5099 = vmatprep.subr.mxu0 0.0
    %5100 = vmatpush2.msra.mxu0 0.0
    %5101 = vmatprep.subr.mxu0 0.0
    %5102 = vmatpush2.msra.mxu0 0.0
    %5103 = vmatprep.subr.mxu0 0.0
    %5104 = vmatpush2.msra.mxu0 0.0
    %5105 = vmatprep.subr.mxu0 0.0
    %5106 = vmatpush2.msra.mxu0 0.0
    %5107 = vmatprep.subr.mxu0 0.0
    %5108 = vmatpush2.msra.mxu0 0.0
    %5109 = vmatprep.subr.mxu0 0.0
    %5110 = vmatpush2.msra.mxu0 0.0
    %5111 = vmatprep.subr.mxu0 0.0
    %5112 = vmatpush2.msra.mxu0 0.0
    %5113 = vmatprep.subr.mxu0 0.0
    %5114 = vmatpush2.msra.mxu0 0.0
    %5115 = vmatprep.subr.mxu0 0.0
    %5116 = vmatpush2.msra.mxu0 0.0
    %5117 = vmatprep.mubr.f32.mxu0 0.0
    %5118 = vmatmul.mubr.f32.gmra.mxu0 %v4646
    %v5119 = vpop.f32.mrf.mxu0
    %v5120 = vadd.f32 %v5050, %v5119
    %v5121 = vpop.f32.mrf.mxu0
    %5122 = vdwg.mxu0
    %v5123 = vadd.f32 %v5120, %v790
    %v5124 = vxor.u32 %v5123, 2147483648
    %v5125 = vmul.f32 %v5124, 1.442695
    %v5126 = vpow.pop %v5125
    %v5127 = vadd.f32 %v5126, 1.0
    %v5128 = vrcp.pop %v5127
    %v5129 = vmul.f32 1.0, %v5128
    %v5130 = vtanh.pop %v5123
    %v5131 = vmul.f32 %v5129, %v4421
    %5133 = vrot.lane.b32.xlu0 %v5130, 64
    %v5134 = vpop.permute.xlu0 %5133
    %v5136 = vmul.f32 %v5129, %v5134
    %5138 = vrot.lane.b32.xlu0 %v5136, 32
    %v5139 = vpop.permute.xlu0 %5138
    %v5141 = vadd.f32 %v5131, %v5139
    %v5142 = vtanh.pop %v5141
    %5144 = vrot.lane.b32.xlu0 %v5142, 64
    %v5145 = vpop.permute.xlu0 %5144
    %v5147 = vmul.f32 %v5129, %v5145
    %5149 = vrot.lane.b32.xlu0 %v5147, 32
    %v5150 = vpop.permute.xlu0 %5149
    %v5152 = vsel %vm294, %v5150, %v4949
    %v5153 = vld [vmem:[%s16] sm:$0xff]
    %v5154 = vld [vmem:[%s16 + $0x8] sm:$0xff]
    %v5155 = vld [vmem:[%s16 + $0x10] sm:$0xff]
    %v5156 = vld [vmem:[%s16 + $0x18] sm:$0xff]
    %v5157 = vld [vmem:[%s16 + $0x20] sm:$0xff]
    %v5158 = vld [vmem:[%s16 + $0x28] sm:$0xff]
    %v5159 = vld [vmem:[%s16 + $0x30] sm:$0xff]
    %v5160 = vld [vmem:[%s16 + $0x38] sm:$0xff]
    %v5161 = vld [vmem:[%s16 + $0x40] sm:$0xff]
    %v5162 = vld [vmem:[%s16 + $0x48] sm:$0xff]
    %v5163 = vld [vmem:[%s16 + $0x50] sm:$0xff]
    %v5164 = vld [vmem:[%s16 + $0x58] sm:$0xff]
    %v5165 = vld [vmem:[%s16 + $0x60] sm:$0xff]
    %v5166 = vld [vmem:[%s16 + $0x68] sm:$0xff]
    %v5167 = vld [vmem:[%s16 + $0x70] sm:$0xff]
    %v5168 = vld [vmem:[%s16 + $0x78] sm:$0xff]
    %v5169 = vld [vmem:[%s17] sm:$0xff]
    %v5170 = vld [vmem:[%s17 + $0x8] sm:$0xff]
    %v5171 = vld [vmem:[%s17 + $0x10] sm:$0xff]
    %v5172 = vld [vmem:[%s17 + $0x18] sm:$0xff]
    %v5173 = vld [vmem:[%s17 + $0x20] sm:$0xff]
    %v5174 = vld [vmem:[%s17 + $0x28] sm:$0xff]
    %v5175 = vld [vmem:[%s17 + $0x30] sm:$0xff]
    %v5176 = vld [vmem:[%s17 + $0x38] sm:$0xff]
    %v5177 = vld [vmem:[%s17 + $0x40] sm:$0xff]
    %v5178 = vld [vmem:[%s17 + $0x48] sm:$0xff]
    %v5179 = vld [vmem:[%s17 + $0x50] sm:$0xff]
    %v5180 = vld [vmem:[%s17 + $0x58] sm:$0xff]
    %v5182 = vsel %vm642, %v5152, 0
    %5184 = vmatprep.subr.mxu0 0.0
    %5185 = vmatpush1.msra.mxu0 0.0
    %5186 = vmatprep.subr.mxu0 0.0
    %5187 = vmatpush1.msra.mxu0 0.0
    %5188 = vmatprep.subr.mxu0 0.0
    %5189 = vmatpush1.msra.mxu0 0.0
    %5190 = vmatprep.subr.mxu0 0.0
    %5191 = vmatpush1.msra.mxu0 0.0
    %5192 = vmatprep.subr.mxu0 0.0
    %5193 = vmatpush1.msra.mxu0 %v5180
    %5194 = vmatprep.subr.mxu0 0.0
    %5195 = vmatpush1.msra.mxu0 %v5179
    %5196 = vmatprep.subr.mxu0 0.0
    %5197 = vmatpush1.msra.mxu0 %v5178
    %5198 = vmatprep.subr.mxu0 0.0
    %5199 = vmatpush1.msra.mxu0 %v5177
    %5200 = vmatprep.subr.mxu0 0.0
    %5201 = vmatpush1.msra.mxu0 %v5176
    %5202 = vmatprep.subr.mxu0 0.0
    %5203 = vmatpush1.msra.mxu0 %v5175
    %5204 = vmatprep.subr.mxu0 0.0
    %5205 = vmatpush1.msra.mxu0 %v5174
    %5206 = vmatprep.subr.mxu0 0.0
    %5207 = vmatpush1.msra.mxu0 %v5173
    %5208 = vmatprep.subr.mxu0 0.0
    %5209 = vmatpush1.msra.mxu0 %v5172
    %5210 = vmatprep.subr.mxu0 0.0
    %5211 = vmatpush1.msra.mxu0 %v5171
    %5212 = vmatprep.subr.mxu0 0.0
    %5213 = vmatpush1.msra.mxu0 %v5170
    %5214 = vmatprep.subr.mxu0 0.0
    %5215 = vmatpush1.msra.mxu0 %v5169
    %5216 = vmatprep.subr.mxu0 0.0
    %5217 = vmatpush2.msra.mxu0 0.0
    %5218 = vmatprep.subr.mxu0 0.0
    %5219 = vmatpush2.msra.mxu0 0.0
    %5220 = vmatprep.subr.mxu0 0.0
    %5221 = vmatpush2.msra.mxu0 0.0
    %5222 = vmatprep.subr.mxu0 0.0
    %5223 = vmatpush2.msra.mxu0 0.0
    %5224 = vmatprep.subr.mxu0 0.0
    %5225 = vmatpush2.msra.mxu0 0.0
    %5226 = vmatprep.subr.mxu0 0.0
    %5227 = vmatpush2.msra.mxu0 0.0
    %5228 = vmatprep.subr.mxu0 0.0
    %5229 = vmatpush2.msra.mxu0 0.0
    %5230 = vmatprep.subr.mxu0 0.0
    %5231 = vmatpush2.msra.mxu0 0.0
    %5232 = vmatprep.subr.mxu0 0.0
    %5233 = vmatpush2.msra.mxu0 0.0
    %5234 = vmatprep.subr.mxu0 0.0
    %5235 = vmatpush2.msra.mxu0 0.0
    %5236 = vmatprep.subr.mxu0 0.0
    %5237 = vmatpush2.msra.mxu0 0.0
    %5238 = vmatprep.subr.mxu0 0.0
    %5239 = vmatpush2.msra.mxu0 0.0
    %5240 = vmatprep.subr.mxu0 0.0
    %5241 = vmatpush2.msra.mxu0 0.0
    %5242 = vmatprep.subr.mxu0 0.0
    %5243 = vmatpush2.msra.mxu0 0.0
    %5244 = vmatprep.subr.mxu0 0.0
    %5245 = vmatpush2.msra.mxu0 0.0
    %5246 = vmatprep.subr.mxu0 0.0
    %5247 = vmatpush2.msra.mxu0 0.0
    %5248 = vmatprep.mubr.f32.mxu0 0.0
    %5249 = vmatmul.mubr.f32.gmra.mxu0 %v5182
    %v5250 = vpop.f32.mrf.mxu0
    %v5251 = vadd.f32 0.0, %v5250
    %v5252 = vpop.f32.mrf.mxu0
    %5253 = vdwg.mxu0
    %5254 = vmatprep.subr.mxu0 0.0
    %5255 = vmatpush1.msra.mxu0 %v5168
    %5256 = vmatprep.subr.mxu0 0.0
    %5257 = vmatpush1.msra.mxu0 %v5167
    %5258 = vmatprep.subr.mxu0 0.0
    %5259 = vmatpush1.msra.mxu0 %v5166
    %5260 = vmatprep.subr.mxu0 0.0
    %5261 = vmatpush1.msra.mxu0 %v5165
    %5262 = vmatprep.subr.mxu0 0.0
    %5263 = vmatpush1.msra.mxu0 %v5164
    %5264 = vmatprep.subr.mxu0 0.0
    %5265 = vmatpush1.msra.mxu0 %v5163
    %5266 = vmatprep.subr.mxu0 0.0
    %5267 = vmatpush1.msra.mxu0 %v5162
    %5268 = vmatprep.subr.mxu0 0.0
    %5269 = vmatpush1.msra.mxu0 %v5161
    %5270 = vmatprep.subr.mxu0 0.0
    %5271 = vmatpush1.msra.mxu0 %v5160
    %5272 = vmatprep.subr.mxu0 0.0
    %5273 = vmatpush1.msra.mxu0 %v5159
    %5274 = vmatprep.subr.mxu0 0.0
    %5275 = vmatpush1.msra.mxu0 %v5158
    %5276 = vmatprep.subr.mxu0 0.0
    %5277 = vmatpush1.msra.mxu0 %v5157
    %5278 = vmatprep.subr.mxu0 0.0
    %5279 = vmatpush1.msra.mxu0 %v5156
    %5280 = vmatprep.subr.mxu0 0.0
    %5281 = vmatpush1.msra.mxu0 %v5155
    %5282 = vmatprep.subr.mxu0 0.0
    %5283 = vmatpush1.msra.mxu0 %v5154
    %5284 = vmatprep.subr.mxu0 0.0
    %5285 = vmatpush1.msra.mxu0 %v5153
    %5286 = vmatprep.subr.mxu0 0.0
    %5287 = vmatpush2.msra.mxu0 0.0
    %5288 = vmatprep.subr.mxu0 0.0
    %5289 = vmatpush2.msra.mxu0 0.0
    %5290 = vmatprep.subr.mxu0 0.0
    %5291 = vmatpush2.msra.mxu0 0.0
    %5292 = vmatprep.subr.mxu0 0.0
    %5293 = vmatpush2.msra.mxu0 0.0
    %5294 = vmatprep.subr.mxu0 0.0
    %5295 = vmatpush2.msra.mxu0 0.0
    %5296 = vmatprep.subr.mxu0 0.0
    %5297 = vmatpush2.msra.mxu0 0.0
    %5298 = vmatprep.subr.mxu0 0.0
    %5299 = vmatpush2.msra.mxu0 0.0
    %5300 = vmatprep.subr.mxu0 0.0
    %5301 = vmatpush2.msra.mxu0 0.0
    %5302 = vmatprep.subr.mxu0 0.0
    %5303 = vmatpush2.msra.mxu0 0.0
    %5304 = vmatprep.subr.mxu0 0.0
    %5305 = vmatpush2.msra.mxu0 0.0
    %5306 = vmatprep.subr.mxu0 0.0
    %5307 = vmatpush2.msra.mxu0 0.0
    %5308 = vmatprep.subr.mxu0 0.0
    %5309 = vmatpush2.msra.mxu0 0.0
    %5310 = vmatprep.subr.mxu0 0.0
    %5311 = vmatpush2.msra.mxu0 0.0
    %5312 = vmatprep.subr.mxu0 0.0
    %5313 = vmatpush2.msra.mxu0 0.0
    %5314 = vmatprep.subr.mxu0 0.0
    %5315 = vmatpush2.msra.mxu0 0.0
    %5316 = vmatprep.subr.mxu0 0.0
    %5317 = vmatpush2.msra.mxu0 0.0
    %5318 = vmatprep.mubr.f32.mxu0 0.0
    %5319 = vmatmul.mubr.f32.gmra.mxu0 %v4646
    %v5320 = vpop.f32.mrf.mxu0
    %v5321 = vadd.f32 %v5251, %v5320
    %v5322 = vpop.f32.mrf.mxu0
    %5323 = vdwg.mxu0
    %v5324 = vadd.f32 %v5321, %v1001
    %s5325 = scalar_lea.vmem %s19, 56
    %5326 = vst [vmem:[%s5325] sm:$0xff] %v5324
    // Predicated region
    $region82: #{seq2seq_forward.3} parent=1 // pred_check
      _
    $region83: #{seq2seq_forward.3} parent=1 // pred_check_branch
      %5328 = sbr.rel (0) target = $region85
    $region84: #{seq2seq_forward.3} parent=1 // pred_region
      _
    $region85: #{seq2seq_forward.3} parent=1 // pred_fallthru
      _
    // Predicated region
    $region86: #{seq2seq_forward.3} parent=1 // pred_check
      _
    $region87: #{seq2seq_forward.3} parent=1 // pred_check_branch
      %5330 = sbr.rel (0) target = $region89
    $region88: #{seq2seq_forward.3} parent=1 // pred_region
      _
    $region89: #{seq2seq_forward.3} parent=1 // pred_fallthru
      _
    %5331 = vsyncpa [#allocation4], 1

</llo_original>
